<compile_context>
chip_gen: v7x
topology: tpu7x:2x2x1
jax: 0.10.0
libtpu: 0.0.40
codegen_flags: <defaults>
</compile_context>

<pallas_src>
import math
import functools

import jax
import jax.numpy as jnp
from jax import lax
from jax.experimental import pallas as pl
from jax.experimental.pallas import tpu as pltpu


def _layernorm(x, gamma, beta, eps=1e-12):
    # PyTorch module explicitly uses eps=1e-12.
    mu = jnp.mean(x, axis=-1, keepdims=True)
    var = jnp.mean((x - mu) ** 2, axis=-1, keepdims=True)
    return (x - mu) * lax.rsqrt(var + eps) * gamma + beta


def _gelu_exact(x):
    # nn.GELU() default = exact erf formulation (kept for parity; the tanh
    # approximation would move work to the EUP but changes numerics slightly).
    return 0.5 * x * (1.0 + lax.erf(x * (1.0 / math.sqrt(2.0))))


def encoder_kernel(num_heads,
                   x_ref,
                   wqkv_ref, bqkv_ref,
                   wo_ref, bo_ref,
                   g1_ref, be1_ref,
                   w1_ref, b1_ref,
                   w2_ref, b2_ref,
                   g2_ref, be2_ref,
                   out_ref,
                   ctx_ref):
    TB, T, D = x_ref.shape
    M = TB * T
    dh = D // num_heads

    # (TB, T, D) -> (TB*T, D): cheap sublane merge, keeps D lane-dense.
    x = x_ref[...].reshape(M, D).astype(jnp.float32)
    x_bf = x.astype(jnp.bfloat16)

    # ---- fused QKV projection (one MXU matmul, N = 3D) -------------------
    # 1/sqrt(dh) is pre-folded into the Q columns of wqkv/bqkv (param prep).
    qkv = jnp.dot(x_bf, wqkv_ref[...],
                  preferred_element_type=jnp.float32) + bqkv_ref[...]
    qkv_bf = qkv.astype(jnp.bfloat16)          # single whole-slab cast
    q = qkv_bf[:, 0 * D:1 * D].reshape(TB, T, D)
    k = qkv_bf[:, 1 * D:2 * D].reshape(TB, T, D)
    v = qkv_bf[:, 2 * D:3 * D].reshape(TB, T, D)

    # ---- attention: static loop over heads, matmuls batched over TB ------
    # Each head's (TB, T, dh) context is stored bf16 into its own column slot
    # of the ctx scratch slab (disjoint columns -> no RMW, no zero init).
    for h in range(num_heads):
        c0 = h * dh
        qh = q[:, :, c0:c0 + dh]
        kh = k[:, :, c0:c0 + dh]
        vh = v[:, :, c0:c0 + dh]
        s = jnp.einsum("bqd,bkd->bqk", qh, kh,
                       preferred_element_type=jnp.float32)      # (TB, T, T)
        s = s - jnp.max(s, axis=-1, keepdims=True)
        p = jnp.exp(s)
        p = p * pl.reciprocal(jnp.sum(p, axis=-1, keepdims=True), approx=True)
        # attn_drop is identity in eval mode.
        ctx = jnp.einsum("bqk,bkd->bqd", p.astype(jnp.bfloat16), vh,
                         preferred_element_type=jnp.float32)    # (TB, T, dh)
        ctx_ref[:, c0:c0 + dh] = ctx.reshape(M, dh).astype(jnp.bfloat16)

    # ---- single output projection: (M, D) @ (D, D), full-D contraction ---
    attn = jnp.dot(ctx_ref[...], wo_ref[...],
                   preferred_element_type=jnp.float32) + bo_ref[...]

    # ---- residual + LayerNorm1 (self.dropout is identity in eval mode) ---
    x1 = _layernorm(x + attn, g1_ref[...], be1_ref[...])

    # ---- MLP: Linear -> GELU(exact) -> Linear (Dropout = identity) -------
    h1 = jnp.dot(x1.astype(jnp.bfloat16), w1_ref[...],
                 preferred_element_type=jnp.float32) + b1_ref[...]
    h1 = _gelu_exact(h1)
    h2 = jnp.dot(h1.astype(jnp.bfloat16), w2_ref[...],
                 preferred_element_type=jnp.float32) + b2_ref[...]

    # ---- residual + LayerNorm2 -------------------------------------------
    y = _layernorm(x1 + h2, g2_ref[...], be2_ref[...])
    out_ref[...] = y.reshape(TB, T, D).astype(out_ref.dtype)


_PARAM_ORDER = ("wqkv", "bqkv", "wo", "bo", "ln1_g", "ln1_b",
                "w1", "b1", "w2", "b2", "ln2_g", "ln2_b")


def _pick_batch_block(B, T, target_rows=256, min_rows=128):
    """Pick per-grid-step batch block TB.

    Targets ~256 MXU rows/step (v6e/v7x 256-wide MXU), keeps >= 2 grid steps,
    and prefers >= 4 steps (2 per v7x TensorCore) when that does not drop the
    row slab below ~128 rows.
    """
    divisors = [d for d in range(1, B + 1) if B % d == 0]
    cands = [d for d in divisors if B // d >= 2] or [B]
    fit = [d for d in cands if d * T <= target_rows]
    tb = max(fit) if fit else min(cands)
    deeper = [d for d in cands if d <= tb and B // d >= 4 and d * T >= min_rows]
    if deeper:
        tb = max(deeper)
    return tb


def _vmem_limit_bytes(tb, T, D, hidden, weights, single_buffer_weights):
    """Footprint-based VMEM request with headroom (never the full 64 MiB)."""
    M = tb * T
    w_bytes = sum(int(w.size) * w.dtype.itemsize for w in weights)
    w_bytes *= 1 if single_buffer_weights else 2
    io_bytes = 2 * 2 * M * D * 4              # x + out blocks, double-buffered
    scratch_bytes = M * D * 2                 # bf16 ctx slab
    # generous estimate for in-kernel f32 temporaries (qkv, MLP hidden, LN/resid)
    tmp_bytes = 4 * M * (3 * D + hidden + 4 * D) + 4 * 2 * tb * T * T
    est = w_bytes + io_bytes + scratch_bytes + tmp_bytes + (4 << 20)
    return int(min(max(est, 8 << 20), 56 << 20))


def fold_attention_scale(params, num_heads):
    """One-time parameter prep: fold 1/sqrt(d_head) into the Q columns of the
    fused QKV weight/bias so the kernel skips the per-step (M, D) scale mul."""
    p = dict(params)
    D = p["wo"].shape[0]
    dh = D // num_heads
    scale = 1.0 / math.sqrt(dh)
    col_scale = jnp.concatenate([jnp.full((D,), scale, jnp.float32),
                                 jnp.ones((2 * D,), jnp.float32)])
    p["wqkv"] = (p["wqkv"].astype(jnp.float32)
                 * col_scale[None, :]).astype(p["wqkv"].dtype)
    p["bqkv"] = (p["bqkv"].astype(jnp.float32)
                 * col_scale[None, :]).astype(p["bqkv"].dtype)
    return p


def encoder_forward(x, params, num_heads, *, batch_block=None):
    """params must be pre-scaled via fold_attention_scale()."""
    B, T, D = x.shape
    hidden = params["w1"].shape[1]
    tb = _pick_batch_block(B, T) if batch_block is None else batch_block
    assert B % tb == 0

    weights = [params[name] for name in _PARAM_ORDER]

    def build(single_buffer_weights):
        def weight_spec(arr):
            idx = lambda i, _nd=arr.ndim: (0,) * _nd
            if single_buffer_weights:
                # Constant index_map => the block never changes; a second
                # pipeline buffer is pure VMEM waste (matters on v7x, 64 MiB).
                return pl.BlockSpec(arr.shape, idx, pipeline_mode=pl.Buffered(1))
            return pl.BlockSpec(arr.shape, idx)

        in_specs = ([pl.BlockSpec((tb, T, D), lambda i: (i, 0, 0))]
                    + [weight_spec(w) for w in weights])

        return pl.pallas_call(
            functools.partial(encoder_kernel, num_heads),
            out_shape=jax.ShapeDtypeStruct((B, T, D), x.dtype),
            grid_spec=pltpu.PrefetchScalarGridSpec(
                num_scalar_prefetch=0,
                grid=(B // tb,),
                in_specs=in_specs,
                out_specs=pl.BlockSpec((tb, T, D), lambda i: (i, 0, 0)),
                scratch_shapes=[pltpu.VMEM((tb * T, D), jnp.bfloat16)],
            ),
            compiler_params=pltpu.CompilerParams(
                dimension_semantics=("parallel",),
                vmem_limit_bytes=_vmem_limit_bytes(
                    tb, T, D, hidden, weights, single_buffer_weights),
            ),
        )

    args = (x, *weights)
    if hasattr(pl, "Buffered"):
        try:
            return build(True)(*args)
        except Exception:
            # Fallback: some JAX builds may reject pipeline_mode on inputs.
            pass
    return build(False)(*args)


def make_params(key, dim, hidden_dim, wdtype=jnp.bfloat16):
    ks = jax.random.split(key, 16)
    w = lambda k, shp: jax.random.normal(k, shp, jnp.float32) * 0.02
    wq, wk, wv = w(ks[0], (dim, dim)), w(ks[1], (dim, dim)), w(ks[2], (dim, dim))
    return {
        # weights stored bf16 (halves DMA / VMEM); biases & LN params f32
        "wqkv": jnp.concatenate([wq, wk, wv], axis=1).astype(wdtype),
        "bqkv": jax.random.normal(ks[3], (1, 3 * dim), jnp.float32) * 0.02,
        "wo": w(ks[4], (dim, dim)).astype(wdtype),
        "bo": jax.random.normal(ks[5], (1, dim), jnp.float32) * 0.02,
        "ln1_g": 1.0 + jax.random.normal(ks[6], (1, dim), jnp.float32) * 0.1,
        "ln1_b": jax.random.normal(ks[7], (1, dim), jnp.float32) * 0.05,
        "w1": w(ks[8], (dim, hidden_dim)).astype(wdtype),
        "b1": jax.random.normal(ks[9], (1, hidden_dim), jnp.float32) * 0.02,
        "w2": w(ks[10], (hidden_dim, dim)).astype(wdtype),
        "b2": jax.random.normal(ks[11], (1, dim), jnp.float32) * 0.02,
        "ln2_g": 1.0 + jax.random.normal(ks[12], (1, dim), jnp.float32) * 0.1,
        "ln2_b": jax.random.normal(ks[13], (1, dim), jnp.float32) * 0.05,
    }


def encoder_ref(x, p, num_heads):
    """Pure-JAX f32 reference mirroring the PyTorch forward (eval mode).
    Uses the UN-folded params (applies 1/sqrt(d_head) explicitly)."""
    B, T, D = x.shape
    dh = D // num_heads
    f32 = lambda a: a.astype(jnp.float32)

    qkv = x @ f32(p["wqkv"]) + p["bqkv"][0]
    q, k, v = qkv[..., :D], qkv[..., D:2 * D], qkv[..., 2 * D:]

    def split(a):
        return a.reshape(B, T, num_heads, dh).transpose(0, 2, 1, 3)

    q, k, v = split(q), split(k), split(v)
    s = jnp.einsum("bhqd,bhkd->bhqk", q, k) / math.sqrt(dh)
    s = jax.nn.softmax(s, axis=-1)
    o = jnp.einsum("bhqk,bhkd->bhqd", s, v).transpose(0, 2, 1, 3).reshape(B, T, D)
    o = o @ f32(p["wo"]) + p["bo"][0]

    def ln(a, g, b, eps=1e-12):
        mu = a.mean(-1, keepdims=True)
        var = ((a - mu) ** 2).mean(-1, keepdims=True)
        return (a - mu) / jnp.sqrt(var + eps) * g[0] + b[0]

    x1 = ln(x + o, p["ln1_g"], p["ln1_b"])
    h = jax.nn.gelu(x1 @ f32(p["w1"]) + p["b1"][0], approximate=False)
    h = h @ f32(p["w2"]) + p["b2"][0]
    return ln(x1 + h, p["ln2_g"], p["ln2_b"])


if __name__ == "__main__":
    # Small but TPU-friendly shapes (dim divisible by heads, hidden = 2*dim as
    # in Encoder(dim=768, hidden_dim=1536); D=128 keeps outputs lane-dense).
    B, T, DIM, HIDDEN, HEADS = 4, 64, 128, 256, 4

    key = jax.random.PRNGKey(0)
    kx, kp = jax.random.split(key)
    x = jax.random.normal(kx, (B, T, DIM), jnp.float32)
    params = make_params(kp, DIM, HIDDEN)
    kernel_params = fold_attention_scale(params, HEADS)   # one-time prep

    out = jax.block_until_ready(encoder_forward(x, kernel_params, HEADS))
    ref = encoder_ref(x, params, HEADS)

    assert out.shape == (B, T, DIM)
    err = float(jnp.max(jnp.abs(out - ref)))
    # bf16 MXU operands vs f32 reference -> tolerance ~1e-2
    assert err < 2e-2, f"max abs err {err}"
    print("KERNEL_OK")
</pallas_src>

<mosaic_0001>
module attributes {stable_mosaic.version = 11 : i64} {
  func.func @encoder_kernel(%arg0: i32, %arg1: memref<2x64x128xf32, #tpu.memory_space<vmem>>, %arg2: memref<128x384xbf16, #tpu.memory_space<vmem>>, %arg3: memref<1x384xf32, #tpu.memory_space<vmem>>, %arg4: memref<128x128xbf16, #tpu.memory_space<vmem>>, %arg5: memref<1x128xf32, #tpu.memory_space<vmem>>, %arg6: memref<1x128xf32, #tpu.memory_space<vmem>>, %arg7: memref<1x128xf32, #tpu.memory_space<vmem>>, %arg8: memref<128x256xbf16, #tpu.memory_space<vmem>>, %arg9: memref<1x256xf32, #tpu.memory_space<vmem>>, %arg10: memref<256x128xbf16, #tpu.memory_space<vmem>>, %arg11: memref<1x128xf32, #tpu.memory_space<vmem>>, %arg12: memref<1x128xf32, #tpu.memory_space<vmem>>, %arg13: memref<1x128xf32, #tpu.memory_space<vmem>>, %arg14: memref<2x64x128xf32, #tpu.memory_space<vmem>>, %arg15: memref<128x128xbf16, #tpu.memory_space<vmem>>) attributes {dimension_semantics = [#tpu.dimension_semantics<parallel>], iteration_bounds = array<i64: 2>, scalar_prefetch = 0 : i64, scratch_operands = 1 : i64, tpu.core_type = #tpu.core_type<tc>, window_params = [{transform_indices = @transform_0, window_bounds = array<i64: 2, 64, 128>}, {pipeline_mode = #tpu.pipeline_mode<synchronous>, transform_indices = @transform_1, window_bounds = array<i64: 128, 384>}, {pipeline_mode = #tpu.pipeline_mode<synchronous>, transform_indices = @transform_2, window_bounds = array<i64: 1, 384>}, {pipeline_mode = #tpu.pipeline_mode<synchronous>, transform_indices = @transform_3, window_bounds = array<i64: 128, 128>}, {pipeline_mode = #tpu.pipeline_mode<synchronous>, transform_indices = @transform_4, window_bounds = array<i64: 1, 128>}, {pipeline_mode = #tpu.pipeline_mode<synchronous>, transform_indices = @transform_5, window_bounds = array<i64: 1, 128>}, {pipeline_mode = #tpu.pipeline_mode<synchronous>, transform_indices = @transform_6, window_bounds = array<i64: 1, 128>}, {pipeline_mode = #tpu.pipeline_mode<synchronous>, transform_indices = @transform_7, window_bounds = array<i64: 128, 256>}, {pipeline_mode = #tpu.pipeline_mode<synchronous>, transform_indices = @transform_8, window_bounds = array<i64: 1, 256>}, {pipeline_mode = #tpu.pipeline_mode<synchronous>, transform_indices = @transform_9, window_bounds = array<i64: 256, 128>}, {pipeline_mode = #tpu.pipeline_mode<synchronous>, transform_indices = @transform_10, window_bounds = array<i64: 1, 128>}, {pipeline_mode = #tpu.pipeline_mode<synchronous>, transform_indices = @transform_11, window_bounds = array<i64: 1, 128>}, {pipeline_mode = #tpu.pipeline_mode<synchronous>, transform_indices = @transform_12, window_bounds = array<i64: 1, 128>}, {transform_indices = @transform_13, window_bounds = array<i64: 2, 64, 128>}]} {
    %c0 = arith.constant 0 : index
    %c0_0 = arith.constant 0 : index
    %c0_1 = arith.constant 0 : index
    %0 = vector.load %arg1[%c0, %c0_0, %c0_1] : memref<2x64x128xf32, #tpu.memory_space<vmem>>, vector<2x64x128xf32>
    %1 = vector.shape_cast %0 : vector<2x64x128xf32> to vector<128x128xf32>
    %2 = arith.truncf %1 : vector<128x128xf32> to vector<128x128xbf16>
    %c0_2 = arith.constant 0 : index
    %c0_3 = arith.constant 0 : index
    %3 = vector.load %arg2[%c0_2, %c0_3] : memref<128x384xbf16, #tpu.memory_space<vmem>>, vector<128x384xbf16>
    %cst = arith.constant dense<0.000000e+00> : vector<128x384xf32>
    %4 = tpu.matmul %2, %3, %cst {dimension_numbers = #tpu.dot_dimension_numbers<[1], [0], [0], [1], [0, 0, 1, 1], [], []>} : vector<128x128xbf16>, vector<128x384xbf16>, vector<128x384xf32> -> vector<128x384xf32>
    %c0_4 = arith.constant 0 : index
    %c0_5 = arith.constant 0 : index
    %5 = vector.load %arg3[%c0_4, %c0_5] : memref<1x384xf32, #tpu.memory_space<vmem>>, vector<1x384xf32>
    %6 = vector.broadcast %5 : vector<1x384xf32> to vector<128x384xf32>
    %7 = arith.addf %4, %6 : vector<128x384xf32>
    %8 = arith.truncf %7 : vector<128x384xf32> to vector<128x384xbf16>
    %9 = vector.extract_strided_slice %8 {offsets = [0, 0], sizes = [128, 128], strides = [1, 1]} : vector<128x384xbf16> to vector<128x128xbf16>
    %10 = vector.shape_cast %9 : vector<128x128xbf16> to vector<2x64x128xbf16>
    %11 = vector.extract_strided_slice %8 {offsets = [0, 128], sizes = [128, 128], strides = [1, 1]} : vector<128x384xbf16> to vector<128x128xbf16>
    %12 = vector.shape_cast %11 : vector<128x128xbf16> to vector<2x64x128xbf16>
    %13 = vector.extract_strided_slice %8 {offsets = [0, 256], sizes = [128, 128], strides = [1, 1]} : vector<128x384xbf16> to vector<128x128xbf16>
    %14 = vector.shape_cast %13 : vector<128x128xbf16> to vector<2x64x128xbf16>
    %15 = vector.extract_strided_slice %10 {offsets = [0, 0, 0], sizes = [2, 64, 32], strides = [1, 1, 1]} : vector<2x64x128xbf16> to vector<2x64x32xbf16>
    %16 = vector.extract_strided_slice %12 {offsets = [0, 0, 0], sizes = [2, 64, 32], strides = [1, 1, 1]} : vector<2x64x128xbf16> to vector<2x64x32xbf16>
    %17 = vector.extract_strided_slice %14 {offsets = [0, 0, 0], sizes = [2, 64, 32], strides = [1, 1, 1]} : vector<2x64x128xbf16> to vector<2x64x32xbf16>
    "tpu.trace_start"() <{level = 10 : i32, message = "bqd,bkd->bqk"}> : () -> ()
    %cst_6 = arith.constant dense<0.000000e+00> : vector<2x64x64xf32>
    %18 = tpu.matmul %15, %16, %cst_6 {dimension_numbers = #tpu.dot_dimension_numbers<[2], [2], [1], [1], [0, 0, 0, 1, 1, 1], [0], [0]>} : vector<2x64x32xbf16>, vector<2x64x32xbf16>, vector<2x64x64xf32> -> vector<2x64x64xf32>
    "tpu.trace_stop"() : () -> ()
    %cst_7 = arith.constant dense<0xFF800000> : vector<2x64xf32>
    %19 = vector.multi_reduction <maximumf>, %18, %cst_7 [2] : vector<2x64x64xf32> to vector<2x64xf32>
    %20 = vector.shape_cast %19 : vector<2x64xf32> to vector<2x64x1xf32>
    %21 = vector.broadcast %20 : vector<2x64x1xf32> to vector<2x64x64xf32>
    %22 = arith.subf %18, %21 : vector<2x64x64xf32>
    %23 = math.exp %22 : vector<2x64x64xf32>
    %cst_8 = arith.constant dense<0.000000e+00> : vector<2x64xf32>
    %24 = vector.multi_reduction <add>, %23, %cst_8 [2] : vector<2x64x64xf32> to vector<2x64xf32>
    %25 = vector.shape_cast %24 : vector<2x64xf32> to vector<2x64x1xf32>
    %26 = tpu.reciprocal %25 {approx = true} : vector<2x64x1xf32> -> vector<2x64x1xf32>
    %27 = vector.broadcast %26 : vector<2x64x1xf32> to vector<2x64x64xf32>
    %28 = arith.mulf %23, %27 : vector<2x64x64xf32>
    %29 = arith.truncf %28 : vector<2x64x64xf32> to vector<2x64x64xbf16>
    "tpu.trace_start"() <{level = 10 : i32, message = "bqk,bkd->bqd"}> : () -> ()
    %cst_9 = arith.constant dense<0.000000e+00> : vector<2x64x32xf32>
    %30 = tpu.matmul %29, %17, %cst_9 {dimension_numbers = #tpu.dot_dimension_numbers<[2], [1], [1], [2], [0, 0, 0, 1, 1, 2], [0], [0]>} : vector<2x64x64xbf16>, vector<2x64x32xbf16>, vector<2x64x32xf32> -> vector<2x64x32xf32>
    "tpu.trace_stop"() : () -> ()
    %31 = vector.shape_cast %30 : vector<2x64x32xf32> to vector<128x32xf32>
    %32 = arith.truncf %31 : vector<128x32xf32> to vector<128x32xbf16>
    %c0_10 = arith.constant 0 : index
    %c0_11 = arith.constant 0 : index
    %33 = vector.load %arg15[%c0_10, %c0_11] : memref<128x128xbf16, #tpu.memory_space<vmem>>, vector<128x32xbf16>
    tpu.vector_store %arg15[%c0_10, %c0_11], %32 {strides = array<i32>} : memref<128x128xbf16, #tpu.memory_space<vmem>>, vector<128x32xbf16>,
    %34 = vector.extract_strided_slice %10 {offsets = [0, 0, 32], sizes = [2, 64, 32], strides = [1, 1, 1]} : vector<2x64x128xbf16> to vector<2x64x32xbf16>
    %35 = vector.extract_strided_slice %12 {offsets = [0, 0, 32], sizes = [2, 64, 32], strides = [1, 1, 1]} : vector<2x64x128xbf16> to vector<2x64x32xbf16>
    %36 = vector.extract_strided_slice %14 {offsets = [0, 0, 32], sizes = [2, 64, 32], strides = [1, 1, 1]} : vector<2x64x128xbf16> to vector<2x64x32xbf16>
    "tpu.trace_start"() <{level = 10 : i32, message = "bqd,bkd->bqk"}> : () -> ()
    %cst_12 = arith.constant dense<0.000000e+00> : vector<2x64x64xf32>
    %37 = tpu.matmul %34, %35, %cst_12 {dimension_numbers = #tpu.dot_dimension_numbers<[2], [2], [1], [1], [0, 0, 0, 1, 1, 1], [0], [0]>} : vector<2x64x32xbf16>, vector<2x64x32xbf16>, vector<2x64x64xf32> -> vector<2x64x64xf32>
    "tpu.trace_stop"() : () -> ()
    %cst_13 = arith.constant dense<0xFF800000> : vector<2x64xf32>
    %38 = vector.multi_reduction <maximumf>, %37, %cst_13 [2] : vector<2x64x64xf32> to vector<2x64xf32>
    %39 = vector.shape_cast %38 : vector<2x64xf32> to vector<2x64x1xf32>
    %40 = vector.broadcast %39 : vector<2x64x1xf32> to vector<2x64x64xf32>
    %41 = arith.subf %37, %40 : vector<2x64x64xf32>
    %42 = math.exp %41 : vector<2x64x64xf32>
    %cst_14 = arith.constant dense<0.000000e+00> : vector<2x64xf32>
    %43 = vector.multi_reduction <add>, %42, %cst_14 [2] : vector<2x64x64xf32> to vector<2x64xf32>
    %44 = vector.shape_cast %43 : vector<2x64xf32> to vector<2x64x1xf32>
    %45 = tpu.reciprocal %44 {approx = true} : vector<2x64x1xf32> -> vector<2x64x1xf32>
    %46 = vector.broadcast %45 : vector<2x64x1xf32> to vector<2x64x64xf32>
    %47 = arith.mulf %42, %46 : vector<2x64x64xf32>
    %48 = arith.truncf %47 : vector<2x64x64xf32> to vector<2x64x64xbf16>
    "tpu.trace_start"() <{level = 10 : i32, message = "bqk,bkd->bqd"}> : () -> ()
    %cst_15 = arith.constant dense<0.000000e+00> : vector<2x64x32xf32>
    %49 = tpu.matmul %48, %36, %cst_15 {dimension_numbers = #tpu.dot_dimension_numbers<[2], [1], [1], [2], [0, 0, 0, 1, 1, 2], [0], [0]>} : vector<2x64x64xbf16>, vector<2x64x32xbf16>, vector<2x64x32xf32> -> vector<2x64x32xf32>
    "tpu.trace_stop"() : () -> ()
    %50 = vector.shape_cast %49 : vector<2x64x32xf32> to vector<128x32xf32>
    %51 = arith.truncf %50 : vector<128x32xf32> to vector<128x32xbf16>
    %c0_16 = arith.constant 0 : index
    %c32 = arith.constant 32 : index
    %52 = vector.load %arg15[%c0_16, %c32] : memref<128x128xbf16, #tpu.memory_space<vmem>>, vector<128x32xbf16>
    tpu.vector_store %arg15[%c0_16, %c32], %51 {strides = array<i32>} : memref<128x128xbf16, #tpu.memory_space<vmem>>, vector<128x32xbf16>,
    %53 = vector.extract_strided_slice %10 {offsets = [0, 0, 64], sizes = [2, 64, 32], strides = [1, 1, 1]} : vector<2x64x128xbf16> to vector<2x64x32xbf16>
    %54 = vector.extract_strided_slice %12 {offsets = [0, 0, 64], sizes = [2, 64, 32], strides = [1, 1, 1]} : vector<2x64x128xbf16> to vector<2x64x32xbf16>
    %55 = vector.extract_strided_slice %14 {offsets = [0, 0, 64], sizes = [2, 64, 32], strides = [1, 1, 1]} : vector<2x64x128xbf16> to vector<2x64x32xbf16>
    "tpu.trace_start"() <{level = 10 : i32, message = "bqd,bkd->bqk"}> : () -> ()
    %cst_17 = arith.constant dense<0.000000e+00> : vector<2x64x64xf32>
    %56 = tpu.matmul %53, %54, %cst_17 {dimension_numbers = #tpu.dot_dimension_numbers<[2], [2], [1], [1], [0, 0, 0, 1, 1, 1], [0], [0]>} : vector<2x64x32xbf16>, vector<2x64x32xbf16>, vector<2x64x64xf32> -> vector<2x64x64xf32>
    "tpu.trace_stop"() : () -> ()
    %cst_18 = arith.constant dense<0xFF800000> : vector<2x64xf32>
    %57 = vector.multi_reduction <maximumf>, %56, %cst_18 [2] : vector<2x64x64xf32> to vector<2x64xf32>
    %58 = vector.shape_cast %57 : vector<2x64xf32> to vector<2x64x1xf32>
    %59 = vector.broadcast %58 : vector<2x64x1xf32> to vector<2x64x64xf32>
    %60 = arith.subf %56, %59 : vector<2x64x64xf32>
    %61 = math.exp %60 : vector<2x64x64xf32>
    %cst_19 = arith.constant dense<0.000000e+00> : vector<2x64xf32>
    %62 = vector.multi_reduction <add>, %61, %cst_19 [2] : vector<2x64x64xf32> to vector<2x64xf32>
    %63 = vector.shape_cast %62 : vector<2x64xf32> to vector<2x64x1xf32>
    %64 = tpu.reciprocal %63 {approx = true} : vector<2x64x1xf32> -> vector<2x64x1xf32>
    %65 = vector.broadcast %64 : vector<2x64x1xf32> to vector<2x64x64xf32>
    %66 = arith.mulf %61, %65 : vector<2x64x64xf32>
    %67 = arith.truncf %66 : vector<2x64x64xf32> to vector<2x64x64xbf16>
    "tpu.trace_start"() <{level = 10 : i32, message = "bqk,bkd->bqd"}> : () -> ()
    %cst_20 = arith.constant dense<0.000000e+00> : vector<2x64x32xf32>
    %68 = tpu.matmul %67, %55, %cst_20 {dimension_numbers = #tpu.dot_dimension_numbers<[2], [1], [1], [2], [0, 0, 0, 1, 1, 2], [0], [0]>} : vector<2x64x64xbf16>, vector<2x64x32xbf16>, vector<2x64x32xf32> -> vector<2x64x32xf32>
    "tpu.trace_stop"() : () -> ()
    %69 = vector.shape_cast %68 : vector<2x64x32xf32> to vector<128x32xf32>
    %70 = arith.truncf %69 : vector<128x32xf32> to vector<128x32xbf16>
    %c0_21 = arith.constant 0 : index
    %c64 = arith.constant 64 : index
    %71 = vector.load %arg15[%c0_21, %c64] : memref<128x128xbf16, #tpu.memory_space<vmem>>, vector<128x32xbf16>
    tpu.vector_store %arg15[%c0_21, %c64], %70 {strides = array<i32>} : memref<128x128xbf16, #tpu.memory_space<vmem>>, vector<128x32xbf16>,
    %72 = vector.extract_strided_slice %10 {offsets = [0, 0, 96], sizes = [2, 64, 32], strides = [1, 1, 1]} : vector<2x64x128xbf16> to vector<2x64x32xbf16>
    %73 = vector.extract_strided_slice %12 {offsets = [0, 0, 96], sizes = [2, 64, 32], strides = [1, 1, 1]} : vector<2x64x128xbf16> to vector<2x64x32xbf16>
    %74 = vector.extract_strided_slice %14 {offsets = [0, 0, 96], sizes = [2, 64, 32], strides = [1, 1, 1]} : vector<2x64x128xbf16> to vector<2x64x32xbf16>
    "tpu.trace_start"() <{level = 10 : i32, message = "bqd,bkd->bqk"}> : () -> ()
    %cst_22 = arith.constant dense<0.000000e+00> : vector<2x64x64xf32>
    %75 = tpu.matmul %72, %73, %cst_22 {dimension_numbers = #tpu.dot_dimension_numbers<[2], [2], [1], [1], [0, 0, 0, 1, 1, 1], [0], [0]>} : vector<2x64x32xbf16>, vector<2x64x32xbf16>, vector<2x64x64xf32> -> vector<2x64x64xf32>
    "tpu.trace_stop"() : () -> ()
    %cst_23 = arith.constant dense<0xFF800000> : vector<2x64xf32>
    %76 = vector.multi_reduction <maximumf>, %75, %cst_23 [2] : vector<2x64x64xf32> to vector<2x64xf32>
    %77 = vector.shape_cast %76 : vector<2x64xf32> to vector<2x64x1xf32>
    %78 = vector.broadcast %77 : vector<2x64x1xf32> to vector<2x64x64xf32>
    %79 = arith.subf %75, %78 : vector<2x64x64xf32>
    %80 = math.exp %79 : vector<2x64x64xf32>
    %cst_24 = arith.constant dense<0.000000e+00> : vector<2x64xf32>
    %81 = vector.multi_reduction <add>, %80, %cst_24 [2] : vector<2x64x64xf32> to vector<2x64xf32>
    %82 = vector.shape_cast %81 : vector<2x64xf32> to vector<2x64x1xf32>
    %83 = tpu.reciprocal %82 {approx = true} : vector<2x64x1xf32> -> vector<2x64x1xf32>
    %84 = vector.broadcast %83 : vector<2x64x1xf32> to vector<2x64x64xf32>
    %85 = arith.mulf %80, %84 : vector<2x64x64xf32>
    %86 = arith.truncf %85 : vector<2x64x64xf32> to vector<2x64x64xbf16>
    "tpu.trace_start"() <{level = 10 : i32, message = "bqk,bkd->bqd"}> : () -> ()
    %cst_25 = arith.constant dense<0.000000e+00> : vector<2x64x32xf32>
    %87 = tpu.matmul %86, %74, %cst_25 {dimension_numbers = #tpu.dot_dimension_numbers<[2], [1], [1], [2], [0, 0, 0, 1, 1, 2], [0], [0]>} : vector<2x64x64xbf16>, vector<2x64x32xbf16>, vector<2x64x32xf32> -> vector<2x64x32xf32>
    "tpu.trace_stop"() : () -> ()
    %88 = vector.shape_cast %87 : vector<2x64x32xf32> to vector<128x32xf32>
    %89 = arith.truncf %88 : vector<128x32xf32> to vector<128x32xbf16>
    %c0_26 = arith.constant 0 : index
    %c96 = arith.constant 96 : index
    %90 = vector.load %arg15[%c0_26, %c96] : memref<128x128xbf16, #tpu.memory_space<vmem>>, vector<128x32xbf16>
    tpu.vector_store %arg15[%c0_26, %c96], %89 {strides = array<i32>} : memref<128x128xbf16, #tpu.memory_space<vmem>>, vector<128x32xbf16>,
    %c0_27 = arith.constant 0 : index
    %c0_28 = arith.constant 0 : index
    %91 = vector.load %arg15[%c0_27, %c0_28] : memref<128x128xbf16, #tpu.memory_space<vmem>>, vector<128x128xbf16>
    %c0_29 = arith.constant 0 : index
    %c0_30 = arith.constant 0 : index
    %92 = vector.load %arg4[%c0_29, %c0_30] : memref<128x128xbf16, #tpu.memory_space<vmem>>, vector<128x128xbf16>
    %cst_31 = arith.constant dense<0.000000e+00> : vector<128x128xf32>
    %93 = tpu.matmul %91, %92, %cst_31 {dimension_numbers = #tpu.dot_dimension_numbers<[1], [0], [0], [1], [0, 0, 1, 1], [], []>} : vector<128x128xbf16>, vector<128x128xbf16>, vector<128x128xf32> -> vector<128x128xf32>
    %c0_32 = arith.constant 0 : index
    %c0_33 = arith.constant 0 : index
    %94 = vector.load %arg5[%c0_32, %c0_33] : memref<1x128xf32, #tpu.memory_space<vmem>>, vector<1x128xf32>
    %95 = vector.broadcast %94 : vector<1x128xf32> to vector<128x128xf32>
    %96 = arith.addf %93, %95 : vector<128x128xf32>
    %97 = arith.addf %1, %96 : vector<128x128xf32>
    %c0_34 = arith.constant 0 : index
    %c0_35 = arith.constant 0 : index
    %98 = vector.load %arg6[%c0_34, %c0_35] : memref<1x128xf32, #tpu.memory_space<vmem>>, vector<1x128xf32>
    %c0_36 = arith.constant 0 : index
    %c0_37 = arith.constant 0 : index
    %99 = vector.load %arg7[%c0_36, %c0_37] : memref<1x128xf32, #tpu.memory_space<vmem>>, vector<1x128xf32>
    %cst_38 = arith.constant dense<0.000000e+00> : vector<128xf32>
    %100 = vector.multi_reduction <add>, %97, %cst_38 [1] : vector<128x128xf32> to vector<128xf32>
    %101 = vector.shape_cast %100 : vector<128xf32> to vector<128x1xf32>
    %cst_39 = arith.constant 1.280000e+02 : f32
    %102 = vector.broadcast %cst_39 : f32 to vector<128x1xf32>
    %103 = arith.divf %101, %102 : vector<128x1xf32>
    %104 = vector.broadcast %103 : vector<128x1xf32> to vector<128x128xf32>
    %105 = arith.subf %97, %104 : vector<128x128xf32>
    %106 = arith.mulf %105, %105 : vector<128x128xf32>
    %cst_40 = arith.constant dense<0.000000e+00> : vector<128xf32>
    %107 = vector.multi_reduction <add>, %106, %cst_40 [1] : vector<128x128xf32> to vector<128xf32>
    %108 = vector.shape_cast %107 : vector<128xf32> to vector<128x1xf32>
    %cst_41 = arith.constant 1.280000e+02 : f32
    %109 = vector.broadcast %cst_41 : f32 to vector<128x1xf32>
    %110 = arith.divf %108, %109 : vector<128x1xf32>
    %111 = vector.broadcast %103 : vector<128x1xf32> to vector<128x128xf32>
    %112 = arith.subf %97, %111 : vector<128x128xf32>
    %cst_42 = arith.constant 9.99999996E-13 : f32
    %113 = vector.broadcast %cst_42 : f32 to vector<128x1xf32>
    %114 = arith.addf %110, %113 : vector<128x1xf32>
    %115 = math.rsqrt %114 : vector<128x1xf32>
    %116 = vector.broadcast %115 : vector<128x1xf32> to vector<128x128xf32>
    %117 = arith.mulf %112, %116 : vector<128x128xf32>
    %118 = vector.broadcast %98 : vector<1x128xf32> to vector<128x128xf32>
    %119 = arith.mulf %117, %118 : vector<128x128xf32>
    %120 = vector.broadcast %99 : vector<1x128xf32> to vector<128x128xf32>
    %121 = arith.addf %119, %120 : vector<128x128xf32>
    %122 = arith.truncf %121 : vector<128x128xf32> to vector<128x128xbf16>
    %c0_43 = arith.constant 0 : index
    %c0_44 = arith.constant 0 : index
    %123 = vector.load %arg8[%c0_43, %c0_44] : memref<128x256xbf16, #tpu.memory_space<vmem>>, vector<128x256xbf16>
    %cst_45 = arith.constant dense<0.000000e+00> : vector<128x256xf32>
    %124 = tpu.matmul %122, %123, %cst_45 {dimension_numbers = #tpu.dot_dimension_numbers<[1], [0], [0], [1], [0, 0, 1, 1], [], []>} : vector<128x128xbf16>, vector<128x256xbf16>, vector<128x256xf32> -> vector<128x256xf32>
    %c0_46 = arith.constant 0 : index
    %c0_47 = arith.constant 0 : index
    %125 = vector.load %arg9[%c0_46, %c0_47] : memref<1x256xf32, #tpu.memory_space<vmem>>, vector<1x256xf32>
    %126 = vector.broadcast %125 : vector<1x256xf32> to vector<128x256xf32>
    %127 = arith.addf %124, %126 : vector<128x256xf32>
    %cst_48 = arith.constant 5.000000e-01 : f32
    %128 = vector.broadcast %cst_48 : f32 to vector<128x256xf32>
    %129 = arith.mulf %128, %127 : vector<128x256xf32>
    %cst_49 = arith.constant 0.707106769 : f32
    %130 = vector.broadcast %cst_49 : f32 to vector<128x256xf32>
    %131 = arith.mulf %127, %130 : vector<128x256xf32>
    %132 = math.erf %131 : vector<128x256xf32>
    %cst_50 = arith.constant 1.000000e+00 : f32
    %133 = vector.broadcast %cst_50 : f32 to vector<128x256xf32>
    %134 = arith.addf %133, %132 : vector<128x256xf32>
    %135 = arith.mulf %129, %134 : vector<128x256xf32>
    %136 = arith.truncf %135 : vector<128x256xf32> to vector<128x256xbf16>
    %c0_51 = arith.constant 0 : index
    %c0_52 = arith.constant 0 : index
    %137 = vector.load %arg10[%c0_51, %c0_52] : memref<256x128xbf16, #tpu.memory_space<vmem>>, vector<256x128xbf16>
    %cst_53 = arith.constant dense<0.000000e+00> : vector<128x128xf32>
    %138 = tpu.matmul %136, %137, %cst_53 {dimension_numbers = #tpu.dot_dimension_numbers<[1], [0], [0], [1], [0, 0, 1, 1], [], []>} : vector<128x256xbf16>, vector<256x128xbf16>, vector<128x128xf32> -> vector<128x128xf32>
    %c0_54 = arith.constant 0 : index
    %c0_55 = arith.constant 0 : index
    %139 = vector.load %arg11[%c0_54, %c0_55] : memref<1x128xf32, #tpu.memory_space<vmem>>, vector<1x128xf32>
    %140 = vector.broadcast %139 : vector<1x128xf32> to vector<128x128xf32>
    %141 = arith.addf %138, %140 : vector<128x128xf32>
    %142 = arith.addf %121, %141 : vector<128x128xf32>
    %c0_56 = arith.constant 0 : index
    %c0_57 = arith.constant 0 : index
    %143 = vector.load %arg12[%c0_56, %c0_57] : memref<1x128xf32, #tpu.memory_space<vmem>>, vector<1x128xf32>
    %c0_58 = arith.constant 0 : index
    %c0_59 = arith.constant 0 : index
    %144 = vector.load %arg13[%c0_58, %c0_59] : memref<1x128xf32, #tpu.memory_space<vmem>>, vector<1x128xf32>
    %cst_60 = arith.constant dense<0.000000e+00> : vector<128xf32>
    %145 = vector.multi_reduction <add>, %142, %cst_60 [1] : vector<128x128xf32> to vector<128xf32>
    %146 = vector.shape_cast %145 : vector<128xf32> to vector<128x1xf32>
    %cst_61 = arith.constant 1.280000e+02 : f32
    %147 = vector.broadcast %cst_61 : f32 to vector<128x1xf32>
    %148 = arith.divf %146, %147 : vector<128x1xf32>
    %149 = vector.broadcast %148 : vector<128x1xf32> to vector<128x128xf32>
    %150 = arith.subf %142, %149 : vector<128x128xf32>
    %151 = arith.mulf %150, %150 : vector<128x128xf32>
    %cst_62 = arith.constant dense<0.000000e+00> : vector<128xf32>
    %152 = vector.multi_reduction <add>, %151, %cst_62 [1] : vector<128x128xf32> to vector<128xf32>
    %153 = vector.shape_cast %152 : vector<128xf32> to vector<128x1xf32>
    %cst_63 = arith.constant 1.280000e+02 : f32
    %154 = vector.broadcast %cst_63 : f32 to vector<128x1xf32>
    %155 = arith.divf %153, %154 : vector<128x1xf32>
    %156 = vector.broadcast %148 : vector<128x1xf32> to vector<128x128xf32>
    %157 = arith.subf %142, %156 : vector<128x128xf32>
    %cst_64 = arith.constant 9.99999996E-13 : f32
    %158 = vector.broadcast %cst_64 : f32 to vector<128x1xf32>
    %159 = arith.addf %155, %158 : vector<128x1xf32>
    %160 = math.rsqrt %159 : vector<128x1xf32>
    %161 = vector.broadcast %160 : vector<128x1xf32> to vector<128x128xf32>
    %162 = arith.mulf %157, %161 : vector<128x128xf32>
    %163 = vector.broadcast %143 : vector<1x128xf32> to vector<128x128xf32>
    %164 = arith.mulf %162, %163 : vector<128x128xf32>
    %165 = vector.broadcast %144 : vector<1x128xf32> to vector<128x128xf32>
    %166 = arith.addf %164, %165 : vector<128x128xf32>
    %167 = vector.shape_cast %166 : vector<128x128xf32> to vector<2x64x128xf32>
    %c0_65 = arith.constant 0 : index
    %c0_66 = arith.constant 0 : index
    %c0_67 = arith.constant 0 : index
    %168 = vector.load %arg14[%c0_65, %c0_66, %c0_67] : memref<2x64x128xf32, #tpu.memory_space<vmem>>, vector<2x64x128xf32>
    tpu.vector_store %arg14[%c0_65, %c0_66, %c0_67], %167 {strides = array<i32>} : memref<2x64x128xf32, #tpu.memory_space<vmem>>, vector<2x64x128xf32>,
    return
  }
  func.func @transform_0(%arg0: i32) -> (i32, i32, i32) {
    %c0_i32 = arith.constant 0 : i32
    %c0_i32_0 = arith.constant 0 : i32
    %c0_i32_1 = arith.constant 0 : i32
    return %arg0, %c0_i32, %c0_i32_0 : i32, i32, i32
  }
  func.func @transform_1(%arg0: i32) -> (i32, i32) {
    %c0_i32 = arith.constant 0 : i32
    %c0_i32_0 = arith.constant 0 : i32
    %c0_i32_1 = arith.constant 0 : i32
    return %c0_i32, %c0_i32_0 : i32, i32
  }
  func.func @transform_2(%arg0: i32) -> (i32, i32) {
    %c0_i32 = arith.constant 0 : i32
    %c0_i32_0 = arith.constant 0 : i32
    %c0_i32_1 = arith.constant 0 : i32
    return %c0_i32, %c0_i32_0 : i32, i32
  }
  func.func @transform_3(%arg0: i32) -> (i32, i32) {
    %c0_i32 = arith.constant 0 : i32
    %c0_i32_0 = arith.constant 0 : i32
    %c0_i32_1 = arith.constant 0 : i32
    return %c0_i32, %c0_i32_0 : i32, i32
  }
  func.func @transform_4(%arg0: i32) -> (i32, i32) {
    %c0_i32 = arith.constant 0 : i32
    %c0_i32_0 = arith.constant 0 : i32
    %c0_i32_1 = arith.constant 0 : i32
    return %c0_i32, %c0_i32_0 : i32, i32
  }
  func.func @transform_5(%arg0: i32) -> (i32, i32) {
    %c0_i32 = arith.constant 0 : i32
    %c0_i32_0 = arith.constant 0 : i32
    %c0_i32_1 = arith.constant 0 : i32
    return %c0_i32, %c0_i32_0 : i32, i32
  }
  func.func @transform_6(%arg0: i32) -> (i32, i32) {
    %c0_i32 = arith.constant 0 : i32
    %c0_i32_0 = arith.constant 0 : i32
    %c0_i32_1 = arith.constant 0 : i32
    return %c0_i32, %c0_i32_0 : i32, i32
  }
  func.func @transform_7(%arg0: i32) -> (i32, i32) {
    %c0_i32 = arith.constant 0 : i32
    %c0_i32_0 = arith.constant 0 : i32
    %c0_i32_1 = arith.constant 0 : i32
    return %c0_i32, %c0_i32_0 : i32, i32
  }
  func.func @transform_8(%arg0: i32) -> (i32, i32) {
    %c0_i32 = arith.constant 0 : i32
    %c0_i32_0 = arith.constant 0 : i32
    %c0_i32_1 = arith.constant 0 : i32
    return %c0_i32, %c0_i32_0 : i32, i32
  }
  func.func @transform_9(%arg0: i32) -> (i32, i32) {
    %c0_i32 = arith.constant 0 : i32
    %c0_i32_0 = arith.constant 0 : i32
    %c0_i32_1 = arith.constant 0 : i32
    return %c0_i32, %c0_i32_0 : i32, i32
  }
  func.func @transform_10(%arg0: i32) -> (i32, i32) {
    %c0_i32 = arith.constant 0 : i32
    %c0_i32_0 = arith.constant 0 : i32
    %c0_i32_1 = arith.constant 0 : i32
    return %c0_i32, %c0_i32_0 : i32, i32
  }
  func.func @transform_11(%arg0: i32) -> (i32, i32) {
    %c0_i32 = arith.constant 0 : i32
    %c0_i32_0 = arith.constant 0 : i32
    %c0_i32_1 = arith.constant 0 : i32
    return %c0_i32, %c0_i32_0 : i32, i32
  }
  func.func @transform_12(%arg0: i32) -> (i32, i32) {
    %c0_i32 = arith.constant 0 : i32
    %c0_i32_0 = arith.constant 0 : i32
    %c0_i32_1 = arith.constant 0 : i32
    return %c0_i32, %c0_i32_0 : i32, i32
  }
  func.func @transform_13(%arg0: i32) -> (i32, i32, i32) {
    %c0_i32 = arith.constant 0 : i32
    %c0_i32_0 = arith.constant 0 : i32
    %c0_i32_1 = arith.constant 0 : i32
    return %arg0, %c0_i32, %c0_i32_0 : i32, i32, i32
  }
}

module attributes {stable_mosaic.version = 11 : i64} {
  func.func @encoder_kernel(%arg0: i32, %arg1: memref<2x64x128xf32, #tpu.memory_space<vmem>>, %arg2: memref<128x384xbf16, #tpu.memory_space<vmem>>, %arg3: memref<1x384xf32, #tpu.memory_space<vmem>>, %arg4: memref<128x128xbf16, #tpu.memory_space<vmem>>, %arg5: memref<1x128xf32, #tpu.memory_space<vmem>>, %arg6: memref<1x128xf32, #tpu.memory_space<vmem>>, %arg7: memref<1x128xf32, #tpu.memory_space<vmem>>, %arg8: memref<128x256xbf16, #tpu.memory_space<vmem>>, %arg9: memref<1x256xf32, #tpu.memory_space<vmem>>, %arg10: memref<256x128xbf16, #tpu.memory_space<vmem>>, %arg11: memref<1x128xf32, #tpu.memory_space<vmem>>, %arg12: memref<1x128xf32, #tpu.memory_space<vmem>>, %arg13: memref<1x128xf32, #tpu.memory_space<vmem>>, %arg14: memref<2x64x128xf32, #tpu.memory_space<vmem>>, %arg15: memref<128x128xbf16, #tpu.memory_space<vmem>>) attributes {dimension_semantics = [#tpu.dimension_semantics<parallel>], iteration_bounds = array<i64: 2>, scalar_prefetch = 0 : i64, scratch_operands = 1 : i64, tpu.core_type = #tpu.core_type<tc>, window_params = [{transform_indices = @transform_0, window_bounds = array<i64: 2, 64, 128>}, {pipeline_mode = #tpu.pipeline_mode<synchronous>, transform_indices = @transform_1, window_bounds = array<i64: 128, 384>}, {pipeline_mode = #tpu.pipeline_mode<synchronous>, transform_indices = @transform_2, window_bounds = array<i64: 1, 384>}, {pipeline_mode = #tpu.pipeline_mode<synchronous>, transform_indices = @transform_3, window_bounds = array<i64: 128, 128>}, {pipeline_mode = #tpu.pipeline_mode<synchronous>, transform_indices = @transform_4, window_bounds = array<i64: 1, 128>}, {pipeline_mode = #tpu.pipeline_mode<synchronous>, transform_indices = @transform_5, window_bounds = array<i64: 1, 128>}, {pipeline_mode = #tpu.pipeline_mode<synchronous>, transform_indices = @transform_6, window_bounds = array<i64: 1, 128>}, {pipeline_mode = #tpu.pipeline_mode<synchronous>, transform_indices = @transform_7, window_bounds = array<i64: 128, 256>}, {pipeline_mode = #tpu.pipeline_mode<synchronous>, transform_indices = @transform_8, window_bounds = array<i64: 1, 256>}, {pipeline_mode = #tpu.pipeline_mode<synchronous>, transform_indices = @transform_9, window_bounds = array<i64: 256, 128>}, {pipeline_mode = #tpu.pipeline_mode<synchronous>, transform_indices = @transform_10, window_bounds = array<i64: 1, 128>}, {pipeline_mode = #tpu.pipeline_mode<synchronous>, transform_indices = @transform_11, window_bounds = array<i64: 1, 128>}, {pipeline_mode = #tpu.pipeline_mode<synchronous>, transform_indices = @transform_12, window_bounds = array<i64: 1, 128>}, {transform_indices = @transform_13, window_bounds = array<i64: 2, 64, 128>}]} {
    %c0 = arith.constant 0 : index
    %c0_0 = arith.constant 0 : index
    %c0_1 = arith.constant 0 : index
    %0 = vector.load %arg1[%c0, %c0_0, %c0_1] : memref<2x64x128xf32, #tpu.memory_space<vmem>>, vector<2x64x128xf32>
    %1 = vector.shape_cast %0 : vector<2x64x128xf32> to vector<128x128xf32>
    %2 = arith.truncf %1 : vector<128x128xf32> to vector<128x128xbf16>
    %c0_2 = arith.constant 0 : index
    %c0_3 = arith.constant 0 : index
    %3 = vector.load %arg2[%c0_2, %c0_3] : memref<128x384xbf16, #tpu.memory_space<vmem>>, vector<128x384xbf16>
    %cst = arith.constant dense<0.000000e+00> : vector<128x384xf32>
    %4 = tpu.matmul %2, %3, %cst {dimension_numbers = #tpu.dot_dimension_numbers<[1], [0], [0], [1], [0, 0, 1, 1], [], []>} : vector<128x128xbf16>, vector<128x384xbf16>, vector<128x384xf32> -> vector<128x384xf32>
    %c0_4 = arith.constant 0 : index
    %c0_5 = arith.constant 0 : index
    %5 = vector.load %arg3[%c0_4, %c0_5] : memref<1x384xf32, #tpu.memory_space<vmem>>, vector<1x384xf32>
    %6 = vector.broadcast %5 : vector<1x384xf32> to vector<128x384xf32>
    %7 = arith.addf %4, %6 : vector<128x384xf32>
    %8 = arith.truncf %7 : vector<128x384xf32> to vector<128x384xbf16>
    %9 = vector.extract_strided_slice %8 {offsets = [0, 0], sizes = [128, 128], strides = [1, 1]} : vector<128x384xbf16> to vector<128x128xbf16>
    %10 = vector.shape_cast %9 : vector<128x128xbf16> to vector<2x64x128xbf16>
    %11 = vector.extract_strided_slice %8 {offsets = [0, 128], sizes = [128, 128], strides = [1, 1]} : vector<128x384xbf16> to vector<128x128xbf16>
    %12 = vector.shape_cast %11 : vector<128x128xbf16> to vector<2x64x128xbf16>
    %13 = vector.extract_strided_slice %8 {offsets = [0, 256], sizes = [128, 128], strides = [1, 1]} : vector<128x384xbf16> to vector<128x128xbf16>
    %14 = vector.shape_cast %13 : vector<128x128xbf16> to vector<2x64x128xbf16>
    %15 = vector.extract_strided_slice %10 {offsets = [0, 0, 0], sizes = [2, 64, 32], strides = [1, 1, 1]} : vector<2x64x128xbf16> to vector<2x64x32xbf16>
    %16 = vector.extract_strided_slice %12 {offsets = [0, 0, 0], sizes = [2, 64, 32], strides = [1, 1, 1]} : vector<2x64x128xbf16> to vector<2x64x32xbf16>
    %17 = vector.extract_strided_slice %14 {offsets = [0, 0, 0], sizes = [2, 64, 32], strides = [1, 1, 1]} : vector<2x64x128xbf16> to vector<2x64x32xbf16>
    "tpu.trace_start"() <{level = 10 : i32, message = "bqd,bkd->bqk"}> : () -> ()
    %cst_6 = arith.constant dense<0.000000e+00> : vector<2x64x64xf32>
    %18 = tpu.matmul %15, %16, %cst_6 {dimension_numbers = #tpu.dot_dimension_numbers<[2], [2], [1], [1], [0, 0, 0, 1, 1, 1], [0], [0]>} : vector<2x64x32xbf16>, vector<2x64x32xbf16>, vector<2x64x64xf32> -> vector<2x64x64xf32>
    "tpu.trace_stop"() : () -> ()
    %cst_7 = arith.constant dense<0xFF800000> : vector<2x64xf32>
    %19 = vector.multi_reduction <maximumf>, %18, %cst_7 [2] : vector<2x64x64xf32> to vector<2x64xf32>
    %20 = vector.shape_cast %19 : vector<2x64xf32> to vector<2x64x1xf32>
    %21 = vector.broadcast %20 : vector<2x64x1xf32> to vector<2x64x64xf32>
    %22 = arith.subf %18, %21 : vector<2x64x64xf32>
    %23 = math.exp %22 : vector<2x64x64xf32>
    %cst_8 = arith.constant dense<0.000000e+00> : vector<2x64xf32>
    %24 = vector.multi_reduction <add>, %23, %cst_8 [2] : vector<2x64x64xf32> to vector<2x64xf32>
    %25 = vector.shape_cast %24 : vector<2x64xf32> to vector<2x64x1xf32>
    %26 = tpu.reciprocal %25 {approx = true} : vector<2x64x1xf32> -> vector<2x64x1xf32>
    %27 = vector.broadcast %26 : vector<2x64x1xf32> to vector<2x64x64xf32>
    %28 = arith.mulf %23, %27 : vector<2x64x64xf32>
    %29 = arith.truncf %28 : vector<2x64x64xf32> to vector<2x64x64xbf16>
    "tpu.trace_start"() <{level = 10 : i32, message = "bqk,bkd->bqd"}> : () -> ()
    %cst_9 = arith.constant dense<0.000000e+00> : vector<2x64x32xf32>
    %30 = tpu.matmul %29, %17, %cst_9 {dimension_numbers = #tpu.dot_dimension_numbers<[2], [1], [1], [2], [0, 0, 0, 1, 1, 2], [0], [0]>} : vector<2x64x64xbf16>, vector<2x64x32xbf16>, vector<2x64x32xf32> -> vector<2x64x32xf32>
    "tpu.trace_stop"() : () -> ()
    %31 = vector.shape_cast %30 : vector<2x64x32xf32> to vector<128x32xf32>
    %32 = arith.truncf %31 : vector<128x32xf32> to vector<128x32xbf16>
    %c0_10 = arith.constant 0 : index
    %c0_11 = arith.constant 0 : index
    %33 = vector.load %arg15[%c0_10, %c0_11] : memref<128x128xbf16, #tpu.memory_space<vmem>>, vector<128x32xbf16>
    tpu.vector_store %arg15[%c0_10, %c0_11], %32 {strides = array<i32>} : memref<128x128xbf16, #tpu.memory_space<vmem>>, vector<128x32xbf16>,
    %34 = vector.extract_strided_slice %10 {offsets = [0, 0, 32], sizes = [2, 64, 32], strides = [1, 1, 1]} : vector<2x64x128xbf16> to vector<2x64x32xbf16>
    %35 = vector.extract_strided_slice %12 {offsets = [0, 0, 32], sizes = [2, 64, 32], strides = [1, 1, 1]} : vector<2x64x128xbf16> to vector<2x64x32xbf16>
    %36 = vector.extract_strided_slice %14 {offsets = [0, 0, 32], sizes = [2, 64, 32], strides = [1, 1, 1]} : vector<2x64x128xbf16> to vector<2x64x32xbf16>
    "tpu.trace_start"() <{level = 10 : i32, message = "bqd,bkd->bqk"}> : () -> ()
    %cst_12 = arith.constant dense<0.000000e+00> : vector<2x64x64xf32>
    %37 = tpu.matmul %34, %35, %cst_12 {dimension_numbers = #tpu.dot_dimension_numbers<[2], [2], [1], [1], [0, 0, 0, 1, 1, 1], [0], [0]>} : vector<2x64x32xbf16>, vector<2x64x32xbf16>, vector<2x64x64xf32> -> vector<2x64x64xf32>
    "tpu.trace_stop"() : () -> ()
    %cst_13 = arith.constant dense<0xFF800000> : vector<2x64xf32>
    %38 = vector.multi_reduction <maximumf>, %37, %cst_13 [2] : vector<2x64x64xf32> to vector<2x64xf32>
    %39 = vector.shape_cast %38 : vector<2x64xf32> to vector<2x64x1xf32>
    %40 = vector.broadcast %39 : vector<2x64x1xf32> to vector<2x64x64xf32>
    %41 = arith.subf %37, %40 : vector<2x64x64xf32>
    %42 = math.exp %41 : vector<2x64x64xf32>
    %cst_14 = arith.constant dense<0.000000e+00> : vector<2x64xf32>
    %43 = vector.multi_reduction <add>, %42, %cst_14 [2] : vector<2x64x64xf32> to vector<2x64xf32>
    %44 = vector.shape_cast %43 : vector<2x64xf32> to vector<2x64x1xf32>
    %45 = tpu.reciprocal %44 {approx = true} : vector<2x64x1xf32> -> vector<2x64x1xf32>
    %46 = vector.broadcast %45 : vector<2x64x1xf32> to vector<2x64x64xf32>
    %47 = arith.mulf %42, %46 : vector<2x64x64xf32>
    %48 = arith.truncf %47 : vector<2x64x64xf32> to vector<2x64x64xbf16>
    "tpu.trace_start"() <{level = 10 : i32, message = "bqk,bkd->bqd"}> : () -> ()
    %cst_15 = arith.constant dense<0.000000e+00> : vector<2x64x32xf32>
    %49 = tpu.matmul %48, %36, %cst_15 {dimension_numbers = #tpu.dot_dimension_numbers<[2], [1], [1], [2], [0, 0, 0, 1, 1, 2], [0], [0]>} : vector<2x64x64xbf16>, vector<2x64x32xbf16>, vector<2x64x32xf32> -> vector<2x64x32xf32>
    "tpu.trace_stop"() : () -> ()
    %50 = vector.shape_cast %49 : vector<2x64x32xf32> to vector<128x32xf32>
    %51 = arith.truncf %50 : vector<128x32xf32> to vector<128x32xbf16>
    %c0_16 = arith.constant 0 : index
    %c32 = arith.constant 32 : index
    %52 = vector.load %arg15[%c0_16, %c32] : memref<128x128xbf16, #tpu.memory_space<vmem>>, vector<128x32xbf16>
    tpu.vector_store %arg15[%c0_16, %c32], %51 {strides = array<i32>} : memref<128x128xbf16, #tpu.memory_space<vmem>>, vector<128x32xbf16>,
    %53 = vector.extract_strided_slice %10 {offsets = [0, 0, 64], sizes = [2, 64, 32], strides = [1, 1, 1]} : vector<2x64x128xbf16> to vector<2x64x32xbf16>
    %54 = vector.extract_strided_slice %12 {offsets = [0, 0, 64], sizes = [2, 64, 32], strides = [1, 1, 1]} : vector<2x64x128xbf16> to vector<2x64x32xbf16>
    %55 = vector.extract_strided_slice %14 {offsets = [0, 0, 64], sizes = [2, 64, 32], strides = [1, 1, 1]} : vector<2x64x128xbf16> to vector<2x64x32xbf16>
    "tpu.trace_start"() <{level = 10 : i32, message = "bqd,bkd->bqk"}> : () -> ()
    %cst_17 = arith.constant dense<0.000000e+00> : vector<2x64x64xf32>
    %56 = tpu.matmul %53, %54, %cst_17 {dimension_numbers = #tpu.dot_dimension_numbers<[2], [2], [1], [1], [0, 0, 0, 1, 1, 1], [0], [0]>} : vector<2x64x32xbf16>, vector<2x64x32xbf16>, vector<2x64x64xf32> -> vector<2x64x64xf32>
    "tpu.trace_stop"() : () -> ()
    %cst_18 = arith.constant dense<0xFF800000> : vector<2x64xf32>
    %57 = vector.multi_reduction <maximumf>, %56, %cst_18 [2] : vector<2x64x64xf32> to vector<2x64xf32>
    %58 = vector.shape_cast %57 : vector<2x64xf32> to vector<2x64x1xf32>
    %59 = vector.broadcast %58 : vector<2x64x1xf32> to vector<2x64x64xf32>
    %60 = arith.subf %56, %59 : vector<2x64x64xf32>
    %61 = math.exp %60 : vector<2x64x64xf32>
    %cst_19 = arith.constant dense<0.000000e+00> : vector<2x64xf32>
    %62 = vector.multi_reduction <add>, %61, %cst_19 [2] : vector<2x64x64xf32> to vector<2x64xf32>
    %63 = vector.shape_cast %62 : vector<2x64xf32> to vector<2x64x1xf32>
    %64 = tpu.reciprocal %63 {approx = true} : vector<2x64x1xf32> -> vector<2x64x1xf32>
    %65 = vector.broadcast %64 : vector<2x64x1xf32> to vector<2x64x64xf32>
    %66 = arith.mulf %61, %65 : vector<2x64x64xf32>
    %67 = arith.truncf %66 : vector<2x64x64xf32> to vector<2x64x64xbf16>
    "tpu.trace_start"() <{level = 10 : i32, message = "bqk,bkd->bqd"}> : () -> ()
    %cst_20 = arith.constant dense<0.000000e+00> : vector<2x64x32xf32>
    %68 = tpu.matmul %67, %55, %cst_20 {dimension_numbers = #tpu.dot_dimension_numbers<[2], [1], [1], [2], [0, 0, 0, 1, 1, 2], [0], [0]>} : vector<2x64x64xbf16>, vector<2x64x32xbf16>, vector<2x64x32xf32> -> vector<2x64x32xf32>
    "tpu.trace_stop"() : () -> ()
    %69 = vector.shape_cast %68 : vector<2x64x32xf32> to vector<128x32xf32>
    %70 = arith.truncf %69 : vector<128x32xf32> to vector<128x32xbf16>
    %c0_21 = arith.constant 0 : index
    %c64 = arith.constant 64 : index
    %71 = vector.load %arg15[%c0_21, %c64] : memref<128x128xbf16, #tpu.memory_space<vmem>>, vector<128x32xbf16>
    tpu.vector_store %arg15[%c0_21, %c64], %70 {strides = array<i32>} : memref<128x128xbf16, #tpu.memory_space<vmem>>, vector<128x32xbf16>,
    %72 = vector.extract_strided_slice %10 {offsets = [0, 0, 96], sizes = [2, 64, 32], strides = [1, 1, 1]} : vector<2x64x128xbf16> to vector<2x64x32xbf16>
    %73 = vector.extract_strided_slice %12 {offsets = [0, 0, 96], sizes = [2, 64, 32], strides = [1, 1, 1]} : vector<2x64x128xbf16> to vector<2x64x32xbf16>
    %74 = vector.extract_strided_slice %14 {offsets = [0, 0, 96], sizes = [2, 64, 32], strides = [1, 1, 1]} : vector<2x64x128xbf16> to vector<2x64x32xbf16>
    "tpu.trace_start"() <{level = 10 : i32, message = "bqd,bkd->bqk"}> : () -> ()
    %cst_22 = arith.constant dense<0.000000e+00> : vector<2x64x64xf32>
    %75 = tpu.matmul %72, %73, %cst_22 {dimension_numbers = #tpu.dot_dimension_numbers<[2], [2], [1], [1], [0, 0, 0, 1, 1, 1], [0], [0]>} : vector<2x64x32xbf16>, vector<2x64x32xbf16>, vector<2x64x64xf32> -> vector<2x64x64xf32>
    "tpu.trace_stop"() : () -> ()
    %cst_23 = arith.constant dense<0xFF800000> : vector<2x64xf32>
    %76 = vector.multi_reduction <maximumf>, %75, %cst_23 [2] : vector<2x64x64xf32> to vector<2x64xf32>
    %77 = vector.shape_cast %76 : vector<2x64xf32> to vector<2x64x1xf32>
    %78 = vector.broadcast %77 : vector<2x64x1xf32> to vector<2x64x64xf32>
    %79 = arith.subf %75, %78 : vector<2x64x64xf32>
    %80 = math.exp %79 : vector<2x64x64xf32>
    %cst_24 = arith.constant dense<0.000000e+00> : vector<2x64xf32>
    %81 = vector.multi_reduction <add>, %80, %cst_24 [2] : vector<2x64x64xf32> to vector<2x64xf32>
    %82 = vector.shape_cast %81 : vector<2x64xf32> to vector<2x64x1xf32>
    %83 = tpu.reciprocal %82 {approx = true} : vector<2x64x1xf32> -> vector<2x64x1xf32>
    %84 = vector.broadcast %83 : vector<2x64x1xf32> to vector<2x64x64xf32>
    %85 = arith.mulf %80, %84 : vector<2x64x64xf32>
    %86 = arith.truncf %85 : vector<2x64x64xf32> to vector<2x64x64xbf16>
    "tpu.trace_start"() <{level = 10 : i32, message = "bqk,bkd->bqd"}> : () -> ()
    %cst_25 = arith.constant dense<0.000000e+00> : vector<2x64x32xf32>
    %87 = tpu.matmul %86, %74, %cst_25 {dimension_numbers = #tpu.dot_dimension_numbers<[2], [1], [1], [2], [0, 0, 0, 1, 1, 2], [0], [0]>} : vector<2x64x64xbf16>, vector<2x64x32xbf16>, vector<2x64x32xf32> -> vector<2x64x32xf32>
    "tpu.trace_stop"() : () -> ()
    %88 = vector.shape_cast %87 : vector<2x64x32xf32> to vector<128x32xf32>
    %89 = arith.truncf %88 : vector<128x32xf32> to vector<128x32xbf16>
    %c0_26 = arith.constant 0 : index
    %c96 = arith.constant 96 : index
    %90 = vector.load %arg15[%c0_26, %c96] : memref<128x128xbf16, #tpu.memory_space<vmem>>, vector<128x32xbf16>
    tpu.vector_store %arg15[%c0_26, %c96], %89 {strides = array<i32>} : memref<128x128xbf16, #tpu.memory_space<vmem>>, vector<128x32xbf16>,
    %c0_27 = arith.constant 0 : index
    %c0_28 = arith.constant 0 : index
    %91 = vector.load %arg15[%c0_27, %c0_28] : memref<128x128xbf16, #tpu.memory_space<vmem>>, vector<128x128xbf16>
    %c0_29 = arith.constant 0 : index
    %c0_30 = arith.constant 0 : index
    %92 = vector.load %arg4[%c0_29, %c0_30] : memref<128x128xbf16, #tpu.memory_space<vmem>>, vector<128x128xbf16>
    %cst_31 = arith.constant dense<0.000000e+00> : vector<128x128xf32>
    %93 = tpu.matmul %91, %92, %cst_31 {dimension_numbers = #tpu.dot_dimension_numbers<[1], [0], [0], [1], [0, 0, 1, 1], [], []>} : vector<128x128xbf16>, vector<128x128xbf16>, vector<128x128xf32> -> vector<128x128xf32>
    %c0_32 = arith.constant 0 : index
    %c0_33 = arith.constant 0 : index
    %94 = vector.load %arg5[%c0_32, %c0_33] : memref<1x128xf32, #tpu.memory_space<vmem>>, vector<1x128xf32>
    %95 = vector.broadcast %94 : vector<1x128xf32> to vector<128x128xf32>
    %96 = arith.addf %93, %95 : vector<128x128xf32>
    %97 = arith.addf %1, %96 : vector<128x128xf32>
    %c0_34 = arith.constant 0 : index
    %c0_35 = arith.constant 0 : index
    %98 = vector.load %arg6[%c0_34, %c0_35] : memref<1x128xf32, #tpu.memory_space<vmem>>, vector<1x128xf32>
    %c0_36 = arith.constant 0 : index
    %c0_37 = arith.constant 0 : index
    %99 = vector.load %arg7[%c0_36, %c0_37] : memref<1x128xf32, #tpu.memory_space<vmem>>, vector<1x128xf32>
    %cst_38 = arith.constant dense<0.000000e+00> : vector<128xf32>
    %100 = vector.multi_reduction <add>, %97, %cst_38 [1] : vector<128x128xf32> to vector<128xf32>
    %101 = vector.shape_cast %100 : vector<128xf32> to vector<128x1xf32>
    %cst_39 = arith.constant 1.280000e+02 : f32
    %102 = vector.broadcast %cst_39 : f32 to vector<128x1xf32>
    %103 = arith.divf %101, %102 : vector<128x1xf32>
    %104 = vector.broadcast %103 : vector<128x1xf32> to vector<128x128xf32>
    %105 = arith.subf %97, %104 : vector<128x128xf32>
    %106 = arith.mulf %105, %105 : vector<128x128xf32>
    %cst_40 = arith.constant dense<0.000000e+00> : vector<128xf32>
    %107 = vector.multi_reduction <add>, %106, %cst_40 [1] : vector<128x128xf32> to vector<128xf32>
    %108 = vector.shape_cast %107 : vector<128xf32> to vector<128x1xf32>
    %cst_41 = arith.constant 1.280000e+02 : f32
    %109 = vector.broadcast %cst_41 : f32 to vector<128x1xf32>
    %110 = arith.divf %108, %109 : vector<128x1xf32>
    %111 = vector.broadcast %103 : vector<128x1xf32> to vector<128x128xf32>
    %112 = arith.subf %97, %111 : vector<128x128xf32>
    %cst_42 = arith.constant 9.99999996E-13 : f32
    %113 = vector.broadcast %cst_42 : f32 to vector<128x1xf32>
    %114 = arith.addf %110, %113 : vector<128x1xf32>
    %115 = math.rsqrt %114 : vector<128x1xf32>
    %116 = vector.broadcast %115 : vector<128x1xf32> to vector<128x128xf32>
    %117 = arith.mulf %112, %116 : vector<128x128xf32>
    %118 = vector.broadcast %98 : vector<1x128xf32> to vector<128x128xf32>
    %119 = arith.mulf %117, %118 : vector<128x128xf32>
    %120 = vector.broadcast %99 : vector<1x128xf32> to vector<128x128xf32>
    %121 = arith.addf %119, %120 : vector<128x128xf32>
    %122 = arith.truncf %121 : vector<128x128xf32> to vector<128x128xbf16>
    %c0_43 = arith.constant 0 : index
    %c0_44 = arith.constant 0 : index
    %123 = vector.load %arg8[%c0_43, %c0_44] : memref<128x256xbf16, #tpu.memory_space<vmem>>, vector<128x256xbf16>
    %cst_45 = arith.constant dense<0.000000e+00> : vector<128x256xf32>
    %124 = tpu.matmul %122, %123, %cst_45 {dimension_numbers = #tpu.dot_dimension_numbers<[1], [0], [0], [1], [0, 0, 1, 1], [], []>} : vector<128x128xbf16>, vector<128x256xbf16>, vector<128x256xf32> -> vector<128x256xf32>
    %c0_46 = arith.constant 0 : index
    %c0_47 = arith.constant 0 : index
    %125 = vector.load %arg9[%c0_46, %c0_47] : memref<1x256xf32, #tpu.memory_space<vmem>>, vector<1x256xf32>
    %126 = vector.broadcast %125 : vector<1x256xf32> to vector<128x256xf32>
    %127 = arith.addf %124, %126 : vector<128x256xf32>
    %cst_48 = arith.constant 5.000000e-01 : f32
    %128 = vector.broadcast %cst_48 : f32 to vector<128x256xf32>
    %129 = arith.mulf %128, %127 : vector<128x256xf32>
    %cst_49 = arith.constant 0.707106769 : f32
    %130 = vector.broadcast %cst_49 : f32 to vector<128x256xf32>
    %131 = arith.mulf %127, %130 : vector<128x256xf32>
    %132 = math.erf %131 : vector<128x256xf32>
    %cst_50 = arith.constant 1.000000e+00 : f32
    %133 = vector.broadcast %cst_50 : f32 to vector<128x256xf32>
    %134 = arith.addf %133, %132 : vector<128x256xf32>
    %135 = arith.mulf %129, %134 : vector<128x256xf32>
    %136 = arith.truncf %135 : vector<128x256xf32> to vector<128x256xbf16>
    %c0_51 = arith.constant 0 : index
    %c0_52 = arith.constant 0 : index
    %137 = vector.load %arg10[%c0_51, %c0_52] : memref<256x128xbf16, #tpu.memory_space<vmem>>, vector<256x128xbf16>
    %cst_53 = arith.constant dense<0.000000e+00> : vector<128x128xf32>
    %138 = tpu.matmul %136, %137, %cst_53 {dimension_numbers = #tpu.dot_dimension_numbers<[1], [0], [0], [1], [0, 0, 1, 1], [], []>} : vector<128x256xbf16>, vector<256x128xbf16>, vector<128x128xf32> -> vector<128x128xf32>
    %c0_54 = arith.constant 0 : index
    %c0_55 = arith.constant 0 : index
    %139 = vector.load %arg11[%c0_54, %c0_55] : memref<1x128xf32, #tpu.memory_space<vmem>>, vector<1x128xf32>
    %140 = vector.broadcast %139 : vector<1x128xf32> to vector<128x128xf32>
    %141 = arith.addf %138, %140 : vector<128x128xf32>
    %142 = arith.addf %121, %141 : vector<128x128xf32>
    %c0_56 = arith.constant 0 : index
    %c0_57 = arith.constant 0 : index
    %143 = vector.load %arg12[%c0_56, %c0_57] : memref<1x128xf32, #tpu.memory_space<vmem>>, vector<1x128xf32>
    %c0_58 = arith.constant 0 : index
    %c0_59 = arith.constant 0 : index
    %144 = vector.load %arg13[%c0_58, %c0_59] : memref<1x128xf32, #tpu.memory_space<vmem>>, vector<1x128xf32>
    %cst_60 = arith.constant dense<0.000000e+00> : vector<128xf32>
    %145 = vector.multi_reduction <add>, %142, %cst_60 [1] : vector<128x128xf32> to vector<128xf32>
    %146 = vector.shape_cast %145 : vector<128xf32> to vector<128x1xf32>
    %cst_61 = arith.constant 1.280000e+02 : f32
    %147 = vector.broadcast %cst_61 : f32 to vector<128x1xf32>
    %148 = arith.divf %146, %147 : vector<128x1xf32>
    %149 = vector.broadcast %148 : vector<128x1xf32> to vector<128x128xf32>
    %150 = arith.subf %142, %149 : vector<128x128xf32>
    %151 = arith.mulf %150, %150 : vector<128x128xf32>
    %cst_62 = arith.constant dense<0.000000e+00> : vector<128xf32>
    %152 = vector.multi_reduction <add>, %151, %cst_62 [1] : vector<128x128xf32> to vector<128xf32>
    %153 = vector.shape_cast %152 : vector<128xf32> to vector<128x1xf32>
    %cst_63 = arith.constant 1.280000e+02 : f32
    %154 = vector.broadcast %cst_63 : f32 to vector<128x1xf32>
    %155 = arith.divf %153, %154 : vector<128x1xf32>
    %156 = vector.broadcast %148 : vector<128x1xf32> to vector<128x128xf32>
    %157 = arith.subf %142, %156 : vector<128x128xf32>
    %cst_64 = arith.constant 9.99999996E-13 : f32
    %158 = vector.broadcast %cst_64 : f32 to vector<128x1xf32>
    %159 = arith.addf %155, %158 : vector<128x1xf32>
    %160 = math.rsqrt %159 : vector<128x1xf32>
    %161 = vector.broadcast %160 : vector<128x1xf32> to vector<128x128xf32>
    %162 = arith.mulf %157, %161 : vector<128x128xf32>
    %163 = vector.broadcast %143 : vector<1x128xf32> to vector<128x128xf32>
    %164 = arith.mulf %162, %163 : vector<128x128xf32>
    %165 = vector.broadcast %144 : vector<1x128xf32> to vector<128x128xf32>
    %166 = arith.addf %164, %165 : vector<128x128xf32>
    %167 = vector.shape_cast %166 : vector<128x128xf32> to vector<2x64x128xf32>
    %c0_65 = arith.constant 0 : index
    %c0_66 = arith.constant 0 : index
    %c0_67 = arith.constant 0 : index
    %168 = vector.load %arg14[%c0_65, %c0_66, %c0_67] : memref<2x64x128xf32, #tpu.memory_space<vmem>>, vector<2x64x128xf32>
    tpu.vector_store %arg14[%c0_65, %c0_66, %c0_67], %167 {strides = array<i32>} : memref<2x64x128xf32, #tpu.memory_space<vmem>>, vector<2x64x128xf32>,
    return
  }
  func.func @transform_0(%arg0: i32) -> (i32, i32, i32) {
    %c0_i32 = arith.constant 0 : i32
    %c0_i32_0 = arith.constant 0 : i32
    %c0_i32_1 = arith.constant 0 : i32
    return %arg0, %c0_i32, %c0_i32_0 : i32, i32, i32
  }
  func.func @transform_1(%arg0: i32) -> (i32, i32) {
    %c0_i32 = arith.constant 0 : i32
    %c0_i32_0 = arith.constant 0 : i32
    %c0_i32_1 = arith.constant 0 : i32
    return %c0_i32, %c0_i32_0 : i32, i32
  }
  func.func @transform_2(%arg0: i32) -> (i32, i32) {
    %c0_i32 = arith.constant 0 : i32
    %c0_i32_0 = arith.constant 0 : i32
    %c0_i32_1 = arith.constant 0 : i32
    return %c0_i32, %c0_i32_0 : i32, i32
  }
  func.func @transform_3(%arg0: i32) -> (i32, i32) {
    %c0_i32 = arith.constant 0 : i32
    %c0_i32_0 = arith.constant 0 : i32
    %c0_i32_1 = arith.constant 0 : i32
    return %c0_i32, %c0_i32_0 : i32, i32
  }
  func.func @transform_4(%arg0: i32) -> (i32, i32) {
    %c0_i32 = arith.constant 0 : i32
    %c0_i32_0 = arith.constant 0 : i32
    %c0_i32_1 = arith.constant 0 : i32
    return %c0_i32, %c0_i32_0 : i32, i32
  }
  func.func @transform_5(%arg0: i32) -> (i32, i32) {
    %c0_i32 = arith.constant 0 : i32
    %c0_i32_0 = arith.constant 0 : i32
    %c0_i32_1 = arith.constant 0 : i32
    return %c0_i32, %c0_i32_0 : i32, i32
  }
  func.func @transform_6(%arg0: i32) -> (i32, i32) {
    %c0_i32 = arith.constant 0 : i32
    %c0_i32_0 = arith.constant 0 : i32
    %c0_i32_1 = arith.constant 0 : i32
    return %c0_i32, %c0_i32_0 : i32, i32
  }
  func.func @transform_7(%arg0: i32) -> (i32, i32) {
    %c0_i32 = arith.constant 0 : i32
    %c0_i32_0 = arith.constant 0 : i32
    %c0_i32_1 = arith.constant 0 : i32
    return %c0_i32, %c0_i32_0 : i32, i32
  }
  func.func @transform_8(%arg0: i32) -> (i32, i32) {
    %c0_i32 = arith.constant 0 : i32
    %c0_i32_0 = arith.constant 0 : i32
    %c0_i32_1 = arith.constant 0 : i32
    return %c0_i32, %c0_i32_0 : i32, i32
  }
  func.func @transform_9(%arg0: i32) -> (i32, i32) {
    %c0_i32 = arith.constant 0 : i32
    %c0_i32_0 = arith.constant 0 : i32
    %c0_i32_1 = arith.constant 0 : i32
    return %c0_i32, %c0_i32_0 : i32, i32
  }
  func.func @transform_10(%arg0: i32) -> (i32, i32) {
    %c0_i32 = arith.constant 0 : i32
    %c0_i32_0 = arith.constant 0 : i32
    %c0_i32_1 = arith.constant 0 : i32
    return %c0_i32, %c0_i32_0 : i32, i32
  }
  func.func @transform_11(%arg0: i32) -> (i32, i32) {
    %c0_i32 = arith.constant 0 : i32
    %c0_i32_0 = arith.constant 0 : i32
    %c0_i32_1 = arith.constant 0 : i32
    return %c0_i32, %c0_i32_0 : i32, i32
  }
  func.func @transform_12(%arg0: i32) -> (i32, i32) {
    %c0_i32 = arith.constant 0 : i32
    %c0_i32_0 = arith.constant 0 : i32
    %c0_i32_1 = arith.constant 0 : i32
    return %c0_i32, %c0_i32_0 : i32, i32
  }
  func.func @transform_13(%arg0: i32) -> (i32, i32, i32) {
    %c0_i32 = arith.constant 0 : i32
    %c0_i32_0 = arith.constant 0 : i32
    %c0_i32_1 = arith.constant 0 : i32
    return %arg0, %c0_i32, %c0_i32_0 : i32, i32, i32
  }
}

</mosaic_0001>

<llo_original>
// kernel: tpu_custom_call.1
$region0: #{tpu_custom_call.1}
  #allocation0 [shape = 'u32[]', space=smem, size = 0x4, offset = 0x4, fixed_abs, tag = 'smem constant byte address 0x4 - core index']
  #allocation1 [shape = 'u32[144,128]{1,0:T(1,128)}', space=vmem, size = 0x12000, scoped, tag = 'internal scratch']
  #allocation2 [shape = 'bf16[128,128]{1,0:T(16,128)(2,1)}', space=vmem, size = 0x8000, scoped, tag = 'scratch operand']
  %s0 = inlined_call_operand.hbm [shape: f32[4,64,128], index: 0, kind: input, shape index: {}]
  %s1 = inlined_call_operand.hbm [shape: bf16[128,384], index: 1, kind: input, shape index: {}]
  %s2 = inlined_call_operand.vmem [shape: f32[1,384], index: 2, kind: input, shape index: {}]
  %s3 = inlined_call_operand.hbm [shape: bf16[128,128], index: 3, kind: input, shape index: {}]
  %s4 = inlined_call_operand.vmem [shape: f32[1,128], index: 4, kind: input, shape index: {}]
  %s5 = inlined_call_operand.vmem [shape: f32[1,128], index: 5, kind: input, shape index: {}]
  %s6 = inlined_call_operand.vmem [shape: f32[1,128], index: 6, kind: input, shape index: {}]
  %s7 = inlined_call_operand.hbm [shape: bf16[128,256], index: 7, kind: input, shape index: {}]
  %s8 = inlined_call_operand.vmem [shape: f32[1,256], index: 8, kind: input, shape index: {}]
  %s9 = inlined_call_operand.hbm [shape: bf16[256,128], index: 9, kind: input, shape index: {}]
  %s10 = inlined_call_operand.vmem [shape: f32[1,128], index: 10, kind: input, shape index: {}]
  %s11 = inlined_call_operand.vmem [shape: f32[1,128], index: 11, kind: input, shape index: {}]
  %s12 = inlined_call_operand.vmem [shape: f32[1,128], index: 12, kind: input, shape index: {}]
  %s13 = inlined_call_operand.hbm [shape: f32[4,64,128], index: 13, kind: output, shape index: {}]
  %s14 = sld [smem:[#allocation0]]
  $region105: #{tpu_custom_call.1} parent=0
    _
  %s16 = ssub.s32 1, %s14
  %s17 = scalar_select 0, %s16, %s14
  $region1: #{tpu_custom_call.1} parent=0
    #allocation3 [shape = 'u8[131072]{0}', space=vmem, size = 0x20000, scoped, tag = 'input window, operand 0']
    #allocation4 [shape = 's32[2]{0}', space=sflag, size = 0x8, scoped, tag = 'scoped memory for tpu_custom_call.1']
    #allocation5 [shape = 's32[2]{0}', space=sflag, size = 0x8, scoped, tag = 'scoped memory for tpu_custom_call.1']
    #allocation6 [shape = 'u8[98304]{0}', space=vmem, size = 0x18000, scoped, tag = 'input window, operand 1, single buffered']
    #allocation7 [shape = 's32[1]{0}', space=sflag, size = 0x4, scoped, tag = 'scoped memory for tpu_custom_call.1']
    #allocation8 [shape = 'u8[32768]{0}', space=vmem, size = 0x8000, scoped, tag = 'input window, operand 3, single buffered']
    #allocation9 [shape = 'u8[65536]{0}', space=vmem, size = 0x10000, scoped, tag = 'input window, operand 7, single buffered']
    #allocation10 [shape = 's32[1]{0}', space=sflag, size = 0x4, scoped, tag = 'scoped memory for tpu_custom_call.1']
    #allocation11 [shape = 'u8[65536]{0}', space=vmem, size = 0x10000, scoped, tag = 'input window, operand 9, single buffered']
    #allocation12 [shape = 'u8[131072]{0}', space=vmem, size = 0x20000, scoped, tag = 'output window, operand 0']
    %18 = vsyncpa [#allocation4], 0
    %s19 = scalar_lea.sflag [#allocation4], 1
    %20 = vsyncpa %s19, 0
    %21 = vsyncpa [#allocation7], 0
    %22 = vsyncpa [#allocation10], 0
    %23 = vsyncpa [#allocation5], 0
    %s24 = scalar_lea.sflag [#allocation5], 1
    %25 = vsyncpa %s24, 0
    loop: start=0, step=1, limit=4
    $region2: #{tpu_custom_call.1} parent=1 // loop_pre_header
      _
    $region3: #{tpu_custom_call.1} parent=1 // loop_header
      %s27 = sphi 0, %s31
      %p28 = scmp.ge.s32.totalorder %s27, 4
      %s37 = sphi 0, %s39
      %s40 = sphi 0, %s37
      %s41 = sphi 0, %s40
      %s57 = sphi 0, %s41
      %s61 = sphi 0, %s61
      %s63 = sphi 0, %s61
      %s64 = sphi 0, %s63
      %s78 = sphi 0, %s64
      %s82 = sphi 0, %s82
      %s84 = sphi 0, %s82
      %s85 = sphi 0, %s84
      %s99 = sphi 0, %s85
      %s103 = sphi 0, %s103
      %s105 = sphi 0, %s103
      %s106 = sphi 0, %s105
      %s120 = sphi 0, %s106
      %s124 = sphi 0, %s124
      %s126 = sphi 0, %s124
      %s127 = sphi 0, %s126
      %s141 = sphi 0, %s127
      %s145 = sphi 0, %s145
      %s147 = sphi 0, %s145
      %s148 = sphi 0, %s147
      %s162 = sphi 0, %s148
      %s166 = sphi 0, %s166
      %s168 = sphi 0, %s166
      %s169 = sphi 0, %s168
      %s183 = sphi 0, %s169
      %s187 = sphi 0, %s187
      %s189 = sphi 0, %s187
      %s190 = sphi 0, %s189
      %s204 = sphi 0, %s190
      %s208 = sphi 0, %s208
      %s210 = sphi 0, %s208
      %s211 = sphi 0, %s210
      %s225 = sphi 0, %s211
      %s229 = sphi 0, %s229
      %s231 = sphi 0, %s229
      %s232 = sphi 0, %s231
      %s246 = sphi 0, %s232
      %s250 = sphi 0, %s250
      %s252 = sphi 0, %s250
      %s253 = sphi 0, %s252
      %s267 = sphi 0, %s253
      %s271 = sphi 0, %s271
      %s273 = sphi 0, %s271
      %s274 = sphi 0, %s273
      %s288 = sphi 0, %s274
      %s292 = sphi 0, %s292
      %s294 = sphi 0, %s292
      %s295 = sphi 0, %s294
      %s309 = sphi 0, %s295
      %s315 = sphi 0, %s317
      %s318 = sphi 0, %s315
      %s319 = sphi 0, %s318
      %s335 = sphi 0, %s319
    $region4: #{tpu_custom_call.1} parent=1 // loop_header_branch
      %30 = sbr.rel (%p28) target = $region8
    $region5: #{tpu_custom_call.1} parent=1 // loop_body
      %s32 = ssub.s32 %s27, 1
      %s33 = ssub.s32 %s27, 2
      %s34 = sadd.s32 %s27, 1
      %s35 = ssub.s32 %s27, %s34
      %p36 = scmp.eq.s32.totalorder %s35, 0
      %s38 = sadd.s32 %s37, 1
      %s39 = scalar_select %p36, %s37, %s38
      %p42 = pneg %p36
      %p43 = scmp.eq.s32.totalorder %s27, 1
      %p44 = por %p42, %p43
      %p45 = scmp.ne.s32.totalorder %s37, %s40
      %p46 = scmp.eq.s32.totalorder %s27, 0
      %p47 = por %p45, %p46
      %p48 = scmp.ne.s32.totalorder %s37, %s40
      %p49 = scmp.eq.s32.totalorder %s32, 1
      %p50 = por %p48, %p49
      %p51 = scmp.ne.s32.totalorder %s40, %s41
      %p52 = scmp.eq.s32.totalorder %s32, 0
      %p53 = por %p51, %p52
      %p54 = scmp.ne.s32.totalorder %s40, %s41
      %p55 = scmp.eq.s32.totalorder %s33, 1
      %p56 = por %p54, %p55
      %p58 = scmp.ne.s32.totalorder %s41, %s57
      %p59 = scmp.eq.s32.totalorder %s33, 0
      %p60 = por %p58, %p59
      %s62 = sadd.s32 %s61, 1
      %p65 = scmp.eq.s32.totalorder %s27, 1
      %p66 = scmp.ne.s32.totalorder %s61, %s63
      %p67 = scmp.eq.s32.totalorder %s27, 0
      %p68 = por %p66, %p67
      %p69 = scmp.ne.s32.totalorder %s61, %s63
      %p70 = scmp.eq.s32.totalorder %s32, 1
      %p71 = por %p69, %p70
      %p72 = scmp.ne.s32.totalorder %s63, %s64
      %p73 = scmp.eq.s32.totalorder %s32, 0
      %p74 = por %p72, %p73
      %p75 = scmp.ne.s32.totalorder %s63, %s64
      %p76 = scmp.eq.s32.totalorder %s33, 1
      %p77 = por %p75, %p76
      %p79 = scmp.ne.s32.totalorder %s64, %s78
      %p80 = scmp.eq.s32.totalorder %s33, 0
      %p81 = por %p79, %p80
      %s83 = sadd.s32 %s82, 1
      %p86 = scmp.eq.s32.totalorder %s27, 1
      %p87 = scmp.ne.s32.totalorder %s82, %s84
      %p88 = scmp.eq.s32.totalorder %s27, 0
      %p89 = por %p87, %p88
      %p90 = scmp.ne.s32.totalorder %s82, %s84
      %p91 = scmp.eq.s32.totalorder %s32, 1
      %p92 = por %p90, %p91
      %p93 = scmp.ne.s32.totalorder %s84, %s85
      %p94 = scmp.eq.s32.totalorder %s32, 0
      %p95 = por %p93, %p94
      %p96 = scmp.ne.s32.totalorder %s84, %s85
      %p97 = scmp.eq.s32.totalorder %s33, 1
      %p98 = por %p96, %p97
      %p100 = scmp.ne.s32.totalorder %s85, %s99
      %p101 = scmp.eq.s32.totalorder %s33, 0
      %p102 = por %p100, %p101
      %s104 = sadd.s32 %s103, 1
      %p107 = scmp.eq.s32.totalorder %s27, 1
      %p108 = scmp.ne.s32.totalorder %s103, %s105
      %p109 = scmp.eq.s32.totalorder %s27, 0
      %p110 = por %p108, %p109
      %p111 = scmp.ne.s32.totalorder %s103, %s105
      %p112 = scmp.eq.s32.totalorder %s32, 1
      %p113 = por %p111, %p112
      %p114 = scmp.ne.s32.totalorder %s105, %s106
      %p115 = scmp.eq.s32.totalorder %s32, 0
      %p116 = por %p114, %p115
      %p117 = scmp.ne.s32.totalorder %s105, %s106
      %p118 = scmp.eq.s32.totalorder %s33, 1
      %p119 = por %p117, %p118
      %p121 = scmp.ne.s32.totalorder %s106, %s120
      %p122 = scmp.eq.s32.totalorder %s33, 0
      %p123 = por %p121, %p122
      %s125 = sadd.s32 %s124, 1
      %p128 = scmp.eq.s32.totalorder %s27, 1
      %p129 = scmp.ne.s32.totalorder %s124, %s126
      %p130 = scmp.eq.s32.totalorder %s27, 0
      %p131 = por %p129, %p130
      %p132 = scmp.ne.s32.totalorder %s124, %s126
      %p133 = scmp.eq.s32.totalorder %s32, 1
      %p134 = por %p132, %p133
      %p135 = scmp.ne.s32.totalorder %s126, %s127
      %p136 = scmp.eq.s32.totalorder %s32, 0
      %p137 = por %p135, %p136
      %p138 = scmp.ne.s32.totalorder %s126, %s127
      %p139 = scmp.eq.s32.totalorder %s33, 1
      %p140 = por %p138, %p139
      %p142 = scmp.ne.s32.totalorder %s127, %s141
      %p143 = scmp.eq.s32.totalorder %s33, 0
      %p144 = por %p142, %p143
      %s146 = sadd.s32 %s145, 1
      %p149 = scmp.eq.s32.totalorder %s27, 1
      %p150 = scmp.ne.s32.totalorder %s145, %s147
      %p151 = scmp.eq.s32.totalorder %s27, 0
      %p152 = por %p150, %p151
      %p153 = scmp.ne.s32.totalorder %s145, %s147
      %p154 = scmp.eq.s32.totalorder %s32, 1
      %p155 = por %p153, %p154
      %p156 = scmp.ne.s32.totalorder %s147, %s148
      %p157 = scmp.eq.s32.totalorder %s32, 0
      %p158 = por %p156, %p157
      %p159 = scmp.ne.s32.totalorder %s147, %s148
      %p160 = scmp.eq.s32.totalorder %s33, 1
      %p161 = por %p159, %p160
      %p163 = scmp.ne.s32.totalorder %s148, %s162
      %p164 = scmp.eq.s32.totalorder %s33, 0
      %p165 = por %p163, %p164
      %s167 = sadd.s32 %s166, 1
      %p170 = scmp.eq.s32.totalorder %s27, 1
      %p171 = scmp.ne.s32.totalorder %s166, %s168
      %p172 = scmp.eq.s32.totalorder %s27, 0
      %p173 = por %p171, %p172
      %p174 = scmp.ne.s32.totalorder %s166, %s168
      %p175 = scmp.eq.s32.totalorder %s32, 1
      %p176 = por %p174, %p175
      %p177 = scmp.ne.s32.totalorder %s168, %s169
      %p178 = scmp.eq.s32.totalorder %s32, 0
      %p179 = por %p177, %p178
      %p180 = scmp.ne.s32.totalorder %s168, %s169
      %p181 = scmp.eq.s32.totalorder %s33, 1
      %p182 = por %p180, %p181
      %p184 = scmp.ne.s32.totalorder %s169, %s183
      %p185 = scmp.eq.s32.totalorder %s33, 0
      %p186 = por %p184, %p185
      %s188 = sadd.s32 %s187, 1
      %p191 = scmp.eq.s32.totalorder %s27, 1
      %p192 = scmp.ne.s32.totalorder %s187, %s189
      %p193 = scmp.eq.s32.totalorder %s27, 0
      %p194 = por %p192, %p193
      %p195 = scmp.ne.s32.totalorder %s187, %s189
      %p196 = scmp.eq.s32.totalorder %s32, 1
      %p197 = por %p195, %p196
      %p198 = scmp.ne.s32.totalorder %s189, %s190
      %p199 = scmp.eq.s32.totalorder %s32, 0
      %p200 = por %p198, %p199
      %p201 = scmp.ne.s32.totalorder %s189, %s190
      %p202 = scmp.eq.s32.totalorder %s33, 1
      %p203 = por %p201, %p202
      %p205 = scmp.ne.s32.totalorder %s190, %s204
      %p206 = scmp.eq.s32.totalorder %s33, 0
      %p207 = por %p205, %p206
      %s209 = sadd.s32 %s208, 1
      %p212 = scmp.eq.s32.totalorder %s27, 1
      %p213 = scmp.ne.s32.totalorder %s208, %s210
      %p214 = scmp.eq.s32.totalorder %s27, 0
      %p215 = por %p213, %p214
      %p216 = scmp.ne.s32.totalorder %s208, %s210
      %p217 = scmp.eq.s32.totalorder %s32, 1
      %p218 = por %p216, %p217
      %p219 = scmp.ne.s32.totalorder %s210, %s211
      %p220 = scmp.eq.s32.totalorder %s32, 0
      %p221 = por %p219, %p220
      %p222 = scmp.ne.s32.totalorder %s210, %s211
      %p223 = scmp.eq.s32.totalorder %s33, 1
      %p224 = por %p222, %p223
      %p226 = scmp.ne.s32.totalorder %s211, %s225
      %p227 = scmp.eq.s32.totalorder %s33, 0
      %p228 = por %p226, %p227
      %s230 = sadd.s32 %s229, 1
      %p233 = scmp.eq.s32.totalorder %s27, 1
      %p234 = scmp.ne.s32.totalorder %s229, %s231
      %p235 = scmp.eq.s32.totalorder %s27, 0
      %p236 = por %p234, %p235
      %p237 = scmp.ne.s32.totalorder %s229, %s231
      %p238 = scmp.eq.s32.totalorder %s32, 1
      %p239 = por %p237, %p238
      %p240 = scmp.ne.s32.totalorder %s231, %s232
      %p241 = scmp.eq.s32.totalorder %s32, 0
      %p242 = por %p240, %p241
      %p243 = scmp.ne.s32.totalorder %s231, %s232
      %p244 = scmp.eq.s32.totalorder %s33, 1
      %p245 = por %p243, %p244
      %p247 = scmp.ne.s32.totalorder %s232, %s246
      %p248 = scmp.eq.s32.totalorder %s33, 0
      %p249 = por %p247, %p248
      %s251 = sadd.s32 %s250, 1
      %p254 = scmp.eq.s32.totalorder %s27, 1
      %p255 = scmp.ne.s32.totalorder %s250, %s252
      %p256 = scmp.eq.s32.totalorder %s27, 0
      %p257 = por %p255, %p256
      %p258 = scmp.ne.s32.totalorder %s250, %s252
      %p259 = scmp.eq.s32.totalorder %s32, 1
      %p260 = por %p258, %p259
      %p261 = scmp.ne.s32.totalorder %s252, %s253
      %p262 = scmp.eq.s32.totalorder %s32, 0
      %p263 = por %p261, %p262
      %p264 = scmp.ne.s32.totalorder %s252, %s253
      %p265 = scmp.eq.s32.totalorder %s33, 1
      %p266 = por %p264, %p265
      %p268 = scmp.ne.s32.totalorder %s253, %s267
      %p269 = scmp.eq.s32.totalorder %s33, 0
      %p270 = por %p268, %p269
      %s272 = sadd.s32 %s271, 1
      %p275 = scmp.eq.s32.totalorder %s27, 1
      %p276 = scmp.ne.s32.totalorder %s271, %s273
      %p277 = scmp.eq.s32.totalorder %s27, 0
      %p278 = por %p276, %p277
      %p279 = scmp.ne.s32.totalorder %s271, %s273
      %p280 = scmp.eq.s32.totalorder %s32, 1
      %p281 = por %p279, %p280
      %p282 = scmp.ne.s32.totalorder %s273, %s274
      %p283 = scmp.eq.s32.totalorder %s32, 0
      %p284 = por %p282, %p283
      %p285 = scmp.ne.s32.totalorder %s273, %s274
      %p286 = scmp.eq.s32.totalorder %s33, 1
      %p287 = por %p285, %p286
      %p289 = scmp.ne.s32.totalorder %s274, %s288
      %p290 = scmp.eq.s32.totalorder %s33, 0
      %p291 = por %p289, %p290
      %s293 = sadd.s32 %s292, 1
      %p296 = scmp.eq.s32.totalorder %s27, 1
      %p297 = scmp.ne.s32.totalorder %s292, %s294
      %p298 = scmp.eq.s32.totalorder %s27, 0
      %p299 = por %p297, %p298
      %p300 = scmp.ne.s32.totalorder %s292, %s294
      %p301 = scmp.eq.s32.totalorder %s32, 1
      %p302 = por %p300, %p301
      %p303 = scmp.ne.s32.totalorder %s294, %s295
      %p304 = scmp.eq.s32.totalorder %s32, 0
      %p305 = por %p303, %p304
      %p306 = scmp.ne.s32.totalorder %s294, %s295
      %p307 = scmp.eq.s32.totalorder %s33, 1
      %p308 = por %p306, %p307
      %p310 = scmp.ne.s32.totalorder %s295, %s309
      %p311 = scmp.eq.s32.totalorder %s33, 0
      %p312 = por %p310, %p311
      %s313 = ssub.s32 %s27, %s34
      %p314 = scmp.eq.s32.totalorder %s313, 0
      %s316 = sadd.s32 %s315, 1
      %s317 = scalar_select %p314, %s315, %s316
      %p320 = pneg %p314
      %p321 = scmp.eq.s32.totalorder %s27, 1
      %p322 = por %p320, %p321
      %p323 = scmp.ne.s32.totalorder %s315, %s318
      %p324 = scmp.eq.s32.totalorder %s27, 0
      %p325 = por %p323, %p324
      %p326 = scmp.ne.s32.totalorder %s315, %s318
      %p327 = scmp.eq.s32.totalorder %s32, 1
      %p328 = por %p326, %p327
      %p329 = scmp.ne.s32.totalorder %s318, %s319
      %p330 = scmp.eq.s32.totalorder %s32, 0
      %p331 = por %p329, %p330
      %p332 = scmp.ne.s32.totalorder %s318, %s319
      %p333 = scmp.eq.s32.totalorder %s33, 1
      %p334 = por %p332, %p333
      %p336 = scmp.ne.s32.totalorder %s319, %s335
      %p337 = scmp.eq.s32.totalorder %s33, 0
      %p338 = por %p336, %p337
      %p339 = scmp.le.s32.totalorder 1, %s27
      %p340 = scmp.lt.s32.totalorder %s27, 3
      %p341 = pnand %p339, %p340
      %p342 = pneg %p341
      // Predicated region
      $region9: #{tpu_custom_call.1} parent=5 // pred_check
        _
      $region10: #{tpu_custom_call.1} parent=5 // pred_check_branch
        %344 = sbr.rel (%p341) target = $region12
      $region11: #{tpu_custom_call.1} parent=5 // pred_region
        %s345 = ssub.s32 %s27, 1
        // Predicated region
        $region13: #{tpu_custom_call.1} parent=11 // pred_check
          %p346 = pneg %p74
        $region14: #{tpu_custom_call.1} parent=11 // pred_check_branch
          %348 = sbr.rel (%p346) target = $region16
        $region15: #{tpu_custom_call.1} parent=11 // pred_region
          %s350 = ssub.s32 3072, 3072
          %351 = vsyncadd [#allocation7], %s350
          %s352 = sshll.u32 [#allocation6], 4
          %s353 = int_to_ptr.vmem [resolvable:$true] %s352
          %358 = dma.hbm_to_vmem [thread:$0]  %s1, 3072, %s353, [#allocation7], 192, 192, 12
        $region16: #{tpu_custom_call.1} parent=11 // pred_fallthru
          _
        // Predicated region
        $region17: #{tpu_custom_call.1} parent=11 // pred_check
          %p359 = pneg %p95
        $region18: #{tpu_custom_call.1} parent=11 // pred_check_branch
          %361 = sbr.rel (%p359) target = $region20
        $region19: #{tpu_custom_call.1} parent=11 // pred_region
          _
        $region20: #{tpu_custom_call.1} parent=11 // pred_fallthru
          _
        // Predicated region
        $region21: #{tpu_custom_call.1} parent=11 // pred_check
          %p362 = pneg %p116
        $region22: #{tpu_custom_call.1} parent=11 // pred_check_branch
          %364 = sbr.rel (%p362) target = $region24
        $region23: #{tpu_custom_call.1} parent=11 // pred_region
          %s366 = ssub.s32 1024, 1024
          %367 = vsyncadd [#allocation7], %s366
          %s368 = sshll.u32 [#allocation8], 4
          %s369 = int_to_ptr.vmem [resolvable:$true] %s368
          %374 = dma.hbm_to_vmem [thread:$0]  %s3, 1024, %s369, [#allocation7], 64, 64, 4
        $region24: #{tpu_custom_call.1} parent=11 // pred_fallthru
          _
        // Predicated region
        $region25: #{tpu_custom_call.1} parent=11 // pred_check
          %p375 = pneg %p137
        $region26: #{tpu_custom_call.1} parent=11 // pred_check_branch
          %377 = sbr.rel (%p375) target = $region28
        $region27: #{tpu_custom_call.1} parent=11 // pred_region
          _
        $region28: #{tpu_custom_call.1} parent=11 // pred_fallthru
          _
        // Predicated region
        $region29: #{tpu_custom_call.1} parent=11 // pred_check
          %p378 = pneg %p158
        $region30: #{tpu_custom_call.1} parent=11 // pred_check_branch
          %380 = sbr.rel (%p378) target = $region32
        $region31: #{tpu_custom_call.1} parent=11 // pred_region
          _
        $region32: #{tpu_custom_call.1} parent=11 // pred_fallthru
          _
        // Predicated region
        $region33: #{tpu_custom_call.1} parent=11 // pred_check
          %p381 = pneg %p179
        $region34: #{tpu_custom_call.1} parent=11 // pred_check_branch
          %383 = sbr.rel (%p381) target = $region36
        $region35: #{tpu_custom_call.1} parent=11 // pred_region
          _
        $region36: #{tpu_custom_call.1} parent=11 // pred_fallthru
          _
        // Predicated region
        $region37: #{tpu_custom_call.1} parent=11 // pred_check
          %p384 = pneg %p200
        $region38: #{tpu_custom_call.1} parent=11 // pred_check_branch
          %386 = sbr.rel (%p384) target = $region40
        $region39: #{tpu_custom_call.1} parent=11 // pred_region
          %s388 = ssub.s32 2048, 2048
          %389 = vsyncadd [#allocation10], %s388
          %s390 = sshll.u32 [#allocation9], 4
          %s391 = int_to_ptr.vmem [resolvable:$true] %s390
          %396 = dma.hbm_to_vmem [thread:$0]  %s7, 2048, %s391, [#allocation10], 128, 128, 8
        $region40: #{tpu_custom_call.1} parent=11 // pred_fallthru
          _
        // Predicated region
        $region41: #{tpu_custom_call.1} parent=11 // pred_check
          %p397 = pneg %p221
        $region42: #{tpu_custom_call.1} parent=11 // pred_check_branch
          %399 = sbr.rel (%p397) target = $region44
        $region43: #{tpu_custom_call.1} parent=11 // pred_region
          _
        $region44: #{tpu_custom_call.1} parent=11 // pred_fallthru
          _
        // Predicated region
        $region45: #{tpu_custom_call.1} parent=11 // pred_check
          %p400 = pneg %p242
        $region46: #{tpu_custom_call.1} parent=11 // pred_check_branch
          %402 = sbr.rel (%p400) target = $region48
        $region47: #{tpu_custom_call.1} parent=11 // pred_region
          %s404 = ssub.s32 2048, 2048
          %405 = vsyncadd [#allocation10], %s404
          %s406 = sshll.u32 [#allocation11], 4
          %s407 = int_to_ptr.vmem [resolvable:$true] %s406
          %412 = dma.hbm_to_vmem [thread:$0]  %s9, 2048, %s407, [#allocation10], 64, 64, 4
        $region48: #{tpu_custom_call.1} parent=11 // pred_fallthru
          _
        // Predicated region
        $region49: #{tpu_custom_call.1} parent=11 // pred_check
          %p413 = pneg %p263
        $region50: #{tpu_custom_call.1} parent=11 // pred_check_branch
          %415 = sbr.rel (%p413) target = $region52
        $region51: #{tpu_custom_call.1} parent=11 // pred_region
          _
        $region52: #{tpu_custom_call.1} parent=11 // pred_fallthru
          _
        // Predicated region
        $region53: #{tpu_custom_call.1} parent=11 // pred_check
          %p416 = pneg %p284
        $region54: #{tpu_custom_call.1} parent=11 // pred_check_branch
          %418 = sbr.rel (%p416) target = $region56
        $region55: #{tpu_custom_call.1} parent=11 // pred_region
          _
        $region56: #{tpu_custom_call.1} parent=11 // pred_fallthru
          _
        // Predicated region
        $region57: #{tpu_custom_call.1} parent=11 // pred_check
          %p419 = pneg %p305
        $region58: #{tpu_custom_call.1} parent=11 // pred_check_branch
          %421 = sbr.rel (%p419) target = $region60
        $region59: #{tpu_custom_call.1} parent=11 // pred_region
          _
        $region60: #{tpu_custom_call.1} parent=11 // pred_fallthru
          _
      $region12: #{tpu_custom_call.1} parent=5 // pred_fallthru
        _
      %p422 = scmp.lt.s32.totalorder %s27, 2
      // Predicated region
      $region61: #{tpu_custom_call.1} parent=5 // pred_check
        %p423 = pneg %p422
      $region62: #{tpu_custom_call.1} parent=5 // pred_check_branch
        %425 = sbr.rel (%p423) target = $region64
      $region63: #{tpu_custom_call.1} parent=5 // pred_region
        // Predicated region
        $region65: #{tpu_custom_call.1} parent=63 // pred_check
          %p426 = pneg %p47
        $region66: #{tpu_custom_call.1} parent=63 // pred_check_branch
          %428 = sbr.rel (%p426) target = $region68
        $region67: #{tpu_custom_call.1} parent=63 // pred_region
          %s429 = sand.u32 %s37, 1
          %s430 = scalar_lea.sflag [#allocation4], %s429
          %s431 = sand.u32 %s37, 1
          %s432 = smul.addr %s431, 128
          %s433 = scalar_lea.vmem [#allocation3], %s432
          %s434 = smul.u32 2, %s27
          %s436 = ssub.s32 2048, 2048
          %437 = vsyncadd %s430, %s436
          %s438 = smul.addr %s434, 8
          %s439 = smul.addr %s438, 128
          %s440 = scalar_lea.hbm %s0, %s439
          %s441 = sshll.u32 %s433, 4
          %s442 = int_to_ptr.vmem [resolvable:$true] %s441
          %447 = dma.hbm_to_vmem [thread:$0]  %s440, 2048, %s442, %s430, 128, 128, 8
        $region68: #{tpu_custom_call.1} parent=63 // pred_fallthru
          _
      $region64: #{tpu_custom_call.1} parent=5 // pred_fallthru
        _
      %p448 = scmp.le.s32.totalorder 1, %s27
      %p449 = scmp.lt.s32.totalorder %s27, 3
      %p450 = pnand %p448, %p449
      %p451 = pneg %p450
      // Predicated region
      $region69: #{tpu_custom_call.1} parent=5 // pred_check
        _
      $region70: #{tpu_custom_call.1} parent=5 // pred_check_branch
        %453 = sbr.rel (%p450) target = $region72
      $region71: #{tpu_custom_call.1} parent=5 // pred_region
        %s454 = ssub.s32 %s27, 1
        %s455 = sand.u32 %s40, 1
        %s456 = scalar_lea.sflag [#allocation4], %s455
        %s457 = sand.u32 %s40, 1
        %s458 = smul.addr %s457, 128
        %s459 = scalar_lea.vmem [#allocation3], %s458
        // Predicated region
        $region73: #{tpu_custom_call.1} parent=71 // pred_check
          %p460 = pneg %p53
        $region74: #{tpu_custom_call.1} parent=71 // pred_check_branch
          %462 = sbr.rel (%p460) target = $region76
        $region75: #{tpu_custom_call.1} parent=71 // pred_region
          %463 = dma.done %s456, 2048
        $region76: #{tpu_custom_call.1} parent=71 // pred_fallthru
          _
        // Predicated region
        $region77: #{tpu_custom_call.1} parent=71 // pred_check
          %p464 = pneg %p74
        $region78: #{tpu_custom_call.1} parent=71 // pred_check_branch
          %466 = sbr.rel (%p464) target = $region80
        $region79: #{tpu_custom_call.1} parent=71 // pred_region
          %467 = dma.done [#allocation7], 3072
        $region80: #{tpu_custom_call.1} parent=71 // pred_fallthru
          _
        // Predicated region
        $region81: #{tpu_custom_call.1} parent=71 // pred_check
          %p468 = pneg %p116
        $region82: #{tpu_custom_call.1} parent=71 // pred_check_branch
          %470 = sbr.rel (%p468) target = $region84
        $region83: #{tpu_custom_call.1} parent=71 // pred_region
          %471 = dma.done [#allocation7], 1024
        $region84: #{tpu_custom_call.1} parent=71 // pred_fallthru
          _
        // Predicated region
        $region85: #{tpu_custom_call.1} parent=71 // pred_check
          %p472 = pneg %p200
        $region86: #{tpu_custom_call.1} parent=71 // pred_check_branch
          %474 = sbr.rel (%p472) target = $region88
        $region87: #{tpu_custom_call.1} parent=71 // pred_region
          %475 = dma.done [#allocation10], 2048
        $region88: #{tpu_custom_call.1} parent=71 // pred_fallthru
          _
        // Predicated region
        $region89: #{tpu_custom_call.1} parent=71 // pred_check
          %p476 = pneg %p242
        $region90: #{tpu_custom_call.1} parent=71 // pred_check_branch
          %478 = sbr.rel (%p476) target = $region92
        $region91: #{tpu_custom_call.1} parent=71 // pred_region
          %479 = dma.done [#allocation10], 2048
        $region92: #{tpu_custom_call.1} parent=71 // pred_fallthru
          _
        %s480 = sand.u32 %s40, 1
        %s481 = scalar_lea.sflag [#allocation4], %s480
        %s482 = sand.u32 %s40, 1
        %s483 = smul.addr %s482, 128
        %s484 = scalar_lea.vmem [#allocation3], %s483
        %p485 = pneg %p53
        %p486 = pneg %p50
        %p487 = pneg %p74
        %p488 = pneg %p71
        %p489 = pneg %p95
        %p490 = pneg %p92
        %p491 = pneg %p116
        %p492 = pneg %p113
        %p493 = pneg %p137
        %p494 = pneg %p134
        %p495 = pneg %p158
        %p496 = pneg %p155
        %p497 = pneg %p179
        %p498 = pneg %p176
        %p499 = pneg %p200
        %p500 = pneg %p197
        %p501 = pneg %p221
        %p502 = pneg %p218
        %p503 = pneg %p242
        %p504 = pneg %p239
        %p505 = pneg %p263
        %p506 = pneg %p260
        %p507 = pneg %p284
        %p508 = pneg %p281
        %p509 = pneg %p305
        %p510 = pneg %p302
        %p511 = pneg %p331
        %p512 = pneg %p328
        %s513 = sand.u32 %s318, 1
        %s514 = scalar_lea.sflag [#allocation5], %s513
        %s515 = sand.u32 %s318, 1
        %s516 = smul.addr %s515, 128
        %s517 = scalar_lea.vmem [#allocation12], %s516
        %s518 = smul.u32 2, %s32
        %s519 = smul.u32 2, %s32
        %v521 = vld [vmem:[%s459] sm:$0xff]
        %v522 = vld [vmem:[%s459 + $0x8] sm:$0xff]
        %v523 = vld [vmem:[%s459 + $0x10] sm:$0xff]
        %v524 = vld [vmem:[%s459 + $0x18] sm:$0xff]
        %v525 = vld [vmem:[%s459 + $0x20] sm:$0xff]
        %v526 = vld [vmem:[%s459 + $0x28] sm:$0xff]
        %v527 = vld [vmem:[%s459 + $0x30] sm:$0xff]
        %v528 = vld [vmem:[%s459 + $0x38] sm:$0xff]
        %v529 = vld [vmem:[%s459 + $0x40] sm:$0xff]
        %v530 = vld [vmem:[%s459 + $0x48] sm:$0xff]
        %v531 = vld [vmem:[%s459 + $0x50] sm:$0xff]
        %v532 = vld [vmem:[%s459 + $0x58] sm:$0xff]
        %v533 = vld [vmem:[%s459 + $0x60] sm:$0xff]
        %v534 = vld [vmem:[%s459 + $0x68] sm:$0xff]
        %v535 = vld [vmem:[%s459 + $0x70] sm:$0xff]
        %v536 = vld [vmem:[%s459 + $0x78] sm:$0xff]
        %v537 = vpack.c.bf16 %v522, %v521
        %v538 = vpack.c.bf16 %v524, %v523
        %v539 = vpack.c.bf16 %v526, %v525
        %v540 = vpack.c.bf16 %v528, %v527
        %v541 = vpack.c.bf16 %v530, %v529
        %v542 = vpack.c.bf16 %v532, %v531
        %v543 = vpack.c.bf16 %v534, %v533
        %v544 = vpack.c.bf16 %v536, %v535
        %v545 = vld [vmem:[#allocation6] sm:$0xff]
        %v546 = vld [vmem:[#allocation6 + $0x8] sm:$0xf]
        %v547 = vld [vmem:[#allocation6 + $0xc] sm:$0xff]
        %v548 = vld [vmem:[#allocation6 + $0x14] sm:$0xf]
        %v549 = vld [vmem:[#allocation6 + $0x18] sm:$0xff]
        %v550 = vld [vmem:[#allocation6 + $0x20] sm:$0xf]
        %v551 = vld [vmem:[#allocation6 + $0x24] sm:$0xff]
        %v552 = vld [vmem:[#allocation6 + $0x2c] sm:$0xf]
        %v553 = vld [vmem:[#allocation6 + $0x30] sm:$0xff]
        %v554 = vld [vmem:[#allocation6 + $0x38] sm:$0xf]
        %v555 = vld [vmem:[#allocation6 + $0x3c] sm:$0xff]
        %v556 = vld [vmem:[#allocation6 + $0x44] sm:$0xf]
        %v557 = vld [vmem:[#allocation6 + $0x48] sm:$0xff]
        %v558 = vld [vmem:[#allocation6 + $0x50] sm:$0xf]
        %v559 = vld [vmem:[#allocation6 + $0x54] sm:$0xff]
        %v560 = vld [vmem:[#allocation6 + $0x5c] sm:$0xf]
        %v561 = vld [vmem:[#allocation6 + $0x60] sm:$0xff]
        %v562 = vld [vmem:[#allocation6 + $0x68] sm:$0xf]
        %v563 = vld [vmem:[#allocation6 + $0x6c] sm:$0xff]
        %v564 = vld [vmem:[#allocation6 + $0x74] sm:$0xf]
        %v565 = vld [vmem:[#allocation6 + $0x78] sm:$0xff]
        %v566 = vld [vmem:[#allocation6 + $0x80] sm:$0xf]
        %v567 = vld [vmem:[#allocation6 + $0x84] sm:$0xff]
        %v568 = vld [vmem:[#allocation6 + $0x8c] sm:$0xf]
        %v569 = vld [vmem:[#allocation6 + $0x90] sm:$0xff]
        %v570 = vld [vmem:[#allocation6 + $0x98] sm:$0xf]
        %v571 = vld [vmem:[#allocation6 + $0x9c] sm:$0xff]
        %v572 = vld [vmem:[#allocation6 + $0xa4] sm:$0xf]
        %v573 = vld [vmem:[#allocation6 + $0xa8] sm:$0xff]
        %v574 = vld [vmem:[#allocation6 + $0xb0] sm:$0xf]
        %v575 = vld [vmem:[#allocation6 + $0xb4] sm:$0xff]
        %v576 = vld [vmem:[#allocation6 + $0xbc] sm:$0xf]
        %v577 = vld [vmem:[%s2] sm:$0x7]
        %v579 = vlaneseq
        %v580 = vshrl.u32 %v579, 7
        %v581 = vsub.s32 0, %v580
        %v582 = vrot.slane %v577, %v581
        %v583 = vlaneseq
        %v584 = vshrl.u32 %v583, 7
        %v585 = vsub.s32 1, %v584
        %v586 = vrot.slane %v577, %v585
        %v587 = vlaneseq
        %v588 = vshrl.u32 %v587, 7
        %v589 = vsub.s32 2, %v588
        %v590 = vrot.slane %v577, %v589
        %v626 = vunpack.c.l.b16 %v545
        %v627 = vunpack.c.h.b16 %v545
        %v628 = vunpack.c.l.b16 %v546
        %v629 = vunpack.c.l.b16 %v547
        %v630 = vunpack.c.h.b16 %v547
        %v631 = vunpack.c.l.b16 %v548
        %v632 = vunpack.c.l.b16 %v549
        %v633 = vunpack.c.h.b16 %v549
        %v634 = vunpack.c.l.b16 %v550
        %v635 = vunpack.c.l.b16 %v551
        %v636 = vunpack.c.h.b16 %v551
        %v637 = vunpack.c.l.b16 %v552
        %v638 = vunpack.c.l.b16 %v553
        %v639 = vunpack.c.h.b16 %v553
        %v640 = vunpack.c.l.b16 %v554
        %v641 = vunpack.c.l.b16 %v555
        %v642 = vunpack.c.h.b16 %v555
        %v643 = vunpack.c.l.b16 %v556
        %v644 = vunpack.c.l.b16 %v557
        %v645 = vunpack.c.h.b16 %v557
        %v646 = vunpack.c.l.b16 %v558
        %v647 = vunpack.c.l.b16 %v559
        %v648 = vunpack.c.h.b16 %v559
        %v649 = vunpack.c.l.b16 %v560
        %v650 = vunpack.c.l.b16 %v561
        %v651 = vunpack.c.h.b16 %v561
        %v652 = vunpack.c.l.b16 %v562
        %v653 = vunpack.c.l.b16 %v563
        %v654 = vunpack.c.h.b16 %v563
        %v655 = vunpack.c.l.b16 %v564
        %v656 = vunpack.c.l.b16 %v565
        %v657 = vunpack.c.h.b16 %v565
        %v658 = vunpack.c.l.b16 %v566
        %v659 = vunpack.c.l.b16 %v567
        %v660 = vunpack.c.h.b16 %v567
        %v661 = vunpack.c.l.b16 %v568
        %v662 = vunpack.c.l.b16 %v569
        %v663 = vunpack.c.h.b16 %v569
        %v664 = vunpack.c.l.b16 %v570
        %v665 = vunpack.c.l.b16 %v571
        %v666 = vunpack.c.h.b16 %v571
        %v667 = vunpack.c.l.b16 %v572
        %v668 = vunpack.c.l.b16 %v573
        %v669 = vunpack.c.h.b16 %v573
        %v670 = vunpack.c.l.b16 %v574
        %v671 = vunpack.c.l.b16 %v575
        %v672 = vunpack.c.h.b16 %v575
        %v673 = vunpack.c.l.b16 %v576
        %v674 = vpack.c.b16 %v629, %v626
        %v675 = vpack.c.b16 %v630, %v627
        %v676 = vpack.c.b16 %v631, %v628
        %v677 = vpack.c.b16 %v635, %v632
        %v678 = vpack.c.b16 %v636, %v633
        %v679 = vpack.c.b16 %v637, %v634
        %v680 = vpack.c.b16 %v641, %v638
        %v681 = vpack.c.b16 %v642, %v639
        %v682 = vpack.c.b16 %v643, %v640
        %v683 = vpack.c.b16 %v647, %v644
        %v684 = vpack.c.b16 %v648, %v645
        %v685 = vpack.c.b16 %v649, %v646
        %v686 = vpack.c.b16 %v653, %v650
        %v687 = vpack.c.b16 %v654, %v651
        %v688 = vpack.c.b16 %v655, %v652
        %v689 = vpack.c.b16 %v659, %v656
        %v690 = vpack.c.b16 %v660, %v657
        %v691 = vpack.c.b16 %v661, %v658
        %v692 = vpack.c.b16 %v665, %v662
        %v693 = vpack.c.b16 %v666, %v663
        %v694 = vpack.c.b16 %v667, %v664
        %v695 = vpack.c.b16 %v671, %v668
        %v696 = vpack.c.b16 %v672, %v669
        %v697 = vpack.c.b16 %v673, %v670
        %722 = vmatprep.subr.bf16.mxu0 %v675
        %723 = vmatpush1.bf16.msra.mxu0 %v674
        %724 = vmatprep.subr.bf16.mxu0 %v678
        %725 = vmatpush1.bf16.msra.mxu0 %v677
        %726 = vmatprep.subr.bf16.mxu0 %v681
        %727 = vmatpush1.bf16.msra.mxu0 %v680
        %728 = vmatprep.subr.bf16.mxu0 %v684
        %729 = vmatpush1.bf16.msra.mxu0 %v683
        %730 = vmatprep.subr.bf16.mxu0 %v687
        %731 = vmatpush1.bf16.msra.mxu0 %v686
        %732 = vmatprep.subr.bf16.mxu0 %v690
        %733 = vmatpush1.bf16.msra.mxu0 %v689
        %734 = vmatprep.subr.bf16.mxu0 %v693
        %735 = vmatpush1.bf16.msra.mxu0 %v692
        %736 = vmatprep.subr.bf16.mxu0 %v696
        %737 = vmatpush1.bf16.msra.mxu0 %v695
        %738 = vmatprep.subr.bf16.mxu0 0
        %739 = vmatpush1.bf16.msra.mxu0 0
        %740 = vmatprep.subr.bf16.mxu0 0
        %741 = vmatpush1.bf16.msra.mxu0 0
        %742 = vmatprep.subr.bf16.mxu0 0
        %743 = vmatpush1.bf16.msra.mxu0 0
        %744 = vmatprep.subr.bf16.mxu0 0
        %745 = vmatpush1.bf16.msra.mxu0 0
        %746 = vmatprep.subr.bf16.mxu0 0
        %747 = vmatpush1.bf16.msra.mxu0 0
        %748 = vmatprep.subr.bf16.mxu0 0
        %749 = vmatpush1.bf16.msra.mxu0 0
        %750 = vmatprep.subr.bf16.mxu0 0
        %751 = vmatpush1.bf16.msra.mxu0 0
        %752 = vmatprep.subr.bf16.mxu0 0
        %753 = vmatpush1.bf16.msra.mxu0 0
        %754 = vmatprep.mubr.bf16.mxu0 0
        %755 = vmatmul.mubr.bf16.gmra.mrb[0].mxu0 %v537
        %v756 = vpop.f32.mrb[0].mxu0
        %v757 = vadd.f32 %v582, %v756
        %v758 = vpop.f32.mrb[0].mxu0
        %v759 = vadd.f32 %v586, %v758
        %v760 = vpop.f32.mrb[0].mxu0
        %v761 = vadd.f32 %v582, %v760
        %v762 = vpop.f32.mrb[0].mxu0
        %v763 = vadd.f32 %v586, %v762
        %764 = vmatprep.mubr.bf16.mxu0 0
        %765 = vmatmul.mubr.bf16.gmra.mrb[0].mxu0 %v538
        %v766 = vpop.f32.mrb[0].mxu0
        %v767 = vadd.f32 %v582, %v766
        %v768 = vpop.f32.mrb[0].mxu0
        %v769 = vadd.f32 %v586, %v768
        %v770 = vpop.f32.mrb[0].mxu0
        %v771 = vadd.f32 %v582, %v770
        %v772 = vpop.f32.mrb[0].mxu0
        %v773 = vadd.f32 %v586, %v772
        %774 = vmatprep.mubr.bf16.mxu0 0
        %775 = vmatmul.mubr.bf16.gmra.mrb[0].mxu0 %v539
        %v776 = vpop.f32.mrb[0].mxu0
        %v777 = vadd.f32 %v582, %v776
        %v778 = vpop.f32.mrb[0].mxu0
        %v779 = vadd.f32 %v586, %v778
        %v780 = vpop.f32.mrb[0].mxu0
        %v781 = vadd.f32 %v582, %v780
        %v782 = vpop.f32.mrb[0].mxu0
        %v783 = vadd.f32 %v586, %v782
        %784 = vmatprep.mubr.bf16.mxu0 0
        %785 = vmatmul.mubr.bf16.gmra.mrb[0].mxu0 %v540
        %v786 = vpop.f32.mrb[0].mxu0
        %v787 = vadd.f32 %v582, %v786
        %v788 = vpop.f32.mrb[0].mxu0
        %v789 = vadd.f32 %v586, %v788
        %v790 = vpop.f32.mrb[0].mxu0
        %v791 = vadd.f32 %v582, %v790
        %v792 = vpop.f32.mrb[0].mxu0
        %v793 = vadd.f32 %v586, %v792
        %794 = vmatprep.mubr.bf16.mxu0 0
        %795 = vmatmul.mubr.bf16.gmra.mrb[0].mxu0 %v541
        %v796 = vpop.f32.mrb[0].mxu0
        %v797 = vadd.f32 %v582, %v796
        %v798 = vpop.f32.mrb[0].mxu0
        %v799 = vadd.f32 %v586, %v798
        %v800 = vpop.f32.mrb[0].mxu0
        %v801 = vadd.f32 %v582, %v800
        %v802 = vpop.f32.mrb[0].mxu0
        %v803 = vadd.f32 %v586, %v802
        %804 = vmatprep.mubr.bf16.mxu0 0
        %805 = vmatmul.mubr.bf16.gmra.mrb[0].mxu0 %v542
        %v806 = vpop.f32.mrb[0].mxu0
        %v807 = vadd.f32 %v582, %v806
        %v808 = vpop.f32.mrb[0].mxu0
        %v809 = vadd.f32 %v586, %v808
        %v810 = vpop.f32.mrb[0].mxu0
        %v811 = vadd.f32 %v582, %v810
        %v812 = vpop.f32.mrb[0].mxu0
        %v813 = vadd.f32 %v586, %v812
        %814 = vmatprep.mubr.bf16.mxu0 0
        %815 = vmatmul.mubr.bf16.gmra.mrb[0].mxu0 %v543
        %v816 = vpop.f32.mrb[0].mxu0
        %v817 = vadd.f32 %v582, %v816
        %v818 = vpop.f32.mrb[0].mxu0
        %v819 = vadd.f32 %v586, %v818
        %v820 = vpop.f32.mrb[0].mxu0
        %v821 = vadd.f32 %v582, %v820
        %v822 = vpop.f32.mrb[0].mxu0
        %v823 = vadd.f32 %v586, %v822
        %824 = vmatprep.mubr.bf16.mxu0 0
        %825 = vmatmul.mubr.bf16.gmra.mrb[0].mxu0 %v544
        %v826 = vpop.f32.mrb[0].mxu0
        %v827 = vadd.f32 %v582, %v826
        %v828 = vpop.f32.mrb[0].mxu0
        %v829 = vadd.f32 %v586, %v828
        %v830 = vpop.f32.mrb[0].mxu0
        %v831 = vadd.f32 %v582, %v830
        %v832 = vpop.f32.mrb[0].mxu0
        %v833 = vadd.f32 %v586, %v832
        %834 = vdwg.mxu0
        %835 = vmatprep.subr.bf16.mxu0 0
        %836 = vmatpush1.bf16.msra.mxu0 %v676
        %837 = vmatprep.subr.bf16.mxu0 0
        %838 = vmatpush1.bf16.msra.mxu0 %v679
        %839 = vmatprep.subr.bf16.mxu0 0
        %840 = vmatpush1.bf16.msra.mxu0 %v682
        %841 = vmatprep.subr.bf16.mxu0 0
        %842 = vmatpush1.bf16.msra.mxu0 %v685
        %843 = vmatprep.subr.bf16.mxu0 0
        %844 = vmatpush1.bf16.msra.mxu0 %v688
        %845 = vmatprep.subr.bf16.mxu0 0
        %846 = vmatpush1.bf16.msra.mxu0 %v691
        %847 = vmatprep.subr.bf16.mxu0 0
        %848 = vmatpush1.bf16.msra.mxu0 %v694
        %849 = vmatprep.subr.bf16.mxu0 0
        %850 = vmatpush1.bf16.msra.mxu0 %v697
        %851 = vmatprep.subr.bf16.mxu0 0
        %852 = vmatpush1.bf16.msra.mxu0 0
        %853 = vmatprep.subr.bf16.mxu0 0
        %854 = vmatpush1.bf16.msra.mxu0 0
        %855 = vmatprep.subr.bf16.mxu0 0
        %856 = vmatpush1.bf16.msra.mxu0 0
        %857 = vmatprep.subr.bf16.mxu0 0
        %858 = vmatpush1.bf16.msra.mxu0 0
        %859 = vmatprep.subr.bf16.mxu0 0
        %860 = vmatpush1.bf16.msra.mxu0 0
        %861 = vmatprep.subr.bf16.mxu0 0
        %862 = vmatpush1.bf16.msra.mxu0 0
        %863 = vmatprep.subr.bf16.mxu0 0
        %864 = vmatpush1.bf16.msra.mxu0 0
        %865 = vmatprep.subr.bf16.mxu0 0
        %866 = vmatpush1.bf16.msra.mxu0 0
        %867 = vmatprep.mubr.bf16.mxu0 0
        %868 = vmatmul.mubr.bf16.gmra.mrb[0].mxu0 %v537
        %v869 = vpop.f32.mrb[0].mxu0
        %v870 = vadd.f32 %v590, %v869
        %v871 = vpop.f32.mrb[0].mxu0
        %v872 = vpop.f32.mrb[0].mxu0
        %v873 = vadd.f32 %v590, %v872
        %v874 = vpop.f32.mrb[0].mxu0
        %875 = vmatprep.mubr.bf16.mxu0 0
        %876 = vmatmul.mubr.bf16.gmra.mrb[0].mxu0 %v538
        %v877 = vpop.f32.mrb[0].mxu0
        %v878 = vadd.f32 %v590, %v877
        %v879 = vpop.f32.mrb[0].mxu0
        %v880 = vpop.f32.mrb[0].mxu0
        %v881 = vadd.f32 %v590, %v880
        %v882 = vpop.f32.mrb[0].mxu0
        %883 = vmatprep.mubr.bf16.mxu0 0
        %884 = vmatmul.mubr.bf16.gmra.mrb[0].mxu0 %v539
        %v885 = vpop.f32.mrb[0].mxu0
        %v886 = vadd.f32 %v590, %v885
        %v887 = vpop.f32.mrb[0].mxu0
        %v888 = vpop.f32.mrb[0].mxu0
        %v889 = vadd.f32 %v590, %v888
        %v890 = vpop.f32.mrb[0].mxu0
        %891 = vmatprep.mubr.bf16.mxu0 0
        %892 = vmatmul.mubr.bf16.gmra.mrb[0].mxu0 %v540
        %v893 = vpop.f32.mrb[0].mxu0
        %v894 = vadd.f32 %v590, %v893
        %v895 = vpop.f32.mrb[0].mxu0
        %v896 = vpop.f32.mrb[0].mxu0
        %v897 = vadd.f32 %v590, %v896
        %v898 = vpop.f32.mrb[0].mxu0
        %899 = vmatprep.mubr.bf16.mxu0 0
        %900 = vmatmul.mubr.bf16.gmra.mrb[0].mxu0 %v541
        %v901 = vpop.f32.mrb[0].mxu0
        %v902 = vadd.f32 %v590, %v901
        %v903 = vpop.f32.mrb[0].mxu0
        %v904 = vpop.f32.mrb[0].mxu0
        %v905 = vadd.f32 %v590, %v904
        %v906 = vpop.f32.mrb[0].mxu0
        %907 = vmatprep.mubr.bf16.mxu0 0
        %908 = vmatmul.mubr.bf16.gmra.mrb[0].mxu0 %v542
        %v909 = vpop.f32.mrb[0].mxu0
        %v910 = vadd.f32 %v590, %v909
        %v911 = vpop.f32.mrb[0].mxu0
        %v912 = vpop.f32.mrb[0].mxu0
        %v913 = vadd.f32 %v590, %v912
        %v914 = vpop.f32.mrb[0].mxu0
        %915 = vmatprep.mubr.bf16.mxu0 0
        %916 = vmatmul.mubr.bf16.gmra.mrb[0].mxu0 %v543
        %v917 = vpop.f32.mrb[0].mxu0
        %v918 = vadd.f32 %v590, %v917
        %v919 = vpop.f32.mrb[0].mxu0
        %v920 = vpop.f32.mrb[0].mxu0
        %v921 = vadd.f32 %v590, %v920
        %v922 = vpop.f32.mrb[0].mxu0
        %923 = vmatprep.mubr.bf16.mxu0 0
        %924 = vmatmul.mubr.bf16.gmra.mrb[0].mxu0 %v544
        %v925 = vpop.f32.mrb[0].mxu0
        %v926 = vadd.f32 %v590, %v925
        %v927 = vpop.f32.mrb[0].mxu0
        %v928 = vpop.f32.mrb[0].mxu0
        %v929 = vadd.f32 %v590, %v928
        %v930 = vpop.f32.mrb[0].mxu0
        %931 = vdwg.mxu0
        %v932 = vpack.c.bf16 %v761, %v757
        %v933 = vpack.c.bf16 %v763, %v759
        %v934 = vpack.c.bf16 %v873, %v870
        %v935 = vpack.c.bf16 %v771, %v767
        %v936 = vpack.c.bf16 %v773, %v769
        %v937 = vpack.c.bf16 %v881, %v878
        %v938 = vpack.c.bf16 %v781, %v777
        %v939 = vpack.c.bf16 %v783, %v779
        %v940 = vpack.c.bf16 %v889, %v886
        %v941 = vpack.c.bf16 %v791, %v787
        %v942 = vpack.c.bf16 %v793, %v789
        %v943 = vpack.c.bf16 %v897, %v894
        %v944 = vpack.c.bf16 %v801, %v797
        %v945 = vpack.c.bf16 %v803, %v799
        %v946 = vpack.c.bf16 %v905, %v902
        %v947 = vpack.c.bf16 %v811, %v807
        %v948 = vpack.c.bf16 %v813, %v809
        %v949 = vpack.c.bf16 %v913, %v910
        %v950 = vpack.c.bf16 %v821, %v817
        %v951 = vpack.c.bf16 %v823, %v819
        %v952 = vpack.c.bf16 %v921, %v918
        %v953 = vpack.c.bf16 %v831, %v827
        %v954 = vpack.c.bf16 %v833, %v829
        %v955 = vpack.c.bf16 %v929, %v926
        %vm956 = vcmask 261120
        %v958 = vsel %vm956, %v932, 0
        %v961 = vsel %vm956, %v935, 0
        %v964 = vsel %vm956, %v938, 0
        %v967 = vsel %vm956, %v941, 0
        %v970 = vsel %vm956, %v933, 0
        %v973 = vsel %vm956, %v936, 0
        %v976 = vsel %vm956, %v939, 0
        %v979 = vsel %vm956, %v942, 0
        %981 = vmatprep.subr.bf16.mxu0 0
        %982 = vmatpush1.bf16.xpose.msra.mxu0 %v970
        %983 = vmatprep.subr.bf16.mxu0 0
        %984 = vmatpush1.bf16.xpose.msra.mxu0 %v973
        %985 = vmatprep.subr.bf16.mxu0 0
        %986 = vmatpush1.bf16.xpose.msra.mxu0 %v976
        %987 = vmatprep.subr.bf16.mxu0 0
        %988 = vmatpush1.bf16.xpose.msra.mxu0 %v979
        %989 = vmatprep.subr.bf16.mxu0 0
        %990 = vmatpush1.bf16.xpose.msra.mxu0 0
        %991 = vmatprep.subr.bf16.mxu0 0
        %992 = vmatpush1.bf16.xpose.msra.mxu0 0
        %993 = vmatprep.subr.bf16.mxu0 0
        %994 = vmatpush1.bf16.xpose.msra.mxu0 0
        %995 = vmatprep.subr.bf16.mxu0 0
        %996 = vmatpush1.bf16.xpose.msra.mxu0 0
        %997 = vmatprep.subr.bf16.mxu0 0
        %998 = vmatpush1.bf16.xpose.msra.mxu0 0
        %999 = vmatprep.subr.bf16.mxu0 0
        %1000 = vmatpush1.bf16.xpose.msra.mxu0 0
        %1001 = vmatprep.subr.bf16.mxu0 0
        %1002 = vmatpush1.bf16.xpose.msra.mxu0 0
        %1003 = vmatprep.subr.bf16.mxu0 0
        %1004 = vmatpush1.bf16.xpose.msra.mxu0 0
        %1005 = vmatprep.subr.bf16.mxu0 0
        %1006 = vmatpush1.bf16.xpose.msra.mxu0 0
        %1007 = vmatprep.subr.bf16.mxu0 0
        %1008 = vmatpush1.bf16.xpose.msra.mxu0 0
        %1009 = vmatprep.subr.bf16.mxu0 0
        %1010 = vmatpush1.bf16.xpose.msra.mxu0 0
        %1011 = vmatprep.subr.bf16.mxu0 0
        %1012 = vmatpush1.bf16.xpose.msra.mxu0 0
        %1013 = vmatprep.mubr.bf16.mxu0 0
        %1014 = vmatmul.mubr.bf16.gmra.mrb[0].mxu0 %v958
        %v1015 = vpop.f32.mrb[0].mxu0
        %v1016 = vadd.f32 0.0, %v1015
        %v1017 = vpop.f32.mrb[0].mxu0
        %v1018 = vpop.f32.mrb[0].mxu0
        %v1019 = vadd.f32 0.0, %v1018
        %v1020 = vpop.f32.mrb[0].mxu0
        %1021 = vmatprep.mubr.bf16.mxu0 0
        %1022 = vmatmul.mubr.bf16.gmra.mrb[0].mxu0 %v961
        %v1023 = vpop.f32.mrb[0].mxu0
        %v1024 = vadd.f32 0.0, %v1023
        %v1025 = vpop.f32.mrb[0].mxu0
        %v1026 = vpop.f32.mrb[0].mxu0
        %v1027 = vadd.f32 0.0, %v1026
        %v1028 = vpop.f32.mrb[0].mxu0
        %1029 = vmatprep.mubr.bf16.mxu0 0
        %1030 = vmatmul.mubr.bf16.gmra.mrb[0].mxu0 %v964
        %v1031 = vpop.f32.mrb[0].mxu0
        %v1032 = vadd.f32 0.0, %v1031
        %v1033 = vpop.f32.mrb[0].mxu0
        %v1034 = vpop.f32.mrb[0].mxu0
        %v1035 = vadd.f32 0.0, %v1034
        %v1036 = vpop.f32.mrb[0].mxu0
        %1037 = vmatprep.mubr.bf16.mxu0 0
        %1038 = vmatmul.mubr.bf16.gmra.mrb[0].mxu0 %v967
        %v1039 = vpop.f32.mrb[0].mxu0
        %v1040 = vadd.f32 0.0, %v1039
        %v1041 = vpop.f32.mrb[0].mxu0
        %v1042 = vpop.f32.mrb[0].mxu0
        %v1043 = vadd.f32 0.0, %v1042
        %v1044 = vpop.f32.mrb[0].mxu0
        %1045 = vdwg.mxu0
        %v1047 = vsel %vm956, %v944, 0
        %v1050 = vsel %vm956, %v947, 0
        %v1053 = vsel %vm956, %v950, 0
        %v1056 = vsel %vm956, %v953, 0
        %v1059 = vsel %vm956, %v945, 0
        %v1062 = vsel %vm956, %v948, 0
        %v1065 = vsel %vm956, %v951, 0
        %v1068 = vsel %vm956, %v954, 0
        %1070 = vmatprep.subr.bf16.mxu0 0
        %1071 = vmatpush1.bf16.xpose.msra.mxu0 %v1059
        %1072 = vmatprep.subr.bf16.mxu0 0
        %1073 = vmatpush1.bf16.xpose.msra.mxu0 %v1062
        %1074 = vmatprep.subr.bf16.mxu0 0
        %1075 = vmatpush1.bf16.xpose.msra.mxu0 %v1065
        %1076 = vmatprep.subr.bf16.mxu0 0
        %1077 = vmatpush1.bf16.xpose.msra.mxu0 %v1068
        %1078 = vmatprep.subr.bf16.mxu0 0
        %1079 = vmatpush1.bf16.xpose.msra.mxu0 0
        %1080 = vmatprep.subr.bf16.mxu0 0
        %1081 = vmatpush1.bf16.xpose.msra.mxu0 0
        %1082 = vmatprep.subr.bf16.mxu0 0
        %1083 = vmatpush1.bf16.xpose.msra.mxu0 0
        %1084 = vmatprep.subr.bf16.mxu0 0
        %1085 = vmatpush1.bf16.xpose.msra.mxu0 0
        %1086 = vmatprep.subr.bf16.mxu0 0
        %1087 = vmatpush1.bf16.xpose.msra.mxu0 0
        %1088 = vmatprep.subr.bf16.mxu0 0
        %1089 = vmatpush1.bf16.xpose.msra.mxu0 0
        %1090 = vmatprep.subr.bf16.mxu0 0
        %1091 = vmatpush1.bf16.xpose.msra.mxu0 0
        %1092 = vmatprep.subr.bf16.mxu0 0
        %1093 = vmatpush1.bf16.xpose.msra.mxu0 0
        %1094 = vmatprep.subr.bf16.mxu0 0
        %1095 = vmatpush1.bf16.xpose.msra.mxu0 0
        %1096 = vmatprep.subr.bf16.mxu0 0
        %1097 = vmatpush1.bf16.xpose.msra.mxu0 0
        %1098 = vmatprep.subr.bf16.mxu0 0
        %1099 = vmatpush1.bf16.xpose.msra.mxu0 0
        %1100 = vmatprep.subr.bf16.mxu0 0
        %1101 = vmatpush1.bf16.xpose.msra.mxu0 0
        %1102 = vmatprep.mubr.bf16.mxu0 0
        %1103 = vmatmul.mubr.bf16.gmra.mrb[0].mxu0 %v1047
        %v1104 = vpop.f32.mrb[0].mxu0
        %v1105 = vadd.f32 0.0, %v1104
        %v1106 = vpop.f32.mrb[0].mxu0
        %v1107 = vpop.f32.mrb[0].mxu0
        %v1108 = vadd.f32 0.0, %v1107
        %v1109 = vpop.f32.mrb[0].mxu0
        %1110 = vmatprep.mubr.bf16.mxu0 0
        %1111 = vmatmul.mubr.bf16.gmra.mrb[0].mxu0 %v1050
        %v1112 = vpop.f32.mrb[0].mxu0
        %v1113 = vadd.f32 0.0, %v1112
        %v1114 = vpop.f32.mrb[0].mxu0
        %v1115 = vpop.f32.mrb[0].mxu0
        %v1116 = vadd.f32 0.0, %v1115
        %v1117 = vpop.f32.mrb[0].mxu0
        %1118 = vmatprep.mubr.bf16.mxu0 0
        %1119 = vmatmul.mubr.bf16.gmra.mrb[0].mxu0 %v1053
        %v1120 = vpop.f32.mrb[0].mxu0
        %v1121 = vadd.f32 0.0, %v1120
        %v1122 = vpop.f32.mrb[0].mxu0
        %v1123 = vpop.f32.mrb[0].mxu0
        %v1124 = vadd.f32 0.0, %v1123
        %v1125 = vpop.f32.mrb[0].mxu0
        %1126 = vmatprep.mubr.bf16.mxu0 0
        %1127 = vmatmul.mubr.bf16.gmra.mrb[0].mxu0 %v1056
        %v1128 = vpop.f32.mrb[0].mxu0
        %v1129 = vadd.f32 0.0, %v1128
        %v1130 = vpop.f32.mrb[0].mxu0
        %v1131 = vpop.f32.mrb[0].mxu0
        %v1132 = vadd.f32 0.0, %v1131
        %v1133 = vpop.f32.mrb[0].mxu0
        %1134 = vdwg.mxu0
        %vm1135 = vcmask 523264
        %v1136 = vsel %vm1135, %v1016, -inf
        %1137 = vmax.xlane.f32.xlu0 %v1136
        %v1138 = vpop.xlane.xlu0 %1137
        %v1139 = vsel %vm1135, %v1019, -inf
        %1140 = vmax.xlane.f32.xlu0 %v1139
        %v1141 = vpop.xlane.xlu0 %1140
        %v1142 = vsel %vm1135, %v1024, -inf
        %1143 = vmax.xlane.f32.xlu0 %v1142
        %v1144 = vpop.xlane.xlu0 %1143
        %v1145 = vsel %vm1135, %v1027, -inf
        %1146 = vmax.xlane.f32.xlu0 %v1145
        %v1147 = vpop.xlane.xlu0 %1146
        %v1148 = vsel %vm1135, %v1032, -inf
        %1149 = vmax.xlane.f32.xlu0 %v1148
        %v1150 = vpop.xlane.xlu0 %1149
        %v1151 = vsel %vm1135, %v1035, -inf
        %1152 = vmax.xlane.f32.xlu0 %v1151
        %v1153 = vpop.xlane.xlu0 %1152
        %v1154 = vsel %vm1135, %v1040, -inf
        %1155 = vmax.xlane.f32.xlu0 %v1154
        %v1156 = vpop.xlane.xlu0 %1155
        %v1157 = vsel %vm1135, %v1043, -inf
        %1158 = vmax.xlane.f32.xlu0 %v1157
        %v1159 = vpop.xlane.xlu0 %1158
        %v1160 = vsel %vm1135, %v1105, -inf
        %1161 = vmax.xlane.f32.xlu0 %v1160
        %v1162 = vpop.xlane.xlu0 %1161
        %v1163 = vsel %vm1135, %v1108, -inf
        %1164 = vmax.xlane.f32.xlu0 %v1163
        %v1165 = vpop.xlane.xlu0 %1164
        %v1166 = vsel %vm1135, %v1113, -inf
        %1167 = vmax.xlane.f32.xlu0 %v1166
        %v1168 = vpop.xlane.xlu0 %1167
        %v1169 = vsel %vm1135, %v1116, -inf
        %1170 = vmax.xlane.f32.xlu0 %v1169
        %v1171 = vpop.xlane.xlu0 %1170
        %v1172 = vsel %vm1135, %v1121, -inf
        %1173 = vmax.xlane.f32.xlu0 %v1172
        %v1174 = vpop.xlane.xlu0 %1173
        %v1175 = vsel %vm1135, %v1124, -inf
        %1176 = vmax.xlane.f32.xlu0 %v1175
        %v1177 = vpop.xlane.xlu0 %1176
        %v1178 = vsel %vm1135, %v1129, -inf
        %1179 = vmax.xlane.f32.xlu0 %v1178
        %v1180 = vpop.xlane.xlu0 %1179
        %v1181 = vsel %vm1135, %v1132, -inf
        %1182 = vmax.xlane.f32.xlu0 %v1181
        %v1183 = vpop.xlane.xlu0 %1182
        %v1184 = vsub.f32 %v1016, %v1138
        %v1185 = vsub.f32 %v1019, %v1141
        %v1186 = vsub.f32 %v1024, %v1144
        %v1187 = vsub.f32 %v1027, %v1147
        %v1188 = vsub.f32 %v1032, %v1150
        %v1189 = vsub.f32 %v1035, %v1153
        %v1190 = vsub.f32 %v1040, %v1156
        %v1191 = vsub.f32 %v1043, %v1159
        %v1192 = vsub.f32 %v1105, %v1162
        %v1193 = vsub.f32 %v1108, %v1165
        %v1194 = vsub.f32 %v1113, %v1168
        %v1195 = vsub.f32 %v1116, %v1171
        %v1196 = vsub.f32 %v1121, %v1174
        %v1197 = vsub.f32 %v1124, %v1177
        %v1198 = vsub.f32 %v1129, %v1180
        %v1199 = vsub.f32 %v1132, %v1183
        %v1200 = vmul.f32 %v1184, 1.442695
        %v1201 = vpow.pop %v1200
        %v1202 = vmul.f32 %v1185, 1.442695
        %v1203 = vpow.pop %v1202
        %v1204 = vmul.f32 %v1186, 1.442695
        %v1205 = vpow.pop %v1204
        %v1206 = vmul.f32 %v1187, 1.442695
        %v1207 = vpow.pop %v1206
        %v1208 = vmul.f32 %v1188, 1.442695
        %v1209 = vpow.pop %v1208
        %v1210 = vmul.f32 %v1189, 1.442695
        %v1211 = vpow.pop %v1210
        %v1212 = vmul.f32 %v1190, 1.442695
        %v1213 = vpow.pop %v1212
        %v1214 = vmul.f32 %v1191, 1.442695
        %v1215 = vpow.pop %v1214
        %v1216 = vmul.f32 %v1192, 1.442695
        %v1217 = vpow.pop %v1216
        %v1218 = vmul.f32 %v1193, 1.442695
        %v1219 = vpow.pop %v1218
        %v1220 = vmul.f32 %v1194, 1.442695
        %v1221 = vpow.pop %v1220
        %v1222 = vmul.f32 %v1195, 1.442695
        %v1223 = vpow.pop %v1222
        %v1224 = vmul.f32 %v1196, 1.442695
        %v1225 = vpow.pop %v1224
        %v1226 = vmul.f32 %v1197, 1.442695
        %v1227 = vpow.pop %v1226
        %v1228 = vmul.f32 %v1198, 1.442695
        %v1229 = vpow.pop %v1228
        %v1230 = vmul.f32 %v1199, 1.442695
        %v1231 = vpow.pop %v1230
        %v1232 = vsel %vm1135, %v1201, 0.0
        %1233 = vadd.xlane.f32.xlu0 %v1232
        %v1234 = vpop.xlane.xlu0 %1233
        %v1235 = vsel %vm1135, %v1203, 0.0
        %1236 = vadd.xlane.f32.xlu0 %v1235
        %v1237 = vpop.xlane.xlu0 %1236
        %v1238 = vsel %vm1135, %v1205, 0.0
        %1239 = vadd.xlane.f32.xlu0 %v1238
        %v1240 = vpop.xlane.xlu0 %1239
        %v1241 = vsel %vm1135, %v1207, 0.0
        %1242 = vadd.xlane.f32.xlu0 %v1241
        %v1243 = vpop.xlane.xlu0 %1242
        %v1244 = vsel %vm1135, %v1209, 0.0
        %1245 = vadd.xlane.f32.xlu0 %v1244
        %v1246 = vpop.xlane.xlu0 %1245
        %v1247 = vsel %vm1135, %v1211, 0.0
        %1248 = vadd.xlane.f32.xlu0 %v1247
        %v1249 = vpop.xlane.xlu0 %1248
        %v1250 = vsel %vm1135, %v1213, 0.0
        %1251 = vadd.xlane.f32.xlu0 %v1250
        %v1252 = vpop.xlane.xlu0 %1251
        %v1253 = vsel %vm1135, %v1215, 0.0
        %1254 = vadd.xlane.f32.xlu0 %v1253
        %v1255 = vpop.xlane.xlu0 %1254
        %v1256 = vsel %vm1135, %v1217, 0.0
        %1257 = vadd.xlane.f32.xlu0 %v1256
        %v1258 = vpop.xlane.xlu0 %1257
        %v1259 = vsel %vm1135, %v1219, 0.0
        %1260 = vadd.xlane.f32.xlu0 %v1259
        %v1261 = vpop.xlane.xlu0 %1260
        %v1262 = vsel %vm1135, %v1221, 0.0
        %1263 = vadd.xlane.f32.xlu0 %v1262
        %v1264 = vpop.xlane.xlu0 %1263
        %v1265 = vsel %vm1135, %v1223, 0.0
        %1266 = vadd.xlane.f32.xlu0 %v1265
        %v1267 = vpop.xlane.xlu0 %1266
        %v1268 = vsel %vm1135, %v1225, 0.0
        %1269 = vadd.xlane.f32.xlu0 %v1268
        %v1270 = vpop.xlane.xlu0 %1269
        %v1271 = vsel %vm1135, %v1227, 0.0
        %1272 = vadd.xlane.f32.xlu0 %v1271
        %v1273 = vpop.xlane.xlu0 %1272
        %v1274 = vsel %vm1135, %v1229, 0.0
        %1275 = vadd.xlane.f32.xlu0 %v1274
        %v1276 = vpop.xlane.xlu0 %1275
        %v1277 = vsel %vm1135, %v1231, 0.0
        %1278 = vadd.xlane.f32.xlu0 %v1277
        %v1279 = vpop.xlane.xlu0 %1278
        %v1280 = vrcp.pop %v1234
        %v1281 = vrcp.pop %v1237
        %v1282 = vrcp.pop %v1240
        %v1283 = vrcp.pop %v1243
        %v1284 = vrcp.pop %v1246
        %v1285 = vrcp.pop %v1249
        %v1286 = vrcp.pop %v1252
        %v1287 = vrcp.pop %v1255
        %v1288 = vrcp.pop %v1258
        %v1289 = vrcp.pop %v1261
        %v1290 = vrcp.pop %v1264
        %v1291 = vrcp.pop %v1267
        %v1292 = vrcp.pop %v1270
        %v1293 = vrcp.pop %v1273
        %v1294 = vrcp.pop %v1276
        %v1295 = vrcp.pop %v1279
        %v1296 = vmul.f32 %v1201, %v1280
        %v1297 = vmul.f32 %v1203, %v1281
        %v1298 = vmul.f32 %v1205, %v1282
        %v1299 = vmul.f32 %v1207, %v1283
        %v1300 = vmul.f32 %v1209, %v1284
        %v1301 = vmul.f32 %v1211, %v1285
        %v1302 = vmul.f32 %v1213, %v1286
        %v1303 = vmul.f32 %v1215, %v1287
        %v1304 = vmul.f32 %v1217, %v1288
        %v1305 = vmul.f32 %v1219, %v1289
        %v1306 = vmul.f32 %v1221, %v1290
        %v1307 = vmul.f32 %v1223, %v1291
        %v1308 = vmul.f32 %v1225, %v1292
        %v1309 = vmul.f32 %v1227, %v1293
        %v1310 = vmul.f32 %v1229, %v1294
        %v1311 = vmul.f32 %v1231, %v1295
        %v1312 = vpack.c.bf16 %v1297, %v1296
        %v1313 = vpack.c.bf16 %v1299, %v1298
        %v1314 = vpack.c.bf16 %v1301, %v1300
        %v1315 = vpack.c.bf16 %v1303, %v1302
        %v1316 = vpack.c.bf16 %v1305, %v1304
        %v1317 = vpack.c.bf16 %v1307, %v1306
        %v1318 = vpack.c.bf16 %v1309, %v1308
        %v1319 = vpack.c.bf16 %v1311, %v1310
        %v1321 = vsel %vm1135, %v1312, 0
        %v1324 = vsel %vm1135, %v1313, 0
        %v1327 = vsel %vm1135, %v1314, 0
        %v1330 = vsel %vm1135, %v1315, 0
        %1332 = vmatprep.subr.bf16.mxu0 0
        %1333 = vmatpush1.bf16.msra.mxu0 %v934
        %1334 = vmatprep.subr.bf16.mxu0 0
        %1335 = vmatpush1.bf16.msra.mxu0 %v937
        %1336 = vmatprep.subr.bf16.mxu0 0
        %1337 = vmatpush1.bf16.msra.mxu0 %v940
        %1338 = vmatprep.subr.bf16.mxu0 0
        %1339 = vmatpush1.bf16.msra.mxu0 %v943
        %1340 = vmatprep.subr.bf16.mxu0 0
        %1341 = vmatpush1.bf16.msra.mxu0 0
        %1342 = vmatprep.subr.bf16.mxu0 0
        %1343 = vmatpush1.bf16.msra.mxu0 0
        %1344 = vmatprep.subr.bf16.mxu0 0
        %1345 = vmatpush1.bf16.msra.mxu0 0
        %1346 = vmatprep.subr.bf16.mxu0 0
        %1347 = vmatpush1.bf16.msra.mxu0 0
        %1348 = vmatprep.subr.bf16.mxu0 0
        %1349 = vmatpush1.bf16.msra.mxu0 0
        %1350 = vmatprep.subr.bf16.mxu0 0
        %1351 = vmatpush1.bf16.msra.mxu0 0
        %1352 = vmatprep.subr.bf16.mxu0 0
        %1353 = vmatpush1.bf16.msra.mxu0 0
        %1354 = vmatprep.subr.bf16.mxu0 0
        %1355 = vmatpush1.bf16.msra.mxu0 0
        %1356 = vmatprep.subr.bf16.mxu0 0
        %1357 = vmatpush1.bf16.msra.mxu0 0
        %1358 = vmatprep.subr.bf16.mxu0 0
        %1359 = vmatpush1.bf16.msra.mxu0 0
        %1360 = vmatprep.subr.bf16.mxu0 0
        %1361 = vmatpush1.bf16.msra.mxu0 0
        %1362 = vmatprep.subr.bf16.mxu0 0
        %1363 = vmatpush1.bf16.msra.mxu0 0
        %1364 = vmatprep.mubr.bf16.mxu0 0
        %1365 = vmatmul.mubr.bf16.gmra.mrb[0].mxu0 %v1321
        %v1366 = vpop.f32.mrb[0].mxu0
        %v1367 = vadd.f32 0.0, %v1366
        %v1368 = vpop.f32.mrb[0].mxu0
        %v1369 = vpop.f32.mrb[0].mxu0
        %v1370 = vadd.f32 0.0, %v1369
        %v1371 = vpop.f32.mrb[0].mxu0
        %1372 = vmatprep.mubr.bf16.mxu0 0
        %1373 = vmatmul.mubr.bf16.gmra.mrb[0].mxu0 %v1324
        %v1374 = vpop.f32.mrb[0].mxu0
        %v1375 = vadd.f32 0.0, %v1374
        %v1376 = vpop.f32.mrb[0].mxu0
        %v1377 = vpop.f32.mrb[0].mxu0
        %v1378 = vadd.f32 0.0, %v1377
        %v1379 = vpop.f32.mrb[0].mxu0
        %1380 = vmatprep.mubr.bf16.mxu0 0
        %1381 = vmatmul.mubr.bf16.gmra.mrb[0].mxu0 %v1327
        %v1382 = vpop.f32.mrb[0].mxu0
        %v1383 = vadd.f32 0.0, %v1382
        %v1384 = vpop.f32.mrb[0].mxu0
        %v1385 = vpop.f32.mrb[0].mxu0
        %v1386 = vadd.f32 0.0, %v1385
        %v1387 = vpop.f32.mrb[0].mxu0
        %1388 = vmatprep.mubr.bf16.mxu0 0
        %1389 = vmatmul.mubr.bf16.gmra.mrb[0].mxu0 %v1330
        %v1390 = vpop.f32.mrb[0].mxu0
        %v1391 = vadd.f32 0.0, %v1390
        %v1392 = vpop.f32.mrb[0].mxu0
        %v1393 = vpop.f32.mrb[0].mxu0
        %v1394 = vadd.f32 0.0, %v1393
        %v1395 = vpop.f32.mrb[0].mxu0
        %1396 = vdwg.mxu0
        %v1398 = vsel %vm1135, %v1316, 0
        %v1401 = vsel %vm1135, %v1317, 0
        %v1404 = vsel %vm1135, %v1318, 0
        %v1407 = vsel %vm1135, %v1319, 0
        %1409 = vmatprep.subr.bf16.mxu0 0
        %1410 = vmatpush1.bf16.msra.mxu0 %v946
        %1411 = vmatprep.subr.bf16.mxu0 0
        %1412 = vmatpush1.bf16.msra.mxu0 %v949
        %1413 = vmatprep.subr.bf16.mxu0 0
        %1414 = vmatpush1.bf16.msra.mxu0 %v952
        %1415 = vmatprep.subr.bf16.mxu0 0
        %1416 = vmatpush1.bf16.msra.mxu0 %v955
        %1417 = vmatprep.subr.bf16.mxu0 0
        %1418 = vmatpush1.bf16.msra.mxu0 0
        %1419 = vmatprep.subr.bf16.mxu0 0
        %1420 = vmatpush1.bf16.msra.mxu0 0
        %1421 = vmatprep.subr.bf16.mxu0 0
        %1422 = vmatpush1.bf16.msra.mxu0 0
        %1423 = vmatprep.subr.bf16.mxu0 0
        %1424 = vmatpush1.bf16.msra.mxu0 0
        %1425 = vmatprep.subr.bf16.mxu0 0
        %1426 = vmatpush1.bf16.msra.mxu0 0
        %1427 = vmatprep.subr.bf16.mxu0 0
        %1428 = vmatpush1.bf16.msra.mxu0 0
        %1429 = vmatprep.subr.bf16.mxu0 0
        %1430 = vmatpush1.bf16.msra.mxu0 0
        %1431 = vmatprep.subr.bf16.mxu0 0
        %1432 = vmatpush1.bf16.msra.mxu0 0
        %1433 = vmatprep.subr.bf16.mxu0 0
        %1434 = vmatpush1.bf16.msra.mxu0 0
        %1435 = vmatprep.subr.bf16.mxu0 0
        %1436 = vmatpush1.bf16.msra.mxu0 0
        %1437 = vmatprep.subr.bf16.mxu0 0
        %1438 = vmatpush1.bf16.msra.mxu0 0
        %1439 = vmatprep.subr.bf16.mxu0 0
        %1440 = vmatpush1.bf16.msra.mxu0 0
        %1441 = vmatprep.mubr.bf16.mxu0 0
        %1442 = vmatmul.mubr.bf16.gmra.mrb[0].mxu0 %v1398
        %v1443 = vpop.f32.mrb[0].mxu0
        %v1444 = vadd.f32 0.0, %v1443
        %v1445 = vpop.f32.mrb[0].mxu0
        %v1446 = vpop.f32.mrb[0].mxu0
        %v1447 = vadd.f32 0.0, %v1446
        %v1448 = vpop.f32.mrb[0].mxu0
        %1449 = vmatprep.mubr.bf16.mxu0 0
        %1450 = vmatmul.mubr.bf16.gmra.mrb[0].mxu0 %v1401
        %v1451 = vpop.f32.mrb[0].mxu0
        %v1452 = vadd.f32 0.0, %v1451
        %v1453 = vpop.f32.mrb[0].mxu0
        %v1454 = vpop.f32.mrb[0].mxu0
        %v1455 = vadd.f32 0.0, %v1454
        %v1456 = vpop.f32.mrb[0].mxu0
        %1457 = vmatprep.mubr.bf16.mxu0 0
        %1458 = vmatmul.mubr.bf16.gmra.mrb[0].mxu0 %v1404
        %v1459 = vpop.f32.mrb[0].mxu0
        %v1460 = vadd.f32 0.0, %v1459
        %v1461 = vpop.f32.mrb[0].mxu0
        %v1462 = vpop.f32.mrb[0].mxu0
        %v1463 = vadd.f32 0.0, %v1462
        %v1464 = vpop.f32.mrb[0].mxu0
        %1465 = vmatprep.mubr.bf16.mxu0 0
        %1466 = vmatmul.mubr.bf16.gmra.mrb[0].mxu0 %v1407
        %v1467 = vpop.f32.mrb[0].mxu0
        %v1468 = vadd.f32 0.0, %v1467
        %v1469 = vpop.f32.mrb[0].mxu0
        %v1470 = vpop.f32.mrb[0].mxu0
        %v1471 = vadd.f32 0.0, %v1470
        %v1472 = vpop.f32.mrb[0].mxu0
        %1473 = vdwg.mxu0
        %v1474 = vpack.c.bf16 %v1370, %v1367
        %v1475 = vpack.c.bf16 %v1378, %v1375
        %v1476 = vpack.c.bf16 %v1386, %v1383
        %v1477 = vpack.c.bf16 %v1394, %v1391
        %v1478 = vpack.c.bf16 %v1447, %v1444
        %v1479 = vpack.c.bf16 %v1455, %v1452
        %v1480 = vpack.c.bf16 %v1463, %v1460
        %v1481 = vpack.c.bf16 %v1471, %v1468
        %1482 = vst.msk [vmem:[#allocation2] sm:$0xff] %vm956, %v1474
        %1483 = vst.msk [vmem:[#allocation2 + $0x8] sm:$0xff] %vm956, %v1475
        %1484 = vst.msk [vmem:[#allocation2 + $0x10] sm:$0xff] %vm956, %v1476
        %1485 = vst.msk [vmem:[#allocation2 + $0x18] sm:$0xff] %vm956, %v1477
        %1486 = vst.msk [vmem:[#allocation2 + $0x20] sm:$0xff] %vm956, %v1478
        %1487 = vst.msk [vmem:[#allocation2 + $0x28] sm:$0xff] %vm956, %v1479
        %1488 = vst.msk [vmem:[#allocation2 + $0x30] sm:$0xff] %vm956, %v1480
        %1489 = vst.msk [vmem:[#allocation2 + $0x38] sm:$0xff] %vm956, %v1481
        %1494 = vrot.lane.b32.xlu0 %v932, 96
        %v1495 = vpop.permute.xlu0 %1494
        %1496 = vrot.lane.b32.xlu0 %v935, 96
        %v1497 = vpop.permute.xlu0 %1496
        %1498 = vrot.lane.b32.xlu0 %v938, 96
        %v1499 = vpop.permute.xlu0 %1498
        %1500 = vrot.lane.b32.xlu0 %v941, 96
        %v1501 = vpop.permute.xlu0 %1500
        %1506 = vrot.lane.b32.xlu0 %v933, 96
        %v1507 = vpop.permute.xlu0 %1506
        %1508 = vrot.lane.b32.xlu0 %v936, 96
        %v1509 = vpop.permute.xlu0 %1508
        %1510 = vrot.lane.b32.xlu0 %v939, 96
        %v1511 = vpop.permute.xlu0 %1510
        %1512 = vrot.lane.b32.xlu0 %v942, 96
        %v1513 = vpop.permute.xlu0 %1512
        %v1515 = vsel %vm956, %v1495, 0
        %v1518 = vsel %vm956, %v1497, 0
        %v1521 = vsel %vm956, %v1499, 0
        %v1524 = vsel %vm956, %v1501, 0
        %v1527 = vsel %vm956, %v1507, 0
        %v1530 = vsel %vm956, %v1509, 0
        %v1533 = vsel %vm956, %v1511, 0
        %v1536 = vsel %vm956, %v1513, 0
        %1538 = vmatprep.subr.bf16.mxu0 0
        %1539 = vmatpush1.bf16.xpose.msra.mxu0 %v1527
        %1540 = vmatprep.subr.bf16.mxu0 0
        %1541 = vmatpush1.bf16.xpose.msra.mxu0 %v1530
        %1542 = vmatprep.subr.bf16.mxu0 0
        %1543 = vmatpush1.bf16.xpose.msra.mxu0 %v1533
        %1544 = vmatprep.subr.bf16.mxu0 0
        %1545 = vmatpush1.bf16.xpose.msra.mxu0 %v1536
        %1546 = vmatprep.subr.bf16.mxu0 0
        %1547 = vmatpush1.bf16.xpose.msra.mxu0 0
        %1548 = vmatprep.subr.bf16.mxu0 0
        %1549 = vmatpush1.bf16.xpose.msra.mxu0 0
        %1550 = vmatprep.subr.bf16.mxu0 0
        %1551 = vmatpush1.bf16.xpose.msra.mxu0 0
        %1552 = vmatprep.subr.bf16.mxu0 0
        %1553 = vmatpush1.bf16.xpose.msra.mxu0 0
        %1554 = vmatprep.subr.bf16.mxu0 0
        %1555 = vmatpush1.bf16.xpose.msra.mxu0 0
        %1556 = vmatprep.subr.bf16.mxu0 0
        %1557 = vmatpush1.bf16.xpose.msra.mxu0 0
        %1558 = vmatprep.subr.bf16.mxu0 0
        %1559 = vmatpush1.bf16.xpose.msra.mxu0 0
        %1560 = vmatprep.subr.bf16.mxu0 0
        %1561 = vmatpush1.bf16.xpose.msra.mxu0 0
        %1562 = vmatprep.subr.bf16.mxu0 0
        %1563 = vmatpush1.bf16.xpose.msra.mxu0 0
        %1564 = vmatprep.subr.bf16.mxu0 0
        %1565 = vmatpush1.bf16.xpose.msra.mxu0 0
        %1566 = vmatprep.subr.bf16.mxu0 0
        %1567 = vmatpush1.bf16.xpose.msra.mxu0 0
        %1568 = vmatprep.subr.bf16.mxu0 0
        %1569 = vmatpush1.bf16.xpose.msra.mxu0 0
        %1570 = vmatprep.mubr.bf16.mxu0 0
        %1571 = vmatmul.mubr.bf16.gmra.mrb[0].mxu0 %v1515
        %v1572 = vpop.f32.mrb[0].mxu0
        %v1573 = vadd.f32 0.0, %v1572
        %v1574 = vpop.f32.mrb[0].mxu0
        %v1575 = vpop.f32.mrb[0].mxu0
        %v1576 = vadd.f32 0.0, %v1575
        %v1577 = vpop.f32.mrb[0].mxu0
        %1578 = vmatprep.mubr.bf16.mxu0 0
        %1579 = vmatmul.mubr.bf16.gmra.mrb[0].mxu0 %v1518
        %v1580 = vpop.f32.mrb[0].mxu0
        %v1581 = vadd.f32 0.0, %v1580
        %v1582 = vpop.f32.mrb[0].mxu0
        %v1583 = vpop.f32.mrb[0].mxu0
        %v1584 = vadd.f32 0.0, %v1583
        %v1585 = vpop.f32.mrb[0].mxu0
        %1586 = vmatprep.mubr.bf16.mxu0 0
        %1587 = vmatmul.mubr.bf16.gmra.mrb[0].mxu0 %v1521
        %v1588 = vpop.f32.mrb[0].mxu0
        %v1589 = vadd.f32 0.0, %v1588
        %v1590 = vpop.f32.mrb[0].mxu0
        %v1591 = vpop.f32.mrb[0].mxu0
        %v1592 = vadd.f32 0.0, %v1591
        %v1593 = vpop.f32.mrb[0].mxu0
        %1594 = vmatprep.mubr.bf16.mxu0 0
        %1595 = vmatmul.mubr.bf16.gmra.mrb[0].mxu0 %v1524
        %v1596 = vpop.f32.mrb[0].mxu0
        %v1597 = vadd.f32 0.0, %v1596
        %v1598 = vpop.f32.mrb[0].mxu0
        %v1599 = vpop.f32.mrb[0].mxu0
        %v1600 = vadd.f32 0.0, %v1599
        %v1601 = vpop.f32.mrb[0].mxu0
        %1602 = vdwg.mxu0
        %1607 = vrot.lane.b32.xlu0 %v944, 96
        %v1608 = vpop.permute.xlu0 %1607
        %1609 = vrot.lane.b32.xlu0 %v947, 96
        %v1610 = vpop.permute.xlu0 %1609
        %1611 = vrot.lane.b32.xlu0 %v950, 96
        %v1612 = vpop.permute.xlu0 %1611
        %1613 = vrot.lane.b32.xlu0 %v953, 96
        %v1614 = vpop.permute.xlu0 %1613
        %1619 = vrot.lane.b32.xlu0 %v945, 96
        %v1620 = vpop.permute.xlu0 %1619
        %1621 = vrot.lane.b32.xlu0 %v948, 96
        %v1622 = vpop.permute.xlu0 %1621
        %1623 = vrot.lane.b32.xlu0 %v951, 96
        %v1624 = vpop.permute.xlu0 %1623
        %1625 = vrot.lane.b32.xlu0 %v954, 96
        %v1626 = vpop.permute.xlu0 %1625
        %v1628 = vsel %vm956, %v1608, 0
        %v1631 = vsel %vm956, %v1610, 0
        %v1634 = vsel %vm956, %v1612, 0
        %v1637 = vsel %vm956, %v1614, 0
        %v1640 = vsel %vm956, %v1620, 0
        %v1643 = vsel %vm956, %v1622, 0
        %v1646 = vsel %vm956, %v1624, 0
        %v1649 = vsel %vm956, %v1626, 0
        %1651 = vmatprep.subr.bf16.mxu0 0
        %1652 = vmatpush1.bf16.xpose.msra.mxu0 %v1640
        %1653 = vmatprep.subr.bf16.mxu0 0
        %1654 = vmatpush1.bf16.xpose.msra.mxu0 %v1643
        %1655 = vmatprep.subr.bf16.mxu0 0
        %1656 = vmatpush1.bf16.xpose.msra.mxu0 %v1646
        %1657 = vmatprep.subr.bf16.mxu0 0
        %1658 = vmatpush1.bf16.xpose.msra.mxu0 %v1649
        %1659 = vmatprep.subr.bf16.mxu0 0
        %1660 = vmatpush1.bf16.xpose.msra.mxu0 0
        %1661 = vmatprep.subr.bf16.mxu0 0
        %1662 = vmatpush1.bf16.xpose.msra.mxu0 0
        %1663 = vmatprep.subr.bf16.mxu0 0
        %1664 = vmatpush1.bf16.xpose.msra.mxu0 0
        %1665 = vmatprep.subr.bf16.mxu0 0
        %1666 = vmatpush1.bf16.xpose.msra.mxu0 0
        %1667 = vmatprep.subr.bf16.mxu0 0
        %1668 = vmatpush1.bf16.xpose.msra.mxu0 0
        %1669 = vmatprep.subr.bf16.mxu0 0
        %1670 = vmatpush1.bf16.xpose.msra.mxu0 0
        %1671 = vmatprep.subr.bf16.mxu0 0
        %1672 = vmatpush1.bf16.xpose.msra.mxu0 0
        %1673 = vmatprep.subr.bf16.mxu0 0
        %1674 = vmatpush1.bf16.xpose.msra.mxu0 0
        %1675 = vmatprep.subr.bf16.mxu0 0
        %1676 = vmatpush1.bf16.xpose.msra.mxu0 0
        %1677 = vmatprep.subr.bf16.mxu0 0
        %1678 = vmatpush1.bf16.xpose.msra.mxu0 0
        %1679 = vmatprep.subr.bf16.mxu0 0
        %1680 = vmatpush1.bf16.xpose.msra.mxu0 0
        %1681 = vmatprep.subr.bf16.mxu0 0
        %1682 = vmatpush1.bf16.xpose.msra.mxu0 0
        %1683 = vmatprep.mubr.bf16.mxu0 0
        %1684 = vmatmul.mubr.bf16.gmra.mrb[0].mxu0 %v1628
        %v1685 = vpop.f32.mrb[0].mxu0
        %v1686 = vadd.f32 0.0, %v1685
        %v1687 = vpop.f32.mrb[0].mxu0
        %v1688 = vpop.f32.mrb[0].mxu0
        %v1689 = vadd.f32 0.0, %v1688
        %v1690 = vpop.f32.mrb[0].mxu0
        %1691 = vmatprep.mubr.bf16.mxu0 0
        %1692 = vmatmul.mubr.bf16.gmra.mrb[0].mxu0 %v1631
        %v1693 = vpop.f32.mrb[0].mxu0
        %v1694 = vadd.f32 0.0, %v1693
        %v1695 = vpop.f32.mrb[0].mxu0
        %v1696 = vpop.f32.mrb[0].mxu0
        %v1697 = vadd.f32 0.0, %v1696
        %v1698 = vpop.f32.mrb[0].mxu0
        %1699 = vmatprep.mubr.bf16.mxu0 0
        %1700 = vmatmul.mubr.bf16.gmra.mrb[0].mxu0 %v1634
        %v1701 = vpop.f32.mrb[0].mxu0
        %v1702 = vadd.f32 0.0, %v1701
        %v1703 = vpop.f32.mrb[0].mxu0
        %v1704 = vpop.f32.mrb[0].mxu0
        %v1705 = vadd.f32 0.0, %v1704
        %v1706 = vpop.f32.mrb[0].mxu0
        %1707 = vmatprep.mubr.bf16.mxu0 0
        %1708 = vmatmul.mubr.bf16.gmra.mrb[0].mxu0 %v1637
        %v1709 = vpop.f32.mrb[0].mxu0
        %v1710 = vadd.f32 0.0, %v1709
        %v1711 = vpop.f32.mrb[0].mxu0
        %v1712 = vpop.f32.mrb[0].mxu0
        %v1713 = vadd.f32 0.0, %v1712
        %v1714 = vpop.f32.mrb[0].mxu0
        %1715 = vdwg.mxu0
        %v1716 = vsel %vm1135, %v1573, -inf
        %1717 = vmax.xlane.f32.xlu0 %v1716
        %v1718 = vpop.xlane.xlu0 %1717
        %v1719 = vsel %vm1135, %v1576, -inf
        %1720 = vmax.xlane.f32.xlu0 %v1719
        %v1721 = vpop.xlane.xlu0 %1720
        %v1722 = vsel %vm1135, %v1581, -inf
        %1723 = vmax.xlane.f32.xlu0 %v1722
        %v1724 = vpop.xlane.xlu0 %1723
        %v1725 = vsel %vm1135, %v1584, -inf
        %1726 = vmax.xlane.f32.xlu0 %v1725
        %v1727 = vpop.xlane.xlu0 %1726
        %v1728 = vsel %vm1135, %v1589, -inf
        %1729 = vmax.xlane.f32.xlu0 %v1728
        %v1730 = vpop.xlane.xlu0 %1729
        %v1731 = vsel %vm1135, %v1592, -inf
        %1732 = vmax.xlane.f32.xlu0 %v1731
        %v1733 = vpop.xlane.xlu0 %1732
        %v1734 = vsel %vm1135, %v1597, -inf
        %1735 = vmax.xlane.f32.xlu0 %v1734
        %v1736 = vpop.xlane.xlu0 %1735
        %v1737 = vsel %vm1135, %v1600, -inf
        %1738 = vmax.xlane.f32.xlu0 %v1737
        %v1739 = vpop.xlane.xlu0 %1738
        %v1740 = vsel %vm1135, %v1686, -inf
        %1741 = vmax.xlane.f32.xlu0 %v1740
        %v1742 = vpop.xlane.xlu0 %1741
        %v1743 = vsel %vm1135, %v1689, -inf
        %1744 = vmax.xlane.f32.xlu0 %v1743
        %v1745 = vpop.xlane.xlu0 %1744
        %v1746 = vsel %vm1135, %v1694, -inf
        %1747 = vmax.xlane.f32.xlu0 %v1746
        %v1748 = vpop.xlane.xlu0 %1747
        %v1749 = vsel %vm1135, %v1697, -inf
        %1750 = vmax.xlane.f32.xlu0 %v1749
        %v1751 = vpop.xlane.xlu0 %1750
        %v1752 = vsel %vm1135, %v1702, -inf
        %1753 = vmax.xlane.f32.xlu0 %v1752
        %v1754 = vpop.xlane.xlu0 %1753
        %v1755 = vsel %vm1135, %v1705, -inf
        %1756 = vmax.xlane.f32.xlu0 %v1755
        %v1757 = vpop.xlane.xlu0 %1756
        %v1758 = vsel %vm1135, %v1710, -inf
        %1759 = vmax.xlane.f32.xlu0 %v1758
        %v1760 = vpop.xlane.xlu0 %1759
        %v1761 = vsel %vm1135, %v1713, -inf
        %1762 = vmax.xlane.f32.xlu0 %v1761
        %v1763 = vpop.xlane.xlu0 %1762
        %v1764 = vsub.f32 %v1573, %v1718
        %v1765 = vsub.f32 %v1576, %v1721
        %v1766 = vsub.f32 %v1581, %v1724
        %v1767 = vsub.f32 %v1584, %v1727
        %v1768 = vsub.f32 %v1589, %v1730
        %v1769 = vsub.f32 %v1592, %v1733
        %v1770 = vsub.f32 %v1597, %v1736
        %v1771 = vsub.f32 %v1600, %v1739
        %v1772 = vsub.f32 %v1686, %v1742
        %v1773 = vsub.f32 %v1689, %v1745
        %v1774 = vsub.f32 %v1694, %v1748
        %v1775 = vsub.f32 %v1697, %v1751
        %v1776 = vsub.f32 %v1702, %v1754
        %v1777 = vsub.f32 %v1705, %v1757
        %v1778 = vsub.f32 %v1710, %v1760
        %v1779 = vsub.f32 %v1713, %v1763
        %v1780 = vmul.f32 %v1764, 1.442695
        %v1781 = vpow.pop %v1780
        %v1782 = vmul.f32 %v1765, 1.442695
        %v1783 = vpow.pop %v1782
        %v1784 = vmul.f32 %v1766, 1.442695
        %v1785 = vpow.pop %v1784
        %v1786 = vmul.f32 %v1767, 1.442695
        %v1787 = vpow.pop %v1786
        %v1788 = vmul.f32 %v1768, 1.442695
        %v1789 = vpow.pop %v1788
        %v1790 = vmul.f32 %v1769, 1.442695
        %v1791 = vpow.pop %v1790
        %v1792 = vmul.f32 %v1770, 1.442695
        %v1793 = vpow.pop %v1792
        %v1794 = vmul.f32 %v1771, 1.442695
        %v1795 = vpow.pop %v1794
        %v1796 = vmul.f32 %v1772, 1.442695
        %v1797 = vpow.pop %v1796
        %v1798 = vmul.f32 %v1773, 1.442695
        %v1799 = vpow.pop %v1798
        %v1800 = vmul.f32 %v1774, 1.442695
        %v1801 = vpow.pop %v1800
        %v1802 = vmul.f32 %v1775, 1.442695
        %v1803 = vpow.pop %v1802
        %v1804 = vmul.f32 %v1776, 1.442695
        %v1805 = vpow.pop %v1804
        %v1806 = vmul.f32 %v1777, 1.442695
        %v1807 = vpow.pop %v1806
        %v1808 = vmul.f32 %v1778, 1.442695
        %v1809 = vpow.pop %v1808
        %v1810 = vmul.f32 %v1779, 1.442695
        %v1811 = vpow.pop %v1810
        %v1812 = vsel %vm1135, %v1781, 0.0
        %1813 = vadd.xlane.f32.xlu0 %v1812
        %v1814 = vpop.xlane.xlu0 %1813
        %v1815 = vsel %vm1135, %v1783, 0.0
        %1816 = vadd.xlane.f32.xlu0 %v1815
        %v1817 = vpop.xlane.xlu0 %1816
        %v1818 = vsel %vm1135, %v1785, 0.0
        %1819 = vadd.xlane.f32.xlu0 %v1818
        %v1820 = vpop.xlane.xlu0 %1819
        %v1821 = vsel %vm1135, %v1787, 0.0
        %1822 = vadd.xlane.f32.xlu0 %v1821
        %v1823 = vpop.xlane.xlu0 %1822
        %v1824 = vsel %vm1135, %v1789, 0.0
        %1825 = vadd.xlane.f32.xlu0 %v1824
        %v1826 = vpop.xlane.xlu0 %1825
        %v1827 = vsel %vm1135, %v1791, 0.0
        %1828 = vadd.xlane.f32.xlu0 %v1827
        %v1829 = vpop.xlane.xlu0 %1828
        %v1830 = vsel %vm1135, %v1793, 0.0
        %1831 = vadd.xlane.f32.xlu0 %v1830
        %v1832 = vpop.xlane.xlu0 %1831
        %v1833 = vsel %vm1135, %v1795, 0.0
        %1834 = vadd.xlane.f32.xlu0 %v1833
        %v1835 = vpop.xlane.xlu0 %1834
        %v1836 = vsel %vm1135, %v1797, 0.0
        %1837 = vadd.xlane.f32.xlu0 %v1836
        %v1838 = vpop.xlane.xlu0 %1837
        %v1839 = vsel %vm1135, %v1799, 0.0
        %1840 = vadd.xlane.f32.xlu0 %v1839
        %v1841 = vpop.xlane.xlu0 %1840
        %v1842 = vsel %vm1135, %v1801, 0.0
        %1843 = vadd.xlane.f32.xlu0 %v1842
        %v1844 = vpop.xlane.xlu0 %1843
        %v1845 = vsel %vm1135, %v1803, 0.0
        %1846 = vadd.xlane.f32.xlu0 %v1845
        %v1847 = vpop.xlane.xlu0 %1846
        %v1848 = vsel %vm1135, %v1805, 0.0
        %1849 = vadd.xlane.f32.xlu0 %v1848
        %v1850 = vpop.xlane.xlu0 %1849
        %v1851 = vsel %vm1135, %v1807, 0.0
        %1852 = vadd.xlane.f32.xlu0 %v1851
        %v1853 = vpop.xlane.xlu0 %1852
        %v1854 = vsel %vm1135, %v1809, 0.0
        %1855 = vadd.xlane.f32.xlu0 %v1854
        %v1856 = vpop.xlane.xlu0 %1855
        %v1857 = vsel %vm1135, %v1811, 0.0
        %1858 = vadd.xlane.f32.xlu0 %v1857
        %v1859 = vpop.xlane.xlu0 %1858
        %v1860 = vrcp.pop %v1814
        %v1861 = vrcp.pop %v1817
        %v1862 = vrcp.pop %v1820
        %v1863 = vrcp.pop %v1823
        %v1864 = vrcp.pop %v1826
        %v1865 = vrcp.pop %v1829
        %v1866 = vrcp.pop %v1832
        %v1867 = vrcp.pop %v1835
        %v1868 = vrcp.pop %v1838
        %v1869 = vrcp.pop %v1841
        %v1870 = vrcp.pop %v1844
        %v1871 = vrcp.pop %v1847
        %v1872 = vrcp.pop %v1850
        %v1873 = vrcp.pop %v1853
        %v1874 = vrcp.pop %v1856
        %v1875 = vrcp.pop %v1859
        %v1876 = vmul.f32 %v1781, %v1860
        %v1877 = vmul.f32 %v1783, %v1861
        %v1878 = vmul.f32 %v1785, %v1862
        %v1879 = vmul.f32 %v1787, %v1863
        %v1880 = vmul.f32 %v1789, %v1864
        %v1881 = vmul.f32 %v1791, %v1865
        %v1882 = vmul.f32 %v1793, %v1866
        %v1883 = vmul.f32 %v1795, %v1867
        %v1884 = vmul.f32 %v1797, %v1868
        %v1885 = vmul.f32 %v1799, %v1869
        %v1886 = vmul.f32 %v1801, %v1870
        %v1887 = vmul.f32 %v1803, %v1871
        %v1888 = vmul.f32 %v1805, %v1872
        %v1889 = vmul.f32 %v1807, %v1873
        %v1890 = vmul.f32 %v1809, %v1874
        %v1891 = vmul.f32 %v1811, %v1875
        %v1892 = vpack.c.bf16 %v1877, %v1876
        %v1893 = vpack.c.bf16 %v1879, %v1878
        %v1894 = vpack.c.bf16 %v1881, %v1880
        %v1895 = vpack.c.bf16 %v1883, %v1882
        %v1896 = vpack.c.bf16 %v1885, %v1884
        %v1897 = vpack.c.bf16 %v1887, %v1886
        %v1898 = vpack.c.bf16 %v1889, %v1888
        %v1899 = vpack.c.bf16 %v1891, %v1890
        %1904 = vrot.lane.b32.xlu0 %v934, 96
        %v1905 = vpop.permute.xlu0 %1904
        %1906 = vrot.lane.b32.xlu0 %v937, 96
        %v1907 = vpop.permute.xlu0 %1906
        %1908 = vrot.lane.b32.xlu0 %v940, 96
        %v1909 = vpop.permute.xlu0 %1908
        %1910 = vrot.lane.b32.xlu0 %v943, 96
        %v1911 = vpop.permute.xlu0 %1910
        %v1917 = vsel %vm1135, %v1892, 0
        %v1920 = vsel %vm1135, %v1893, 0
        %v1923 = vsel %vm1135, %v1894, 0
        %v1926 = vsel %vm1135, %v1895, 0
        %1928 = vmatprep.subr.bf16.mxu0 0
        %1929 = vmatpush1.bf16.msra.mxu0 %v1905
        %1930 = vmatprep.subr.bf16.mxu0 0
        %1931 = vmatpush1.bf16.msra.mxu0 %v1907
        %1932 = vmatprep.subr.bf16.mxu0 0
        %1933 = vmatpush1.bf16.msra.mxu0 %v1909
        %1934 = vmatprep.subr.bf16.mxu0 0
        %1935 = vmatpush1.bf16.msra.mxu0 %v1911
        %1936 = vmatprep.subr.bf16.mxu0 0
        %1937 = vmatpush1.bf16.msra.mxu0 0
        %1938 = vmatprep.subr.bf16.mxu0 0
        %1939 = vmatpush1.bf16.msra.mxu0 0
        %1940 = vmatprep.subr.bf16.mxu0 0
        %1941 = vmatpush1.bf16.msra.mxu0 0
        %1942 = vmatprep.subr.bf16.mxu0 0
        %1943 = vmatpush1.bf16.msra.mxu0 0
        %1944 = vmatprep.subr.bf16.mxu0 0
        %1945 = vmatpush1.bf16.msra.mxu0 0
        %1946 = vmatprep.subr.bf16.mxu0 0
        %1947 = vmatpush1.bf16.msra.mxu0 0
        %1948 = vmatprep.subr.bf16.mxu0 0
        %1949 = vmatpush1.bf16.msra.mxu0 0
        %1950 = vmatprep.subr.bf16.mxu0 0
        %1951 = vmatpush1.bf16.msra.mxu0 0
        %1952 = vmatprep.subr.bf16.mxu0 0
        %1953 = vmatpush1.bf16.msra.mxu0 0
        %1954 = vmatprep.subr.bf16.mxu0 0
        %1955 = vmatpush1.bf16.msra.mxu0 0
        %1956 = vmatprep.subr.bf16.mxu0 0
        %1957 = vmatpush1.bf16.msra.mxu0 0
        %1958 = vmatprep.subr.bf16.mxu0 0
        %1959 = vmatpush1.bf16.msra.mxu0 0
        %1960 = vmatprep.mubr.bf16.mxu0 0
        %1961 = vmatmul.mubr.bf16.gmra.mrb[0].mxu0 %v1917
        %v1962 = vpop.f32.mrb[0].mxu0
        %v1963 = vadd.f32 0.0, %v1962
        %v1964 = vpop.f32.mrb[0].mxu0
        %v1965 = vpop.f32.mrb[0].mxu0
        %v1966 = vadd.f32 0.0, %v1965
        %v1967 = vpop.f32.mrb[0].mxu0
        %1968 = vmatprep.mubr.bf16.mxu0 0
        %1969 = vmatmul.mubr.bf16.gmra.mrb[0].mxu0 %v1920
        %v1970 = vpop.f32.mrb[0].mxu0
        %v1971 = vadd.f32 0.0, %v1970
        %v1972 = vpop.f32.mrb[0].mxu0
        %v1973 = vpop.f32.mrb[0].mxu0
        %v1974 = vadd.f32 0.0, %v1973
        %v1975 = vpop.f32.mrb[0].mxu0
        %1976 = vmatprep.mubr.bf16.mxu0 0
        %1977 = vmatmul.mubr.bf16.gmra.mrb[0].mxu0 %v1923
        %v1978 = vpop.f32.mrb[0].mxu0
        %v1979 = vadd.f32 0.0, %v1978
        %v1980 = vpop.f32.mrb[0].mxu0
        %v1981 = vpop.f32.mrb[0].mxu0
        %v1982 = vadd.f32 0.0, %v1981
        %v1983 = vpop.f32.mrb[0].mxu0
        %1984 = vmatprep.mubr.bf16.mxu0 0
        %1985 = vmatmul.mubr.bf16.gmra.mrb[0].mxu0 %v1926
        %v1986 = vpop.f32.mrb[0].mxu0
        %v1987 = vadd.f32 0.0, %v1986
        %v1988 = vpop.f32.mrb[0].mxu0
        %v1989 = vpop.f32.mrb[0].mxu0
        %v1990 = vadd.f32 0.0, %v1989
        %v1991 = vpop.f32.mrb[0].mxu0
        %1992 = vdwg.mxu0
        %1997 = vrot.lane.b32.xlu0 %v946, 96
        %v1998 = vpop.permute.xlu0 %1997
        %1999 = vrot.lane.b32.xlu0 %v949, 96
        %v2000 = vpop.permute.xlu0 %1999
        %2001 = vrot.lane.b32.xlu0 %v952, 96
        %v2002 = vpop.permute.xlu0 %2001
        %2003 = vrot.lane.b32.xlu0 %v955, 96
        %v2004 = vpop.permute.xlu0 %2003
        %v2010 = vsel %vm1135, %v1896, 0
        %v2013 = vsel %vm1135, %v1897, 0
        %v2016 = vsel %vm1135, %v1898, 0
        %v2019 = vsel %vm1135, %v1899, 0
        %2021 = vmatprep.subr.bf16.mxu0 0
        %2022 = vmatpush1.bf16.msra.mxu0 %v1998
        %2023 = vmatprep.subr.bf16.mxu0 0
        %2024 = vmatpush1.bf16.msra.mxu0 %v2000
        %2025 = vmatprep.subr.bf16.mxu0 0
        %2026 = vmatpush1.bf16.msra.mxu0 %v2002
        %2027 = vmatprep.subr.bf16.mxu0 0
        %2028 = vmatpush1.bf16.msra.mxu0 %v2004
        %2029 = vmatprep.subr.bf16.mxu0 0
        %2030 = vmatpush1.bf16.msra.mxu0 0
        %2031 = vmatprep.subr.bf16.mxu0 0
        %2032 = vmatpush1.bf16.msra.mxu0 0
        %2033 = vmatprep.subr.bf16.mxu0 0
        %2034 = vmatpush1.bf16.msra.mxu0 0
        %2035 = vmatprep.subr.bf16.mxu0 0
        %2036 = vmatpush1.bf16.msra.mxu0 0
        %2037 = vmatprep.subr.bf16.mxu0 0
        %2038 = vmatpush1.bf16.msra.mxu0 0
        %2039 = vmatprep.subr.bf16.mxu0 0
        %2040 = vmatpush1.bf16.msra.mxu0 0
        %2041 = vmatprep.subr.bf16.mxu0 0
        %2042 = vmatpush1.bf16.msra.mxu0 0
        %2043 = vmatprep.subr.bf16.mxu0 0
        %2044 = vmatpush1.bf16.msra.mxu0 0
        %2045 = vmatprep.subr.bf16.mxu0 0
        %2046 = vmatpush1.bf16.msra.mxu0 0
        %2047 = vmatprep.subr.bf16.mxu0 0
        %2048 = vmatpush1.bf16.msra.mxu0 0
        %2049 = vmatprep.subr.bf16.mxu0 0
        %2050 = vmatpush1.bf16.msra.mxu0 0
        %2051 = vmatprep.subr.bf16.mxu0 0
        %2052 = vmatpush1.bf16.msra.mxu0 0
        %2053 = vmatprep.mubr.bf16.mxu0 0
        %2054 = vmatmul.mubr.bf16.gmra.mrb[0].mxu0 %v2010
        %v2055 = vpop.f32.mrb[0].mxu0
        %v2056 = vadd.f32 0.0, %v2055
        %v2057 = vpop.f32.mrb[0].mxu0
        %v2058 = vpop.f32.mrb[0].mxu0
        %v2059 = vadd.f32 0.0, %v2058
        %v2060 = vpop.f32.mrb[0].mxu0
        %2061 = vmatprep.mubr.bf16.mxu0 0
        %2062 = vmatmul.mubr.bf16.gmra.mrb[0].mxu0 %v2013
        %v2063 = vpop.f32.mrb[0].mxu0
        %v2064 = vadd.f32 0.0, %v2063
        %v2065 = vpop.f32.mrb[0].mxu0
        %v2066 = vpop.f32.mrb[0].mxu0
        %v2067 = vadd.f32 0.0, %v2066
        %v2068 = vpop.f32.mrb[0].mxu0
        %2069 = vmatprep.mubr.bf16.mxu0 0
        %2070 = vmatmul.mubr.bf16.gmra.mrb[0].mxu0 %v2016
        %v2071 = vpop.f32.mrb[0].mxu0
        %v2072 = vadd.f32 0.0, %v2071
        %v2073 = vpop.f32.mrb[0].mxu0
        %v2074 = vpop.f32.mrb[0].mxu0
        %v2075 = vadd.f32 0.0, %v2074
        %v2076 = vpop.f32.mrb[0].mxu0
        %2077 = vmatprep.mubr.bf16.mxu0 0
        %2078 = vmatmul.mubr.bf16.gmra.mrb[0].mxu0 %v2019
        %v2079 = vpop.f32.mrb[0].mxu0
        %v2080 = vadd.f32 0.0, %v2079
        %v2081 = vpop.f32.mrb[0].mxu0
        %v2082 = vpop.f32.mrb[0].mxu0
        %v2083 = vadd.f32 0.0, %v2082
        %v2084 = vpop.f32.mrb[0].mxu0
        %2085 = vdwg.mxu0
        %v2086 = vpack.c.bf16 %v1966, %v1963
        %v2087 = vpack.c.bf16 %v1974, %v1971
        %v2088 = vpack.c.bf16 %v1982, %v1979
        %v2089 = vpack.c.bf16 %v1990, %v1987
        %v2090 = vpack.c.bf16 %v2059, %v2056
        %v2091 = vpack.c.bf16 %v2067, %v2064
        %v2092 = vpack.c.bf16 %v2075, %v2072
        %v2093 = vpack.c.bf16 %v2083, %v2080
        %2102 = vrot.lane.b32.xlu0 %v2086, 32
        %v2103 = vpop.permute.xlu0 %2102
        %2104 = vrot.lane.b32.xlu0 %v2087, 32
        %v2105 = vpop.permute.xlu0 %2104
        %2106 = vrot.lane.b32.xlu0 %v2088, 32
        %v2107 = vpop.permute.xlu0 %2106
        %2108 = vrot.lane.b32.xlu0 %v2089, 32
        %v2109 = vpop.permute.xlu0 %2108
        %2110 = vrot.lane.b32.xlu0 %v2090, 32
        %v2111 = vpop.permute.xlu0 %2110
        %2112 = vrot.lane.b32.xlu0 %v2091, 32
        %v2113 = vpop.permute.xlu0 %2112
        %2114 = vrot.lane.b32.xlu0 %v2092, 32
        %v2115 = vpop.permute.xlu0 %2114
        %2116 = vrot.lane.b32.xlu0 %v2093, 32
        %v2117 = vpop.permute.xlu0 %2116
        %vm2126 = vcmask 523520
        %2127 = vst.msk [vmem:[#allocation2] sm:$0xff] %vm2126, %v2103
        %2128 = vst.msk [vmem:[#allocation2 + $0x8] sm:$0xff] %vm2126, %v2105
        %2129 = vst.msk [vmem:[#allocation2 + $0x10] sm:$0xff] %vm2126, %v2107
        %2130 = vst.msk [vmem:[#allocation2 + $0x18] sm:$0xff] %vm2126, %v2109
        %2131 = vst.msk [vmem:[#allocation2 + $0x20] sm:$0xff] %vm2126, %v2111
        %2132 = vst.msk [vmem:[#allocation2 + $0x28] sm:$0xff] %vm2126, %v2113
        %2133 = vst.msk [vmem:[#allocation2 + $0x30] sm:$0xff] %vm2126, %v2115
        %2134 = vst.msk [vmem:[#allocation2 + $0x38] sm:$0xff] %vm2126, %v2117
        %2135 = vrot.lane.b32.xlu0 %v932, 64
        %v2136 = vpop.permute.xlu0 %2135
        %2137 = vrot.lane.b32.xlu0 %v935, 64
        %v2138 = vpop.permute.xlu0 %2137
        %2139 = vrot.lane.b32.xlu0 %v938, 64
        %v2140 = vpop.permute.xlu0 %2139
        %2141 = vrot.lane.b32.xlu0 %v941, 64
        %v2142 = vpop.permute.xlu0 %2141
        %2143 = vrot.lane.b32.xlu0 %v933, 64
        %v2144 = vpop.permute.xlu0 %2143
        %2145 = vrot.lane.b32.xlu0 %v936, 64
        %v2146 = vpop.permute.xlu0 %2145
        %2147 = vrot.lane.b32.xlu0 %v939, 64
        %v2148 = vpop.permute.xlu0 %2147
        %2149 = vrot.lane.b32.xlu0 %v942, 64
        %v2150 = vpop.permute.xlu0 %2149
        %v2152 = vsel %vm956, %v2136, 0
        %v2155 = vsel %vm956, %v2138, 0
        %v2158 = vsel %vm956, %v2140, 0
        %v2161 = vsel %vm956, %v2142, 0
        %v2164 = vsel %vm956, %v2144, 0
        %v2167 = vsel %vm956, %v2146, 0
        %v2170 = vsel %vm956, %v2148, 0
        %v2173 = vsel %vm956, %v2150, 0
        %2175 = vmatprep.subr.bf16.mxu0 0
        %2176 = vmatpush1.bf16.xpose.msra.mxu0 %v2164
        %2177 = vmatprep.subr.bf16.mxu0 0
        %2178 = vmatpush1.bf16.xpose.msra.mxu0 %v2167
        %2179 = vmatprep.subr.bf16.mxu0 0
        %2180 = vmatpush1.bf16.xpose.msra.mxu0 %v2170
        %2181 = vmatprep.subr.bf16.mxu0 0
        %2182 = vmatpush1.bf16.xpose.msra.mxu0 %v2173
        %2183 = vmatprep.subr.bf16.mxu0 0
        %2184 = vmatpush1.bf16.xpose.msra.mxu0 0
        %2185 = vmatprep.subr.bf16.mxu0 0
        %2186 = vmatpush1.bf16.xpose.msra.mxu0 0
        %2187 = vmatprep.subr.bf16.mxu0 0
        %2188 = vmatpush1.bf16.xpose.msra.mxu0 0
        %2189 = vmatprep.subr.bf16.mxu0 0
        %2190 = vmatpush1.bf16.xpose.msra.mxu0 0
        %2191 = vmatprep.subr.bf16.mxu0 0
        %2192 = vmatpush1.bf16.xpose.msra.mxu0 0
        %2193 = vmatprep.subr.bf16.mxu0 0
        %2194 = vmatpush1.bf16.xpose.msra.mxu0 0
        %2195 = vmatprep.subr.bf16.mxu0 0
        %2196 = vmatpush1.bf16.xpose.msra.mxu0 0
        %2197 = vmatprep.subr.bf16.mxu0 0
        %2198 = vmatpush1.bf16.xpose.msra.mxu0 0
        %2199 = vmatprep.subr.bf16.mxu0 0
        %2200 = vmatpush1.bf16.xpose.msra.mxu0 0
        %2201 = vmatprep.subr.bf16.mxu0 0
        %2202 = vmatpush1.bf16.xpose.msra.mxu0 0
        %2203 = vmatprep.subr.bf16.mxu0 0
        %2204 = vmatpush1.bf16.xpose.msra.mxu0 0
        %2205 = vmatprep.subr.bf16.mxu0 0
        %2206 = vmatpush1.bf16.xpose.msra.mxu0 0
        %2207 = vmatprep.mubr.bf16.mxu0 0
        %2208 = vmatmul.mubr.bf16.gmra.mrb[0].mxu0 %v2152
        %v2209 = vpop.f32.mrb[0].mxu0
        %v2210 = vadd.f32 0.0, %v2209
        %v2211 = vpop.f32.mrb[0].mxu0
        %v2212 = vpop.f32.mrb[0].mxu0
        %v2213 = vadd.f32 0.0, %v2212
        %v2214 = vpop.f32.mrb[0].mxu0
        %2215 = vmatprep.mubr.bf16.mxu0 0
        %2216 = vmatmul.mubr.bf16.gmra.mrb[0].mxu0 %v2155
        %v2217 = vpop.f32.mrb[0].mxu0
        %v2218 = vadd.f32 0.0, %v2217
        %v2219 = vpop.f32.mrb[0].mxu0
        %v2220 = vpop.f32.mrb[0].mxu0
        %v2221 = vadd.f32 0.0, %v2220
        %v2222 = vpop.f32.mrb[0].mxu0
        %2223 = vmatprep.mubr.bf16.mxu0 0
        %2224 = vmatmul.mubr.bf16.gmra.mrb[0].mxu0 %v2158
        %v2225 = vpop.f32.mrb[0].mxu0
        %v2226 = vadd.f32 0.0, %v2225
        %v2227 = vpop.f32.mrb[0].mxu0
        %v2228 = vpop.f32.mrb[0].mxu0
        %v2229 = vadd.f32 0.0, %v2228
        %v2230 = vpop.f32.mrb[0].mxu0
        %2231 = vmatprep.mubr.bf16.mxu0 0
        %2232 = vmatmul.mubr.bf16.gmra.mrb[0].mxu0 %v2161
        %v2233 = vpop.f32.mrb[0].mxu0
        %v2234 = vadd.f32 0.0, %v2233
        %v2235 = vpop.f32.mrb[0].mxu0
        %v2236 = vpop.f32.mrb[0].mxu0
        %v2237 = vadd.f32 0.0, %v2236
        %v2238 = vpop.f32.mrb[0].mxu0
        %2239 = vdwg.mxu0
        %2240 = vrot.lane.b32.xlu0 %v944, 64
        %v2241 = vpop.permute.xlu0 %2240
        %2242 = vrot.lane.b32.xlu0 %v947, 64
        %v2243 = vpop.permute.xlu0 %2242
        %2244 = vrot.lane.b32.xlu0 %v950, 64
        %v2245 = vpop.permute.xlu0 %2244
        %2246 = vrot.lane.b32.xlu0 %v953, 64
        %v2247 = vpop.permute.xlu0 %2246
        %2248 = vrot.lane.b32.xlu0 %v945, 64
        %v2249 = vpop.permute.xlu0 %2248
        %2250 = vrot.lane.b32.xlu0 %v948, 64
        %v2251 = vpop.permute.xlu0 %2250
        %2252 = vrot.lane.b32.xlu0 %v951, 64
        %v2253 = vpop.permute.xlu0 %2252
        %2254 = vrot.lane.b32.xlu0 %v954, 64
        %v2255 = vpop.permute.xlu0 %2254
        %v2257 = vsel %vm956, %v2241, 0
        %v2260 = vsel %vm956, %v2243, 0
        %v2263 = vsel %vm956, %v2245, 0
        %v2266 = vsel %vm956, %v2247, 0
        %v2269 = vsel %vm956, %v2249, 0
        %v2272 = vsel %vm956, %v2251, 0
        %v2275 = vsel %vm956, %v2253, 0
        %v2278 = vsel %vm956, %v2255, 0
        %2280 = vmatprep.subr.bf16.mxu0 0
        %2281 = vmatpush1.bf16.xpose.msra.mxu0 %v2269
        %2282 = vmatprep.subr.bf16.mxu0 0
        %2283 = vmatpush1.bf16.xpose.msra.mxu0 %v2272
        %2284 = vmatprep.subr.bf16.mxu0 0
        %2285 = vmatpush1.bf16.xpose.msra.mxu0 %v2275
        %2286 = vmatprep.subr.bf16.mxu0 0
        %2287 = vmatpush1.bf16.xpose.msra.mxu0 %v2278
        %2288 = vmatprep.subr.bf16.mxu0 0
        %2289 = vmatpush1.bf16.xpose.msra.mxu0 0
        %2290 = vmatprep.subr.bf16.mxu0 0
        %2291 = vmatpush1.bf16.xpose.msra.mxu0 0
        %2292 = vmatprep.subr.bf16.mxu0 0
        %2293 = vmatpush1.bf16.xpose.msra.mxu0 0
        %2294 = vmatprep.subr.bf16.mxu0 0
        %2295 = vmatpush1.bf16.xpose.msra.mxu0 0
        %2296 = vmatprep.subr.bf16.mxu0 0
        %2297 = vmatpush1.bf16.xpose.msra.mxu0 0
        %2298 = vmatprep.subr.bf16.mxu0 0
        %2299 = vmatpush1.bf16.xpose.msra.mxu0 0
        %2300 = vmatprep.subr.bf16.mxu0 0
        %2301 = vmatpush1.bf16.xpose.msra.mxu0 0
        %2302 = vmatprep.subr.bf16.mxu0 0
        %2303 = vmatpush1.bf16.xpose.msra.mxu0 0
        %2304 = vmatprep.subr.bf16.mxu0 0
        %2305 = vmatpush1.bf16.xpose.msra.mxu0 0
        %2306 = vmatprep.subr.bf16.mxu0 0
        %2307 = vmatpush1.bf16.xpose.msra.mxu0 0
        %2308 = vmatprep.subr.bf16.mxu0 0
        %2309 = vmatpush1.bf16.xpose.msra.mxu0 0
        %2310 = vmatprep.subr.bf16.mxu0 0
        %2311 = vmatpush1.bf16.xpose.msra.mxu0 0
        %2312 = vmatprep.mubr.bf16.mxu0 0
        %2313 = vmatmul.mubr.bf16.gmra.mrb[0].mxu0 %v2257
        %v2314 = vpop.f32.mrb[0].mxu0
        %v2315 = vadd.f32 0.0, %v2314
        %v2316 = vpop.f32.mrb[0].mxu0
        %v2317 = vpop.f32.mrb[0].mxu0
        %v2318 = vadd.f32 0.0, %v2317
        %v2319 = vpop.f32.mrb[0].mxu0
        %2320 = vmatprep.mubr.bf16.mxu0 0
        %2321 = vmatmul.mubr.bf16.gmra.mrb[0].mxu0 %v2260
        %v2322 = vpop.f32.mrb[0].mxu0
        %v2323 = vadd.f32 0.0, %v2322
        %v2324 = vpop.f32.mrb[0].mxu0
        %v2325 = vpop.f32.mrb[0].mxu0
        %v2326 = vadd.f32 0.0, %v2325
        %v2327 = vpop.f32.mrb[0].mxu0
        %2328 = vmatprep.mubr.bf16.mxu0 0
        %2329 = vmatmul.mubr.bf16.gmra.mrb[0].mxu0 %v2263
        %v2330 = vpop.f32.mrb[0].mxu0
        %v2331 = vadd.f32 0.0, %v2330
        %v2332 = vpop.f32.mrb[0].mxu0
        %v2333 = vpop.f32.mrb[0].mxu0
        %v2334 = vadd.f32 0.0, %v2333
        %v2335 = vpop.f32.mrb[0].mxu0
        %2336 = vmatprep.mubr.bf16.mxu0 0
        %2337 = vmatmul.mubr.bf16.gmra.mrb[0].mxu0 %v2266
        %v2338 = vpop.f32.mrb[0].mxu0
        %v2339 = vadd.f32 0.0, %v2338
        %v2340 = vpop.f32.mrb[0].mxu0
        %v2341 = vpop.f32.mrb[0].mxu0
        %v2342 = vadd.f32 0.0, %v2341
        %v2343 = vpop.f32.mrb[0].mxu0
        %2344 = vdwg.mxu0
        %v2345 = vsel %vm1135, %v2210, -inf
        %2346 = vmax.xlane.f32.xlu0 %v2345
        %v2347 = vpop.xlane.xlu0 %2346
        %v2348 = vsel %vm1135, %v2213, -inf
        %2349 = vmax.xlane.f32.xlu0 %v2348
        %v2350 = vpop.xlane.xlu0 %2349
        %v2351 = vsel %vm1135, %v2218, -inf
        %2352 = vmax.xlane.f32.xlu0 %v2351
        %v2353 = vpop.xlane.xlu0 %2352
        %v2354 = vsel %vm1135, %v2221, -inf
        %2355 = vmax.xlane.f32.xlu0 %v2354
        %v2356 = vpop.xlane.xlu0 %2355
        %v2357 = vsel %vm1135, %v2226, -inf
        %2358 = vmax.xlane.f32.xlu0 %v2357
        %v2359 = vpop.xlane.xlu0 %2358
        %v2360 = vsel %vm1135, %v2229, -inf
        %2361 = vmax.xlane.f32.xlu0 %v2360
        %v2362 = vpop.xlane.xlu0 %2361
        %v2363 = vsel %vm1135, %v2234, -inf
        %2364 = vmax.xlane.f32.xlu0 %v2363
        %v2365 = vpop.xlane.xlu0 %2364
        %v2366 = vsel %vm1135, %v2237, -inf
        %2367 = vmax.xlane.f32.xlu0 %v2366
        %v2368 = vpop.xlane.xlu0 %2367
        %v2369 = vsel %vm1135, %v2315, -inf
        %2370 = vmax.xlane.f32.xlu0 %v2369
        %v2371 = vpop.xlane.xlu0 %2370
        %v2372 = vsel %vm1135, %v2318, -inf
        %2373 = vmax.xlane.f32.xlu0 %v2372
        %v2374 = vpop.xlane.xlu0 %2373
        %v2375 = vsel %vm1135, %v2323, -inf
        %2376 = vmax.xlane.f32.xlu0 %v2375
        %v2377 = vpop.xlane.xlu0 %2376
        %v2378 = vsel %vm1135, %v2326, -inf
        %2379 = vmax.xlane.f32.xlu0 %v2378
        %v2380 = vpop.xlane.xlu0 %2379
        %v2381 = vsel %vm1135, %v2331, -inf
        %2382 = vmax.xlane.f32.xlu0 %v2381
        %v2383 = vpop.xlane.xlu0 %2382
        %v2384 = vsel %vm1135, %v2334, -inf
        %2385 = vmax.xlane.f32.xlu0 %v2384
        %v2386 = vpop.xlane.xlu0 %2385
        %v2387 = vsel %vm1135, %v2339, -inf
        %2388 = vmax.xlane.f32.xlu0 %v2387
        %v2389 = vpop.xlane.xlu0 %2388
        %v2390 = vsel %vm1135, %v2342, -inf
        %2391 = vmax.xlane.f32.xlu0 %v2390
        %v2392 = vpop.xlane.xlu0 %2391
        %v2393 = vsub.f32 %v2210, %v2347
        %v2394 = vsub.f32 %v2213, %v2350
        %v2395 = vsub.f32 %v2218, %v2353
        %v2396 = vsub.f32 %v2221, %v2356
        %v2397 = vsub.f32 %v2226, %v2359
        %v2398 = vsub.f32 %v2229, %v2362
        %v2399 = vsub.f32 %v2234, %v2365
        %v2400 = vsub.f32 %v2237, %v2368
        %v2401 = vsub.f32 %v2315, %v2371
        %v2402 = vsub.f32 %v2318, %v2374
        %v2403 = vsub.f32 %v2323, %v2377
        %v2404 = vsub.f32 %v2326, %v2380
        %v2405 = vsub.f32 %v2331, %v2383
        %v2406 = vsub.f32 %v2334, %v2386
        %v2407 = vsub.f32 %v2339, %v2389
        %v2408 = vsub.f32 %v2342, %v2392
        %v2409 = vmul.f32 %v2393, 1.442695
        %v2410 = vpow.pop %v2409
        %v2411 = vmul.f32 %v2394, 1.442695
        %v2412 = vpow.pop %v2411
        %v2413 = vmul.f32 %v2395, 1.442695
        %v2414 = vpow.pop %v2413
        %v2415 = vmul.f32 %v2396, 1.442695
        %v2416 = vpow.pop %v2415
        %v2417 = vmul.f32 %v2397, 1.442695
        %v2418 = vpow.pop %v2417
        %v2419 = vmul.f32 %v2398, 1.442695
        %v2420 = vpow.pop %v2419
        %v2421 = vmul.f32 %v2399, 1.442695
        %v2422 = vpow.pop %v2421
        %v2423 = vmul.f32 %v2400, 1.442695
        %v2424 = vpow.pop %v2423
        %v2425 = vmul.f32 %v2401, 1.442695
        %v2426 = vpow.pop %v2425
        %v2427 = vmul.f32 %v2402, 1.442695
        %v2428 = vpow.pop %v2427
        %v2429 = vmul.f32 %v2403, 1.442695
        %v2430 = vpow.pop %v2429
        %v2431 = vmul.f32 %v2404, 1.442695
        %v2432 = vpow.pop %v2431
        %v2433 = vmul.f32 %v2405, 1.442695
        %v2434 = vpow.pop %v2433
        %v2435 = vmul.f32 %v2406, 1.442695
        %v2436 = vpow.pop %v2435
        %v2437 = vmul.f32 %v2407, 1.442695
        %v2438 = vpow.pop %v2437
        %v2439 = vmul.f32 %v2408, 1.442695
        %v2440 = vpow.pop %v2439
        %v2441 = vsel %vm1135, %v2410, 0.0
        %2442 = vadd.xlane.f32.xlu0 %v2441
        %v2443 = vpop.xlane.xlu0 %2442
        %v2444 = vsel %vm1135, %v2412, 0.0
        %2445 = vadd.xlane.f32.xlu0 %v2444
        %v2446 = vpop.xlane.xlu0 %2445
        %v2447 = vsel %vm1135, %v2414, 0.0
        %2448 = vadd.xlane.f32.xlu0 %v2447
        %v2449 = vpop.xlane.xlu0 %2448
        %v2450 = vsel %vm1135, %v2416, 0.0
        %2451 = vadd.xlane.f32.xlu0 %v2450
        %v2452 = vpop.xlane.xlu0 %2451
        %v2453 = vsel %vm1135, %v2418, 0.0
        %2454 = vadd.xlane.f32.xlu0 %v2453
        %v2455 = vpop.xlane.xlu0 %2454
        %v2456 = vsel %vm1135, %v2420, 0.0
        %2457 = vadd.xlane.f32.xlu0 %v2456
        %v2458 = vpop.xlane.xlu0 %2457
        %v2459 = vsel %vm1135, %v2422, 0.0
        %2460 = vadd.xlane.f32.xlu0 %v2459
        %v2461 = vpop.xlane.xlu0 %2460
        %v2462 = vsel %vm1135, %v2424, 0.0
        %2463 = vadd.xlane.f32.xlu0 %v2462
        %v2464 = vpop.xlane.xlu0 %2463
        %v2465 = vsel %vm1135, %v2426, 0.0
        %2466 = vadd.xlane.f32.xlu0 %v2465
        %v2467 = vpop.xlane.xlu0 %2466
        %v2468 = vsel %vm1135, %v2428, 0.0
        %2469 = vadd.xlane.f32.xlu0 %v2468
        %v2470 = vpop.xlane.xlu0 %2469
        %v2471 = vsel %vm1135, %v2430, 0.0
        %2472 = vadd.xlane.f32.xlu0 %v2471
        %v2473 = vpop.xlane.xlu0 %2472
        %v2474 = vsel %vm1135, %v2432, 0.0
        %2475 = vadd.xlane.f32.xlu0 %v2474
        %v2476 = vpop.xlane.xlu0 %2475
        %v2477 = vsel %vm1135, %v2434, 0.0
        %2478 = vadd.xlane.f32.xlu0 %v2477
        %v2479 = vpop.xlane.xlu0 %2478
        %v2480 = vsel %vm1135, %v2436, 0.0
        %2481 = vadd.xlane.f32.xlu0 %v2480
        %v2482 = vpop.xlane.xlu0 %2481
        %v2483 = vsel %vm1135, %v2438, 0.0
        %2484 = vadd.xlane.f32.xlu0 %v2483
        %v2485 = vpop.xlane.xlu0 %2484
        %v2486 = vsel %vm1135, %v2440, 0.0
        %2487 = vadd.xlane.f32.xlu0 %v2486
        %v2488 = vpop.xlane.xlu0 %2487
        %v2489 = vrcp.pop %v2443
        %v2490 = vrcp.pop %v2446
        %v2491 = vrcp.pop %v2449
        %v2492 = vrcp.pop %v2452
        %v2493 = vrcp.pop %v2455
        %v2494 = vrcp.pop %v2458
        %v2495 = vrcp.pop %v2461
        %v2496 = vrcp.pop %v2464
        %v2497 = vrcp.pop %v2467
        %v2498 = vrcp.pop %v2470
        %v2499 = vrcp.pop %v2473
        %v2500 = vrcp.pop %v2476
        %v2501 = vrcp.pop %v2479
        %v2502 = vrcp.pop %v2482
        %v2503 = vrcp.pop %v2485
        %v2504 = vrcp.pop %v2488
        %v2505 = vmul.f32 %v2410, %v2489
        %v2506 = vmul.f32 %v2412, %v2490
        %v2507 = vmul.f32 %v2414, %v2491
        %v2508 = vmul.f32 %v2416, %v2492
        %v2509 = vmul.f32 %v2418, %v2493
        %v2510 = vmul.f32 %v2420, %v2494
        %v2511 = vmul.f32 %v2422, %v2495
        %v2512 = vmul.f32 %v2424, %v2496
        %v2513 = vmul.f32 %v2426, %v2497
        %v2514 = vmul.f32 %v2428, %v2498
        %v2515 = vmul.f32 %v2430, %v2499
        %v2516 = vmul.f32 %v2432, %v2500
        %v2517 = vmul.f32 %v2434, %v2501
        %v2518 = vmul.f32 %v2436, %v2502
        %v2519 = vmul.f32 %v2438, %v2503
        %v2520 = vmul.f32 %v2440, %v2504
        %v2521 = vpack.c.bf16 %v2506, %v2505
        %v2522 = vpack.c.bf16 %v2508, %v2507
        %v2523 = vpack.c.bf16 %v2510, %v2509
        %v2524 = vpack.c.bf16 %v2512, %v2511
        %v2525 = vpack.c.bf16 %v2514, %v2513
        %v2526 = vpack.c.bf16 %v2516, %v2515
        %v2527 = vpack.c.bf16 %v2518, %v2517
        %v2528 = vpack.c.bf16 %v2520, %v2519
        %2529 = vrot.lane.b32.xlu0 %v934, 64
        %v2530 = vpop.permute.xlu0 %2529
        %2531 = vrot.lane.b32.xlu0 %v937, 64
        %v2532 = vpop.permute.xlu0 %2531
        %2533 = vrot.lane.b32.xlu0 %v940, 64
        %v2534 = vpop.permute.xlu0 %2533
        %2535 = vrot.lane.b32.xlu0 %v943, 64
        %v2536 = vpop.permute.xlu0 %2535
        %v2542 = vsel %vm1135, %v2521, 0
        %v2545 = vsel %vm1135, %v2522, 0
        %v2548 = vsel %vm1135, %v2523, 0
        %v2551 = vsel %vm1135, %v2524, 0
        %2553 = vmatprep.subr.bf16.mxu0 0
        %2554 = vmatpush1.bf16.msra.mxu0 %v2530
        %2555 = vmatprep.subr.bf16.mxu0 0
        %2556 = vmatpush1.bf16.msra.mxu0 %v2532
        %2557 = vmatprep.subr.bf16.mxu0 0
        %2558 = vmatpush1.bf16.msra.mxu0 %v2534
        %2559 = vmatprep.subr.bf16.mxu0 0
        %2560 = vmatpush1.bf16.msra.mxu0 %v2536
        %2561 = vmatprep.subr.bf16.mxu0 0
        %2562 = vmatpush1.bf16.msra.mxu0 0
        %2563 = vmatprep.subr.bf16.mxu0 0
        %2564 = vmatpush1.bf16.msra.mxu0 0
        %2565 = vmatprep.subr.bf16.mxu0 0
        %2566 = vmatpush1.bf16.msra.mxu0 0
        %2567 = vmatprep.subr.bf16.mxu0 0
        %2568 = vmatpush1.bf16.msra.mxu0 0
        %2569 = vmatprep.subr.bf16.mxu0 0
        %2570 = vmatpush1.bf16.msra.mxu0 0
        %2571 = vmatprep.subr.bf16.mxu0 0
        %2572 = vmatpush1.bf16.msra.mxu0 0
        %2573 = vmatprep.subr.bf16.mxu0 0
        %2574 = vmatpush1.bf16.msra.mxu0 0
        %2575 = vmatprep.subr.bf16.mxu0 0
        %2576 = vmatpush1.bf16.msra.mxu0 0
        %2577 = vmatprep.subr.bf16.mxu0 0
        %2578 = vmatpush1.bf16.msra.mxu0 0
        %2579 = vmatprep.subr.bf16.mxu0 0
        %2580 = vmatpush1.bf16.msra.mxu0 0
        %2581 = vmatprep.subr.bf16.mxu0 0
        %2582 = vmatpush1.bf16.msra.mxu0 0
        %2583 = vmatprep.subr.bf16.mxu0 0
        %2584 = vmatpush1.bf16.msra.mxu0 0
        %2585 = vmatprep.mubr.bf16.mxu0 0
        %2586 = vmatmul.mubr.bf16.gmra.mrb[0].mxu0 %v2542
        %v2587 = vpop.f32.mrb[0].mxu0
        %v2588 = vadd.f32 0.0, %v2587
        %v2589 = vpop.f32.mrb[0].mxu0
        %v2590 = vpop.f32.mrb[0].mxu0
        %v2591 = vadd.f32 0.0, %v2590
        %v2592 = vpop.f32.mrb[0].mxu0
        %2593 = vmatprep.mubr.bf16.mxu0 0
        %2594 = vmatmul.mubr.bf16.gmra.mrb[0].mxu0 %v2545
        %v2595 = vpop.f32.mrb[0].mxu0
        %v2596 = vadd.f32 0.0, %v2595
        %v2597 = vpop.f32.mrb[0].mxu0
        %v2598 = vpop.f32.mrb[0].mxu0
        %v2599 = vadd.f32 0.0, %v2598
        %v2600 = vpop.f32.mrb[0].mxu0
        %2601 = vmatprep.mubr.bf16.mxu0 0
        %2602 = vmatmul.mubr.bf16.gmra.mrb[0].mxu0 %v2548
        %v2603 = vpop.f32.mrb[0].mxu0
        %v2604 = vadd.f32 0.0, %v2603
        %v2605 = vpop.f32.mrb[0].mxu0
        %v2606 = vpop.f32.mrb[0].mxu0
        %v2607 = vadd.f32 0.0, %v2606
        %v2608 = vpop.f32.mrb[0].mxu0
        %2609 = vmatprep.mubr.bf16.mxu0 0
        %2610 = vmatmul.mubr.bf16.gmra.mrb[0].mxu0 %v2551
        %v2611 = vpop.f32.mrb[0].mxu0
        %v2612 = vadd.f32 0.0, %v2611
        %v2613 = vpop.f32.mrb[0].mxu0
        %v2614 = vpop.f32.mrb[0].mxu0
        %v2615 = vadd.f32 0.0, %v2614
        %v2616 = vpop.f32.mrb[0].mxu0
        %2617 = vdwg.mxu0
        %2618 = vrot.lane.b32.xlu0 %v946, 64
        %v2619 = vpop.permute.xlu0 %2618
        %2620 = vrot.lane.b32.xlu0 %v949, 64
        %v2621 = vpop.permute.xlu0 %2620
        %2622 = vrot.lane.b32.xlu0 %v952, 64
        %v2623 = vpop.permute.xlu0 %2622
        %2624 = vrot.lane.b32.xlu0 %v955, 64
        %v2625 = vpop.permute.xlu0 %2624
        %v2631 = vsel %vm1135, %v2525, 0
        %v2634 = vsel %vm1135, %v2526, 0
        %v2637 = vsel %vm1135, %v2527, 0
        %v2640 = vsel %vm1135, %v2528, 0
        %2642 = vmatprep.subr.bf16.mxu0 0
        %2643 = vmatpush1.bf16.msra.mxu0 %v2619
        %2644 = vmatprep.subr.bf16.mxu0 0
        %2645 = vmatpush1.bf16.msra.mxu0 %v2621
        %2646 = vmatprep.subr.bf16.mxu0 0
        %2647 = vmatpush1.bf16.msra.mxu0 %v2623
        %2648 = vmatprep.subr.bf16.mxu0 0
        %2649 = vmatpush1.bf16.msra.mxu0 %v2625
        %2650 = vmatprep.subr.bf16.mxu0 0
        %2651 = vmatpush1.bf16.msra.mxu0 0
        %2652 = vmatprep.subr.bf16.mxu0 0
        %2653 = vmatpush1.bf16.msra.mxu0 0
        %2654 = vmatprep.subr.bf16.mxu0 0
        %2655 = vmatpush1.bf16.msra.mxu0 0
        %2656 = vmatprep.subr.bf16.mxu0 0
        %2657 = vmatpush1.bf16.msra.mxu0 0
        %2658 = vmatprep.subr.bf16.mxu0 0
        %2659 = vmatpush1.bf16.msra.mxu0 0
        %2660 = vmatprep.subr.bf16.mxu0 0
        %2661 = vmatpush1.bf16.msra.mxu0 0
        %2662 = vmatprep.subr.bf16.mxu0 0
        %2663 = vmatpush1.bf16.msra.mxu0 0
        %2664 = vmatprep.subr.bf16.mxu0 0
        %2665 = vmatpush1.bf16.msra.mxu0 0
        %2666 = vmatprep.subr.bf16.mxu0 0
        %2667 = vmatpush1.bf16.msra.mxu0 0
        %2668 = vmatprep.subr.bf16.mxu0 0
        %2669 = vmatpush1.bf16.msra.mxu0 0
        %2670 = vmatprep.subr.bf16.mxu0 0
        %2671 = vmatpush1.bf16.msra.mxu0 0
        %2672 = vmatprep.subr.bf16.mxu0 0
        %2673 = vmatpush1.bf16.msra.mxu0 0
        %2674 = vmatprep.mubr.bf16.mxu0 0
        %2675 = vmatmul.mubr.bf16.gmra.mrb[0].mxu0 %v2631
        %v2676 = vpop.f32.mrb[0].mxu0
        %v2677 = vadd.f32 0.0, %v2676
        %v2678 = vpop.f32.mrb[0].mxu0
        %v2679 = vpop.f32.mrb[0].mxu0
        %v2680 = vadd.f32 0.0, %v2679
        %v2681 = vpop.f32.mrb[0].mxu0
        %2682 = vmatprep.mubr.bf16.mxu0 0
        %2683 = vmatmul.mubr.bf16.gmra.mrb[0].mxu0 %v2634
        %v2684 = vpop.f32.mrb[0].mxu0
        %v2685 = vadd.f32 0.0, %v2684
        %v2686 = vpop.f32.mrb[0].mxu0
        %v2687 = vpop.f32.mrb[0].mxu0
        %v2688 = vadd.f32 0.0, %v2687
        %v2689 = vpop.f32.mrb[0].mxu0
        %2690 = vmatprep.mubr.bf16.mxu0 0
        %2691 = vmatmul.mubr.bf16.gmra.mrb[0].mxu0 %v2637
        %v2692 = vpop.f32.mrb[0].mxu0
        %v2693 = vadd.f32 0.0, %v2692
        %v2694 = vpop.f32.mrb[0].mxu0
        %v2695 = vpop.f32.mrb[0].mxu0
        %v2696 = vadd.f32 0.0, %v2695
        %v2697 = vpop.f32.mrb[0].mxu0
        %2698 = vmatprep.mubr.bf16.mxu0 0
        %2699 = vmatmul.mubr.bf16.gmra.mrb[0].mxu0 %v2640
        %v2700 = vpop.f32.mrb[0].mxu0
        %v2701 = vadd.f32 0.0, %v2700
        %v2702 = vpop.f32.mrb[0].mxu0
        %v2703 = vpop.f32.mrb[0].mxu0
        %v2704 = vadd.f32 0.0, %v2703
        %v2705 = vpop.f32.mrb[0].mxu0
        %2706 = vdwg.mxu0
        %v2707 = vpack.c.bf16 %v2591, %v2588
        %v2708 = vpack.c.bf16 %v2599, %v2596
        %v2709 = vpack.c.bf16 %v2607, %v2604
        %v2710 = vpack.c.bf16 %v2615, %v2612
        %v2711 = vpack.c.bf16 %v2680, %v2677
        %v2712 = vpack.c.bf16 %v2688, %v2685
        %v2713 = vpack.c.bf16 %v2696, %v2693
        %v2714 = vpack.c.bf16 %v2704, %v2701
        %2723 = vrot.lane.b32.xlu0 %v2707, 64
        %v2724 = vpop.permute.xlu0 %2723
        %2725 = vrot.lane.b32.xlu0 %v2708, 64
        %v2726 = vpop.permute.xlu0 %2725
        %2727 = vrot.lane.b32.xlu0 %v2709, 64
        %v2728 = vpop.permute.xlu0 %2727
        %2729 = vrot.lane.b32.xlu0 %v2710, 64
        %v2730 = vpop.permute.xlu0 %2729
        %2731 = vrot.lane.b32.xlu0 %v2711, 64
        %v2732 = vpop.permute.xlu0 %2731
        %2733 = vrot.lane.b32.xlu0 %v2712, 64
        %v2734 = vpop.permute.xlu0 %2733
        %2735 = vrot.lane.b32.xlu0 %v2713, 64
        %v2736 = vpop.permute.xlu0 %2735
        %2737 = vrot.lane.b32.xlu0 %v2714, 64
        %v2738 = vpop.permute.xlu0 %2737
        %vm2747 = vcmask 785920
        %2748 = vst.msk [vmem:[#allocation2] sm:$0xff] %vm2747, %v2724
        %2749 = vst.msk [vmem:[#allocation2 + $0x8] sm:$0xff] %vm2747, %v2726
        %2750 = vst.msk [vmem:[#allocation2 + $0x10] sm:$0xff] %vm2747, %v2728
        %2751 = vst.msk [vmem:[#allocation2 + $0x18] sm:$0xff] %vm2747, %v2730
        %2752 = vst.msk [vmem:[#allocation2 + $0x20] sm:$0xff] %vm2747, %v2732
        %2753 = vst.msk [vmem:[#allocation2 + $0x28] sm:$0xff] %vm2747, %v2734
        %2754 = vst.msk [vmem:[#allocation2 + $0x30] sm:$0xff] %vm2747, %v2736
        %2755 = vst.msk [vmem:[#allocation2 + $0x38] sm:$0xff] %vm2747, %v2738
        %2756 = vrot.lane.b32.xlu0 %v932, 32
        %v2757 = vpop.permute.xlu0 %2756
        %2758 = vrot.lane.b32.xlu0 %v935, 32
        %v2759 = vpop.permute.xlu0 %2758
        %2760 = vrot.lane.b32.xlu0 %v938, 32
        %v2761 = vpop.permute.xlu0 %2760
        %2762 = vrot.lane.b32.xlu0 %v941, 32
        %v2763 = vpop.permute.xlu0 %2762
        %2764 = vrot.lane.b32.xlu0 %v933, 32
        %v2765 = vpop.permute.xlu0 %2764
        %2766 = vrot.lane.b32.xlu0 %v936, 32
        %v2767 = vpop.permute.xlu0 %2766
        %2768 = vrot.lane.b32.xlu0 %v939, 32
        %v2769 = vpop.permute.xlu0 %2768
        %2770 = vrot.lane.b32.xlu0 %v942, 32
        %v2771 = vpop.permute.xlu0 %2770
        %v2773 = vsel %vm956, %v2757, 0
        %v2776 = vsel %vm956, %v2759, 0
        %v2779 = vsel %vm956, %v2761, 0
        %v2782 = vsel %vm956, %v2763, 0
        %v2785 = vsel %vm956, %v2765, 0
        %v2788 = vsel %vm956, %v2767, 0
        %v2791 = vsel %vm956, %v2769, 0
        %v2794 = vsel %vm956, %v2771, 0
        %2796 = vmatprep.subr.bf16.mxu0 0
        %2797 = vmatpush1.bf16.xpose.msra.mxu0 %v2785
        %2798 = vmatprep.subr.bf16.mxu0 0
        %2799 = vmatpush1.bf16.xpose.msra.mxu0 %v2788
        %2800 = vmatprep.subr.bf16.mxu0 0
        %2801 = vmatpush1.bf16.xpose.msra.mxu0 %v2791
        %2802 = vmatprep.subr.bf16.mxu0 0
        %2803 = vmatpush1.bf16.xpose.msra.mxu0 %v2794
        %2804 = vmatprep.subr.bf16.mxu0 0
        %2805 = vmatpush1.bf16.xpose.msra.mxu0 0
        %2806 = vmatprep.subr.bf16.mxu0 0
        %2807 = vmatpush1.bf16.xpose.msra.mxu0 0
        %2808 = vmatprep.subr.bf16.mxu0 0
        %2809 = vmatpush1.bf16.xpose.msra.mxu0 0
        %2810 = vmatprep.subr.bf16.mxu0 0
        %2811 = vmatpush1.bf16.xpose.msra.mxu0 0
        %2812 = vmatprep.subr.bf16.mxu0 0
        %2813 = vmatpush1.bf16.xpose.msra.mxu0 0
        %2814 = vmatprep.subr.bf16.mxu0 0
        %2815 = vmatpush1.bf16.xpose.msra.mxu0 0
        %2816 = vmatprep.subr.bf16.mxu0 0
        %2817 = vmatpush1.bf16.xpose.msra.mxu0 0
        %2818 = vmatprep.subr.bf16.mxu0 0
        %2819 = vmatpush1.bf16.xpose.msra.mxu0 0
        %2820 = vmatprep.subr.bf16.mxu0 0
        %2821 = vmatpush1.bf16.xpose.msra.mxu0 0
        %2822 = vmatprep.subr.bf16.mxu0 0
        %2823 = vmatpush1.bf16.xpose.msra.mxu0 0
        %2824 = vmatprep.subr.bf16.mxu0 0
        %2825 = vmatpush1.bf16.xpose.msra.mxu0 0
        %2826 = vmatprep.subr.bf16.mxu0 0
        %2827 = vmatpush1.bf16.xpose.msra.mxu0 0
        %2828 = vmatprep.mubr.bf16.mxu0 0
        %2829 = vmatmul.mubr.bf16.gmra.mrb[0].mxu0 %v2773
        %v2830 = vpop.f32.mrb[0].mxu0
        %v2831 = vadd.f32 0.0, %v2830
        %v2832 = vpop.f32.mrb[0].mxu0
        %v2833 = vpop.f32.mrb[0].mxu0
        %v2834 = vadd.f32 0.0, %v2833
        %v2835 = vpop.f32.mrb[0].mxu0
        %2836 = vmatprep.mubr.bf16.mxu0 0
        %2837 = vmatmul.mubr.bf16.gmra.mrb[0].mxu0 %v2776
        %v2838 = vpop.f32.mrb[0].mxu0
        %v2839 = vadd.f32 0.0, %v2838
        %v2840 = vpop.f32.mrb[0].mxu0
        %v2841 = vpop.f32.mrb[0].mxu0
        %v2842 = vadd.f32 0.0, %v2841
        %v2843 = vpop.f32.mrb[0].mxu0
        %2844 = vmatprep.mubr.bf16.mxu0 0
        %2845 = vmatmul.mubr.bf16.gmra.mrb[0].mxu0 %v2779
        %v2846 = vpop.f32.mrb[0].mxu0
        %v2847 = vadd.f32 0.0, %v2846
        %v2848 = vpop.f32.mrb[0].mxu0
        %v2849 = vpop.f32.mrb[0].mxu0
        %v2850 = vadd.f32 0.0, %v2849
        %v2851 = vpop.f32.mrb[0].mxu0
        %2852 = vmatprep.mubr.bf16.mxu0 0
        %2853 = vmatmul.mubr.bf16.gmra.mrb[0].mxu0 %v2782
        %v2854 = vpop.f32.mrb[0].mxu0
        %v2855 = vadd.f32 0.0, %v2854
        %v2856 = vpop.f32.mrb[0].mxu0
        %v2857 = vpop.f32.mrb[0].mxu0
        %v2858 = vadd.f32 0.0, %v2857
        %v2859 = vpop.f32.mrb[0].mxu0
        %2860 = vdwg.mxu0
        %2861 = vrot.lane.b32.xlu0 %v944, 32
        %v2862 = vpop.permute.xlu0 %2861
        %2863 = vrot.lane.b32.xlu0 %v947, 32
        %v2864 = vpop.permute.xlu0 %2863
        %2865 = vrot.lane.b32.xlu0 %v950, 32
        %v2866 = vpop.permute.xlu0 %2865
        %2867 = vrot.lane.b32.xlu0 %v953, 32
        %v2868 = vpop.permute.xlu0 %2867
        %2869 = vrot.lane.b32.xlu0 %v945, 32
        %v2870 = vpop.permute.xlu0 %2869
        %2871 = vrot.lane.b32.xlu0 %v948, 32
        %v2872 = vpop.permute.xlu0 %2871
        %2873 = vrot.lane.b32.xlu0 %v951, 32
        %v2874 = vpop.permute.xlu0 %2873
        %2875 = vrot.lane.b32.xlu0 %v954, 32
        %v2876 = vpop.permute.xlu0 %2875
        %v2878 = vsel %vm956, %v2862, 0
        %v2881 = vsel %vm956, %v2864, 0
        %v2884 = vsel %vm956, %v2866, 0
        %v2887 = vsel %vm956, %v2868, 0
        %v2890 = vsel %vm956, %v2870, 0
        %v2893 = vsel %vm956, %v2872, 0
        %v2896 = vsel %vm956, %v2874, 0
        %v2899 = vsel %vm956, %v2876, 0
        %2901 = vmatprep.subr.bf16.mxu0 0
        %2902 = vmatpush1.bf16.xpose.msra.mxu0 %v2890
        %2903 = vmatprep.subr.bf16.mxu0 0
        %2904 = vmatpush1.bf16.xpose.msra.mxu0 %v2893
        %2905 = vmatprep.subr.bf16.mxu0 0
        %2906 = vmatpush1.bf16.xpose.msra.mxu0 %v2896
        %2907 = vmatprep.subr.bf16.mxu0 0
        %2908 = vmatpush1.bf16.xpose.msra.mxu0 %v2899
        %2909 = vmatprep.subr.bf16.mxu0 0
        %2910 = vmatpush1.bf16.xpose.msra.mxu0 0
        %2911 = vmatprep.subr.bf16.mxu0 0
        %2912 = vmatpush1.bf16.xpose.msra.mxu0 0
        %2913 = vmatprep.subr.bf16.mxu0 0
        %2914 = vmatpush1.bf16.xpose.msra.mxu0 0
        %2915 = vmatprep.subr.bf16.mxu0 0
        %2916 = vmatpush1.bf16.xpose.msra.mxu0 0
        %2917 = vmatprep.subr.bf16.mxu0 0
        %2918 = vmatpush1.bf16.xpose.msra.mxu0 0
        %2919 = vmatprep.subr.bf16.mxu0 0
        %2920 = vmatpush1.bf16.xpose.msra.mxu0 0
        %2921 = vmatprep.subr.bf16.mxu0 0
        %2922 = vmatpush1.bf16.xpose.msra.mxu0 0
        %2923 = vmatprep.subr.bf16.mxu0 0
        %2924 = vmatpush1.bf16.xpose.msra.mxu0 0
        %2925 = vmatprep.subr.bf16.mxu0 0
        %2926 = vmatpush1.bf16.xpose.msra.mxu0 0
        %2927 = vmatprep.subr.bf16.mxu0 0
        %2928 = vmatpush1.bf16.xpose.msra.mxu0 0
        %2929 = vmatprep.subr.bf16.mxu0 0
        %2930 = vmatpush1.bf16.xpose.msra.mxu0 0
        %2931 = vmatprep.subr.bf16.mxu0 0
        %2932 = vmatpush1.bf16.xpose.msra.mxu0 0
        %2933 = vmatprep.mubr.bf16.mxu0 0
        %2934 = vmatmul.mubr.bf16.gmra.mrb[0].mxu0 %v2878
        %v2935 = vpop.f32.mrb[0].mxu0
        %v2936 = vadd.f32 0.0, %v2935
        %v2937 = vpop.f32.mrb[0].mxu0
        %v2938 = vpop.f32.mrb[0].mxu0
        %v2939 = vadd.f32 0.0, %v2938
        %v2940 = vpop.f32.mrb[0].mxu0
        %2941 = vmatprep.mubr.bf16.mxu0 0
        %2942 = vmatmul.mubr.bf16.gmra.mrb[0].mxu0 %v2881
        %v2943 = vpop.f32.mrb[0].mxu0
        %v2944 = vadd.f32 0.0, %v2943
        %v2945 = vpop.f32.mrb[0].mxu0
        %v2946 = vpop.f32.mrb[0].mxu0
        %v2947 = vadd.f32 0.0, %v2946
        %v2948 = vpop.f32.mrb[0].mxu0
        %2949 = vmatprep.mubr.bf16.mxu0 0
        %2950 = vmatmul.mubr.bf16.gmra.mrb[0].mxu0 %v2884
        %v2951 = vpop.f32.mrb[0].mxu0
        %v2952 = vadd.f32 0.0, %v2951
        %v2953 = vpop.f32.mrb[0].mxu0
        %v2954 = vpop.f32.mrb[0].mxu0
        %v2955 = vadd.f32 0.0, %v2954
        %v2956 = vpop.f32.mrb[0].mxu0
        %2957 = vmatprep.mubr.bf16.mxu0 0
        %2958 = vmatmul.mubr.bf16.gmra.mrb[0].mxu0 %v2887
        %v2959 = vpop.f32.mrb[0].mxu0
        %v2960 = vadd.f32 0.0, %v2959
        %v2961 = vpop.f32.mrb[0].mxu0
        %v2962 = vpop.f32.mrb[0].mxu0
        %v2963 = vadd.f32 0.0, %v2962
        %v2964 = vpop.f32.mrb[0].mxu0
        %2965 = vdwg.mxu0
        %v2966 = vsel %vm1135, %v2831, -inf
        %2967 = vmax.xlane.f32.xlu0 %v2966
        %v2968 = vpop.xlane.xlu0 %2967
        %v2969 = vsel %vm1135, %v2834, -inf
        %2970 = vmax.xlane.f32.xlu0 %v2969
        %v2971 = vpop.xlane.xlu0 %2970
        %v2972 = vsel %vm1135, %v2839, -inf
        %2973 = vmax.xlane.f32.xlu0 %v2972
        %v2974 = vpop.xlane.xlu0 %2973
        %v2975 = vsel %vm1135, %v2842, -inf
        %2976 = vmax.xlane.f32.xlu0 %v2975
        %v2977 = vpop.xlane.xlu0 %2976
        %v2978 = vsel %vm1135, %v2847, -inf
        %2979 = vmax.xlane.f32.xlu0 %v2978
        %v2980 = vpop.xlane.xlu0 %2979
        %v2981 = vsel %vm1135, %v2850, -inf
        %2982 = vmax.xlane.f32.xlu0 %v2981
        %v2983 = vpop.xlane.xlu0 %2982
        %v2984 = vsel %vm1135, %v2855, -inf
        %2985 = vmax.xlane.f32.xlu0 %v2984
        %v2986 = vpop.xlane.xlu0 %2985
        %v2987 = vsel %vm1135, %v2858, -inf
        %2988 = vmax.xlane.f32.xlu0 %v2987
        %v2989 = vpop.xlane.xlu0 %2988
        %v2990 = vsel %vm1135, %v2936, -inf
        %2991 = vmax.xlane.f32.xlu0 %v2990
        %v2992 = vpop.xlane.xlu0 %2991
        %v2993 = vsel %vm1135, %v2939, -inf
        %2994 = vmax.xlane.f32.xlu0 %v2993
        %v2995 = vpop.xlane.xlu0 %2994
        %v2996 = vsel %vm1135, %v2944, -inf
        %2997 = vmax.xlane.f32.xlu0 %v2996
        %v2998 = vpop.xlane.xlu0 %2997
        %v2999 = vsel %vm1135, %v2947, -inf
        %3000 = vmax.xlane.f32.xlu0 %v2999
        %v3001 = vpop.xlane.xlu0 %3000
        %v3002 = vsel %vm1135, %v2952, -inf
        %3003 = vmax.xlane.f32.xlu0 %v3002
        %v3004 = vpop.xlane.xlu0 %3003
        %v3005 = vsel %vm1135, %v2955, -inf
        %3006 = vmax.xlane.f32.xlu0 %v3005
        %v3007 = vpop.xlane.xlu0 %3006
        %v3008 = vsel %vm1135, %v2960, -inf
        %3009 = vmax.xlane.f32.xlu0 %v3008
        %v3010 = vpop.xlane.xlu0 %3009
        %v3011 = vsel %vm1135, %v2963, -inf
        %3012 = vmax.xlane.f32.xlu0 %v3011
        %v3013 = vpop.xlane.xlu0 %3012
        %v3014 = vsub.f32 %v2831, %v2968
        %v3015 = vsub.f32 %v2834, %v2971
        %v3016 = vsub.f32 %v2839, %v2974
        %v3017 = vsub.f32 %v2842, %v2977
        %v3018 = vsub.f32 %v2847, %v2980
        %v3019 = vsub.f32 %v2850, %v2983
        %v3020 = vsub.f32 %v2855, %v2986
        %v3021 = vsub.f32 %v2858, %v2989
        %v3022 = vsub.f32 %v2936, %v2992
        %v3023 = vsub.f32 %v2939, %v2995
        %v3024 = vsub.f32 %v2944, %v2998
        %v3025 = vsub.f32 %v2947, %v3001
        %v3026 = vsub.f32 %v2952, %v3004
        %v3027 = vsub.f32 %v2955, %v3007
        %v3028 = vsub.f32 %v2960, %v3010
        %v3029 = vsub.f32 %v2963, %v3013
        %v3030 = vmul.f32 %v3014, 1.442695
        %v3031 = vpow.pop %v3030
        %v3032 = vmul.f32 %v3015, 1.442695
        %v3033 = vpow.pop %v3032
        %v3034 = vmul.f32 %v3016, 1.442695
        %v3035 = vpow.pop %v3034
        %v3036 = vmul.f32 %v3017, 1.442695
        %v3037 = vpow.pop %v3036
        %v3038 = vmul.f32 %v3018, 1.442695
        %v3039 = vpow.pop %v3038
        %v3040 = vmul.f32 %v3019, 1.442695
        %v3041 = vpow.pop %v3040
        %v3042 = vmul.f32 %v3020, 1.442695
        %v3043 = vpow.pop %v3042
        %v3044 = vmul.f32 %v3021, 1.442695
        %v3045 = vpow.pop %v3044
        %v3046 = vmul.f32 %v3022, 1.442695
        %v3047 = vpow.pop %v3046
        %v3048 = vmul.f32 %v3023, 1.442695
        %v3049 = vpow.pop %v3048
        %v3050 = vmul.f32 %v3024, 1.442695
        %v3051 = vpow.pop %v3050
        %v3052 = vmul.f32 %v3025, 1.442695
        %v3053 = vpow.pop %v3052
        %v3054 = vmul.f32 %v3026, 1.442695
        %v3055 = vpow.pop %v3054
        %v3056 = vmul.f32 %v3027, 1.442695
        %v3057 = vpow.pop %v3056
        %v3058 = vmul.f32 %v3028, 1.442695
        %v3059 = vpow.pop %v3058
        %v3060 = vmul.f32 %v3029, 1.442695
        %v3061 = vpow.pop %v3060
        %v3062 = vsel %vm1135, %v3031, 0.0
        %3063 = vadd.xlane.f32.xlu0 %v3062
        %v3064 = vpop.xlane.xlu0 %3063
        %v3065 = vsel %vm1135, %v3033, 0.0
        %3066 = vadd.xlane.f32.xlu0 %v3065
        %v3067 = vpop.xlane.xlu0 %3066
        %v3068 = vsel %vm1135, %v3035, 0.0
        %3069 = vadd.xlane.f32.xlu0 %v3068
        %v3070 = vpop.xlane.xlu0 %3069
        %v3071 = vsel %vm1135, %v3037, 0.0
        %3072 = vadd.xlane.f32.xlu0 %v3071
        %v3073 = vpop.xlane.xlu0 %3072
        %v3074 = vsel %vm1135, %v3039, 0.0
        %3075 = vadd.xlane.f32.xlu0 %v3074
        %v3076 = vpop.xlane.xlu0 %3075
        %v3077 = vsel %vm1135, %v3041, 0.0
        %3078 = vadd.xlane.f32.xlu0 %v3077
        %v3079 = vpop.xlane.xlu0 %3078
        %v3080 = vsel %vm1135, %v3043, 0.0
        %3081 = vadd.xlane.f32.xlu0 %v3080
        %v3082 = vpop.xlane.xlu0 %3081
        %v3083 = vsel %vm1135, %v3045, 0.0
        %3084 = vadd.xlane.f32.xlu0 %v3083
        %v3085 = vpop.xlane.xlu0 %3084
        %v3086 = vsel %vm1135, %v3047, 0.0
        %3087 = vadd.xlane.f32.xlu0 %v3086
        %v3088 = vpop.xlane.xlu0 %3087
        %v3089 = vsel %vm1135, %v3049, 0.0
        %3090 = vadd.xlane.f32.xlu0 %v3089
        %v3091 = vpop.xlane.xlu0 %3090
        %v3092 = vsel %vm1135, %v3051, 0.0
        %3093 = vadd.xlane.f32.xlu0 %v3092
        %v3094 = vpop.xlane.xlu0 %3093
        %v3095 = vsel %vm1135, %v3053, 0.0
        %3096 = vadd.xlane.f32.xlu0 %v3095
        %v3097 = vpop.xlane.xlu0 %3096
        %v3098 = vsel %vm1135, %v3055, 0.0
        %3099 = vadd.xlane.f32.xlu0 %v3098
        %v3100 = vpop.xlane.xlu0 %3099
        %v3101 = vsel %vm1135, %v3057, 0.0
        %3102 = vadd.xlane.f32.xlu0 %v3101
        %v3103 = vpop.xlane.xlu0 %3102
        %v3104 = vsel %vm1135, %v3059, 0.0
        %3105 = vadd.xlane.f32.xlu0 %v3104
        %v3106 = vpop.xlane.xlu0 %3105
        %v3107 = vsel %vm1135, %v3061, 0.0
        %3108 = vadd.xlane.f32.xlu0 %v3107
        %v3109 = vpop.xlane.xlu0 %3108
        %v3110 = vrcp.pop %v3064
        %v3111 = vrcp.pop %v3067
        %v3112 = vrcp.pop %v3070
        %v3113 = vrcp.pop %v3073
        %v3114 = vrcp.pop %v3076
        %v3115 = vrcp.pop %v3079
        %v3116 = vrcp.pop %v3082
        %v3117 = vrcp.pop %v3085
        %v3118 = vrcp.pop %v3088
        %v3119 = vrcp.pop %v3091
        %v3120 = vrcp.pop %v3094
        %v3121 = vrcp.pop %v3097
        %v3122 = vrcp.pop %v3100
        %v3123 = vrcp.pop %v3103
        %v3124 = vrcp.pop %v3106
        %v3125 = vrcp.pop %v3109
        %v3126 = vmul.f32 %v3031, %v3110
        %v3127 = vmul.f32 %v3033, %v3111
        %v3128 = vmul.f32 %v3035, %v3112
        %v3129 = vmul.f32 %v3037, %v3113
        %v3130 = vmul.f32 %v3039, %v3114
        %v3131 = vmul.f32 %v3041, %v3115
        %v3132 = vmul.f32 %v3043, %v3116
        %v3133 = vmul.f32 %v3045, %v3117
        %v3134 = vmul.f32 %v3047, %v3118
        %v3135 = vmul.f32 %v3049, %v3119
        %v3136 = vmul.f32 %v3051, %v3120
        %v3137 = vmul.f32 %v3053, %v3121
        %v3138 = vmul.f32 %v3055, %v3122
        %v3139 = vmul.f32 %v3057, %v3123
        %v3140 = vmul.f32 %v3059, %v3124
        %v3141 = vmul.f32 %v3061, %v3125
        %v3142 = vpack.c.bf16 %v3127, %v3126
        %v3143 = vpack.c.bf16 %v3129, %v3128
        %v3144 = vpack.c.bf16 %v3131, %v3130
        %v3145 = vpack.c.bf16 %v3133, %v3132
        %v3146 = vpack.c.bf16 %v3135, %v3134
        %v3147 = vpack.c.bf16 %v3137, %v3136
        %v3148 = vpack.c.bf16 %v3139, %v3138
        %v3149 = vpack.c.bf16 %v3141, %v3140
        %3150 = vrot.lane.b32.xlu0 %v934, 32
        %v3151 = vpop.permute.xlu0 %3150
        %3152 = vrot.lane.b32.xlu0 %v937, 32
        %v3153 = vpop.permute.xlu0 %3152
        %3154 = vrot.lane.b32.xlu0 %v940, 32
        %v3155 = vpop.permute.xlu0 %3154
        %3156 = vrot.lane.b32.xlu0 %v943, 32
        %v3157 = vpop.permute.xlu0 %3156
        %v3163 = vsel %vm1135, %v3142, 0
        %v3166 = vsel %vm1135, %v3143, 0
        %v3169 = vsel %vm1135, %v3144, 0
        %v3172 = vsel %vm1135, %v3145, 0
        %3174 = vmatprep.subr.bf16.mxu0 0
        %3175 = vmatpush1.bf16.msra.mxu0 %v3151
        %3176 = vmatprep.subr.bf16.mxu0 0
        %3177 = vmatpush1.bf16.msra.mxu0 %v3153
        %3178 = vmatprep.subr.bf16.mxu0 0
        %3179 = vmatpush1.bf16.msra.mxu0 %v3155
        %3180 = vmatprep.subr.bf16.mxu0 0
        %3181 = vmatpush1.bf16.msra.mxu0 %v3157
        %3182 = vmatprep.subr.bf16.mxu0 0
        %3183 = vmatpush1.bf16.msra.mxu0 0
        %3184 = vmatprep.subr.bf16.mxu0 0
        %3185 = vmatpush1.bf16.msra.mxu0 0
        %3186 = vmatprep.subr.bf16.mxu0 0
        %3187 = vmatpush1.bf16.msra.mxu0 0
        %3188 = vmatprep.subr.bf16.mxu0 0
        %3189 = vmatpush1.bf16.msra.mxu0 0
        %3190 = vmatprep.subr.bf16.mxu0 0
        %3191 = vmatpush1.bf16.msra.mxu0 0
        %3192 = vmatprep.subr.bf16.mxu0 0
        %3193 = vmatpush1.bf16.msra.mxu0 0
        %3194 = vmatprep.subr.bf16.mxu0 0
        %3195 = vmatpush1.bf16.msra.mxu0 0
        %3196 = vmatprep.subr.bf16.mxu0 0
        %3197 = vmatpush1.bf16.msra.mxu0 0
        %3198 = vmatprep.subr.bf16.mxu0 0
        %3199 = vmatpush1.bf16.msra.mxu0 0
        %3200 = vmatprep.subr.bf16.mxu0 0
        %3201 = vmatpush1.bf16.msra.mxu0 0
        %3202 = vmatprep.subr.bf16.mxu0 0
        %3203 = vmatpush1.bf16.msra.mxu0 0
        %3204 = vmatprep.subr.bf16.mxu0 0
        %3205 = vmatpush1.bf16.msra.mxu0 0
        %3206 = vmatprep.mubr.bf16.mxu0 0
        %3207 = vmatmul.mubr.bf16.gmra.mrb[0].mxu0 %v3163
        %v3208 = vpop.f32.mrb[0].mxu0
        %v3209 = vadd.f32 0.0, %v3208
        %v3210 = vpop.f32.mrb[0].mxu0
        %v3211 = vpop.f32.mrb[0].mxu0
        %v3212 = vadd.f32 0.0, %v3211
        %v3213 = vpop.f32.mrb[0].mxu0
        %3214 = vmatprep.mubr.bf16.mxu0 0
        %3215 = vmatmul.mubr.bf16.gmra.mrb[0].mxu0 %v3166
        %v3216 = vpop.f32.mrb[0].mxu0
        %v3217 = vadd.f32 0.0, %v3216
        %v3218 = vpop.f32.mrb[0].mxu0
        %v3219 = vpop.f32.mrb[0].mxu0
        %v3220 = vadd.f32 0.0, %v3219
        %v3221 = vpop.f32.mrb[0].mxu0
        %3222 = vmatprep.mubr.bf16.mxu0 0
        %3223 = vmatmul.mubr.bf16.gmra.mrb[0].mxu0 %v3169
        %v3224 = vpop.f32.mrb[0].mxu0
        %v3225 = vadd.f32 0.0, %v3224
        %v3226 = vpop.f32.mrb[0].mxu0
        %v3227 = vpop.f32.mrb[0].mxu0
        %v3228 = vadd.f32 0.0, %v3227
        %v3229 = vpop.f32.mrb[0].mxu0
        %3230 = vmatprep.mubr.bf16.mxu0 0
        %3231 = vmatmul.mubr.bf16.gmra.mrb[0].mxu0 %v3172
        %v3232 = vpop.f32.mrb[0].mxu0
        %v3233 = vadd.f32 0.0, %v3232
        %v3234 = vpop.f32.mrb[0].mxu0
        %v3235 = vpop.f32.mrb[0].mxu0
        %v3236 = vadd.f32 0.0, %v3235
        %v3237 = vpop.f32.mrb[0].mxu0
        %3238 = vdwg.mxu0
        %3239 = vrot.lane.b32.xlu0 %v946, 32
        %v3240 = vpop.permute.xlu0 %3239
        %3241 = vrot.lane.b32.xlu0 %v949, 32
        %v3242 = vpop.permute.xlu0 %3241
        %3243 = vrot.lane.b32.xlu0 %v952, 32
        %v3244 = vpop.permute.xlu0 %3243
        %3245 = vrot.lane.b32.xlu0 %v955, 32
        %v3246 = vpop.permute.xlu0 %3245
        %v3252 = vsel %vm1135, %v3146, 0
        %v3255 = vsel %vm1135, %v3147, 0
        %v3258 = vsel %vm1135, %v3148, 0
        %v3261 = vsel %vm1135, %v3149, 0
        %3263 = vmatprep.subr.bf16.mxu0 0
        %3264 = vmatpush1.bf16.msra.mxu0 %v3240
        %3265 = vmatprep.subr.bf16.mxu0 0
        %3266 = vmatpush1.bf16.msra.mxu0 %v3242
        %3267 = vmatprep.subr.bf16.mxu0 0
        %3268 = vmatpush1.bf16.msra.mxu0 %v3244
        %3269 = vmatprep.subr.bf16.mxu0 0
        %3270 = vmatpush1.bf16.msra.mxu0 %v3246
        %3271 = vmatprep.subr.bf16.mxu0 0
        %3272 = vmatpush1.bf16.msra.mxu0 0
        %3273 = vmatprep.subr.bf16.mxu0 0
        %3274 = vmatpush1.bf16.msra.mxu0 0
        %3275 = vmatprep.subr.bf16.mxu0 0
        %3276 = vmatpush1.bf16.msra.mxu0 0
        %3277 = vmatprep.subr.bf16.mxu0 0
        %3278 = vmatpush1.bf16.msra.mxu0 0
        %3279 = vmatprep.subr.bf16.mxu0 0
        %3280 = vmatpush1.bf16.msra.mxu0 0
        %3281 = vmatprep.subr.bf16.mxu0 0
        %3282 = vmatpush1.bf16.msra.mxu0 0
        %3283 = vmatprep.subr.bf16.mxu0 0
        %3284 = vmatpush1.bf16.msra.mxu0 0
        %3285 = vmatprep.subr.bf16.mxu0 0
        %3286 = vmatpush1.bf16.msra.mxu0 0
        %3287 = vmatprep.subr.bf16.mxu0 0
        %3288 = vmatpush1.bf16.msra.mxu0 0
        %3289 = vmatprep.subr.bf16.mxu0 0
        %3290 = vmatpush1.bf16.msra.mxu0 0
        %3291 = vmatprep.subr.bf16.mxu0 0
        %3292 = vmatpush1.bf16.msra.mxu0 0
        %3293 = vmatprep.subr.bf16.mxu0 0
        %3294 = vmatpush1.bf16.msra.mxu0 0
        %3295 = vmatprep.mubr.bf16.mxu0 0
        %3296 = vmatmul.mubr.bf16.gmra.mrb[0].mxu0 %v3252
        %v3297 = vpop.f32.mrb[0].mxu0
        %v3298 = vadd.f32 0.0, %v3297
        %v3299 = vpop.f32.mrb[0].mxu0
        %v3300 = vpop.f32.mrb[0].mxu0
        %v3301 = vadd.f32 0.0, %v3300
        %v3302 = vpop.f32.mrb[0].mxu0
        %3303 = vmatprep.mubr.bf16.mxu0 0
        %3304 = vmatmul.mubr.bf16.gmra.mrb[0].mxu0 %v3255
        %v3305 = vpop.f32.mrb[0].mxu0
        %v3306 = vadd.f32 0.0, %v3305
        %v3307 = vpop.f32.mrb[0].mxu0
        %v3308 = vpop.f32.mrb[0].mxu0
        %v3309 = vadd.f32 0.0, %v3308
        %v3310 = vpop.f32.mrb[0].mxu0
        %3311 = vmatprep.mubr.bf16.mxu0 0
        %3312 = vmatmul.mubr.bf16.gmra.mrb[0].mxu0 %v3258
        %v3313 = vpop.f32.mrb[0].mxu0
        %v3314 = vadd.f32 0.0, %v3313
        %v3315 = vpop.f32.mrb[0].mxu0
        %v3316 = vpop.f32.mrb[0].mxu0
        %v3317 = vadd.f32 0.0, %v3316
        %v3318 = vpop.f32.mrb[0].mxu0
        %3319 = vmatprep.mubr.bf16.mxu0 0
        %3320 = vmatmul.mubr.bf16.gmra.mrb[0].mxu0 %v3261
        %v3321 = vpop.f32.mrb[0].mxu0
        %v3322 = vadd.f32 0.0, %v3321
        %v3323 = vpop.f32.mrb[0].mxu0
        %v3324 = vpop.f32.mrb[0].mxu0
        %v3325 = vadd.f32 0.0, %v3324
        %v3326 = vpop.f32.mrb[0].mxu0
        %3327 = vdwg.mxu0
        %v3328 = vpack.c.bf16 %v3212, %v3209
        %v3329 = vpack.c.bf16 %v3220, %v3217
        %v3330 = vpack.c.bf16 %v3228, %v3225
        %v3331 = vpack.c.bf16 %v3236, %v3233
        %v3332 = vpack.c.bf16 %v3301, %v3298
        %v3333 = vpack.c.bf16 %v3309, %v3306
        %v3334 = vpack.c.bf16 %v3317, %v3314
        %v3335 = vpack.c.bf16 %v3325, %v3322
        %3344 = vrot.lane.b32.xlu0 %v3328, 96
        %v3345 = vpop.permute.xlu0 %3344
        %3346 = vrot.lane.b32.xlu0 %v3329, 96
        %v3347 = vpop.permute.xlu0 %3346
        %3348 = vrot.lane.b32.xlu0 %v3330, 96
        %v3349 = vpop.permute.xlu0 %3348
        %3350 = vrot.lane.b32.xlu0 %v3331, 96
        %v3351 = vpop.permute.xlu0 %3350
        %3352 = vrot.lane.b32.xlu0 %v3332, 96
        %v3353 = vpop.permute.xlu0 %3352
        %3354 = vrot.lane.b32.xlu0 %v3333, 96
        %v3355 = vpop.permute.xlu0 %3354
        %3356 = vrot.lane.b32.xlu0 %v3334, 96
        %v3357 = vpop.permute.xlu0 %3356
        %3358 = vrot.lane.b32.xlu0 %v3335, 96
        %v3359 = vpop.permute.xlu0 %3358
        %vm3368 = vcmask 1048320
        %3369 = vst.msk [vmem:[#allocation2] sm:$0xff] %vm3368, %v3345
        %3370 = vst.msk [vmem:[#allocation2 + $0x8] sm:$0xff] %vm3368, %v3347
        %3371 = vst.msk [vmem:[#allocation2 + $0x10] sm:$0xff] %vm3368, %v3349
        %3372 = vst.msk [vmem:[#allocation2 + $0x18] sm:$0xff] %vm3368, %v3351
        %3373 = vst.msk [vmem:[#allocation2 + $0x20] sm:$0xff] %vm3368, %v3353
        %3374 = vst.msk [vmem:[#allocation2 + $0x28] sm:$0xff] %vm3368, %v3355
        %3375 = vst.msk [vmem:[#allocation2 + $0x30] sm:$0xff] %vm3368, %v3357
        %3376 = vst.msk [vmem:[#allocation2 + $0x38] sm:$0xff] %vm3368, %v3359
        %v3377 = vld [vmem:[#allocation2] sm:$0xff]
        %v3378 = vld [vmem:[#allocation2 + $0x8] sm:$0xff]
        %v3379 = vld [vmem:[#allocation2 + $0x10] sm:$0xff]
        %v3380 = vld [vmem:[#allocation2 + $0x18] sm:$0xff]
        %v3381 = vld [vmem:[#allocation2 + $0x20] sm:$0xff]
        %v3382 = vld [vmem:[#allocation2 + $0x28] sm:$0xff]
        %v3383 = vld [vmem:[#allocation2 + $0x30] sm:$0xff]
        %v3384 = vld [vmem:[#allocation2 + $0x38] sm:$0xff]
        %v3385 = vld [vmem:[#allocation8] sm:$0xf]
        %v3386 = vld [vmem:[#allocation8 + $0x4] sm:$0xf]
        %v3387 = vld [vmem:[#allocation8 + $0x8] sm:$0xf]
        %v3388 = vld [vmem:[#allocation8 + $0xc] sm:$0xf]
        %v3389 = vld [vmem:[#allocation8 + $0x10] sm:$0xf]
        %v3390 = vld [vmem:[#allocation8 + $0x14] sm:$0xf]
        %v3391 = vld [vmem:[#allocation8 + $0x18] sm:$0xf]
        %v3392 = vld [vmem:[#allocation8 + $0x1c] sm:$0xf]
        %v3393 = vld [vmem:[#allocation8 + $0x20] sm:$0xf]
        %v3394 = vld [vmem:[#allocation8 + $0x24] sm:$0xf]
        %v3395 = vld [vmem:[#allocation8 + $0x28] sm:$0xf]
        %v3396 = vld [vmem:[#allocation8 + $0x2c] sm:$0xf]
        %v3397 = vld [vmem:[#allocation8 + $0x30] sm:$0xf]
        %v3398 = vld [vmem:[#allocation8 + $0x34] sm:$0xf]
        %v3399 = vld [vmem:[#allocation8 + $0x38] sm:$0xf]
        %v3400 = vld [vmem:[#allocation8 + $0x3c] sm:$0xf]
        %v3401 = vld [vmem:[%s4] sm:$0x1]
        %v3403 = vlaneseq
        %v3404 = vshrl.u32 %v3403, 7
        %v3405 = vsub.s32 0, %v3404
        %v3406 = vrot.slane %v3401, %v3405
        %v3424 = vunpack.c.l.b16 %v3385
        %v3425 = vunpack.c.l.b16 %v3386
        %v3426 = vunpack.c.l.b16 %v3387
        %v3427 = vunpack.c.l.b16 %v3388
        %v3428 = vunpack.c.l.b16 %v3389
        %v3429 = vunpack.c.l.b16 %v3390
        %v3430 = vunpack.c.l.b16 %v3391
        %v3431 = vunpack.c.l.b16 %v3392
        %v3432 = vunpack.c.l.b16 %v3393
        %v3433 = vunpack.c.l.b16 %v3394
        %v3434 = vunpack.c.l.b16 %v3395
        %v3435 = vunpack.c.l.b16 %v3396
        %v3436 = vunpack.c.l.b16 %v3397
        %v3437 = vunpack.c.l.b16 %v3398
        %v3438 = vunpack.c.l.b16 %v3399
        %v3439 = vunpack.c.l.b16 %v3400
        %v3440 = vpack.c.b16 %v3425, %v3424
        %v3441 = vpack.c.b16 %v3427, %v3426
        %v3442 = vpack.c.b16 %v3429, %v3428
        %v3443 = vpack.c.b16 %v3431, %v3430
        %v3444 = vpack.c.b16 %v3433, %v3432
        %v3445 = vpack.c.b16 %v3435, %v3434
        %v3446 = vpack.c.b16 %v3437, %v3436
        %v3447 = vpack.c.b16 %v3439, %v3438
        %3456 = vmatprep.subr.bf16.mxu0 0
        %3457 = vmatpush1.bf16.msra.mxu0 %v3440
        %3458 = vmatprep.subr.bf16.mxu0 0
        %3459 = vmatpush1.bf16.msra.mxu0 %v3441
        %3460 = vmatprep.subr.bf16.mxu0 0
        %3461 = vmatpush1.bf16.msra.mxu0 %v3442
        %3462 = vmatprep.subr.bf16.mxu0 0
        %3463 = vmatpush1.bf16.msra.mxu0 %v3443
        %3464 = vmatprep.subr.bf16.mxu0 0
        %3465 = vmatpush1.bf16.msra.mxu0 %v3444
        %3466 = vmatprep.subr.bf16.mxu0 0
        %3467 = vmatpush1.bf16.msra.mxu0 %v3445
        %3468 = vmatprep.subr.bf16.mxu0 0
        %3469 = vmatpush1.bf16.msra.mxu0 %v3446
        %3470 = vmatprep.subr.bf16.mxu0 0
        %3471 = vmatpush1.bf16.msra.mxu0 %v3447
        %3472 = vmatprep.subr.bf16.mxu0 0
        %3473 = vmatpush1.bf16.msra.mxu0 0
        %3474 = vmatprep.subr.bf16.mxu0 0
        %3475 = vmatpush1.bf16.msra.mxu0 0
        %3476 = vmatprep.subr.bf16.mxu0 0
        %3477 = vmatpush1.bf16.msra.mxu0 0
        %3478 = vmatprep.subr.bf16.mxu0 0
        %3479 = vmatpush1.bf16.msra.mxu0 0
        %3480 = vmatprep.subr.bf16.mxu0 0
        %3481 = vmatpush1.bf16.msra.mxu0 0
        %3482 = vmatprep.subr.bf16.mxu0 0
        %3483 = vmatpush1.bf16.msra.mxu0 0
        %3484 = vmatprep.subr.bf16.mxu0 0
        %3485 = vmatpush1.bf16.msra.mxu0 0
        %3486 = vmatprep.subr.bf16.mxu0 0
        %3487 = vmatpush1.bf16.msra.mxu0 0
        %3488 = vmatprep.mubr.bf16.mxu0 0
        %3489 = vmatmul.mubr.bf16.gmra.mrb[0].mxu0 %v3377
        %v3490 = vpop.f32.mrb[0].mxu0
        %v3491 = vadd.f32 %v3406, %v3490
        %v3492 = vpop.f32.mrb[0].mxu0
        %v3493 = vpop.f32.mrb[0].mxu0
        %v3494 = vadd.f32 %v3406, %v3493
        %v3495 = vpop.f32.mrb[0].mxu0
        %3496 = vmatprep.mubr.bf16.mxu0 0
        %3497 = vmatmul.mubr.bf16.gmra.mrb[0].mxu0 %v3378
        %v3498 = vpop.f32.mrb[0].mxu0
        %v3499 = vadd.f32 %v3406, %v3498
        %v3500 = vpop.f32.mrb[0].mxu0
        %v3501 = vpop.f32.mrb[0].mxu0
        %v3502 = vadd.f32 %v3406, %v3501
        %v3503 = vpop.f32.mrb[0].mxu0
        %3504 = vmatprep.mubr.bf16.mxu0 0
        %3505 = vmatmul.mubr.bf16.gmra.mrb[0].mxu0 %v3379
        %v3506 = vpop.f32.mrb[0].mxu0
        %v3507 = vadd.f32 %v3406, %v3506
        %v3508 = vpop.f32.mrb[0].mxu0
        %v3509 = vpop.f32.mrb[0].mxu0
        %v3510 = vadd.f32 %v3406, %v3509
        %v3511 = vpop.f32.mrb[0].mxu0
        %3512 = vmatprep.mubr.bf16.mxu0 0
        %3513 = vmatmul.mubr.bf16.gmra.mrb[0].mxu0 %v3380
        %v3514 = vpop.f32.mrb[0].mxu0
        %v3515 = vadd.f32 %v3406, %v3514
        %v3516 = vpop.f32.mrb[0].mxu0
        %v3517 = vpop.f32.mrb[0].mxu0
        %v3518 = vadd.f32 %v3406, %v3517
        %v3519 = vpop.f32.mrb[0].mxu0
        %3520 = vmatprep.mubr.bf16.mxu0 0
        %3521 = vmatmul.mubr.bf16.gmra.mrb[0].mxu0 %v3381
        %v3522 = vpop.f32.mrb[0].mxu0
        %v3523 = vadd.f32 %v3406, %v3522
        %v3524 = vpop.f32.mrb[0].mxu0
        %v3525 = vpop.f32.mrb[0].mxu0
        %v3526 = vadd.f32 %v3406, %v3525
        %v3527 = vpop.f32.mrb[0].mxu0
        %3528 = vmatprep.mubr.bf16.mxu0 0
        %3529 = vmatmul.mubr.bf16.gmra.mrb[0].mxu0 %v3382
        %v3530 = vpop.f32.mrb[0].mxu0
        %v3531 = vadd.f32 %v3406, %v3530
        %v3532 = vpop.f32.mrb[0].mxu0
        %v3533 = vpop.f32.mrb[0].mxu0
        %v3534 = vadd.f32 %v3406, %v3533
        %v3535 = vpop.f32.mrb[0].mxu0
        %3536 = vmatprep.mubr.bf16.mxu0 0
        %3537 = vmatmul.mubr.bf16.gmra.mrb[0].mxu0 %v3383
        %v3538 = vpop.f32.mrb[0].mxu0
        %v3539 = vadd.f32 %v3406, %v3538
        %v3540 = vpop.f32.mrb[0].mxu0
        %v3541 = vpop.f32.mrb[0].mxu0
        %v3542 = vadd.f32 %v3406, %v3541
        %v3543 = vpop.f32.mrb[0].mxu0
        %3544 = vmatprep.mubr.bf16.mxu0 0
        %3545 = vmatmul.mubr.bf16.gmra.mrb[0].mxu0 %v3384
        %v3546 = vpop.f32.mrb[0].mxu0
        %v3547 = vadd.f32 %v3406, %v3546
        %v3548 = vpop.f32.mrb[0].mxu0
        %v3549 = vpop.f32.mrb[0].mxu0
        %v3550 = vadd.f32 %v3406, %v3549
        %v3551 = vpop.f32.mrb[0].mxu0
        %3552 = vdwg.mxu0
        %v3553 = vadd.f32 %v521, %v3491
        %v3554 = vadd.f32 %v522, %v3494
        %v3555 = vadd.f32 %v523, %v3499
        %v3556 = vadd.f32 %v524, %v3502
        %v3557 = vadd.f32 %v525, %v3507
        %v3558 = vadd.f32 %v526, %v3510
        %v3559 = vadd.f32 %v527, %v3515
        %v3560 = vadd.f32 %v528, %v3518
        %v3561 = vadd.f32 %v529, %v3523
        %v3562 = vadd.f32 %v530, %v3526
        %v3563 = vadd.f32 %v531, %v3531
        %v3564 = vadd.f32 %v532, %v3534
        %v3565 = vadd.f32 %v533, %v3539
        %v3566 = vadd.f32 %v534, %v3542
        %v3567 = vadd.f32 %v535, %v3547
        %v3568 = vadd.f32 %v536, %v3550
        %v3569 = vld [vmem:[%s5] sm:$0x1]
        %v3570 = vld [vmem:[%s6] sm:$0x1]
        %3571 = vadd.xlane.f32.xlu0 %v3553
        %v3572 = vpop.xlane.xlu0 %3571
        %3573 = vadd.xlane.f32.xlu0 %v3554
        %v3574 = vpop.xlane.xlu0 %3573
        %3575 = vadd.xlane.f32.xlu0 %v3555
        %v3576 = vpop.xlane.xlu0 %3575
        %3577 = vadd.xlane.f32.xlu0 %v3556
        %v3578 = vpop.xlane.xlu0 %3577
        %3579 = vadd.xlane.f32.xlu0 %v3557
        %v3580 = vpop.xlane.xlu0 %3579
        %3581 = vadd.xlane.f32.xlu0 %v3558
        %v3582 = vpop.xlane.xlu0 %3581
        %3583 = vadd.xlane.f32.xlu0 %v3559
        %v3584 = vpop.xlane.xlu0 %3583
        %3585 = vadd.xlane.f32.xlu0 %v3560
        %v3586 = vpop.xlane.xlu0 %3585
        %3587 = vadd.xlane.f32.xlu0 %v3561
        %v3588 = vpop.xlane.xlu0 %3587
        %3589 = vadd.xlane.f32.xlu0 %v3562
        %v3590 = vpop.xlane.xlu0 %3589
        %3591 = vadd.xlane.f32.xlu0 %v3563
        %v3592 = vpop.xlane.xlu0 %3591
        %3593 = vadd.xlane.f32.xlu0 %v3564
        %v3594 = vpop.xlane.xlu0 %3593
        %3595 = vadd.xlane.f32.xlu0 %v3565
        %v3596 = vpop.xlane.xlu0 %3595
        %3597 = vadd.xlane.f32.xlu0 %v3566
        %v3598 = vpop.xlane.xlu0 %3597
        %3599 = vadd.xlane.f32.xlu0 %v3567
        %v3600 = vpop.xlane.xlu0 %3599
        %3601 = vadd.xlane.f32.xlu0 %v3568
        %v3602 = vpop.xlane.xlu0 %3601
        %v3603 = vrcp.pop 128.0
        %v3604 = vmul.f32 %v3572, %v3603
        %v3605 = vmul.f32 %v3574, %v3603
        %v3606 = vmul.f32 %v3576, %v3603
        %v3607 = vmul.f32 %v3578, %v3603
        %v3608 = vmul.f32 %v3580, %v3603
        %v3609 = vmul.f32 %v3582, %v3603
        %v3610 = vmul.f32 %v3584, %v3603
        %v3611 = vmul.f32 %v3586, %v3603
        %v3612 = vmul.f32 %v3588, %v3603
        %v3613 = vmul.f32 %v3590, %v3603
        %v3614 = vmul.f32 %v3592, %v3603
        %v3615 = vmul.f32 %v3594, %v3603
        %v3616 = vmul.f32 %v3596, %v3603
        %v3617 = vmul.f32 %v3598, %v3603
        %v3618 = vmul.f32 %v3600, %v3603
        %v3619 = vmul.f32 %v3602, %v3603
        %v3620 = vsub.f32 %v3553, %v3604
        %v3621 = vsub.f32 %v3554, %v3605
        %v3622 = vsub.f32 %v3555, %v3606
        %v3623 = vsub.f32 %v3556, %v3607
        %v3624 = vsub.f32 %v3557, %v3608
        %v3625 = vsub.f32 %v3558, %v3609
        %v3626 = vsub.f32 %v3559, %v3610
        %v3627 = vsub.f32 %v3560, %v3611
        %v3628 = vsub.f32 %v3561, %v3612
        %v3629 = vsub.f32 %v3562, %v3613
        %v3630 = vsub.f32 %v3563, %v3614
        %v3631 = vsub.f32 %v3564, %v3615
        %v3632 = vsub.f32 %v3565, %v3616
        %v3633 = vsub.f32 %v3566, %v3617
        %v3634 = vsub.f32 %v3567, %v3618
        %v3635 = vsub.f32 %v3568, %v3619
        %v3636 = vmul.f32 %v3620, %v3620
        %v3637 = vmul.f32 %v3621, %v3621
        %v3638 = vmul.f32 %v3622, %v3622
        %v3639 = vmul.f32 %v3623, %v3623
        %v3640 = vmul.f32 %v3624, %v3624
        %v3641 = vmul.f32 %v3625, %v3625
        %v3642 = vmul.f32 %v3626, %v3626
        %v3643 = vmul.f32 %v3627, %v3627
        %v3644 = vmul.f32 %v3628, %v3628
        %v3645 = vmul.f32 %v3629, %v3629
        %v3646 = vmul.f32 %v3630, %v3630
        %v3647 = vmul.f32 %v3631, %v3631
        %v3648 = vmul.f32 %v3632, %v3632
        %v3649 = vmul.f32 %v3633, %v3633
        %v3650 = vmul.f32 %v3634, %v3634
        %v3651 = vmul.f32 %v3635, %v3635
        %3652 = vadd.xlane.f32.xlu0 %v3636
        %v3653 = vpop.xlane.xlu0 %3652
        %3654 = vadd.xlane.f32.xlu0 %v3637
        %v3655 = vpop.xlane.xlu0 %3654
        %3656 = vadd.xlane.f32.xlu0 %v3638
        %v3657 = vpop.xlane.xlu0 %3656
        %3658 = vadd.xlane.f32.xlu0 %v3639
        %v3659 = vpop.xlane.xlu0 %3658
        %3660 = vadd.xlane.f32.xlu0 %v3640
        %v3661 = vpop.xlane.xlu0 %3660
        %3662 = vadd.xlane.f32.xlu0 %v3641
        %v3663 = vpop.xlane.xlu0 %3662
        %3664 = vadd.xlane.f32.xlu0 %v3642
        %v3665 = vpop.xlane.xlu0 %3664
        %3666 = vadd.xlane.f32.xlu0 %v3643
        %v3667 = vpop.xlane.xlu0 %3666
        %3668 = vadd.xlane.f32.xlu0 %v3644
        %v3669 = vpop.xlane.xlu0 %3668
        %3670 = vadd.xlane.f32.xlu0 %v3645
        %v3671 = vpop.xlane.xlu0 %3670
        %3672 = vadd.xlane.f32.xlu0 %v3646
        %v3673 = vpop.xlane.xlu0 %3672
        %3674 = vadd.xlane.f32.xlu0 %v3647
        %v3675 = vpop.xlane.xlu0 %3674
        %3676 = vadd.xlane.f32.xlu0 %v3648
        %v3677 = vpop.xlane.xlu0 %3676
        %3678 = vadd.xlane.f32.xlu0 %v3649
        %v3679 = vpop.xlane.xlu0 %3678
        %3680 = vadd.xlane.f32.xlu0 %v3650
        %v3681 = vpop.xlane.xlu0 %3680
        %3682 = vadd.xlane.f32.xlu0 %v3651
        %v3683 = vpop.xlane.xlu0 %3682
        %v3684 = vmul.f32 %v3653, %v3603
        %v3685 = vmul.f32 %v3655, %v3603
        %v3686 = vmul.f32 %v3657, %v3603
        %v3687 = vmul.f32 %v3659, %v3603
        %v3688 = vmul.f32 %v3661, %v3603
        %v3689 = vmul.f32 %v3663, %v3603
        %v3690 = vmul.f32 %v3665, %v3603
        %v3691 = vmul.f32 %v3667, %v3603
        %v3692 = vmul.f32 %v3669, %v3603
        %v3693 = vmul.f32 %v3671, %v3603
        %v3694 = vmul.f32 %v3673, %v3603
        %v3695 = vmul.f32 %v3675, %v3603
        %v3696 = vmul.f32 %v3677, %v3603
        %v3697 = vmul.f32 %v3679, %v3603
        %v3698 = vmul.f32 %v3681, %v3603
        %v3699 = vmul.f32 %v3683, %v3603
        %v3700 = vadd.f32 %v3684, 1e-12
        %v3701 = vadd.f32 %v3685, 1e-12
        %v3702 = vadd.f32 %v3686, 1e-12
        %v3703 = vadd.f32 %v3687, 1e-12
        %v3704 = vadd.f32 %v3688, 1e-12
        %v3705 = vadd.f32 %v3689, 1e-12
        %v3706 = vadd.f32 %v3690, 1e-12
        %v3707 = vadd.f32 %v3691, 1e-12
        %v3708 = vadd.f32 %v3692, 1e-12
        %v3709 = vadd.f32 %v3693, 1e-12
        %v3710 = vadd.f32 %v3694, 1e-12
        %v3711 = vadd.f32 %v3695, 1e-12
        %v3712 = vadd.f32 %v3696, 1e-12
        %v3713 = vadd.f32 %v3697, 1e-12
        %v3714 = vadd.f32 %v3698, 1e-12
        %v3715 = vadd.f32 %v3699, 1e-12
        %v3716 = vrsqrt.pop %v3700
        %v3717 = vrsqrt.pop %v3701
        %v3718 = vrsqrt.pop %v3702
        %v3719 = vrsqrt.pop %v3703
        %v3720 = vrsqrt.pop %v3704
        %v3721 = vrsqrt.pop %v3705
        %v3722 = vrsqrt.pop %v3706
        %v3723 = vrsqrt.pop %v3707
        %v3724 = vrsqrt.pop %v3708
        %v3725 = vrsqrt.pop %v3709
        %v3726 = vrsqrt.pop %v3710
        %v3727 = vrsqrt.pop %v3711
        %v3728 = vrsqrt.pop %v3712
        %v3729 = vrsqrt.pop %v3713
        %v3730 = vrsqrt.pop %v3714
        %v3731 = vrsqrt.pop %v3715
        %v3732 = vmul.f32 %v3620, %v3716
        %v3733 = vmul.f32 %v3621, %v3717
        %v3734 = vmul.f32 %v3622, %v3718
        %v3735 = vmul.f32 %v3623, %v3719
        %v3736 = vmul.f32 %v3624, %v3720
        %v3737 = vmul.f32 %v3625, %v3721
        %v3738 = vmul.f32 %v3626, %v3722
        %v3739 = vmul.f32 %v3627, %v3723
        %v3740 = vmul.f32 %v3628, %v3724
        %v3741 = vmul.f32 %v3629, %v3725
        %v3742 = vmul.f32 %v3630, %v3726
        %v3743 = vmul.f32 %v3631, %v3727
        %v3744 = vmul.f32 %v3632, %v3728
        %v3745 = vmul.f32 %v3633, %v3729
        %v3746 = vmul.f32 %v3634, %v3730
        %v3747 = vmul.f32 %v3635, %v3731
        %v3749 = vlaneseq
        %v3750 = vshrl.u32 %v3749, 7
        %v3751 = vsub.s32 0, %v3750
        %v3752 = vrot.slane %v3569, %v3751
        %v3754 = vmul.f32 %v3732, %v3752
        %v3755 = vmul.f32 %v3733, %v3752
        %v3756 = vmul.f32 %v3734, %v3752
        %v3757 = vmul.f32 %v3735, %v3752
        %v3758 = vmul.f32 %v3736, %v3752
        %v3759 = vmul.f32 %v3737, %v3752
        %v3760 = vmul.f32 %v3738, %v3752
        %v3761 = vmul.f32 %v3739, %v3752
        %v3762 = vmul.f32 %v3740, %v3752
        %v3763 = vmul.f32 %v3741, %v3752
        %v3764 = vmul.f32 %v3742, %v3752
        %v3765 = vmul.f32 %v3743, %v3752
        %v3766 = vmul.f32 %v3744, %v3752
        %v3767 = vmul.f32 %v3745, %v3752
        %v3768 = vmul.f32 %v3746, %v3752
        %v3769 = vmul.f32 %v3747, %v3752
        %v3771 = vlaneseq
        %v3772 = vshrl.u32 %v3771, 7
        %v3773 = vsub.s32 0, %v3772
        %v3774 = vrot.slane %v3570, %v3773
        %v3776 = vadd.f32 %v3754, %v3774
        %v3777 = vadd.f32 %v3755, %v3774
        %v3778 = vadd.f32 %v3756, %v3774
        %v3779 = vadd.f32 %v3757, %v3774
        %v3780 = vadd.f32 %v3758, %v3774
        %v3781 = vadd.f32 %v3759, %v3774
        %v3782 = vadd.f32 %v3760, %v3774
        %v3783 = vadd.f32 %v3761, %v3774
        %v3784 = vadd.f32 %v3762, %v3774
        %v3785 = vadd.f32 %v3763, %v3774
        %v3786 = vadd.f32 %v3764, %v3774
        %v3787 = vadd.f32 %v3765, %v3774
        %v3788 = vadd.f32 %v3766, %v3774
        %v3789 = vadd.f32 %v3767, %v3774
        %v3790 = vadd.f32 %v3768, %v3774
        %v3791 = vadd.f32 %v3769, %v3774
        %v3792 = vpack.c.bf16 %v3777, %v3776
        %v3793 = vpack.c.bf16 %v3779, %v3778
        %v3794 = vpack.c.bf16 %v3781, %v3780
        %v3795 = vpack.c.bf16 %v3783, %v3782
        %v3796 = vpack.c.bf16 %v3785, %v3784
        %v3797 = vpack.c.bf16 %v3787, %v3786
        %v3798 = vpack.c.bf16 %v3789, %v3788
        %v3799 = vpack.c.bf16 %v3791, %v3790
        %v3800 = vld [vmem:[#allocation9] sm:$0xff]
        %v3801 = vld [vmem:[#allocation9 + $0x8] sm:$0xff]
        %v3802 = vld [vmem:[#allocation9 + $0x10] sm:$0xff]
        %v3803 = vld [vmem:[#allocation9 + $0x18] sm:$0xff]
        %v3804 = vld [vmem:[#allocation9 + $0x20] sm:$0xff]
        %v3805 = vld [vmem:[#allocation9 + $0x28] sm:$0xff]
        %v3806 = vld [vmem:[#allocation9 + $0x30] sm:$0xff]
        %v3807 = vld [vmem:[#allocation9 + $0x38] sm:$0xff]
        %v3808 = vld [vmem:[#allocation9 + $0x40] sm:$0xff]
        %v3809 = vld [vmem:[#allocation9 + $0x48] sm:$0xff]
        %v3810 = vld [vmem:[#allocation9 + $0x50] sm:$0xff]
        %v3811 = vld [vmem:[#allocation9 + $0x58] sm:$0xff]
        %v3812 = vld [vmem:[#allocation9 + $0x60] sm:$0xff]
        %v3813 = vld [vmem:[#allocation9 + $0x68] sm:$0xff]
        %v3814 = vld [vmem:[#allocation9 + $0x70] sm:$0xff]
        %v3815 = vld [vmem:[#allocation9 + $0x78] sm:$0xff]
        %v3816 = vld [vmem:[%s8] sm:$0x3]
        %v3818 = vlaneseq
        %v3819 = vshrl.u32 %v3818, 7
        %v3820 = vsub.s32 0, %v3819
        %v3821 = vrot.slane %v3816, %v3820
        %v3822 = vlaneseq
        %v3823 = vshrl.u32 %v3822, 7
        %v3824 = vsub.s32 1, %v3823
        %v3825 = vrot.slane %v3816, %v3824
        %v3844 = vunpack.c.l.b16 %v3800
        %v3845 = vunpack.c.h.b16 %v3800
        %v3846 = vunpack.c.l.b16 %v3801
        %v3847 = vunpack.c.h.b16 %v3801
        %v3848 = vunpack.c.l.b16 %v3802
        %v3849 = vunpack.c.h.b16 %v3802
        %v3850 = vunpack.c.l.b16 %v3803
        %v3851 = vunpack.c.h.b16 %v3803
        %v3852 = vunpack.c.l.b16 %v3804
        %v3853 = vunpack.c.h.b16 %v3804
        %v3854 = vunpack.c.l.b16 %v3805
        %v3855 = vunpack.c.h.b16 %v3805
        %v3856 = vunpack.c.l.b16 %v3806
        %v3857 = vunpack.c.h.b16 %v3806
        %v3858 = vunpack.c.l.b16 %v3807
        %v3859 = vunpack.c.h.b16 %v3807
        %v3860 = vunpack.c.l.b16 %v3808
        %v3861 = vunpack.c.h.b16 %v3808
        %v3862 = vunpack.c.l.b16 %v3809
        %v3863 = vunpack.c.h.b16 %v3809
        %v3864 = vunpack.c.l.b16 %v3810
        %v3865 = vunpack.c.h.b16 %v3810
        %v3866 = vunpack.c.l.b16 %v3811
        %v3867 = vunpack.c.h.b16 %v3811
        %v3868 = vunpack.c.l.b16 %v3812
        %v3869 = vunpack.c.h.b16 %v3812
        %v3870 = vunpack.c.l.b16 %v3813
        %v3871 = vunpack.c.h.b16 %v3813
        %v3872 = vunpack.c.l.b16 %v3814
        %v3873 = vunpack.c.h.b16 %v3814
        %v3874 = vunpack.c.l.b16 %v3815
        %v3875 = vunpack.c.h.b16 %v3815
        %v3876 = vpack.c.b16 %v3846, %v3844
        %v3877 = vpack.c.b16 %v3847, %v3845
        %v3878 = vpack.c.b16 %v3850, %v3848
        %v3879 = vpack.c.b16 %v3851, %v3849
        %v3880 = vpack.c.b16 %v3854, %v3852
        %v3881 = vpack.c.b16 %v3855, %v3853
        %v3882 = vpack.c.b16 %v3858, %v3856
        %v3883 = vpack.c.b16 %v3859, %v3857
        %v3884 = vpack.c.b16 %v3862, %v3860
        %v3885 = vpack.c.b16 %v3863, %v3861
        %v3886 = vpack.c.b16 %v3866, %v3864
        %v3887 = vpack.c.b16 %v3867, %v3865
        %v3888 = vpack.c.b16 %v3870, %v3868
        %v3889 = vpack.c.b16 %v3871, %v3869
        %v3890 = vpack.c.b16 %v3874, %v3872
        %v3891 = vpack.c.b16 %v3875, %v3873
        %3908 = vmatprep.subr.bf16.mxu0 %v3877
        %3909 = vmatpush1.bf16.msra.mxu0 %v3876
        %3910 = vmatprep.subr.bf16.mxu0 %v3879
        %3911 = vmatpush1.bf16.msra.mxu0 %v3878
        %3912 = vmatprep.subr.bf16.mxu0 %v3881
        %3913 = vmatpush1.bf16.msra.mxu0 %v3880
        %3914 = vmatprep.subr.bf16.mxu0 %v3883
        %3915 = vmatpush1.bf16.msra.mxu0 %v3882
        %3916 = vmatprep.subr.bf16.mxu0 %v3885
        %3917 = vmatpush1.bf16.msra.mxu0 %v3884
        %3918 = vmatprep.subr.bf16.mxu0 %v3887
        %3919 = vmatpush1.bf16.msra.mxu0 %v3886
        %3920 = vmatprep.subr.bf16.mxu0 %v3889
        %3921 = vmatpush1.bf16.msra.mxu0 %v3888
        %3922 = vmatprep.subr.bf16.mxu0 %v3891
        %3923 = vmatpush1.bf16.msra.mxu0 %v3890
        %3924 = vmatprep.subr.bf16.mxu0 0
        %3925 = vmatpush1.bf16.msra.mxu0 0
        %3926 = vmatprep.subr.bf16.mxu0 0
        %3927 = vmatpush1.bf16.msra.mxu0 0
        %3928 = vmatprep.subr.bf16.mxu0 0
        %3929 = vmatpush1.bf16.msra.mxu0 0
        %3930 = vmatprep.subr.bf16.mxu0 0
        %3931 = vmatpush1.bf16.msra.mxu0 0
        %3932 = vmatprep.subr.bf16.mxu0 0
        %3933 = vmatpush1.bf16.msra.mxu0 0
        %3934 = vmatprep.subr.bf16.mxu0 0
        %3935 = vmatpush1.bf16.msra.mxu0 0
        %3936 = vmatprep.subr.bf16.mxu0 0
        %3937 = vmatpush1.bf16.msra.mxu0 0
        %3938 = vmatprep.subr.bf16.mxu0 0
        %3939 = vmatpush1.bf16.msra.mxu0 0
        %3940 = vmatprep.mubr.bf16.mxu0 0
        %3941 = vmatmul.mubr.bf16.gmra.mrb[0].mxu0 %v3792
        %v3942 = vpop.f32.mrb[0].mxu0
        %v3943 = vadd.f32 %v3821, %v3942
        %v3944 = vpop.f32.mrb[0].mxu0
        %v3945 = vadd.f32 %v3825, %v3944
        %v3946 = vpop.f32.mrb[0].mxu0
        %v3947 = vadd.f32 %v3821, %v3946
        %v3948 = vpop.f32.mrb[0].mxu0
        %v3949 = vadd.f32 %v3825, %v3948
        %3950 = vmatprep.mubr.bf16.mxu0 0
        %3951 = vmatmul.mubr.bf16.gmra.mrb[0].mxu0 %v3793
        %v3952 = vpop.f32.mrb[0].mxu0
        %v3953 = vadd.f32 %v3821, %v3952
        %v3954 = vpop.f32.mrb[0].mxu0
        %v3955 = vadd.f32 %v3825, %v3954
        %v3956 = vpop.f32.mrb[0].mxu0
        %v3957 = vadd.f32 %v3821, %v3956
        %v3958 = vpop.f32.mrb[0].mxu0
        %v3959 = vadd.f32 %v3825, %v3958
        %3960 = vmatprep.mubr.bf16.mxu0 0
        %3961 = vmatmul.mubr.bf16.gmra.mrb[0].mxu0 %v3794
        %v3962 = vpop.f32.mrb[0].mxu0
        %v3963 = vadd.f32 %v3821, %v3962
        %v3964 = vpop.f32.mrb[0].mxu0
        %v3965 = vadd.f32 %v3825, %v3964
        %v3966 = vpop.f32.mrb[0].mxu0
        %v3967 = vadd.f32 %v3821, %v3966
        %v3968 = vpop.f32.mrb[0].mxu0
        %v3969 = vadd.f32 %v3825, %v3968
        %3970 = vmatprep.mubr.bf16.mxu0 0
        %3971 = vmatmul.mubr.bf16.gmra.mrb[0].mxu0 %v3795
        %v3972 = vpop.f32.mrb[0].mxu0
        %v3973 = vadd.f32 %v3821, %v3972
        %v3974 = vpop.f32.mrb[0].mxu0
        %v3975 = vadd.f32 %v3825, %v3974
        %v3976 = vpop.f32.mrb[0].mxu0
        %v3977 = vadd.f32 %v3821, %v3976
        %v3978 = vpop.f32.mrb[0].mxu0
        %v3979 = vadd.f32 %v3825, %v3978
        %3980 = vmatprep.mubr.bf16.mxu0 0
        %3981 = vmatmul.mubr.bf16.gmra.mrb[0].mxu0 %v3796
        %v3982 = vpop.f32.mrb[0].mxu0
        %v3983 = vadd.f32 %v3821, %v3982
        %v3984 = vpop.f32.mrb[0].mxu0
        %v3985 = vadd.f32 %v3825, %v3984
        %v3986 = vpop.f32.mrb[0].mxu0
        %v3987 = vadd.f32 %v3821, %v3986
        %v3988 = vpop.f32.mrb[0].mxu0
        %v3989 = vadd.f32 %v3825, %v3988
        %3990 = vmatprep.mubr.bf16.mxu0 0
        %3991 = vmatmul.mubr.bf16.gmra.mrb[0].mxu0 %v3797
        %v3992 = vpop.f32.mrb[0].mxu0
        %v3993 = vadd.f32 %v3821, %v3992
        %v3994 = vpop.f32.mrb[0].mxu0
        %v3995 = vadd.f32 %v3825, %v3994
        %v3996 = vpop.f32.mrb[0].mxu0
        %v3997 = vadd.f32 %v3821, %v3996
        %v3998 = vpop.f32.mrb[0].mxu0
        %v3999 = vadd.f32 %v3825, %v3998
        %4000 = vmatprep.mubr.bf16.mxu0 0
        %4001 = vmatmul.mubr.bf16.gmra.mrb[0].mxu0 %v3798
        %v4002 = vpop.f32.mrb[0].mxu0
        %v4003 = vadd.f32 %v3821, %v4002
        %v4004 = vpop.f32.mrb[0].mxu0
        %v4005 = vadd.f32 %v3825, %v4004
        %v4006 = vpop.f32.mrb[0].mxu0
        %v4007 = vadd.f32 %v3821, %v4006
        %v4008 = vpop.f32.mrb[0].mxu0
        %v4009 = vadd.f32 %v3825, %v4008
        %4010 = vmatprep.mubr.bf16.mxu0 0
        %4011 = vmatmul.mubr.bf16.gmra.mrb[0].mxu0 %v3799
        %v4012 = vpop.f32.mrb[0].mxu0
        %v4013 = vadd.f32 %v3821, %v4012
        %v4014 = vpop.f32.mrb[0].mxu0
        %v4015 = vadd.f32 %v3825, %v4014
        %v4016 = vpop.f32.mrb[0].mxu0
        %v4017 = vadd.f32 %v3821, %v4016
        %v4018 = vpop.f32.mrb[0].mxu0
        %v4019 = vadd.f32 %v3825, %v4018
        %4020 = vdwg.mxu0
        %v4021 = vmul.f32 %v3943, 0.5
        %v4022 = vmul.f32 %v3945, 0.5
        %v4023 = vmul.f32 %v3947, 0.5
        %v4024 = vmul.f32 %v3949, 0.5
        %v4025 = vmul.f32 %v3953, 0.5
        %v4026 = vmul.f32 %v3955, 0.5
        %v4027 = vmul.f32 %v3957, 0.5
        %v4028 = vmul.f32 %v3959, 0.5
        %v4029 = vmul.f32 %v3963, 0.5
        %v4030 = vmul.f32 %v3965, 0.5
        %v4031 = vmul.f32 %v3967, 0.5
        %v4032 = vmul.f32 %v3969, 0.5
        %v4033 = vmul.f32 %v3973, 0.5
        %v4034 = vmul.f32 %v3975, 0.5
        %v4035 = vmul.f32 %v3977, 0.5
        %v4036 = vmul.f32 %v3979, 0.5
        %v4037 = vmul.f32 %v3983, 0.5
        %v4038 = vmul.f32 %v3985, 0.5
        %v4039 = vmul.f32 %v3987, 0.5
        %v4040 = vmul.f32 %v3989, 0.5
        %v4041 = vmul.f32 %v3993, 0.5
        %v4042 = vmul.f32 %v3995, 0.5
        %v4043 = vmul.f32 %v3997, 0.5
        %v4044 = vmul.f32 %v3999, 0.5
        %v4045 = vmul.f32 %v4003, 0.5
        %v4046 = vmul.f32 %v4005, 0.5
        %v4047 = vmul.f32 %v4007, 0.5
        %v4048 = vmul.f32 %v4009, 0.5
        %v4049 = vmul.f32 %v4013, 0.5
        %v4050 = vmul.f32 %v4015, 0.5
        %v4051 = vmul.f32 %v4017, 0.5
        %v4052 = vmul.f32 %v4019, 0.5
        %v4053 = vmul.f32 %v3943, 0.70710677
        %v4054 = vmul.f32 %v3945, 0.70710677
        %v4055 = vmul.f32 %v3947, 0.70710677
        %v4056 = vmul.f32 %v3949, 0.70710677
        %v4057 = vmul.f32 %v3953, 0.70710677
        %v4058 = vmul.f32 %v3955, 0.70710677
        %v4059 = vmul.f32 %v3957, 0.70710677
        %v4060 = vmul.f32 %v3959, 0.70710677
        %v4061 = vmul.f32 %v3963, 0.70710677
        %v4062 = vmul.f32 %v3965, 0.70710677
        %v4063 = vmul.f32 %v3967, 0.70710677
        %v4064 = vmul.f32 %v3969, 0.70710677
        %v4065 = vmul.f32 %v3973, 0.70710677
        %v4066 = vmul.f32 %v3975, 0.70710677
        %v4067 = vmul.f32 %v3977, 0.70710677
        %v4068 = vmul.f32 %v3979, 0.70710677
        %v4069 = vmul.f32 %v3983, 0.70710677
        %v4070 = vmul.f32 %v3985, 0.70710677
        %v4071 = vmul.f32 %v3987, 0.70710677
        %v4072 = vmul.f32 %v3989, 0.70710677
        %v4073 = vmul.f32 %v3993, 0.70710677
        %v4074 = vmul.f32 %v3995, 0.70710677
        %v4075 = vmul.f32 %v3997, 0.70710677
        %v4076 = vmul.f32 %v3999, 0.70710677
        %v4077 = vmul.f32 %v4003, 0.70710677
        %v4078 = vmul.f32 %v4005, 0.70710677
        %v4079 = vmul.f32 %v4007, 0.70710677
        %v4080 = vmul.f32 %v4009, 0.70710677
        %v4081 = vmul.f32 %v4013, 0.70710677
        %v4082 = vmul.f32 %v4015, 0.70710677
        %v4083 = vmul.f32 %v4017, 0.70710677
        %v4084 = vmul.f32 %v4019, 0.70710677
        %v4085 = verf.f32.pop %v4053
        %v4086 = verf.f32.pop %v4054
        %v4087 = verf.f32.pop %v4055
        %v4088 = verf.f32.pop %v4056
        %v4089 = verf.f32.pop %v4057
        %v4090 = verf.f32.pop %v4058
        %v4091 = verf.f32.pop %v4059
        %v4092 = verf.f32.pop %v4060
        %v4093 = verf.f32.pop %v4061
        %v4094 = verf.f32.pop %v4062
        %v4095 = verf.f32.pop %v4063
        %v4096 = verf.f32.pop %v4064
        %v4097 = verf.f32.pop %v4065
        %v4098 = verf.f32.pop %v4066
        %v4099 = verf.f32.pop %v4067
        %v4100 = verf.f32.pop %v4068
        %v4101 = verf.f32.pop %v4069
        %v4102 = verf.f32.pop %v4070
        %v4103 = verf.f32.pop %v4071
        %v4104 = verf.f32.pop %v4072
        %v4105 = verf.f32.pop %v4073
        %v4106 = verf.f32.pop %v4074
        %v4107 = verf.f32.pop %v4075
        %v4108 = verf.f32.pop %v4076
        %v4109 = verf.f32.pop %v4077
        %v4110 = verf.f32.pop %v4078
        %v4111 = verf.f32.pop %v4079
        %v4112 = verf.f32.pop %v4080
        %v4113 = verf.f32.pop %v4081
        %v4114 = verf.f32.pop %v4082
        %v4115 = verf.f32.pop %v4083
        %v4116 = verf.f32.pop %v4084
        %v4117 = vadd.f32 %v4085, 1.0
        %v4118 = vadd.f32 %v4086, 1.0
        %v4119 = vadd.f32 %v4087, 1.0
        %v4120 = vadd.f32 %v4088, 1.0
        %v4121 = vadd.f32 %v4089, 1.0
        %v4122 = vadd.f32 %v4090, 1.0
        %v4123 = vadd.f32 %v4091, 1.0
        %v4124 = vadd.f32 %v4092, 1.0
        %v4125 = vadd.f32 %v4093, 1.0
        %v4126 = vadd.f32 %v4094, 1.0
        %v4127 = vadd.f32 %v4095, 1.0
        %v4128 = vadd.f32 %v4096, 1.0
        %v4129 = vadd.f32 %v4097, 1.0
        %v4130 = vadd.f32 %v4098, 1.0
        %v4131 = vadd.f32 %v4099, 1.0
        %v4132 = vadd.f32 %v4100, 1.0
        %v4133 = vadd.f32 %v4101, 1.0
        %v4134 = vadd.f32 %v4102, 1.0
        %v4135 = vadd.f32 %v4103, 1.0
        %v4136 = vadd.f32 %v4104, 1.0
        %v4137 = vadd.f32 %v4105, 1.0
        %v4138 = vadd.f32 %v4106, 1.0
        %v4139 = vadd.f32 %v4107, 1.0
        %v4140 = vadd.f32 %v4108, 1.0
        %v4141 = vadd.f32 %v4109, 1.0
        %v4142 = vadd.f32 %v4110, 1.0
        %v4143 = vadd.f32 %v4111, 1.0
        %v4144 = vadd.f32 %v4112, 1.0
        %v4145 = vadd.f32 %v4113, 1.0
        %v4146 = vadd.f32 %v4114, 1.0
        %v4147 = vadd.f32 %v4115, 1.0
        %v4148 = vadd.f32 %v4116, 1.0
        %v4149 = vmul.f32 %v4021, %v4117
        %v4150 = vmul.f32 %v4022, %v4118
        %v4151 = vmul.f32 %v4023, %v4119
        %v4152 = vmul.f32 %v4024, %v4120
        %v4153 = vmul.f32 %v4025, %v4121
        %v4154 = vmul.f32 %v4026, %v4122
        %v4155 = vmul.f32 %v4027, %v4123
        %v4156 = vmul.f32 %v4028, %v4124
        %v4157 = vmul.f32 %v4029, %v4125
        %v4158 = vmul.f32 %v4030, %v4126
        %v4159 = vmul.f32 %v4031, %v4127
        %v4160 = vmul.f32 %v4032, %v4128
        %v4161 = vmul.f32 %v4033, %v4129
        %v4162 = vmul.f32 %v4034, %v4130
        %v4163 = vmul.f32 %v4035, %v4131
        %v4164 = vmul.f32 %v4036, %v4132
        %v4165 = vmul.f32 %v4037, %v4133
        %v4166 = vmul.f32 %v4038, %v4134
        %v4167 = vmul.f32 %v4039, %v4135
        %v4168 = vmul.f32 %v4040, %v4136
        %v4169 = vmul.f32 %v4041, %v4137
        %v4170 = vmul.f32 %v4042, %v4138
        %v4171 = vmul.f32 %v4043, %v4139
        %v4172 = vmul.f32 %v4044, %v4140
        %v4173 = vmul.f32 %v4045, %v4141
        %v4174 = vmul.f32 %v4046, %v4142
        %v4175 = vmul.f32 %v4047, %v4143
        %v4176 = vmul.f32 %v4048, %v4144
        %v4177 = vmul.f32 %v4049, %v4145
        %v4178 = vmul.f32 %v4050, %v4146
        %v4179 = vmul.f32 %v4051, %v4147
        %v4180 = vmul.f32 %v4052, %v4148
        %v4181 = vpack.c.bf16 %v4151, %v4149
        %v4182 = vpack.c.bf16 %v4152, %v4150
        %v4183 = vpack.c.bf16 %v4155, %v4153
        %v4184 = vpack.c.bf16 %v4156, %v4154
        %v4185 = vpack.c.bf16 %v4159, %v4157
        %v4186 = vpack.c.bf16 %v4160, %v4158
        %v4187 = vpack.c.bf16 %v4163, %v4161
        %v4188 = vpack.c.bf16 %v4164, %v4162
        %v4189 = vpack.c.bf16 %v4167, %v4165
        %v4190 = vpack.c.bf16 %v4168, %v4166
        %v4191 = vpack.c.bf16 %v4171, %v4169
        %v4192 = vpack.c.bf16 %v4172, %v4170
        %v4193 = vpack.c.bf16 %v4175, %v4173
        %v4194 = vpack.c.bf16 %v4176, %v4174
        %v4195 = vpack.c.bf16 %v4179, %v4177
        %v4196 = vpack.c.bf16 %v4180, %v4178
        %v4197 = vld [vmem:[#allocation11] sm:$0xf]
        %v4198 = vld [vmem:[#allocation11 + $0x4] sm:$0xf]
        %v4199 = vld [vmem:[#allocation11 + $0x8] sm:$0xf]
        %v4200 = vld [vmem:[#allocation11 + $0xc] sm:$0xf]
        %v4201 = vld [vmem:[#allocation11 + $0x10] sm:$0xf]
        %v4202 = vld [vmem:[#allocation11 + $0x14] sm:$0xf]
        %v4203 = vld [vmem:[#allocation11 + $0x18] sm:$0xf]
        %v4204 = vld [vmem:[#allocation11 + $0x1c] sm:$0xf]
        %v4205 = vld [vmem:[#allocation11 + $0x20] sm:$0xf]
        %v4206 = vld [vmem:[#allocation11 + $0x24] sm:$0xf]
        %v4207 = vld [vmem:[#allocation11 + $0x28] sm:$0xf]
        %v4208 = vld [vmem:[#allocation11 + $0x2c] sm:$0xf]
        %v4209 = vld [vmem:[#allocation11 + $0x30] sm:$0xf]
        %v4210 = vld [vmem:[#allocation11 + $0x34] sm:$0xf]
        %v4211 = vld [vmem:[#allocation11 + $0x38] sm:$0xf]
        %v4212 = vld [vmem:[#allocation11 + $0x3c] sm:$0xf]
        %v4213 = vld [vmem:[#allocation11 + $0x40] sm:$0xf]
        %v4214 = vld [vmem:[#allocation11 + $0x44] sm:$0xf]
        %v4215 = vld [vmem:[#allocation11 + $0x48] sm:$0xf]
        %v4216 = vld [vmem:[#allocation11 + $0x4c] sm:$0xf]
        %v4217 = vld [vmem:[#allocation11 + $0x50] sm:$0xf]
        %v4218 = vld [vmem:[#allocation11 + $0x54] sm:$0xf]
        %v4219 = vld [vmem:[#allocation11 + $0x58] sm:$0xf]
        %v4220 = vld [vmem:[#allocation11 + $0x5c] sm:$0xf]
        %v4221 = vld [vmem:[#allocation11 + $0x60] sm:$0xf]
        %v4222 = vld [vmem:[#allocation11 + $0x64] sm:$0xf]
        %v4223 = vld [vmem:[#allocation11 + $0x68] sm:$0xf]
        %v4224 = vld [vmem:[#allocation11 + $0x6c] sm:$0xf]
        %v4225 = vld [vmem:[#allocation11 + $0x70] sm:$0xf]
        %v4226 = vld [vmem:[#allocation11 + $0x74] sm:$0xf]
        %v4227 = vld [vmem:[#allocation11 + $0x78] sm:$0xf]
        %v4228 = vld [vmem:[#allocation11 + $0x7c] sm:$0xf]
        %v4229 = vld [vmem:[%s10] sm:$0x1]
        %v4231 = vlaneseq
        %v4232 = vshrl.u32 %v4231, 7
        %v4233 = vsub.s32 0, %v4232
        %v4234 = vrot.slane %v4229, %v4233
        %v4268 = vunpack.c.l.b16 %v4197
        %v4269 = vunpack.c.l.b16 %v4198
        %v4270 = vunpack.c.l.b16 %v4199
        %v4271 = vunpack.c.l.b16 %v4200
        %v4272 = vunpack.c.l.b16 %v4201
        %v4273 = vunpack.c.l.b16 %v4202
        %v4274 = vunpack.c.l.b16 %v4203
        %v4275 = vunpack.c.l.b16 %v4204
        %v4276 = vunpack.c.l.b16 %v4205
        %v4277 = vunpack.c.l.b16 %v4206
        %v4278 = vunpack.c.l.b16 %v4207
        %v4279 = vunpack.c.l.b16 %v4208
        %v4280 = vunpack.c.l.b16 %v4209
        %v4281 = vunpack.c.l.b16 %v4210
        %v4282 = vunpack.c.l.b16 %v4211
        %v4283 = vunpack.c.l.b16 %v4212
        %v4284 = vunpack.c.l.b16 %v4213
        %v4285 = vunpack.c.l.b16 %v4214
        %v4286 = vunpack.c.l.b16 %v4215
        %v4287 = vunpack.c.l.b16 %v4216
        %v4288 = vunpack.c.l.b16 %v4217
        %v4289 = vunpack.c.l.b16 %v4218
        %v4290 = vunpack.c.l.b16 %v4219
        %v4291 = vunpack.c.l.b16 %v4220
        %v4292 = vunpack.c.l.b16 %v4221
        %v4293 = vunpack.c.l.b16 %v4222
        %v4294 = vunpack.c.l.b16 %v4223
        %v4295 = vunpack.c.l.b16 %v4224
        %v4296 = vunpack.c.l.b16 %v4225
        %v4297 = vunpack.c.l.b16 %v4226
        %v4298 = vunpack.c.l.b16 %v4227
        %v4299 = vunpack.c.l.b16 %v4228
        %v4300 = vpack.c.b16 %v4269, %v4268
        %v4301 = vpack.c.b16 %v4271, %v4270
        %v4302 = vpack.c.b16 %v4273, %v4272
        %v4303 = vpack.c.b16 %v4275, %v4274
        %v4304 = vpack.c.b16 %v4277, %v4276
        %v4305 = vpack.c.b16 %v4279, %v4278
        %v4306 = vpack.c.b16 %v4281, %v4280
        %v4307 = vpack.c.b16 %v4283, %v4282
        %v4308 = vpack.c.b16 %v4285, %v4284
        %v4309 = vpack.c.b16 %v4287, %v4286
        %v4310 = vpack.c.b16 %v4289, %v4288
        %v4311 = vpack.c.b16 %v4291, %v4290
        %v4312 = vpack.c.b16 %v4293, %v4292
        %v4313 = vpack.c.b16 %v4295, %v4294
        %v4314 = vpack.c.b16 %v4297, %v4296
        %v4315 = vpack.c.b16 %v4299, %v4298
        %4332 = vmatprep.subr.bf16.mxu0 0
        %4333 = vmatpush1.bf16.msra.mxu0 %v4300
        %4334 = vmatprep.subr.bf16.mxu0 0
        %4335 = vmatpush1.bf16.msra.mxu0 %v4301
        %4336 = vmatprep.subr.bf16.mxu0 0
        %4337 = vmatpush1.bf16.msra.mxu0 %v4302
        %4338 = vmatprep.subr.bf16.mxu0 0
        %4339 = vmatpush1.bf16.msra.mxu0 %v4303
        %4340 = vmatprep.subr.bf16.mxu0 0
        %4341 = vmatpush1.bf16.msra.mxu0 %v4304
        %4342 = vmatprep.subr.bf16.mxu0 0
        %4343 = vmatpush1.bf16.msra.mxu0 %v4305
        %4344 = vmatprep.subr.bf16.mxu0 0
        %4345 = vmatpush1.bf16.msra.mxu0 %v4306
        %4346 = vmatprep.subr.bf16.mxu0 0
        %4347 = vmatpush1.bf16.msra.mxu0 %v4307
        %4348 = vmatprep.subr.bf16.mxu0 0
        %4349 = vmatpush1.bf16.msra.mxu0 %v4308
        %4350 = vmatprep.subr.bf16.mxu0 0
        %4351 = vmatpush1.bf16.msra.mxu0 %v4309
        %4352 = vmatprep.subr.bf16.mxu0 0
        %4353 = vmatpush1.bf16.msra.mxu0 %v4310
        %4354 = vmatprep.subr.bf16.mxu0 0
        %4355 = vmatpush1.bf16.msra.mxu0 %v4311
        %4356 = vmatprep.subr.bf16.mxu0 0
        %4357 = vmatpush1.bf16.msra.mxu0 %v4312
        %4358 = vmatprep.subr.bf16.mxu0 0
        %4359 = vmatpush1.bf16.msra.mxu0 %v4313
        %4360 = vmatprep.subr.bf16.mxu0 0
        %4361 = vmatpush1.bf16.msra.mxu0 %v4314
        %4362 = vmatprep.subr.bf16.mxu0 0
        %4363 = vmatpush1.bf16.msra.mxu0 %v4315
        %4364 = vmatprep.mubr.bf16.mxu0 %v4182
        %4365 = vmatmul.mubr.bf16.gmra.mrb[0].mxu0 %v4181
        %v4366 = vpop.f32.mrb[0].mxu0
        %v4367 = vadd.f32 %v4234, %v4366
        %v4368 = vpop.f32.mrb[0].mxu0
        %v4369 = vpop.f32.mrb[0].mxu0
        %v4370 = vadd.f32 %v4234, %v4369
        %v4371 = vpop.f32.mrb[0].mxu0
        %4372 = vmatprep.mubr.bf16.mxu0 %v4184
        %4373 = vmatmul.mubr.bf16.gmra.mrb[0].mxu0 %v4183
        %v4374 = vpop.f32.mrb[0].mxu0
        %v4375 = vadd.f32 %v4234, %v4374
        %v4376 = vpop.f32.mrb[0].mxu0
        %v4377 = vpop.f32.mrb[0].mxu0
        %v4378 = vadd.f32 %v4234, %v4377
        %v4379 = vpop.f32.mrb[0].mxu0
        %4380 = vmatprep.mubr.bf16.mxu0 %v4186
        %4381 = vmatmul.mubr.bf16.gmra.mrb[0].mxu0 %v4185
        %v4382 = vpop.f32.mrb[0].mxu0
        %v4383 = vadd.f32 %v4234, %v4382
        %v4384 = vpop.f32.mrb[0].mxu0
        %v4385 = vpop.f32.mrb[0].mxu0
        %v4386 = vadd.f32 %v4234, %v4385
        %v4387 = vpop.f32.mrb[0].mxu0
        %4388 = vmatprep.mubr.bf16.mxu0 %v4188
        %4389 = vmatmul.mubr.bf16.gmra.mrb[0].mxu0 %v4187
        %v4390 = vpop.f32.mrb[0].mxu0
        %v4391 = vadd.f32 %v4234, %v4390
        %v4392 = vpop.f32.mrb[0].mxu0
        %v4393 = vpop.f32.mrb[0].mxu0
        %v4394 = vadd.f32 %v4234, %v4393
        %v4395 = vpop.f32.mrb[0].mxu0
        %4396 = vmatprep.mubr.bf16.mxu0 %v4190
        %4397 = vmatmul.mubr.bf16.gmra.mrb[0].mxu0 %v4189
        %v4398 = vpop.f32.mrb[0].mxu0
        %v4399 = vadd.f32 %v4234, %v4398
        %v4400 = vpop.f32.mrb[0].mxu0
        %v4401 = vpop.f32.mrb[0].mxu0
        %v4402 = vadd.f32 %v4234, %v4401
        %v4403 = vpop.f32.mrb[0].mxu0
        %4404 = vmatprep.mubr.bf16.mxu0 %v4192
        %4405 = vmatmul.mubr.bf16.gmra.mrb[0].mxu0 %v4191
        %v4406 = vpop.f32.mrb[0].mxu0
        %v4407 = vadd.f32 %v4234, %v4406
        %v4408 = vpop.f32.mrb[0].mxu0
        %v4409 = vpop.f32.mrb[0].mxu0
        %v4410 = vadd.f32 %v4234, %v4409
        %v4411 = vpop.f32.mrb[0].mxu0
        %4412 = vmatprep.mubr.bf16.mxu0 %v4194
        %4413 = vmatmul.mubr.bf16.gmra.mrb[0].mxu0 %v4193
        %v4414 = vpop.f32.mrb[0].mxu0
        %v4415 = vadd.f32 %v4234, %v4414
        %v4416 = vpop.f32.mrb[0].mxu0
        %v4417 = vpop.f32.mrb[0].mxu0
        %v4418 = vadd.f32 %v4234, %v4417
        %v4419 = vpop.f32.mrb[0].mxu0
        %4420 = vmatprep.mubr.bf16.mxu0 %v4196
        %4421 = vmatmul.mubr.bf16.gmra.mrb[0].mxu0 %v4195
        %v4422 = vpop.f32.mrb[0].mxu0
        %v4423 = vadd.f32 %v4234, %v4422
        %v4424 = vpop.f32.mrb[0].mxu0
        %v4425 = vpop.f32.mrb[0].mxu0
        %v4426 = vadd.f32 %v4234, %v4425
        %v4427 = vpop.f32.mrb[0].mxu0
        %4428 = vdwg.mxu0
        %v4429 = vadd.f32 %v3776, %v4367
        %v4430 = vadd.f32 %v3777, %v4370
        %v4431 = vadd.f32 %v3778, %v4375
        %v4432 = vadd.f32 %v3779, %v4378
        %v4433 = vadd.f32 %v3780, %v4383
        %v4434 = vadd.f32 %v3781, %v4386
        %v4435 = vadd.f32 %v3782, %v4391
        %v4436 = vadd.f32 %v3783, %v4394
        %v4437 = vadd.f32 %v3784, %v4399
        %v4438 = vadd.f32 %v3785, %v4402
        %v4439 = vadd.f32 %v3786, %v4407
        %v4440 = vadd.f32 %v3787, %v4410
        %v4441 = vadd.f32 %v3788, %v4415
        %v4442 = vadd.f32 %v3789, %v4418
        %v4443 = vadd.f32 %v3790, %v4423
        %v4444 = vadd.f32 %v3791, %v4426
        %v4445 = vld [vmem:[%s11] sm:$0x1]
        %v4446 = vld [vmem:[%s12] sm:$0x1]
        %4447 = vadd.xlane.f32.xlu0 %v4429
        %v4448 = vpop.xlane.xlu0 %4447
        %4449 = vadd.xlane.f32.xlu0 %v4430
        %v4450 = vpop.xlane.xlu0 %4449
        %4451 = vadd.xlane.f32.xlu0 %v4431
        %v4452 = vpop.xlane.xlu0 %4451
        %4453 = vadd.xlane.f32.xlu0 %v4432
        %v4454 = vpop.xlane.xlu0 %4453
        %4455 = vadd.xlane.f32.xlu0 %v4433
        %v4456 = vpop.xlane.xlu0 %4455
        %4457 = vadd.xlane.f32.xlu0 %v4434
        %v4458 = vpop.xlane.xlu0 %4457
        %4459 = vadd.xlane.f32.xlu0 %v4435
        %v4460 = vpop.xlane.xlu0 %4459
        %4461 = vadd.xlane.f32.xlu0 %v4436
        %v4462 = vpop.xlane.xlu0 %4461
        %4463 = vadd.xlane.f32.xlu0 %v4437
        %v4464 = vpop.xlane.xlu0 %4463
        %4465 = vadd.xlane.f32.xlu0 %v4438
        %v4466 = vpop.xlane.xlu0 %4465
        %4467 = vadd.xlane.f32.xlu0 %v4439
        %v4468 = vpop.xlane.xlu0 %4467
        %4469 = vadd.xlane.f32.xlu0 %v4440
        %v4470 = vpop.xlane.xlu0 %4469
        %4471 = vadd.xlane.f32.xlu0 %v4441
        %v4472 = vpop.xlane.xlu0 %4471
        %4473 = vadd.xlane.f32.xlu0 %v4442
        %v4474 = vpop.xlane.xlu0 %4473
        %4475 = vadd.xlane.f32.xlu0 %v4443
        %v4476 = vpop.xlane.xlu0 %4475
        %4477 = vadd.xlane.f32.xlu0 %v4444
        %v4478 = vpop.xlane.xlu0 %4477
        %v4479 = vmul.f32 %v4448, %v3603
        %v4480 = vmul.f32 %v4450, %v3603
        %v4481 = vmul.f32 %v4452, %v3603
        %v4482 = vmul.f32 %v4454, %v3603
        %v4483 = vmul.f32 %v4456, %v3603
        %v4484 = vmul.f32 %v4458, %v3603
        %v4485 = vmul.f32 %v4460, %v3603
        %v4486 = vmul.f32 %v4462, %v3603
        %v4487 = vmul.f32 %v4464, %v3603
        %v4488 = vmul.f32 %v4466, %v3603
        %v4489 = vmul.f32 %v4468, %v3603
        %v4490 = vmul.f32 %v4470, %v3603
        %v4491 = vmul.f32 %v4472, %v3603
        %v4492 = vmul.f32 %v4474, %v3603
        %v4493 = vmul.f32 %v4476, %v3603
        %v4494 = vmul.f32 %v4478, %v3603
        %v4495 = vsub.f32 %v4429, %v4479
        %v4496 = vsub.f32 %v4430, %v4480
        %v4497 = vsub.f32 %v4431, %v4481
        %v4498 = vsub.f32 %v4432, %v4482
        %v4499 = vsub.f32 %v4433, %v4483
        %v4500 = vsub.f32 %v4434, %v4484
        %v4501 = vsub.f32 %v4435, %v4485
        %v4502 = vsub.f32 %v4436, %v4486
        %v4503 = vsub.f32 %v4437, %v4487
        %v4504 = vsub.f32 %v4438, %v4488
        %v4505 = vsub.f32 %v4439, %v4489
        %v4506 = vsub.f32 %v4440, %v4490
        %v4507 = vsub.f32 %v4441, %v4491
        %v4508 = vsub.f32 %v4442, %v4492
        %v4509 = vsub.f32 %v4443, %v4493
        %v4510 = vsub.f32 %v4444, %v4494
        %v4511 = vmul.f32 %v4495, %v4495
        %v4512 = vmul.f32 %v4496, %v4496
        %v4513 = vmul.f32 %v4497, %v4497
        %v4514 = vmul.f32 %v4498, %v4498
        %v4515 = vmul.f32 %v4499, %v4499
        %v4516 = vmul.f32 %v4500, %v4500
        %v4517 = vmul.f32 %v4501, %v4501
        %v4518 = vmul.f32 %v4502, %v4502
        %v4519 = vmul.f32 %v4503, %v4503
        %v4520 = vmul.f32 %v4504, %v4504
        %v4521 = vmul.f32 %v4505, %v4505
        %v4522 = vmul.f32 %v4506, %v4506
        %v4523 = vmul.f32 %v4507, %v4507
        %v4524 = vmul.f32 %v4508, %v4508
        %v4525 = vmul.f32 %v4509, %v4509
        %v4526 = vmul.f32 %v4510, %v4510
        %4527 = vadd.xlane.f32.xlu0 %v4511
        %v4528 = vpop.xlane.xlu0 %4527
        %4529 = vadd.xlane.f32.xlu0 %v4512
        %v4530 = vpop.xlane.xlu0 %4529
        %4531 = vadd.xlane.f32.xlu0 %v4513
        %v4532 = vpop.xlane.xlu0 %4531
        %4533 = vadd.xlane.f32.xlu0 %v4514
        %v4534 = vpop.xlane.xlu0 %4533
        %4535 = vadd.xlane.f32.xlu0 %v4515
        %v4536 = vpop.xlane.xlu0 %4535
        %4537 = vadd.xlane.f32.xlu0 %v4516
        %v4538 = vpop.xlane.xlu0 %4537
        %4539 = vadd.xlane.f32.xlu0 %v4517
        %v4540 = vpop.xlane.xlu0 %4539
        %4541 = vadd.xlane.f32.xlu0 %v4518
        %v4542 = vpop.xlane.xlu0 %4541
        %4543 = vadd.xlane.f32.xlu0 %v4519
        %v4544 = vpop.xlane.xlu0 %4543
        %4545 = vadd.xlane.f32.xlu0 %v4520
        %v4546 = vpop.xlane.xlu0 %4545
        %4547 = vadd.xlane.f32.xlu0 %v4521
        %v4548 = vpop.xlane.xlu0 %4547
        %4549 = vadd.xlane.f32.xlu0 %v4522
        %v4550 = vpop.xlane.xlu0 %4549
        %4551 = vadd.xlane.f32.xlu0 %v4523
        %v4552 = vpop.xlane.xlu0 %4551
        %4553 = vadd.xlane.f32.xlu0 %v4524
        %v4554 = vpop.xlane.xlu0 %4553
        %4555 = vadd.xlane.f32.xlu0 %v4525
        %v4556 = vpop.xlane.xlu0 %4555
        %4557 = vadd.xlane.f32.xlu0 %v4526
        %v4558 = vpop.xlane.xlu0 %4557
        %v4559 = vmul.f32 %v4528, %v3603
        %v4560 = vmul.f32 %v4530, %v3603
        %v4561 = vmul.f32 %v4532, %v3603
        %v4562 = vmul.f32 %v4534, %v3603
        %v4563 = vmul.f32 %v4536, %v3603
        %v4564 = vmul.f32 %v4538, %v3603
        %v4565 = vmul.f32 %v4540, %v3603
        %v4566 = vmul.f32 %v4542, %v3603
        %v4567 = vmul.f32 %v4544, %v3603
        %v4568 = vmul.f32 %v4546, %v3603
        %v4569 = vmul.f32 %v4548, %v3603
        %v4570 = vmul.f32 %v4550, %v3603
        %v4571 = vmul.f32 %v4552, %v3603
        %v4572 = vmul.f32 %v4554, %v3603
        %v4573 = vmul.f32 %v4556, %v3603
        %v4574 = vmul.f32 %v4558, %v3603
        %v4575 = vadd.f32 %v4559, 1e-12
        %v4576 = vadd.f32 %v4560, 1e-12
        %v4577 = vadd.f32 %v4561, 1e-12
        %v4578 = vadd.f32 %v4562, 1e-12
        %v4579 = vadd.f32 %v4563, 1e-12
        %v4580 = vadd.f32 %v4564, 1e-12
        %v4581 = vadd.f32 %v4565, 1e-12
        %v4582 = vadd.f32 %v4566, 1e-12
        %v4583 = vadd.f32 %v4567, 1e-12
        %v4584 = vadd.f32 %v4568, 1e-12
        %v4585 = vadd.f32 %v4569, 1e-12
        %v4586 = vadd.f32 %v4570, 1e-12
        %v4587 = vadd.f32 %v4571, 1e-12
        %v4588 = vadd.f32 %v4572, 1e-12
        %v4589 = vadd.f32 %v4573, 1e-12
        %v4590 = vadd.f32 %v4574, 1e-12
        %v4591 = vrsqrt.pop %v4575
        %v4592 = vrsqrt.pop %v4576
        %v4593 = vrsqrt.pop %v4577
        %v4594 = vrsqrt.pop %v4578
        %v4595 = vrsqrt.pop %v4579
        %v4596 = vrsqrt.pop %v4580
        %v4597 = vrsqrt.pop %v4581
        %v4598 = vrsqrt.pop %v4582
        %v4599 = vrsqrt.pop %v4583
        %v4600 = vrsqrt.pop %v4584
        %v4601 = vrsqrt.pop %v4585
        %v4602 = vrsqrt.pop %v4586
        %v4603 = vrsqrt.pop %v4587
        %v4604 = vrsqrt.pop %v4588
        %v4605 = vrsqrt.pop %v4589
        %v4606 = vrsqrt.pop %v4590
        %v4607 = vmul.f32 %v4495, %v4591
        %v4608 = vmul.f32 %v4496, %v4592
        %v4609 = vmul.f32 %v4497, %v4593
        %v4610 = vmul.f32 %v4498, %v4594
        %v4611 = vmul.f32 %v4499, %v4595
        %v4612 = vmul.f32 %v4500, %v4596
        %v4613 = vmul.f32 %v4501, %v4597
        %v4614 = vmul.f32 %v4502, %v4598
        %v4615 = vmul.f32 %v4503, %v4599
        %v4616 = vmul.f32 %v4504, %v4600
        %v4617 = vmul.f32 %v4505, %v4601
        %v4618 = vmul.f32 %v4506, %v4602
        %v4619 = vmul.f32 %v4507, %v4603
        %v4620 = vmul.f32 %v4508, %v4604
        %v4621 = vmul.f32 %v4509, %v4605
        %v4622 = vmul.f32 %v4510, %v4606
        %v4624 = vlaneseq
        %v4625 = vshrl.u32 %v4624, 7
        %v4626 = vsub.s32 0, %v4625
        %v4627 = vrot.slane %v4445, %v4626
        %v4629 = vmul.f32 %v4607, %v4627
        %v4630 = vmul.f32 %v4608, %v4627
        %v4631 = vmul.f32 %v4609, %v4627
        %v4632 = vmul.f32 %v4610, %v4627
        %v4633 = vmul.f32 %v4611, %v4627
        %v4634 = vmul.f32 %v4612, %v4627
        %v4635 = vmul.f32 %v4613, %v4627
        %v4636 = vmul.f32 %v4614, %v4627
        %v4637 = vmul.f32 %v4615, %v4627
        %v4638 = vmul.f32 %v4616, %v4627
        %v4639 = vmul.f32 %v4617, %v4627
        %v4640 = vmul.f32 %v4618, %v4627
        %v4641 = vmul.f32 %v4619, %v4627
        %v4642 = vmul.f32 %v4620, %v4627
        %v4643 = vmul.f32 %v4621, %v4627
        %v4644 = vmul.f32 %v4622, %v4627
        %v4646 = vlaneseq
        %v4647 = vshrl.u32 %v4646, 7
        %v4648 = vsub.s32 0, %v4647
        %v4649 = vrot.slane %v4446, %v4648
        %v4651 = vadd.f32 %v4629, %v4649
        %v4652 = vadd.f32 %v4630, %v4649
        %v4653 = vadd.f32 %v4631, %v4649
        %v4654 = vadd.f32 %v4632, %v4649
        %v4655 = vadd.f32 %v4633, %v4649
        %v4656 = vadd.f32 %v4634, %v4649
        %v4657 = vadd.f32 %v4635, %v4649
        %v4658 = vadd.f32 %v4636, %v4649
        %v4659 = vadd.f32 %v4637, %v4649
        %v4660 = vadd.f32 %v4638, %v4649
        %v4661 = vadd.f32 %v4639, %v4649
        %v4662 = vadd.f32 %v4640, %v4649
        %v4663 = vadd.f32 %v4641, %v4649
        %v4664 = vadd.f32 %v4642, %v4649
        %v4665 = vadd.f32 %v4643, %v4649
        %v4666 = vadd.f32 %v4644, %v4649
        %4667 = vst [vmem:[%s517] sm:$0xff] %v4651
        %4668 = vst [vmem:[%s517 + $0x8] sm:$0xff] %v4652
        %4669 = vst [vmem:[%s517 + $0x10] sm:$0xff] %v4653
        %4670 = vst [vmem:[%s517 + $0x18] sm:$0xff] %v4654
        %4671 = vst [vmem:[%s517 + $0x20] sm:$0xff] %v4655
        %4672 = vst [vmem:[%s517 + $0x28] sm:$0xff] %v4656
        %4673 = vst [vmem:[%s517 + $0x30] sm:$0xff] %v4657
        %4674 = vst [vmem:[%s517 + $0x38] sm:$0xff] %v4658
        %4675 = vst [vmem:[%s517 + $0x40] sm:$0xff] %v4659
        %4676 = vst [vmem:[%s517 + $0x48] sm:$0xff] %v4660
        %4677 = vst [vmem:[%s517 + $0x50] sm:$0xff] %v4661
        %4678 = vst [vmem:[%s517 + $0x58] sm:$0xff] %v4662
        %4679 = vst [vmem:[%s517 + $0x60] sm:$0xff] %v4663
        %4680 = vst [vmem:[%s517 + $0x68] sm:$0xff] %v4664
        %4681 = vst [vmem:[%s517 + $0x70] sm:$0xff] %v4665
        %4682 = vst [vmem:[%s517 + $0x78] sm:$0xff] %v4666
        %s4683 = sand.u32 %s318, 1
        %s4684 = scalar_lea.sflag [#allocation5], %s4683
        %s4685 = sand.u32 %s318, 1
        %s4686 = smul.addr %s4685, 128
        %s4687 = scalar_lea.vmem [#allocation12], %s4686
        // Predicated region
        $region93: #{tpu_custom_call.1} parent=71 // pred_check
          %p4688 = pneg %p328
        $region94: #{tpu_custom_call.1} parent=71 // pred_check_branch
          %4690 = sbr.rel (%p4688) target = $region96
        $region95: #{tpu_custom_call.1} parent=71 // pred_region
          %s4691 = smul.u32 2, %s32
          %s4693 = ssub.s32 2048, 2048
          %4694 = vsyncadd %s4684, %s4693
          %s4695 = smul.addr %s4691, 8
          %s4696 = smul.addr %s4695, 128
          %s4697 = scalar_lea.hbm %s13, %s4696
          %s4698 = sshll.u32 %s4687, 4
          %s4699 = int_to_ptr.vmem [resolvable:$true] %s4698
          %4704 = dma.vmem_to_hbm [thread:$0]  %s4699, 2048, %s4697, %s4684, 128, 128, 8
        $region96: #{tpu_custom_call.1} parent=71 // pred_fallthru
          _
      $region72: #{tpu_custom_call.1} parent=5 // pred_fallthru
        _
      %p4705 = scmp.le.s32.totalorder 2, %s27
      // Predicated region
      $region97: #{tpu_custom_call.1} parent=5 // pred_check
        %p4706 = pneg %p4705
      $region98: #{tpu_custom_call.1} parent=5 // pred_check_branch
        %4708 = sbr.rel (%p4706) target = $region100
      $region99: #{tpu_custom_call.1} parent=5 // pred_region
        %s4709 = ssub.s32 %s27, 2
        // Predicated region
        $region101: #{tpu_custom_call.1} parent=99 // pred_check
          %p4710 = pneg %p334
        $region102: #{tpu_custom_call.1} parent=99 // pred_check_branch
          %4712 = sbr.rel (%p4710) target = $region104
        $region103: #{tpu_custom_call.1} parent=99 // pred_region
          %s4713 = sand.u32 %s319, 1
          %s4714 = scalar_lea.sflag [#allocation5], %s4713
          %s4715 = sand.u32 %s319, 1
          %s4716 = smul.addr %s4715, 128
          %s4717 = scalar_lea.vmem [#allocation12], %s4716
          %4718 = dma.done %s4714, 2048
        $region104: #{tpu_custom_call.1} parent=99 // pred_fallthru
          _
      $region100: #{tpu_custom_call.1} parent=5 // pred_fallthru
        _
    $region6: #{tpu_custom_call.1} parent=1 // loop_footer
      %s31 = sadd.s32 1, %s27
    $region7: #{tpu_custom_call.1} parent=1 // loop_footer_branch
      %26 = sbr.rel target = $region3
    $region8: #{tpu_custom_call.1} parent=1 // loop_exit
      _
    %4719 = vsyncpa [#allocation4], 1
    %s4720 = scalar_lea.sflag [#allocation4], 1
    %4721 = vsyncpa %s4720, 1
    %4722 = vsyncpa [#allocation7], 1
    %4723 = vsyncpa [#allocation10], 1
    %4724 = vsyncpa [#allocation5], 1
    %s4725 = scalar_lea.sflag [#allocation5], 1
    %4726 = vsyncpa %s4725, 1

// kernel: tpu_custom_call.1
$region0: #{tpu_custom_call.1}
  #allocation0 [shape = 'u32[]', space=smem, size = 0x4, offset = 0x4, fixed_abs, tag = 'smem constant byte address 0x4 - core index']
  #allocation1 [shape = 'u32[144,128]{1,0:T(1,128)}', space=vmem, size = 0x12000, scoped, tag = 'internal scratch']
  #allocation2 [shape = 'bf16[128,128]{1,0:T(16,128)(2,1)}', space=vmem, size = 0x8000, scoped, tag = 'scratch operand']
  %s0 = inlined_call_operand.hbm [shape: f32[4,64,128], index: 0, kind: input, shape index: {}]
  %s1 = inlined_call_operand.hbm [shape: bf16[128,384], index: 1, kind: input, shape index: {}]
  %s2 = inlined_call_operand.vmem [shape: f32[1,384], index: 2, kind: input, shape index: {}]
  %s3 = inlined_call_operand.hbm [shape: bf16[128,128], index: 3, kind: input, shape index: {}]
  %s4 = inlined_call_operand.vmem [shape: f32[1,128], index: 4, kind: input, shape index: {}]
  %s5 = inlined_call_operand.vmem [shape: f32[1,128], index: 5, kind: input, shape index: {}]
  %s6 = inlined_call_operand.vmem [shape: f32[1,128], index: 6, kind: input, shape index: {}]
  %s7 = inlined_call_operand.hbm [shape: bf16[128,256], index: 7, kind: input, shape index: {}]
  %s8 = inlined_call_operand.vmem [shape: f32[1,256], index: 8, kind: input, shape index: {}]
  %s9 = inlined_call_operand.hbm [shape: bf16[256,128], index: 9, kind: input, shape index: {}]
  %s10 = inlined_call_operand.vmem [shape: f32[1,128], index: 10, kind: input, shape index: {}]
  %s11 = inlined_call_operand.vmem [shape: f32[1,128], index: 11, kind: input, shape index: {}]
  %s12 = inlined_call_operand.vmem [shape: f32[1,128], index: 12, kind: input, shape index: {}]
  %s13 = inlined_call_operand.hbm [shape: f32[4,64,128], index: 13, kind: output, shape index: {}]
  %s14 = sld [smem:[#allocation0]]
  $region105: #{tpu_custom_call.1} parent=0
    _
  %s16 = ssub.s32 1, %s14
  %s17 = scalar_select 0, %s16, %s14
  $region1: #{tpu_custom_call.1} parent=0
    #allocation3 [shape = 'u8[131072]{0}', space=vmem, size = 0x20000, scoped, tag = 'input window, operand 0']
    #allocation4 [shape = 's32[2]{0}', space=sflag, size = 0x8, scoped, tag = 'scoped memory for tpu_custom_call.1']
    #allocation5 [shape = 's32[2]{0}', space=sflag, size = 0x8, scoped, tag = 'scoped memory for tpu_custom_call.1']
    #allocation6 [shape = 'u8[98304]{0}', space=vmem, size = 0x18000, scoped, tag = 'input window, operand 1, single buffered']
    #allocation7 [shape = 's32[1]{0}', space=sflag, size = 0x4, scoped, tag = 'scoped memory for tpu_custom_call.1']
    #allocation8 [shape = 'u8[32768]{0}', space=vmem, size = 0x8000, scoped, tag = 'input window, operand 3, single buffered']
    #allocation9 [shape = 'u8[65536]{0}', space=vmem, size = 0x10000, scoped, tag = 'input window, operand 7, single buffered']
    #allocation10 [shape = 's32[1]{0}', space=sflag, size = 0x4, scoped, tag = 'scoped memory for tpu_custom_call.1']
    #allocation11 [shape = 'u8[65536]{0}', space=vmem, size = 0x10000, scoped, tag = 'input window, operand 9, single buffered']
    #allocation12 [shape = 'u8[131072]{0}', space=vmem, size = 0x20000, scoped, tag = 'output window, operand 0']
    %18 = vsyncpa [#allocation4], 0
    %s19 = scalar_lea.sflag [#allocation4], 1
    %20 = vsyncpa %s19, 0
    %21 = vsyncpa [#allocation7], 0
    %22 = vsyncpa [#allocation10], 0
    %23 = vsyncpa [#allocation5], 0
    %s24 = scalar_lea.sflag [#allocation5], 1
    %25 = vsyncpa %s24, 0
    loop: start=0, step=1, limit=4
    $region2: #{tpu_custom_call.1} parent=1 // loop_pre_header
      _
    $region3: #{tpu_custom_call.1} parent=1 // loop_header
      %s27 = sphi 0, %s31
      %p28 = scmp.ge.s32.totalorder %s27, 4
      %s37 = sphi 0, %s39
      %s40 = sphi 0, %s37
      %s41 = sphi 0, %s40
      %s57 = sphi 0, %s41
      %s61 = sphi 0, %s61
      %s63 = sphi 0, %s61
      %s64 = sphi 0, %s63
      %s78 = sphi 0, %s64
      %s82 = sphi 0, %s82
      %s84 = sphi 0, %s82
      %s85 = sphi 0, %s84
      %s99 = sphi 0, %s85
      %s103 = sphi 0, %s103
      %s105 = sphi 0, %s103
      %s106 = sphi 0, %s105
      %s120 = sphi 0, %s106
      %s124 = sphi 0, %s124
      %s126 = sphi 0, %s124
      %s127 = sphi 0, %s126
      %s141 = sphi 0, %s127
      %s145 = sphi 0, %s145
      %s147 = sphi 0, %s145
      %s148 = sphi 0, %s147
      %s162 = sphi 0, %s148
      %s166 = sphi 0, %s166
      %s168 = sphi 0, %s166
      %s169 = sphi 0, %s168
      %s183 = sphi 0, %s169
      %s187 = sphi 0, %s187
      %s189 = sphi 0, %s187
      %s190 = sphi 0, %s189
      %s204 = sphi 0, %s190
      %s208 = sphi 0, %s208
      %s210 = sphi 0, %s208
      %s211 = sphi 0, %s210
      %s225 = sphi 0, %s211
      %s229 = sphi 0, %s229
      %s231 = sphi 0, %s229
      %s232 = sphi 0, %s231
      %s246 = sphi 0, %s232
      %s250 = sphi 0, %s250
      %s252 = sphi 0, %s250
      %s253 = sphi 0, %s252
      %s267 = sphi 0, %s253
      %s271 = sphi 0, %s271
      %s273 = sphi 0, %s271
      %s274 = sphi 0, %s273
      %s288 = sphi 0, %s274
      %s292 = sphi 0, %s292
      %s294 = sphi 0, %s292
      %s295 = sphi 0, %s294
      %s309 = sphi 0, %s295
      %s315 = sphi 0, %s317
      %s318 = sphi 0, %s315
      %s319 = sphi 0, %s318
      %s335 = sphi 0, %s319
    $region4: #{tpu_custom_call.1} parent=1 // loop_header_branch
      %30 = sbr.rel (%p28) target = $region8
    $region5: #{tpu_custom_call.1} parent=1 // loop_body
      %s32 = ssub.s32 %s27, 1
      %s33 = ssub.s32 %s27, 2
      %s34 = sadd.s32 %s27, 1
      %s35 = ssub.s32 %s27, %s34
      %p36 = scmp.eq.s32.totalorder %s35, 0
      %s38 = sadd.s32 %s37, 1
      %s39 = scalar_select %p36, %s37, %s38
      %p42 = pneg %p36
      %p43 = scmp.eq.s32.totalorder %s27, 1
      %p44 = por %p42, %p43
      %p45 = scmp.ne.s32.totalorder %s37, %s40
      %p46 = scmp.eq.s32.totalorder %s27, 0
      %p47 = por %p45, %p46
      %p48 = scmp.ne.s32.totalorder %s37, %s40
      %p49 = scmp.eq.s32.totalorder %s32, 1
      %p50 = por %p48, %p49
      %p51 = scmp.ne.s32.totalorder %s40, %s41
      %p52 = scmp.eq.s32.totalorder %s32, 0
      %p53 = por %p51, %p52
      %p54 = scmp.ne.s32.totalorder %s40, %s41
      %p55 = scmp.eq.s32.totalorder %s33, 1
      %p56 = por %p54, %p55
      %p58 = scmp.ne.s32.totalorder %s41, %s57
      %p59 = scmp.eq.s32.totalorder %s33, 0
      %p60 = por %p58, %p59
      %s62 = sadd.s32 %s61, 1
      %p65 = scmp.eq.s32.totalorder %s27, 1
      %p66 = scmp.ne.s32.totalorder %s61, %s63
      %p67 = scmp.eq.s32.totalorder %s27, 0
      %p68 = por %p66, %p67
      %p69 = scmp.ne.s32.totalorder %s61, %s63
      %p70 = scmp.eq.s32.totalorder %s32, 1
      %p71 = por %p69, %p70
      %p72 = scmp.ne.s32.totalorder %s63, %s64
      %p73 = scmp.eq.s32.totalorder %s32, 0
      %p74 = por %p72, %p73
      %p75 = scmp.ne.s32.totalorder %s63, %s64
      %p76 = scmp.eq.s32.totalorder %s33, 1
      %p77 = por %p75, %p76
      %p79 = scmp.ne.s32.totalorder %s64, %s78
      %p80 = scmp.eq.s32.totalorder %s33, 0
      %p81 = por %p79, %p80
      %s83 = sadd.s32 %s82, 1
      %p86 = scmp.eq.s32.totalorder %s27, 1
      %p87 = scmp.ne.s32.totalorder %s82, %s84
      %p88 = scmp.eq.s32.totalorder %s27, 0
      %p89 = por %p87, %p88
      %p90 = scmp.ne.s32.totalorder %s82, %s84
      %p91 = scmp.eq.s32.totalorder %s32, 1
      %p92 = por %p90, %p91
      %p93 = scmp.ne.s32.totalorder %s84, %s85
      %p94 = scmp.eq.s32.totalorder %s32, 0
      %p95 = por %p93, %p94
      %p96 = scmp.ne.s32.totalorder %s84, %s85
      %p97 = scmp.eq.s32.totalorder %s33, 1
      %p98 = por %p96, %p97
      %p100 = scmp.ne.s32.totalorder %s85, %s99
      %p101 = scmp.eq.s32.totalorder %s33, 0
      %p102 = por %p100, %p101
      %s104 = sadd.s32 %s103, 1
      %p107 = scmp.eq.s32.totalorder %s27, 1
      %p108 = scmp.ne.s32.totalorder %s103, %s105
      %p109 = scmp.eq.s32.totalorder %s27, 0
      %p110 = por %p108, %p109
      %p111 = scmp.ne.s32.totalorder %s103, %s105
      %p112 = scmp.eq.s32.totalorder %s32, 1
      %p113 = por %p111, %p112
      %p114 = scmp.ne.s32.totalorder %s105, %s106
      %p115 = scmp.eq.s32.totalorder %s32, 0
      %p116 = por %p114, %p115
      %p117 = scmp.ne.s32.totalorder %s105, %s106
      %p118 = scmp.eq.s32.totalorder %s33, 1
      %p119 = por %p117, %p118
      %p121 = scmp.ne.s32.totalorder %s106, %s120
      %p122 = scmp.eq.s32.totalorder %s33, 0
      %p123 = por %p121, %p122
      %s125 = sadd.s32 %s124, 1
      %p128 = scmp.eq.s32.totalorder %s27, 1
      %p129 = scmp.ne.s32.totalorder %s124, %s126
      %p130 = scmp.eq.s32.totalorder %s27, 0
      %p131 = por %p129, %p130
      %p132 = scmp.ne.s32.totalorder %s124, %s126
      %p133 = scmp.eq.s32.totalorder %s32, 1
      %p134 = por %p132, %p133
      %p135 = scmp.ne.s32.totalorder %s126, %s127
      %p136 = scmp.eq.s32.totalorder %s32, 0
      %p137 = por %p135, %p136
      %p138 = scmp.ne.s32.totalorder %s126, %s127
      %p139 = scmp.eq.s32.totalorder %s33, 1
      %p140 = por %p138, %p139
      %p142 = scmp.ne.s32.totalorder %s127, %s141
      %p143 = scmp.eq.s32.totalorder %s33, 0
      %p144 = por %p142, %p143
      %s146 = sadd.s32 %s145, 1
      %p149 = scmp.eq.s32.totalorder %s27, 1
      %p150 = scmp.ne.s32.totalorder %s145, %s147
      %p151 = scmp.eq.s32.totalorder %s27, 0
      %p152 = por %p150, %p151
      %p153 = scmp.ne.s32.totalorder %s145, %s147
      %p154 = scmp.eq.s32.totalorder %s32, 1
      %p155 = por %p153, %p154
      %p156 = scmp.ne.s32.totalorder %s147, %s148
      %p157 = scmp.eq.s32.totalorder %s32, 0
      %p158 = por %p156, %p157
      %p159 = scmp.ne.s32.totalorder %s147, %s148
      %p160 = scmp.eq.s32.totalorder %s33, 1
      %p161 = por %p159, %p160
      %p163 = scmp.ne.s32.totalorder %s148, %s162
      %p164 = scmp.eq.s32.totalorder %s33, 0
      %p165 = por %p163, %p164
      %s167 = sadd.s32 %s166, 1
      %p170 = scmp.eq.s32.totalorder %s27, 1
      %p171 = scmp.ne.s32.totalorder %s166, %s168
      %p172 = scmp.eq.s32.totalorder %s27, 0
      %p173 = por %p171, %p172
      %p174 = scmp.ne.s32.totalorder %s166, %s168
      %p175 = scmp.eq.s32.totalorder %s32, 1
      %p176 = por %p174, %p175
      %p177 = scmp.ne.s32.totalorder %s168, %s169
      %p178 = scmp.eq.s32.totalorder %s32, 0
      %p179 = por %p177, %p178
      %p180 = scmp.ne.s32.totalorder %s168, %s169
      %p181 = scmp.eq.s32.totalorder %s33, 1
      %p182 = por %p180, %p181
      %p184 = scmp.ne.s32.totalorder %s169, %s183
      %p185 = scmp.eq.s32.totalorder %s33, 0
      %p186 = por %p184, %p185
      %s188 = sadd.s32 %s187, 1
      %p191 = scmp.eq.s32.totalorder %s27, 1
      %p192 = scmp.ne.s32.totalorder %s187, %s189
      %p193 = scmp.eq.s32.totalorder %s27, 0
      %p194 = por %p192, %p193
      %p195 = scmp.ne.s32.totalorder %s187, %s189
      %p196 = scmp.eq.s32.totalorder %s32, 1
      %p197 = por %p195, %p196
      %p198 = scmp.ne.s32.totalorder %s189, %s190
      %p199 = scmp.eq.s32.totalorder %s32, 0
      %p200 = por %p198, %p199
      %p201 = scmp.ne.s32.totalorder %s189, %s190
      %p202 = scmp.eq.s32.totalorder %s33, 1
      %p203 = por %p201, %p202
      %p205 = scmp.ne.s32.totalorder %s190, %s204
      %p206 = scmp.eq.s32.totalorder %s33, 0
      %p207 = por %p205, %p206
      %s209 = sadd.s32 %s208, 1
      %p212 = scmp.eq.s32.totalorder %s27, 1
      %p213 = scmp.ne.s32.totalorder %s208, %s210
      %p214 = scmp.eq.s32.totalorder %s27, 0
      %p215 = por %p213, %p214
      %p216 = scmp.ne.s32.totalorder %s208, %s210
      %p217 = scmp.eq.s32.totalorder %s32, 1
      %p218 = por %p216, %p217
      %p219 = scmp.ne.s32.totalorder %s210, %s211
      %p220 = scmp.eq.s32.totalorder %s32, 0
      %p221 = por %p219, %p220
      %p222 = scmp.ne.s32.totalorder %s210, %s211
      %p223 = scmp.eq.s32.totalorder %s33, 1
      %p224 = por %p222, %p223
      %p226 = scmp.ne.s32.totalorder %s211, %s225
      %p227 = scmp.eq.s32.totalorder %s33, 0
      %p228 = por %p226, %p227
      %s230 = sadd.s32 %s229, 1
      %p233 = scmp.eq.s32.totalorder %s27, 1
      %p234 = scmp.ne.s32.totalorder %s229, %s231
      %p235 = scmp.eq.s32.totalorder %s27, 0
      %p236 = por %p234, %p235
      %p237 = scmp.ne.s32.totalorder %s229, %s231
      %p238 = scmp.eq.s32.totalorder %s32, 1
      %p239 = por %p237, %p238
      %p240 = scmp.ne.s32.totalorder %s231, %s232
      %p241 = scmp.eq.s32.totalorder %s32, 0
      %p242 = por %p240, %p241
      %p243 = scmp.ne.s32.totalorder %s231, %s232
      %p244 = scmp.eq.s32.totalorder %s33, 1
      %p245 = por %p243, %p244
      %p247 = scmp.ne.s32.totalorder %s232, %s246
      %p248 = scmp.eq.s32.totalorder %s33, 0
      %p249 = por %p247, %p248
      %s251 = sadd.s32 %s250, 1
      %p254 = scmp.eq.s32.totalorder %s27, 1
      %p255 = scmp.ne.s32.totalorder %s250, %s252
      %p256 = scmp.eq.s32.totalorder %s27, 0
      %p257 = por %p255, %p256
      %p258 = scmp.ne.s32.totalorder %s250, %s252
      %p259 = scmp.eq.s32.totalorder %s32, 1
      %p260 = por %p258, %p259
      %p261 = scmp.ne.s32.totalorder %s252, %s253
      %p262 = scmp.eq.s32.totalorder %s32, 0
      %p263 = por %p261, %p262
      %p264 = scmp.ne.s32.totalorder %s252, %s253
      %p265 = scmp.eq.s32.totalorder %s33, 1
      %p266 = por %p264, %p265
      %p268 = scmp.ne.s32.totalorder %s253, %s267
      %p269 = scmp.eq.s32.totalorder %s33, 0
      %p270 = por %p268, %p269
      %s272 = sadd.s32 %s271, 1
      %p275 = scmp.eq.s32.totalorder %s27, 1
      %p276 = scmp.ne.s32.totalorder %s271, %s273
      %p277 = scmp.eq.s32.totalorder %s27, 0
      %p278 = por %p276, %p277
      %p279 = scmp.ne.s32.totalorder %s271, %s273
      %p280 = scmp.eq.s32.totalorder %s32, 1
      %p281 = por %p279, %p280
      %p282 = scmp.ne.s32.totalorder %s273, %s274
      %p283 = scmp.eq.s32.totalorder %s32, 0
      %p284 = por %p282, %p283
      %p285 = scmp.ne.s32.totalorder %s273, %s274
      %p286 = scmp.eq.s32.totalorder %s33, 1
      %p287 = por %p285, %p286
      %p289 = scmp.ne.s32.totalorder %s274, %s288
      %p290 = scmp.eq.s32.totalorder %s33, 0
      %p291 = por %p289, %p290
      %s293 = sadd.s32 %s292, 1
      %p296 = scmp.eq.s32.totalorder %s27, 1
      %p297 = scmp.ne.s32.totalorder %s292, %s294
      %p298 = scmp.eq.s32.totalorder %s27, 0
      %p299 = por %p297, %p298
      %p300 = scmp.ne.s32.totalorder %s292, %s294
      %p301 = scmp.eq.s32.totalorder %s32, 1
      %p302 = por %p300, %p301
      %p303 = scmp.ne.s32.totalorder %s294, %s295
      %p304 = scmp.eq.s32.totalorder %s32, 0
      %p305 = por %p303, %p304
      %p306 = scmp.ne.s32.totalorder %s294, %s295
      %p307 = scmp.eq.s32.totalorder %s33, 1
      %p308 = por %p306, %p307
      %p310 = scmp.ne.s32.totalorder %s295, %s309
      %p311 = scmp.eq.s32.totalorder %s33, 0
      %p312 = por %p310, %p311
      %s313 = ssub.s32 %s27, %s34
      %p314 = scmp.eq.s32.totalorder %s313, 0
      %s316 = sadd.s32 %s315, 1
      %s317 = scalar_select %p314, %s315, %s316
      %p320 = pneg %p314
      %p321 = scmp.eq.s32.totalorder %s27, 1
      %p322 = por %p320, %p321
      %p323 = scmp.ne.s32.totalorder %s315, %s318
      %p324 = scmp.eq.s32.totalorder %s27, 0
      %p325 = por %p323, %p324
      %p326 = scmp.ne.s32.totalorder %s315, %s318
      %p327 = scmp.eq.s32.totalorder %s32, 1
      %p328 = por %p326, %p327
      %p329 = scmp.ne.s32.totalorder %s318, %s319
      %p330 = scmp.eq.s32.totalorder %s32, 0
      %p331 = por %p329, %p330
      %p332 = scmp.ne.s32.totalorder %s318, %s319
      %p333 = scmp.eq.s32.totalorder %s33, 1
      %p334 = por %p332, %p333
      %p336 = scmp.ne.s32.totalorder %s319, %s335
      %p337 = scmp.eq.s32.totalorder %s33, 0
      %p338 = por %p336, %p337
      %p339 = scmp.le.s32.totalorder 1, %s27
      %p340 = scmp.lt.s32.totalorder %s27, 3
      %p341 = pnand %p339, %p340
      %p342 = pneg %p341
      // Predicated region
      $region9: #{tpu_custom_call.1} parent=5 // pred_check
        _
      $region10: #{tpu_custom_call.1} parent=5 // pred_check_branch
        %344 = sbr.rel (%p341) target = $region12
      $region11: #{tpu_custom_call.1} parent=5 // pred_region
        %s345 = ssub.s32 %s27, 1
        // Predicated region
        $region13: #{tpu_custom_call.1} parent=11 // pred_check
          %p346 = pneg %p74
        $region14: #{tpu_custom_call.1} parent=11 // pred_check_branch
          %348 = sbr.rel (%p346) target = $region16
        $region15: #{tpu_custom_call.1} parent=11 // pred_region
          %s350 = ssub.s32 3072, 3072
          %351 = vsyncadd [#allocation7], %s350
          %s352 = sshll.u32 [#allocation6], 4
          %s353 = int_to_ptr.vmem [resolvable:$true] %s352
          %358 = dma.hbm_to_vmem [thread:$0]  %s1, 3072, %s353, [#allocation7], 192, 192, 12
        $region16: #{tpu_custom_call.1} parent=11 // pred_fallthru
          _
        // Predicated region
        $region17: #{tpu_custom_call.1} parent=11 // pred_check
          %p359 = pneg %p95
        $region18: #{tpu_custom_call.1} parent=11 // pred_check_branch
          %361 = sbr.rel (%p359) target = $region20
        $region19: #{tpu_custom_call.1} parent=11 // pred_region
          _
        $region20: #{tpu_custom_call.1} parent=11 // pred_fallthru
          _
        // Predicated region
        $region21: #{tpu_custom_call.1} parent=11 // pred_check
          %p362 = pneg %p116
        $region22: #{tpu_custom_call.1} parent=11 // pred_check_branch
          %364 = sbr.rel (%p362) target = $region24
        $region23: #{tpu_custom_call.1} parent=11 // pred_region
          %s366 = ssub.s32 1024, 1024
          %367 = vsyncadd [#allocation7], %s366
          %s368 = sshll.u32 [#allocation8], 4
          %s369 = int_to_ptr.vmem [resolvable:$true] %s368
          %374 = dma.hbm_to_vmem [thread:$0]  %s3, 1024, %s369, [#allocation7], 64, 64, 4
        $region24: #{tpu_custom_call.1} parent=11 // pred_fallthru
          _
        // Predicated region
        $region25: #{tpu_custom_call.1} parent=11 // pred_check
          %p375 = pneg %p137
        $region26: #{tpu_custom_call.1} parent=11 // pred_check_branch
          %377 = sbr.rel (%p375) target = $region28
        $region27: #{tpu_custom_call.1} parent=11 // pred_region
          _
        $region28: #{tpu_custom_call.1} parent=11 // pred_fallthru
          _
        // Predicated region
        $region29: #{tpu_custom_call.1} parent=11 // pred_check
          %p378 = pneg %p158
        $region30: #{tpu_custom_call.1} parent=11 // pred_check_branch
          %380 = sbr.rel (%p378) target = $region32
        $region31: #{tpu_custom_call.1} parent=11 // pred_region
          _
        $region32: #{tpu_custom_call.1} parent=11 // pred_fallthru
          _
        // Predicated region
        $region33: #{tpu_custom_call.1} parent=11 // pred_check
          %p381 = pneg %p179
        $region34: #{tpu_custom_call.1} parent=11 // pred_check_branch
          %383 = sbr.rel (%p381) target = $region36
        $region35: #{tpu_custom_call.1} parent=11 // pred_region
          _
        $region36: #{tpu_custom_call.1} parent=11 // pred_fallthru
          _
        // Predicated region
        $region37: #{tpu_custom_call.1} parent=11 // pred_check
          %p384 = pneg %p200
        $region38: #{tpu_custom_call.1} parent=11 // pred_check_branch
          %386 = sbr.rel (%p384) target = $region40
        $region39: #{tpu_custom_call.1} parent=11 // pred_region
          %s388 = ssub.s32 2048, 2048
          %389 = vsyncadd [#allocation10], %s388
          %s390 = sshll.u32 [#allocation9], 4
          %s391 = int_to_ptr.vmem [resolvable:$true] %s390
          %396 = dma.hbm_to_vmem [thread:$0]  %s7, 2048, %s391, [#allocation10], 128, 128, 8
        $region40: #{tpu_custom_call.1} parent=11 // pred_fallthru
          _
        // Predicated region
        $region41: #{tpu_custom_call.1} parent=11 // pred_check
          %p397 = pneg %p221
        $region42: #{tpu_custom_call.1} parent=11 // pred_check_branch
          %399 = sbr.rel (%p397) target = $region44
        $region43: #{tpu_custom_call.1} parent=11 // pred_region
          _
        $region44: #{tpu_custom_call.1} parent=11 // pred_fallthru
          _
        // Predicated region
        $region45: #{tpu_custom_call.1} parent=11 // pred_check
          %p400 = pneg %p242
        $region46: #{tpu_custom_call.1} parent=11 // pred_check_branch
          %402 = sbr.rel (%p400) target = $region48
        $region47: #{tpu_custom_call.1} parent=11 // pred_region
          %s404 = ssub.s32 2048, 2048
          %405 = vsyncadd [#allocation10], %s404
          %s406 = sshll.u32 [#allocation11], 4
          %s407 = int_to_ptr.vmem [resolvable:$true] %s406
          %412 = dma.hbm_to_vmem [thread:$0]  %s9, 2048, %s407, [#allocation10], 64, 64, 4
        $region48: #{tpu_custom_call.1} parent=11 // pred_fallthru
          _
        // Predicated region
        $region49: #{tpu_custom_call.1} parent=11 // pred_check
          %p413 = pneg %p263
        $region50: #{tpu_custom_call.1} parent=11 // pred_check_branch
          %415 = sbr.rel (%p413) target = $region52
        $region51: #{tpu_custom_call.1} parent=11 // pred_region
          _
        $region52: #{tpu_custom_call.1} parent=11 // pred_fallthru
          _
        // Predicated region
        $region53: #{tpu_custom_call.1} parent=11 // pred_check
          %p416 = pneg %p284
        $region54: #{tpu_custom_call.1} parent=11 // pred_check_branch
          %418 = sbr.rel (%p416) target = $region56
        $region55: #{tpu_custom_call.1} parent=11 // pred_region
          _
        $region56: #{tpu_custom_call.1} parent=11 // pred_fallthru
          _
        // Predicated region
        $region57: #{tpu_custom_call.1} parent=11 // pred_check
          %p419 = pneg %p305
        $region58: #{tpu_custom_call.1} parent=11 // pred_check_branch
          %421 = sbr.rel (%p419) target = $region60
        $region59: #{tpu_custom_call.1} parent=11 // pred_region
          _
        $region60: #{tpu_custom_call.1} parent=11 // pred_fallthru
          _
      $region12: #{tpu_custom_call.1} parent=5 // pred_fallthru
        _
      %p422 = scmp.lt.s32.totalorder %s27, 2
      // Predicated region
      $region61: #{tpu_custom_call.1} parent=5 // pred_check
        %p423 = pneg %p422
      $region62: #{tpu_custom_call.1} parent=5 // pred_check_branch
        %425 = sbr.rel (%p423) target = $region64
      $region63: #{tpu_custom_call.1} parent=5 // pred_region
        // Predicated region
        $region65: #{tpu_custom_call.1} parent=63 // pred_check
          %p426 = pneg %p47
        $region66: #{tpu_custom_call.1} parent=63 // pred_check_branch
          %428 = sbr.rel (%p426) target = $region68
        $region67: #{tpu_custom_call.1} parent=63 // pred_region
          %s429 = sand.u32 %s37, 1
          %s430 = scalar_lea.sflag [#allocation4], %s429
          %s431 = sand.u32 %s37, 1
          %s432 = smul.addr %s431, 128
          %s433 = scalar_lea.vmem [#allocation3], %s432
          %s434 = smul.u32 2, %s27
          %s436 = ssub.s32 2048, 2048
          %437 = vsyncadd %s430, %s436
          %s438 = smul.addr %s434, 8
          %s439 = smul.addr %s438, 128
          %s440 = scalar_lea.hbm %s0, %s439
          %s441 = sshll.u32 %s433, 4
          %s442 = int_to_ptr.vmem [resolvable:$true] %s441
          %447 = dma.hbm_to_vmem [thread:$0]  %s440, 2048, %s442, %s430, 128, 128, 8
        $region68: #{tpu_custom_call.1} parent=63 // pred_fallthru
          _
      $region64: #{tpu_custom_call.1} parent=5 // pred_fallthru
        _
      %p448 = scmp.le.s32.totalorder 1, %s27
      %p449 = scmp.lt.s32.totalorder %s27, 3
      %p450 = pnand %p448, %p449
      %p451 = pneg %p450
      // Predicated region
      $region69: #{tpu_custom_call.1} parent=5 // pred_check
        _
      $region70: #{tpu_custom_call.1} parent=5 // pred_check_branch
        %453 = sbr.rel (%p450) target = $region72
      $region71: #{tpu_custom_call.1} parent=5 // pred_region
        %s454 = ssub.s32 %s27, 1
        %s455 = sand.u32 %s40, 1
        %s456 = scalar_lea.sflag [#allocation4], %s455
        %s457 = sand.u32 %s40, 1
        %s458 = smul.addr %s457, 128
        %s459 = scalar_lea.vmem [#allocation3], %s458
        // Predicated region
        $region73: #{tpu_custom_call.1} parent=71 // pred_check
          %p460 = pneg %p53
        $region74: #{tpu_custom_call.1} parent=71 // pred_check_branch
          %462 = sbr.rel (%p460) target = $region76
        $region75: #{tpu_custom_call.1} parent=71 // pred_region
          %463 = dma.done %s456, 2048
        $region76: #{tpu_custom_call.1} parent=71 // pred_fallthru
          _
        // Predicated region
        $region77: #{tpu_custom_call.1} parent=71 // pred_check
          %p464 = pneg %p74
        $region78: #{tpu_custom_call.1} parent=71 // pred_check_branch
          %466 = sbr.rel (%p464) target = $region80
        $region79: #{tpu_custom_call.1} parent=71 // pred_region
          %467 = dma.done [#allocation7], 3072
        $region80: #{tpu_custom_call.1} parent=71 // pred_fallthru
          _
        // Predicated region
        $region81: #{tpu_custom_call.1} parent=71 // pred_check
          %p468 = pneg %p116
        $region82: #{tpu_custom_call.1} parent=71 // pred_check_branch
          %470 = sbr.rel (%p468) target = $region84
        $region83: #{tpu_custom_call.1} parent=71 // pred_region
          %471 = dma.done [#allocation7], 1024
        $region84: #{tpu_custom_call.1} parent=71 // pred_fallthru
          _
        // Predicated region
        $region85: #{tpu_custom_call.1} parent=71 // pred_check
          %p472 = pneg %p200
        $region86: #{tpu_custom_call.1} parent=71 // pred_check_branch
          %474 = sbr.rel (%p472) target = $region88
        $region87: #{tpu_custom_call.1} parent=71 // pred_region
          %475 = dma.done [#allocation10], 2048
        $region88: #{tpu_custom_call.1} parent=71 // pred_fallthru
          _
        // Predicated region
        $region89: #{tpu_custom_call.1} parent=71 // pred_check
          %p476 = pneg %p242
        $region90: #{tpu_custom_call.1} parent=71 // pred_check_branch
          %478 = sbr.rel (%p476) target = $region92
        $region91: #{tpu_custom_call.1} parent=71 // pred_region
          %479 = dma.done [#allocation10], 2048
        $region92: #{tpu_custom_call.1} parent=71 // pred_fallthru
          _
        %s480 = sand.u32 %s40, 1
        %s481 = scalar_lea.sflag [#allocation4], %s480
        %s482 = sand.u32 %s40, 1
        %s483 = smul.addr %s482, 128
        %s484 = scalar_lea.vmem [#allocation3], %s483
        %p485 = pneg %p53
        %p486 = pneg %p50
        %p487 = pneg %p74
        %p488 = pneg %p71
        %p489 = pneg %p95
        %p490 = pneg %p92
        %p491 = pneg %p116
        %p492 = pneg %p113
        %p493 = pneg %p137
        %p494 = pneg %p134
        %p495 = pneg %p158
        %p496 = pneg %p155
        %p497 = pneg %p179
        %p498 = pneg %p176
        %p499 = pneg %p200
        %p500 = pneg %p197
        %p501 = pneg %p221
        %p502 = pneg %p218
        %p503 = pneg %p242
        %p504 = pneg %p239
        %p505 = pneg %p263
        %p506 = pneg %p260
        %p507 = pneg %p284
        %p508 = pneg %p281
        %p509 = pneg %p305
        %p510 = pneg %p302
        %p511 = pneg %p331
        %p512 = pneg %p328
        %s513 = sand.u32 %s318, 1
        %s514 = scalar_lea.sflag [#allocation5], %s513
        %s515 = sand.u32 %s318, 1
        %s516 = smul.addr %s515, 128
        %s517 = scalar_lea.vmem [#allocation12], %s516
        %s518 = smul.u32 2, %s32
        %s519 = smul.u32 2, %s32
        %v521 = vld [vmem:[%s459] sm:$0xff]
        %v522 = vld [vmem:[%s459 + $0x8] sm:$0xff]
        %v523 = vld [vmem:[%s459 + $0x10] sm:$0xff]
        %v524 = vld [vmem:[%s459 + $0x18] sm:$0xff]
        %v525 = vld [vmem:[%s459 + $0x20] sm:$0xff]
        %v526 = vld [vmem:[%s459 + $0x28] sm:$0xff]
        %v527 = vld [vmem:[%s459 + $0x30] sm:$0xff]
        %v528 = vld [vmem:[%s459 + $0x38] sm:$0xff]
        %v529 = vld [vmem:[%s459 + $0x40] sm:$0xff]
        %v530 = vld [vmem:[%s459 + $0x48] sm:$0xff]
        %v531 = vld [vmem:[%s459 + $0x50] sm:$0xff]
        %v532 = vld [vmem:[%s459 + $0x58] sm:$0xff]
        %v533 = vld [vmem:[%s459 + $0x60] sm:$0xff]
        %v534 = vld [vmem:[%s459 + $0x68] sm:$0xff]
        %v535 = vld [vmem:[%s459 + $0x70] sm:$0xff]
        %v536 = vld [vmem:[%s459 + $0x78] sm:$0xff]
        %v537 = vpack.c.bf16 %v522, %v521
        %v538 = vpack.c.bf16 %v524, %v523
        %v539 = vpack.c.bf16 %v526, %v525
        %v540 = vpack.c.bf16 %v528, %v527
        %v541 = vpack.c.bf16 %v530, %v529
        %v542 = vpack.c.bf16 %v532, %v531
        %v543 = vpack.c.bf16 %v534, %v533
        %v544 = vpack.c.bf16 %v536, %v535
        %v545 = vld [vmem:[#allocation6] sm:$0xff]
        %v546 = vld [vmem:[#allocation6 + $0x8] sm:$0xf]
        %v547 = vld [vmem:[#allocation6 + $0xc] sm:$0xff]
        %v548 = vld [vmem:[#allocation6 + $0x14] sm:$0xf]
        %v549 = vld [vmem:[#allocation6 + $0x18] sm:$0xff]
        %v550 = vld [vmem:[#allocation6 + $0x20] sm:$0xf]
        %v551 = vld [vmem:[#allocation6 + $0x24] sm:$0xff]
        %v552 = vld [vmem:[#allocation6 + $0x2c] sm:$0xf]
        %v553 = vld [vmem:[#allocation6 + $0x30] sm:$0xff]
        %v554 = vld [vmem:[#allocation6 + $0x38] sm:$0xf]
        %v555 = vld [vmem:[#allocation6 + $0x3c] sm:$0xff]
        %v556 = vld [vmem:[#allocation6 + $0x44] sm:$0xf]
        %v557 = vld [vmem:[#allocation6 + $0x48] sm:$0xff]
        %v558 = vld [vmem:[#allocation6 + $0x50] sm:$0xf]
        %v559 = vld [vmem:[#allocation6 + $0x54] sm:$0xff]
        %v560 = vld [vmem:[#allocation6 + $0x5c] sm:$0xf]
        %v561 = vld [vmem:[#allocation6 + $0x60] sm:$0xff]
        %v562 = vld [vmem:[#allocation6 + $0x68] sm:$0xf]
        %v563 = vld [vmem:[#allocation6 + $0x6c] sm:$0xff]
        %v564 = vld [vmem:[#allocation6 + $0x74] sm:$0xf]
        %v565 = vld [vmem:[#allocation6 + $0x78] sm:$0xff]
        %v566 = vld [vmem:[#allocation6 + $0x80] sm:$0xf]
        %v567 = vld [vmem:[#allocation6 + $0x84] sm:$0xff]
        %v568 = vld [vmem:[#allocation6 + $0x8c] sm:$0xf]
        %v569 = vld [vmem:[#allocation6 + $0x90] sm:$0xff]
        %v570 = vld [vmem:[#allocation6 + $0x98] sm:$0xf]
        %v571 = vld [vmem:[#allocation6 + $0x9c] sm:$0xff]
        %v572 = vld [vmem:[#allocation6 + $0xa4] sm:$0xf]
        %v573 = vld [vmem:[#allocation6 + $0xa8] sm:$0xff]
        %v574 = vld [vmem:[#allocation6 + $0xb0] sm:$0xf]
        %v575 = vld [vmem:[#allocation6 + $0xb4] sm:$0xff]
        %v576 = vld [vmem:[#allocation6 + $0xbc] sm:$0xf]
        %v577 = vld [vmem:[%s2] sm:$0x7]
        %v579 = vlaneseq
        %v580 = vshrl.u32 %v579, 7
        %v581 = vsub.s32 0, %v580
        %v582 = vrot.slane %v577, %v581
        %v583 = vlaneseq
        %v584 = vshrl.u32 %v583, 7
        %v585 = vsub.s32 1, %v584
        %v586 = vrot.slane %v577, %v585
        %v587 = vlaneseq
        %v588 = vshrl.u32 %v587, 7
        %v589 = vsub.s32 2, %v588
        %v590 = vrot.slane %v577, %v589
        %v626 = vunpack.c.l.b16 %v545
        %v627 = vunpack.c.h.b16 %v545
        %v628 = vunpack.c.l.b16 %v546
        %v629 = vunpack.c.l.b16 %v547
        %v630 = vunpack.c.h.b16 %v547
        %v631 = vunpack.c.l.b16 %v548
        %v632 = vunpack.c.l.b16 %v549
        %v633 = vunpack.c.h.b16 %v549
        %v634 = vunpack.c.l.b16 %v550
        %v635 = vunpack.c.l.b16 %v551
        %v636 = vunpack.c.h.b16 %v551
        %v637 = vunpack.c.l.b16 %v552
        %v638 = vunpack.c.l.b16 %v553
        %v639 = vunpack.c.h.b16 %v553
        %v640 = vunpack.c.l.b16 %v554
        %v641 = vunpack.c.l.b16 %v555
        %v642 = vunpack.c.h.b16 %v555
        %v643 = vunpack.c.l.b16 %v556
        %v644 = vunpack.c.l.b16 %v557
        %v645 = vunpack.c.h.b16 %v557
        %v646 = vunpack.c.l.b16 %v558
        %v647 = vunpack.c.l.b16 %v559
        %v648 = vunpack.c.h.b16 %v559
        %v649 = vunpack.c.l.b16 %v560
        %v650 = vunpack.c.l.b16 %v561
        %v651 = vunpack.c.h.b16 %v561
        %v652 = vunpack.c.l.b16 %v562
        %v653 = vunpack.c.l.b16 %v563
        %v654 = vunpack.c.h.b16 %v563
        %v655 = vunpack.c.l.b16 %v564
        %v656 = vunpack.c.l.b16 %v565
        %v657 = vunpack.c.h.b16 %v565
        %v658 = vunpack.c.l.b16 %v566
        %v659 = vunpack.c.l.b16 %v567
        %v660 = vunpack.c.h.b16 %v567
        %v661 = vunpack.c.l.b16 %v568
        %v662 = vunpack.c.l.b16 %v569
        %v663 = vunpack.c.h.b16 %v569
        %v664 = vunpack.c.l.b16 %v570
        %v665 = vunpack.c.l.b16 %v571
        %v666 = vunpack.c.h.b16 %v571
        %v667 = vunpack.c.l.b16 %v572
        %v668 = vunpack.c.l.b16 %v573
        %v669 = vunpack.c.h.b16 %v573
        %v670 = vunpack.c.l.b16 %v574
        %v671 = vunpack.c.l.b16 %v575
        %v672 = vunpack.c.h.b16 %v575
        %v673 = vunpack.c.l.b16 %v576
        %v674 = vpack.c.b16 %v629, %v626
        %v675 = vpack.c.b16 %v630, %v627
        %v676 = vpack.c.b16 %v631, %v628
        %v677 = vpack.c.b16 %v635, %v632
        %v678 = vpack.c.b16 %v636, %v633
        %v679 = vpack.c.b16 %v637, %v634
        %v680 = vpack.c.b16 %v641, %v638
        %v681 = vpack.c.b16 %v642, %v639
        %v682 = vpack.c.b16 %v643, %v640
        %v683 = vpack.c.b16 %v647, %v644
        %v684 = vpack.c.b16 %v648, %v645
        %v685 = vpack.c.b16 %v649, %v646
        %v686 = vpack.c.b16 %v653, %v650
        %v687 = vpack.c.b16 %v654, %v651
        %v688 = vpack.c.b16 %v655, %v652
        %v689 = vpack.c.b16 %v659, %v656
        %v690 = vpack.c.b16 %v660, %v657
        %v691 = vpack.c.b16 %v661, %v658
        %v692 = vpack.c.b16 %v665, %v662
        %v693 = vpack.c.b16 %v666, %v663
        %v694 = vpack.c.b16 %v667, %v664
        %v695 = vpack.c.b16 %v671, %v668
        %v696 = vpack.c.b16 %v672, %v669
        %v697 = vpack.c.b16 %v673, %v670
        %722 = vmatprep.subr.bf16.mxu0 %v675
        %723 = vmatpush1.bf16.msra.mxu0 %v674
        %724 = vmatprep.subr.bf16.mxu0 %v678
        %725 = vmatpush1.bf16.msra.mxu0 %v677
        %726 = vmatprep.subr.bf16.mxu0 %v681
        %727 = vmatpush1.bf16.msra.mxu0 %v680
        %728 = vmatprep.subr.bf16.mxu0 %v684
        %729 = vmatpush1.bf16.msra.mxu0 %v683
        %730 = vmatprep.subr.bf16.mxu0 %v687
        %731 = vmatpush1.bf16.msra.mxu0 %v686
        %732 = vmatprep.subr.bf16.mxu0 %v690
        %733 = vmatpush1.bf16.msra.mxu0 %v689
        %734 = vmatprep.subr.bf16.mxu0 %v693
        %735 = vmatpush1.bf16.msra.mxu0 %v692
        %736 = vmatprep.subr.bf16.mxu0 %v696
        %737 = vmatpush1.bf16.msra.mxu0 %v695
        %738 = vmatprep.subr.bf16.mxu0 0
        %739 = vmatpush1.bf16.msra.mxu0 0
        %740 = vmatprep.subr.bf16.mxu0 0
        %741 = vmatpush1.bf16.msra.mxu0 0
        %742 = vmatprep.subr.bf16.mxu0 0
        %743 = vmatpush1.bf16.msra.mxu0 0
        %744 = vmatprep.subr.bf16.mxu0 0
        %745 = vmatpush1.bf16.msra.mxu0 0
        %746 = vmatprep.subr.bf16.mxu0 0
        %747 = vmatpush1.bf16.msra.mxu0 0
        %748 = vmatprep.subr.bf16.mxu0 0
        %749 = vmatpush1.bf16.msra.mxu0 0
        %750 = vmatprep.subr.bf16.mxu0 0
        %751 = vmatpush1.bf16.msra.mxu0 0
        %752 = vmatprep.subr.bf16.mxu0 0
        %753 = vmatpush1.bf16.msra.mxu0 0
        %754 = vmatprep.mubr.bf16.mxu0 0
        %755 = vmatmul.mubr.bf16.gmra.mrb[0].mxu0 %v537
        %v756 = vpop.f32.mrb[0].mxu0
        %v757 = vadd.f32 %v582, %v756
        %v758 = vpop.f32.mrb[0].mxu0
        %v759 = vadd.f32 %v586, %v758
        %v760 = vpop.f32.mrb[0].mxu0
        %v761 = vadd.f32 %v582, %v760
        %v762 = vpop.f32.mrb[0].mxu0
        %v763 = vadd.f32 %v586, %v762
        %764 = vmatprep.mubr.bf16.mxu0 0
        %765 = vmatmul.mubr.bf16.gmra.mrb[0].mxu0 %v538
        %v766 = vpop.f32.mrb[0].mxu0
        %v767 = vadd.f32 %v582, %v766
        %v768 = vpop.f32.mrb[0].mxu0
        %v769 = vadd.f32 %v586, %v768
        %v770 = vpop.f32.mrb[0].mxu0
        %v771 = vadd.f32 %v582, %v770
        %v772 = vpop.f32.mrb[0].mxu0
        %v773 = vadd.f32 %v586, %v772
        %774 = vmatprep.mubr.bf16.mxu0 0
        %775 = vmatmul.mubr.bf16.gmra.mrb[0].mxu0 %v539
        %v776 = vpop.f32.mrb[0].mxu0
        %v777 = vadd.f32 %v582, %v776
        %v778 = vpop.f32.mrb[0].mxu0
        %v779 = vadd.f32 %v586, %v778
        %v780 = vpop.f32.mrb[0].mxu0
        %v781 = vadd.f32 %v582, %v780
        %v782 = vpop.f32.mrb[0].mxu0
        %v783 = vadd.f32 %v586, %v782
        %784 = vmatprep.mubr.bf16.mxu0 0
        %785 = vmatmul.mubr.bf16.gmra.mrb[0].mxu0 %v540
        %v786 = vpop.f32.mrb[0].mxu0
        %v787 = vadd.f32 %v582, %v786
        %v788 = vpop.f32.mrb[0].mxu0
        %v789 = vadd.f32 %v586, %v788
        %v790 = vpop.f32.mrb[0].mxu0
        %v791 = vadd.f32 %v582, %v790
        %v792 = vpop.f32.mrb[0].mxu0
        %v793 = vadd.f32 %v586, %v792
        %794 = vmatprep.mubr.bf16.mxu0 0
        %795 = vmatmul.mubr.bf16.gmra.mrb[0].mxu0 %v541
        %v796 = vpop.f32.mrb[0].mxu0
        %v797 = vadd.f32 %v582, %v796
        %v798 = vpop.f32.mrb[0].mxu0
        %v799 = vadd.f32 %v586, %v798
        %v800 = vpop.f32.mrb[0].mxu0
        %v801 = vadd.f32 %v582, %v800
        %v802 = vpop.f32.mrb[0].mxu0
        %v803 = vadd.f32 %v586, %v802
        %804 = vmatprep.mubr.bf16.mxu0 0
        %805 = vmatmul.mubr.bf16.gmra.mrb[0].mxu0 %v542
        %v806 = vpop.f32.mrb[0].mxu0
        %v807 = vadd.f32 %v582, %v806
        %v808 = vpop.f32.mrb[0].mxu0
        %v809 = vadd.f32 %v586, %v808
        %v810 = vpop.f32.mrb[0].mxu0
        %v811 = vadd.f32 %v582, %v810
        %v812 = vpop.f32.mrb[0].mxu0
        %v813 = vadd.f32 %v586, %v812
        %814 = vmatprep.mubr.bf16.mxu0 0
        %815 = vmatmul.mubr.bf16.gmra.mrb[0].mxu0 %v543
        %v816 = vpop.f32.mrb[0].mxu0
        %v817 = vadd.f32 %v582, %v816
        %v818 = vpop.f32.mrb[0].mxu0
        %v819 = vadd.f32 %v586, %v818
        %v820 = vpop.f32.mrb[0].mxu0
        %v821 = vadd.f32 %v582, %v820
        %v822 = vpop.f32.mrb[0].mxu0
        %v823 = vadd.f32 %v586, %v822
        %824 = vmatprep.mubr.bf16.mxu0 0
        %825 = vmatmul.mubr.bf16.gmra.mrb[0].mxu0 %v544
        %v826 = vpop.f32.mrb[0].mxu0
        %v827 = vadd.f32 %v582, %v826
        %v828 = vpop.f32.mrb[0].mxu0
        %v829 = vadd.f32 %v586, %v828
        %v830 = vpop.f32.mrb[0].mxu0
        %v831 = vadd.f32 %v582, %v830
        %v832 = vpop.f32.mrb[0].mxu0
        %v833 = vadd.f32 %v586, %v832
        %834 = vdwg.mxu0
        %835 = vmatprep.subr.bf16.mxu0 0
        %836 = vmatpush1.bf16.msra.mxu0 %v676
        %837 = vmatprep.subr.bf16.mxu0 0
        %838 = vmatpush1.bf16.msra.mxu0 %v679
        %839 = vmatprep.subr.bf16.mxu0 0
        %840 = vmatpush1.bf16.msra.mxu0 %v682
        %841 = vmatprep.subr.bf16.mxu0 0
        %842 = vmatpush1.bf16.msra.mxu0 %v685
        %843 = vmatprep.subr.bf16.mxu0 0
        %844 = vmatpush1.bf16.msra.mxu0 %v688
        %845 = vmatprep.subr.bf16.mxu0 0
        %846 = vmatpush1.bf16.msra.mxu0 %v691
        %847 = vmatprep.subr.bf16.mxu0 0
        %848 = vmatpush1.bf16.msra.mxu0 %v694
        %849 = vmatprep.subr.bf16.mxu0 0
        %850 = vmatpush1.bf16.msra.mxu0 %v697
        %851 = vmatprep.subr.bf16.mxu0 0
        %852 = vmatpush1.bf16.msra.mxu0 0
        %853 = vmatprep.subr.bf16.mxu0 0
        %854 = vmatpush1.bf16.msra.mxu0 0
        %855 = vmatprep.subr.bf16.mxu0 0
        %856 = vmatpush1.bf16.msra.mxu0 0
        %857 = vmatprep.subr.bf16.mxu0 0
        %858 = vmatpush1.bf16.msra.mxu0 0
        %859 = vmatprep.subr.bf16.mxu0 0
        %860 = vmatpush1.bf16.msra.mxu0 0
        %861 = vmatprep.subr.bf16.mxu0 0
        %862 = vmatpush1.bf16.msra.mxu0 0
        %863 = vmatprep.subr.bf16.mxu0 0
        %864 = vmatpush1.bf16.msra.mxu0 0
        %865 = vmatprep.subr.bf16.mxu0 0
        %866 = vmatpush1.bf16.msra.mxu0 0
        %867 = vmatprep.mubr.bf16.mxu0 0
        %868 = vmatmul.mubr.bf16.gmra.mrb[0].mxu0 %v537
        %v869 = vpop.f32.mrb[0].mxu0
        %v870 = vadd.f32 %v590, %v869
        %v871 = vpop.f32.mrb[0].mxu0
        %v872 = vpop.f32.mrb[0].mxu0
        %v873 = vadd.f32 %v590, %v872
        %v874 = vpop.f32.mrb[0].mxu0
        %875 = vmatprep.mubr.bf16.mxu0 0
        %876 = vmatmul.mubr.bf16.gmra.mrb[0].mxu0 %v538
        %v877 = vpop.f32.mrb[0].mxu0
        %v878 = vadd.f32 %v590, %v877
        %v879 = vpop.f32.mrb[0].mxu0
        %v880 = vpop.f32.mrb[0].mxu0
        %v881 = vadd.f32 %v590, %v880
        %v882 = vpop.f32.mrb[0].mxu0
        %883 = vmatprep.mubr.bf16.mxu0 0
        %884 = vmatmul.mubr.bf16.gmra.mrb[0].mxu0 %v539
        %v885 = vpop.f32.mrb[0].mxu0
        %v886 = vadd.f32 %v590, %v885
        %v887 = vpop.f32.mrb[0].mxu0
        %v888 = vpop.f32.mrb[0].mxu0
        %v889 = vadd.f32 %v590, %v888
        %v890 = vpop.f32.mrb[0].mxu0
        %891 = vmatprep.mubr.bf16.mxu0 0
        %892 = vmatmul.mubr.bf16.gmra.mrb[0].mxu0 %v540
        %v893 = vpop.f32.mrb[0].mxu0
        %v894 = vadd.f32 %v590, %v893
        %v895 = vpop.f32.mrb[0].mxu0
        %v896 = vpop.f32.mrb[0].mxu0
        %v897 = vadd.f32 %v590, %v896
        %v898 = vpop.f32.mrb[0].mxu0
        %899 = vmatprep.mubr.bf16.mxu0 0
        %900 = vmatmul.mubr.bf16.gmra.mrb[0].mxu0 %v541
        %v901 = vpop.f32.mrb[0].mxu0
        %v902 = vadd.f32 %v590, %v901
        %v903 = vpop.f32.mrb[0].mxu0
        %v904 = vpop.f32.mrb[0].mxu0
        %v905 = vadd.f32 %v590, %v904
        %v906 = vpop.f32.mrb[0].mxu0
        %907 = vmatprep.mubr.bf16.mxu0 0
        %908 = vmatmul.mubr.bf16.gmra.mrb[0].mxu0 %v542
        %v909 = vpop.f32.mrb[0].mxu0
        %v910 = vadd.f32 %v590, %v909
        %v911 = vpop.f32.mrb[0].mxu0
        %v912 = vpop.f32.mrb[0].mxu0
        %v913 = vadd.f32 %v590, %v912
        %v914 = vpop.f32.mrb[0].mxu0
        %915 = vmatprep.mubr.bf16.mxu0 0
        %916 = vmatmul.mubr.bf16.gmra.mrb[0].mxu0 %v543
        %v917 = vpop.f32.mrb[0].mxu0
        %v918 = vadd.f32 %v590, %v917
        %v919 = vpop.f32.mrb[0].mxu0
        %v920 = vpop.f32.mrb[0].mxu0
        %v921 = vadd.f32 %v590, %v920
        %v922 = vpop.f32.mrb[0].mxu0
        %923 = vmatprep.mubr.bf16.mxu0 0
        %924 = vmatmul.mubr.bf16.gmra.mrb[0].mxu0 %v544
        %v925 = vpop.f32.mrb[0].mxu0
        %v926 = vadd.f32 %v590, %v925
        %v927 = vpop.f32.mrb[0].mxu0
        %v928 = vpop.f32.mrb[0].mxu0
        %v929 = vadd.f32 %v590, %v928
        %v930 = vpop.f32.mrb[0].mxu0
        %931 = vdwg.mxu0
        %v932 = vpack.c.bf16 %v761, %v757
        %v933 = vpack.c.bf16 %v763, %v759
        %v934 = vpack.c.bf16 %v873, %v870
        %v935 = vpack.c.bf16 %v771, %v767
        %v936 = vpack.c.bf16 %v773, %v769
        %v937 = vpack.c.bf16 %v881, %v878
        %v938 = vpack.c.bf16 %v781, %v777
        %v939 = vpack.c.bf16 %v783, %v779
        %v940 = vpack.c.bf16 %v889, %v886
        %v941 = vpack.c.bf16 %v791, %v787
        %v942 = vpack.c.bf16 %v793, %v789
        %v943 = vpack.c.bf16 %v897, %v894
        %v944 = vpack.c.bf16 %v801, %v797
        %v945 = vpack.c.bf16 %v803, %v799
        %v946 = vpack.c.bf16 %v905, %v902
        %v947 = vpack.c.bf16 %v811, %v807
        %v948 = vpack.c.bf16 %v813, %v809
        %v949 = vpack.c.bf16 %v913, %v910
        %v950 = vpack.c.bf16 %v821, %v817
        %v951 = vpack.c.bf16 %v823, %v819
        %v952 = vpack.c.bf16 %v921, %v918
        %v953 = vpack.c.bf16 %v831, %v827
        %v954 = vpack.c.bf16 %v833, %v829
        %v955 = vpack.c.bf16 %v929, %v926
        %vm956 = vcmask 261120
        %v958 = vsel %vm956, %v932, 0
        %v961 = vsel %vm956, %v935, 0
        %v964 = vsel %vm956, %v938, 0
        %v967 = vsel %vm956, %v941, 0
        %v970 = vsel %vm956, %v933, 0
        %v973 = vsel %vm956, %v936, 0
        %v976 = vsel %vm956, %v939, 0
        %v979 = vsel %vm956, %v942, 0
        %981 = vmatprep.subr.bf16.mxu0 0
        %982 = vmatpush1.bf16.xpose.msra.mxu0 %v970
        %983 = vmatprep.subr.bf16.mxu0 0
        %984 = vmatpush1.bf16.xpose.msra.mxu0 %v973
        %985 = vmatprep.subr.bf16.mxu0 0
        %986 = vmatpush1.bf16.xpose.msra.mxu0 %v976
        %987 = vmatprep.subr.bf16.mxu0 0
        %988 = vmatpush1.bf16.xpose.msra.mxu0 %v979
        %989 = vmatprep.subr.bf16.mxu0 0
        %990 = vmatpush1.bf16.xpose.msra.mxu0 0
        %991 = vmatprep.subr.bf16.mxu0 0
        %992 = vmatpush1.bf16.xpose.msra.mxu0 0
        %993 = vmatprep.subr.bf16.mxu0 0
        %994 = vmatpush1.bf16.xpose.msra.mxu0 0
        %995 = vmatprep.subr.bf16.mxu0 0
        %996 = vmatpush1.bf16.xpose.msra.mxu0 0
        %997 = vmatprep.subr.bf16.mxu0 0
        %998 = vmatpush1.bf16.xpose.msra.mxu0 0
        %999 = vmatprep.subr.bf16.mxu0 0
        %1000 = vmatpush1.bf16.xpose.msra.mxu0 0
        %1001 = vmatprep.subr.bf16.mxu0 0
        %1002 = vmatpush1.bf16.xpose.msra.mxu0 0
        %1003 = vmatprep.subr.bf16.mxu0 0
        %1004 = vmatpush1.bf16.xpose.msra.mxu0 0
        %1005 = vmatprep.subr.bf16.mxu0 0
        %1006 = vmatpush1.bf16.xpose.msra.mxu0 0
        %1007 = vmatprep.subr.bf16.mxu0 0
        %1008 = vmatpush1.bf16.xpose.msra.mxu0 0
        %1009 = vmatprep.subr.bf16.mxu0 0
        %1010 = vmatpush1.bf16.xpose.msra.mxu0 0
        %1011 = vmatprep.subr.bf16.mxu0 0
        %1012 = vmatpush1.bf16.xpose.msra.mxu0 0
        %1013 = vmatprep.mubr.bf16.mxu0 0
        %1014 = vmatmul.mubr.bf16.gmra.mrb[0].mxu0 %v958
        %v1015 = vpop.f32.mrb[0].mxu0
        %v1016 = vadd.f32 0.0, %v1015
        %v1017 = vpop.f32.mrb[0].mxu0
        %v1018 = vpop.f32.mrb[0].mxu0
        %v1019 = vadd.f32 0.0, %v1018
        %v1020 = vpop.f32.mrb[0].mxu0
        %1021 = vmatprep.mubr.bf16.mxu0 0
        %1022 = vmatmul.mubr.bf16.gmra.mrb[0].mxu0 %v961
        %v1023 = vpop.f32.mrb[0].mxu0
        %v1024 = vadd.f32 0.0, %v1023
        %v1025 = vpop.f32.mrb[0].mxu0
        %v1026 = vpop.f32.mrb[0].mxu0
        %v1027 = vadd.f32 0.0, %v1026
        %v1028 = vpop.f32.mrb[0].mxu0
        %1029 = vmatprep.mubr.bf16.mxu0 0
        %1030 = vmatmul.mubr.bf16.gmra.mrb[0].mxu0 %v964
        %v1031 = vpop.f32.mrb[0].mxu0
        %v1032 = vadd.f32 0.0, %v1031
        %v1033 = vpop.f32.mrb[0].mxu0
        %v1034 = vpop.f32.mrb[0].mxu0
        %v1035 = vadd.f32 0.0, %v1034
        %v1036 = vpop.f32.mrb[0].mxu0
        %1037 = vmatprep.mubr.bf16.mxu0 0
        %1038 = vmatmul.mubr.bf16.gmra.mrb[0].mxu0 %v967
        %v1039 = vpop.f32.mrb[0].mxu0
        %v1040 = vadd.f32 0.0, %v1039
        %v1041 = vpop.f32.mrb[0].mxu0
        %v1042 = vpop.f32.mrb[0].mxu0
        %v1043 = vadd.f32 0.0, %v1042
        %v1044 = vpop.f32.mrb[0].mxu0
        %1045 = vdwg.mxu0
        %v1047 = vsel %vm956, %v944, 0
        %v1050 = vsel %vm956, %v947, 0
        %v1053 = vsel %vm956, %v950, 0
        %v1056 = vsel %vm956, %v953, 0
        %v1059 = vsel %vm956, %v945, 0
        %v1062 = vsel %vm956, %v948, 0
        %v1065 = vsel %vm956, %v951, 0
        %v1068 = vsel %vm956, %v954, 0
        %1070 = vmatprep.subr.bf16.mxu0 0
        %1071 = vmatpush1.bf16.xpose.msra.mxu0 %v1059
        %1072 = vmatprep.subr.bf16.mxu0 0
        %1073 = vmatpush1.bf16.xpose.msra.mxu0 %v1062
        %1074 = vmatprep.subr.bf16.mxu0 0
        %1075 = vmatpush1.bf16.xpose.msra.mxu0 %v1065
        %1076 = vmatprep.subr.bf16.mxu0 0
        %1077 = vmatpush1.bf16.xpose.msra.mxu0 %v1068
        %1078 = vmatprep.subr.bf16.mxu0 0
        %1079 = vmatpush1.bf16.xpose.msra.mxu0 0
        %1080 = vmatprep.subr.bf16.mxu0 0
        %1081 = vmatpush1.bf16.xpose.msra.mxu0 0
        %1082 = vmatprep.subr.bf16.mxu0 0
        %1083 = vmatpush1.bf16.xpose.msra.mxu0 0
        %1084 = vmatprep.subr.bf16.mxu0 0
        %1085 = vmatpush1.bf16.xpose.msra.mxu0 0
        %1086 = vmatprep.subr.bf16.mxu0 0
        %1087 = vmatpush1.bf16.xpose.msra.mxu0 0
        %1088 = vmatprep.subr.bf16.mxu0 0
        %1089 = vmatpush1.bf16.xpose.msra.mxu0 0
        %1090 = vmatprep.subr.bf16.mxu0 0
        %1091 = vmatpush1.bf16.xpose.msra.mxu0 0
        %1092 = vmatprep.subr.bf16.mxu0 0
        %1093 = vmatpush1.bf16.xpose.msra.mxu0 0
        %1094 = vmatprep.subr.bf16.mxu0 0
        %1095 = vmatpush1.bf16.xpose.msra.mxu0 0
        %1096 = vmatprep.subr.bf16.mxu0 0
        %1097 = vmatpush1.bf16.xpose.msra.mxu0 0
        %1098 = vmatprep.subr.bf16.mxu0 0
        %1099 = vmatpush1.bf16.xpose.msra.mxu0 0
        %1100 = vmatprep.subr.bf16.mxu0 0
        %1101 = vmatpush1.bf16.xpose.msra.mxu0 0
        %1102 = vmatprep.mubr.bf16.mxu0 0
        %1103 = vmatmul.mubr.bf16.gmra.mrb[0].mxu0 %v1047
        %v1104 = vpop.f32.mrb[0].mxu0
        %v1105 = vadd.f32 0.0, %v1104
        %v1106 = vpop.f32.mrb[0].mxu0
        %v1107 = vpop.f32.mrb[0].mxu0
        %v1108 = vadd.f32 0.0, %v1107
        %v1109 = vpop.f32.mrb[0].mxu0
        %1110 = vmatprep.mubr.bf16.mxu0 0
        %1111 = vmatmul.mubr.bf16.gmra.mrb[0].mxu0 %v1050
        %v1112 = vpop.f32.mrb[0].mxu0
        %v1113 = vadd.f32 0.0, %v1112
        %v1114 = vpop.f32.mrb[0].mxu0
        %v1115 = vpop.f32.mrb[0].mxu0
        %v1116 = vadd.f32 0.0, %v1115
        %v1117 = vpop.f32.mrb[0].mxu0
        %1118 = vmatprep.mubr.bf16.mxu0 0
        %1119 = vmatmul.mubr.bf16.gmra.mrb[0].mxu0 %v1053
        %v1120 = vpop.f32.mrb[0].mxu0
        %v1121 = vadd.f32 0.0, %v1120
        %v1122 = vpop.f32.mrb[0].mxu0
        %v1123 = vpop.f32.mrb[0].mxu0
        %v1124 = vadd.f32 0.0, %v1123
        %v1125 = vpop.f32.mrb[0].mxu0
        %1126 = vmatprep.mubr.bf16.mxu0 0
        %1127 = vmatmul.mubr.bf16.gmra.mrb[0].mxu0 %v1056
        %v1128 = vpop.f32.mrb[0].mxu0
        %v1129 = vadd.f32 0.0, %v1128
        %v1130 = vpop.f32.mrb[0].mxu0
        %v1131 = vpop.f32.mrb[0].mxu0
        %v1132 = vadd.f32 0.0, %v1131
        %v1133 = vpop.f32.mrb[0].mxu0
        %1134 = vdwg.mxu0
        %vm1135 = vcmask 523264
        %v1136 = vsel %vm1135, %v1016, -inf
        %1137 = vmax.xlane.f32.xlu0 %v1136
        %v1138 = vpop.xlane.xlu0 %1137
        %v1139 = vsel %vm1135, %v1019, -inf
        %1140 = vmax.xlane.f32.xlu0 %v1139
        %v1141 = vpop.xlane.xlu0 %1140
        %v1142 = vsel %vm1135, %v1024, -inf
        %1143 = vmax.xlane.f32.xlu0 %v1142
        %v1144 = vpop.xlane.xlu0 %1143
        %v1145 = vsel %vm1135, %v1027, -inf
        %1146 = vmax.xlane.f32.xlu0 %v1145
        %v1147 = vpop.xlane.xlu0 %1146
        %v1148 = vsel %vm1135, %v1032, -inf
        %1149 = vmax.xlane.f32.xlu0 %v1148
        %v1150 = vpop.xlane.xlu0 %1149
        %v1151 = vsel %vm1135, %v1035, -inf
        %1152 = vmax.xlane.f32.xlu0 %v1151
        %v1153 = vpop.xlane.xlu0 %1152
        %v1154 = vsel %vm1135, %v1040, -inf
        %1155 = vmax.xlane.f32.xlu0 %v1154
        %v1156 = vpop.xlane.xlu0 %1155
        %v1157 = vsel %vm1135, %v1043, -inf
        %1158 = vmax.xlane.f32.xlu0 %v1157
        %v1159 = vpop.xlane.xlu0 %1158
        %v1160 = vsel %vm1135, %v1105, -inf
        %1161 = vmax.xlane.f32.xlu0 %v1160
        %v1162 = vpop.xlane.xlu0 %1161
        %v1163 = vsel %vm1135, %v1108, -inf
        %1164 = vmax.xlane.f32.xlu0 %v1163
        %v1165 = vpop.xlane.xlu0 %1164
        %v1166 = vsel %vm1135, %v1113, -inf
        %1167 = vmax.xlane.f32.xlu0 %v1166
        %v1168 = vpop.xlane.xlu0 %1167
        %v1169 = vsel %vm1135, %v1116, -inf
        %1170 = vmax.xlane.f32.xlu0 %v1169
        %v1171 = vpop.xlane.xlu0 %1170
        %v1172 = vsel %vm1135, %v1121, -inf
        %1173 = vmax.xlane.f32.xlu0 %v1172
        %v1174 = vpop.xlane.xlu0 %1173
        %v1175 = vsel %vm1135, %v1124, -inf
        %1176 = vmax.xlane.f32.xlu0 %v1175
        %v1177 = vpop.xlane.xlu0 %1176
        %v1178 = vsel %vm1135, %v1129, -inf
        %1179 = vmax.xlane.f32.xlu0 %v1178
        %v1180 = vpop.xlane.xlu0 %1179
        %v1181 = vsel %vm1135, %v1132, -inf
        %1182 = vmax.xlane.f32.xlu0 %v1181
        %v1183 = vpop.xlane.xlu0 %1182
        %v1184 = vsub.f32 %v1016, %v1138
        %v1185 = vsub.f32 %v1019, %v1141
        %v1186 = vsub.f32 %v1024, %v1144
        %v1187 = vsub.f32 %v1027, %v1147
        %v1188 = vsub.f32 %v1032, %v1150
        %v1189 = vsub.f32 %v1035, %v1153
        %v1190 = vsub.f32 %v1040, %v1156
        %v1191 = vsub.f32 %v1043, %v1159
        %v1192 = vsub.f32 %v1105, %v1162
        %v1193 = vsub.f32 %v1108, %v1165
        %v1194 = vsub.f32 %v1113, %v1168
        %v1195 = vsub.f32 %v1116, %v1171
        %v1196 = vsub.f32 %v1121, %v1174
        %v1197 = vsub.f32 %v1124, %v1177
        %v1198 = vsub.f32 %v1129, %v1180
        %v1199 = vsub.f32 %v1132, %v1183
        %v1200 = vmul.f32 %v1184, 1.442695
        %v1201 = vpow.pop %v1200
        %v1202 = vmul.f32 %v1185, 1.442695
        %v1203 = vpow.pop %v1202
        %v1204 = vmul.f32 %v1186, 1.442695
        %v1205 = vpow.pop %v1204
        %v1206 = vmul.f32 %v1187, 1.442695
        %v1207 = vpow.pop %v1206
        %v1208 = vmul.f32 %v1188, 1.442695
        %v1209 = vpow.pop %v1208
        %v1210 = vmul.f32 %v1189, 1.442695
        %v1211 = vpow.pop %v1210
        %v1212 = vmul.f32 %v1190, 1.442695
        %v1213 = vpow.pop %v1212
        %v1214 = vmul.f32 %v1191, 1.442695
        %v1215 = vpow.pop %v1214
        %v1216 = vmul.f32 %v1192, 1.442695
        %v1217 = vpow.pop %v1216
        %v1218 = vmul.f32 %v1193, 1.442695
        %v1219 = vpow.pop %v1218
        %v1220 = vmul.f32 %v1194, 1.442695
        %v1221 = vpow.pop %v1220
        %v1222 = vmul.f32 %v1195, 1.442695
        %v1223 = vpow.pop %v1222
        %v1224 = vmul.f32 %v1196, 1.442695
        %v1225 = vpow.pop %v1224
        %v1226 = vmul.f32 %v1197, 1.442695
        %v1227 = vpow.pop %v1226
        %v1228 = vmul.f32 %v1198, 1.442695
        %v1229 = vpow.pop %v1228
        %v1230 = vmul.f32 %v1199, 1.442695
        %v1231 = vpow.pop %v1230
        %v1232 = vsel %vm1135, %v1201, 0.0
        %1233 = vadd.xlane.f32.xlu0 %v1232
        %v1234 = vpop.xlane.xlu0 %1233
        %v1235 = vsel %vm1135, %v1203, 0.0
        %1236 = vadd.xlane.f32.xlu0 %v1235
        %v1237 = vpop.xlane.xlu0 %1236
        %v1238 = vsel %vm1135, %v1205, 0.0
        %1239 = vadd.xlane.f32.xlu0 %v1238
        %v1240 = vpop.xlane.xlu0 %1239
        %v1241 = vsel %vm1135, %v1207, 0.0
        %1242 = vadd.xlane.f32.xlu0 %v1241
        %v1243 = vpop.xlane.xlu0 %1242
        %v1244 = vsel %vm1135, %v1209, 0.0
        %1245 = vadd.xlane.f32.xlu0 %v1244
        %v1246 = vpop.xlane.xlu0 %1245
        %v1247 = vsel %vm1135, %v1211, 0.0
        %1248 = vadd.xlane.f32.xlu0 %v1247
        %v1249 = vpop.xlane.xlu0 %1248
        %v1250 = vsel %vm1135, %v1213, 0.0
        %1251 = vadd.xlane.f32.xlu0 %v1250
        %v1252 = vpop.xlane.xlu0 %1251
        %v1253 = vsel %vm1135, %v1215, 0.0
        %1254 = vadd.xlane.f32.xlu0 %v1253
        %v1255 = vpop.xlane.xlu0 %1254
        %v1256 = vsel %vm1135, %v1217, 0.0
        %1257 = vadd.xlane.f32.xlu0 %v1256
        %v1258 = vpop.xlane.xlu0 %1257
        %v1259 = vsel %vm1135, %v1219, 0.0
        %1260 = vadd.xlane.f32.xlu0 %v1259
        %v1261 = vpop.xlane.xlu0 %1260
        %v1262 = vsel %vm1135, %v1221, 0.0
        %1263 = vadd.xlane.f32.xlu0 %v1262
        %v1264 = vpop.xlane.xlu0 %1263
        %v1265 = vsel %vm1135, %v1223, 0.0
        %1266 = vadd.xlane.f32.xlu0 %v1265
        %v1267 = vpop.xlane.xlu0 %1266
        %v1268 = vsel %vm1135, %v1225, 0.0
        %1269 = vadd.xlane.f32.xlu0 %v1268
        %v1270 = vpop.xlane.xlu0 %1269
        %v1271 = vsel %vm1135, %v1227, 0.0
        %1272 = vadd.xlane.f32.xlu0 %v1271
        %v1273 = vpop.xlane.xlu0 %1272
        %v1274 = vsel %vm1135, %v1229, 0.0
        %1275 = vadd.xlane.f32.xlu0 %v1274
        %v1276 = vpop.xlane.xlu0 %1275
        %v1277 = vsel %vm1135, %v1231, 0.0
        %1278 = vadd.xlane.f32.xlu0 %v1277
        %v1279 = vpop.xlane.xlu0 %1278
        %v1280 = vrcp.pop %v1234
        %v1281 = vrcp.pop %v1237
        %v1282 = vrcp.pop %v1240
        %v1283 = vrcp.pop %v1243
        %v1284 = vrcp.pop %v1246
        %v1285 = vrcp.pop %v1249
        %v1286 = vrcp.pop %v1252
        %v1287 = vrcp.pop %v1255
        %v1288 = vrcp.pop %v1258
        %v1289 = vrcp.pop %v1261
        %v1290 = vrcp.pop %v1264
        %v1291 = vrcp.pop %v1267
        %v1292 = vrcp.pop %v1270
        %v1293 = vrcp.pop %v1273
        %v1294 = vrcp.pop %v1276
        %v1295 = vrcp.pop %v1279
        %v1296 = vmul.f32 %v1201, %v1280
        %v1297 = vmul.f32 %v1203, %v1281
        %v1298 = vmul.f32 %v1205, %v1282
        %v1299 = vmul.f32 %v1207, %v1283
        %v1300 = vmul.f32 %v1209, %v1284
        %v1301 = vmul.f32 %v1211, %v1285
        %v1302 = vmul.f32 %v1213, %v1286
        %v1303 = vmul.f32 %v1215, %v1287
        %v1304 = vmul.f32 %v1217, %v1288
        %v1305 = vmul.f32 %v1219, %v1289
        %v1306 = vmul.f32 %v1221, %v1290
        %v1307 = vmul.f32 %v1223, %v1291
        %v1308 = vmul.f32 %v1225, %v1292
        %v1309 = vmul.f32 %v1227, %v1293
        %v1310 = vmul.f32 %v1229, %v1294
        %v1311 = vmul.f32 %v1231, %v1295
        %v1312 = vpack.c.bf16 %v1297, %v1296
        %v1313 = vpack.c.bf16 %v1299, %v1298
        %v1314 = vpack.c.bf16 %v1301, %v1300
        %v1315 = vpack.c.bf16 %v1303, %v1302
        %v1316 = vpack.c.bf16 %v1305, %v1304
        %v1317 = vpack.c.bf16 %v1307, %v1306
        %v1318 = vpack.c.bf16 %v1309, %v1308
        %v1319 = vpack.c.bf16 %v1311, %v1310
        %v1321 = vsel %vm1135, %v1312, 0
        %v1324 = vsel %vm1135, %v1313, 0
        %v1327 = vsel %vm1135, %v1314, 0
        %v1330 = vsel %vm1135, %v1315, 0
        %1332 = vmatprep.subr.bf16.mxu0 0
        %1333 = vmatpush1.bf16.msra.mxu0 %v934
        %1334 = vmatprep.subr.bf16.mxu0 0
        %1335 = vmatpush1.bf16.msra.mxu0 %v937
        %1336 = vmatprep.subr.bf16.mxu0 0
        %1337 = vmatpush1.bf16.msra.mxu0 %v940
        %1338 = vmatprep.subr.bf16.mxu0 0
        %1339 = vmatpush1.bf16.msra.mxu0 %v943
        %1340 = vmatprep.subr.bf16.mxu0 0
        %1341 = vmatpush1.bf16.msra.mxu0 0
        %1342 = vmatprep.subr.bf16.mxu0 0
        %1343 = vmatpush1.bf16.msra.mxu0 0
        %1344 = vmatprep.subr.bf16.mxu0 0
        %1345 = vmatpush1.bf16.msra.mxu0 0
        %1346 = vmatprep.subr.bf16.mxu0 0
        %1347 = vmatpush1.bf16.msra.mxu0 0
        %1348 = vmatprep.subr.bf16.mxu0 0
        %1349 = vmatpush1.bf16.msra.mxu0 0
        %1350 = vmatprep.subr.bf16.mxu0 0
        %1351 = vmatpush1.bf16.msra.mxu0 0
        %1352 = vmatprep.subr.bf16.mxu0 0
        %1353 = vmatpush1.bf16.msra.mxu0 0
        %1354 = vmatprep.subr.bf16.mxu0 0
        %1355 = vmatpush1.bf16.msra.mxu0 0
        %1356 = vmatprep.subr.bf16.mxu0 0
        %1357 = vmatpush1.bf16.msra.mxu0 0
        %1358 = vmatprep.subr.bf16.mxu0 0
        %1359 = vmatpush1.bf16.msra.mxu0 0
        %1360 = vmatprep.subr.bf16.mxu0 0
        %1361 = vmatpush1.bf16.msra.mxu0 0
        %1362 = vmatprep.subr.bf16.mxu0 0
        %1363 = vmatpush1.bf16.msra.mxu0 0
        %1364 = vmatprep.mubr.bf16.mxu0 0
        %1365 = vmatmul.mubr.bf16.gmra.mrb[0].mxu0 %v1321
        %v1366 = vpop.f32.mrb[0].mxu0
        %v1367 = vadd.f32 0.0, %v1366
        %v1368 = vpop.f32.mrb[0].mxu0
        %v1369 = vpop.f32.mrb[0].mxu0
        %v1370 = vadd.f32 0.0, %v1369
        %v1371 = vpop.f32.mrb[0].mxu0
        %1372 = vmatprep.mubr.bf16.mxu0 0
        %1373 = vmatmul.mubr.bf16.gmra.mrb[0].mxu0 %v1324
        %v1374 = vpop.f32.mrb[0].mxu0
        %v1375 = vadd.f32 0.0, %v1374
        %v1376 = vpop.f32.mrb[0].mxu0
        %v1377 = vpop.f32.mrb[0].mxu0
        %v1378 = vadd.f32 0.0, %v1377
        %v1379 = vpop.f32.mrb[0].mxu0
        %1380 = vmatprep.mubr.bf16.mxu0 0
        %1381 = vmatmul.mubr.bf16.gmra.mrb[0].mxu0 %v1327
        %v1382 = vpop.f32.mrb[0].mxu0
        %v1383 = vadd.f32 0.0, %v1382
        %v1384 = vpop.f32.mrb[0].mxu0
        %v1385 = vpop.f32.mrb[0].mxu0
        %v1386 = vadd.f32 0.0, %v1385
        %v1387 = vpop.f32.mrb[0].mxu0
        %1388 = vmatprep.mubr.bf16.mxu0 0
        %1389 = vmatmul.mubr.bf16.gmra.mrb[0].mxu0 %v1330
        %v1390 = vpop.f32.mrb[0].mxu0
        %v1391 = vadd.f32 0.0, %v1390
        %v1392 = vpop.f32.mrb[0].mxu0
        %v1393 = vpop.f32.mrb[0].mxu0
        %v1394 = vadd.f32 0.0, %v1393
        %v1395 = vpop.f32.mrb[0].mxu0
        %1396 = vdwg.mxu0
        %v1398 = vsel %vm1135, %v1316, 0
        %v1401 = vsel %vm1135, %v1317, 0
        %v1404 = vsel %vm1135, %v1318, 0
        %v1407 = vsel %vm1135, %v1319, 0
        %1409 = vmatprep.subr.bf16.mxu0 0
        %1410 = vmatpush1.bf16.msra.mxu0 %v946
        %1411 = vmatprep.subr.bf16.mxu0 0
        %1412 = vmatpush1.bf16.msra.mxu0 %v949
        %1413 = vmatprep.subr.bf16.mxu0 0
        %1414 = vmatpush1.bf16.msra.mxu0 %v952
        %1415 = vmatprep.subr.bf16.mxu0 0
        %1416 = vmatpush1.bf16.msra.mxu0 %v955
        %1417 = vmatprep.subr.bf16.mxu0 0
        %1418 = vmatpush1.bf16.msra.mxu0 0
        %1419 = vmatprep.subr.bf16.mxu0 0
        %1420 = vmatpush1.bf16.msra.mxu0 0
        %1421 = vmatprep.subr.bf16.mxu0 0
        %1422 = vmatpush1.bf16.msra.mxu0 0
        %1423 = vmatprep.subr.bf16.mxu0 0
        %1424 = vmatpush1.bf16.msra.mxu0 0
        %1425 = vmatprep.subr.bf16.mxu0 0
        %1426 = vmatpush1.bf16.msra.mxu0 0
        %1427 = vmatprep.subr.bf16.mxu0 0
        %1428 = vmatpush1.bf16.msra.mxu0 0
        %1429 = vmatprep.subr.bf16.mxu0 0
        %1430 = vmatpush1.bf16.msra.mxu0 0
        %1431 = vmatprep.subr.bf16.mxu0 0
        %1432 = vmatpush1.bf16.msra.mxu0 0
        %1433 = vmatprep.subr.bf16.mxu0 0
        %1434 = vmatpush1.bf16.msra.mxu0 0
        %1435 = vmatprep.subr.bf16.mxu0 0
        %1436 = vmatpush1.bf16.msra.mxu0 0
        %1437 = vmatprep.subr.bf16.mxu0 0
        %1438 = vmatpush1.bf16.msra.mxu0 0
        %1439 = vmatprep.subr.bf16.mxu0 0
        %1440 = vmatpush1.bf16.msra.mxu0 0
        %1441 = vmatprep.mubr.bf16.mxu0 0
        %1442 = vmatmul.mubr.bf16.gmra.mrb[0].mxu0 %v1398
        %v1443 = vpop.f32.mrb[0].mxu0
        %v1444 = vadd.f32 0.0, %v1443
        %v1445 = vpop.f32.mrb[0].mxu0
        %v1446 = vpop.f32.mrb[0].mxu0
        %v1447 = vadd.f32 0.0, %v1446
        %v1448 = vpop.f32.mrb[0].mxu0
        %1449 = vmatprep.mubr.bf16.mxu0 0
        %1450 = vmatmul.mubr.bf16.gmra.mrb[0].mxu0 %v1401
        %v1451 = vpop.f32.mrb[0].mxu0
        %v1452 = vadd.f32 0.0, %v1451
        %v1453 = vpop.f32.mrb[0].mxu0
        %v1454 = vpop.f32.mrb[0].mxu0
        %v1455 = vadd.f32 0.0, %v1454
        %v1456 = vpop.f32.mrb[0].mxu0
        %1457 = vmatprep.mubr.bf16.mxu0 0
        %1458 = vmatmul.mubr.bf16.gmra.mrb[0].mxu0 %v1404
        %v1459 = vpop.f32.mrb[0].mxu0
        %v1460 = vadd.f32 0.0, %v1459
        %v1461 = vpop.f32.mrb[0].mxu0
        %v1462 = vpop.f32.mrb[0].mxu0
        %v1463 = vadd.f32 0.0, %v1462
        %v1464 = vpop.f32.mrb[0].mxu0
        %1465 = vmatprep.mubr.bf16.mxu0 0
        %1466 = vmatmul.mubr.bf16.gmra.mrb[0].mxu0 %v1407
        %v1467 = vpop.f32.mrb[0].mxu0
        %v1468 = vadd.f32 0.0, %v1467
        %v1469 = vpop.f32.mrb[0].mxu0
        %v1470 = vpop.f32.mrb[0].mxu0
        %v1471 = vadd.f32 0.0, %v1470
        %v1472 = vpop.f32.mrb[0].mxu0
        %1473 = vdwg.mxu0
        %v1474 = vpack.c.bf16 %v1370, %v1367
        %v1475 = vpack.c.bf16 %v1378, %v1375
        %v1476 = vpack.c.bf16 %v1386, %v1383
        %v1477 = vpack.c.bf16 %v1394, %v1391
        %v1478 = vpack.c.bf16 %v1447, %v1444
        %v1479 = vpack.c.bf16 %v1455, %v1452
        %v1480 = vpack.c.bf16 %v1463, %v1460
        %v1481 = vpack.c.bf16 %v1471, %v1468
        %1482 = vst.msk [vmem:[#allocation2] sm:$0xff] %vm956, %v1474
        %1483 = vst.msk [vmem:[#allocation2 + $0x8] sm:$0xff] %vm956, %v1475
        %1484 = vst.msk [vmem:[#allocation2 + $0x10] sm:$0xff] %vm956, %v1476
        %1485 = vst.msk [vmem:[#allocation2 + $0x18] sm:$0xff] %vm956, %v1477
        %1486 = vst.msk [vmem:[#allocation2 + $0x20] sm:$0xff] %vm956, %v1478
        %1487 = vst.msk [vmem:[#allocation2 + $0x28] sm:$0xff] %vm956, %v1479
        %1488 = vst.msk [vmem:[#allocation2 + $0x30] sm:$0xff] %vm956, %v1480
        %1489 = vst.msk [vmem:[#allocation2 + $0x38] sm:$0xff] %vm956, %v1481
        %1494 = vrot.lane.b32.xlu0 %v932, 96
        %v1495 = vpop.permute.xlu0 %1494
        %1496 = vrot.lane.b32.xlu0 %v935, 96
        %v1497 = vpop.permute.xlu0 %1496
        %1498 = vrot.lane.b32.xlu0 %v938, 96
        %v1499 = vpop.permute.xlu0 %1498
        %1500 = vrot.lane.b32.xlu0 %v941, 96
        %v1501 = vpop.permute.xlu0 %1500
        %1506 = vrot.lane.b32.xlu0 %v933, 96
        %v1507 = vpop.permute.xlu0 %1506
        %1508 = vrot.lane.b32.xlu0 %v936, 96
        %v1509 = vpop.permute.xlu0 %1508
        %1510 = vrot.lane.b32.xlu0 %v939, 96
        %v1511 = vpop.permute.xlu0 %1510
        %1512 = vrot.lane.b32.xlu0 %v942, 96
        %v1513 = vpop.permute.xlu0 %1512
        %v1515 = vsel %vm956, %v1495, 0
        %v1518 = vsel %vm956, %v1497, 0
        %v1521 = vsel %vm956, %v1499, 0
        %v1524 = vsel %vm956, %v1501, 0
        %v1527 = vsel %vm956, %v1507, 0
        %v1530 = vsel %vm956, %v1509, 0
        %v1533 = vsel %vm956, %v1511, 0
        %v1536 = vsel %vm956, %v1513, 0
        %1538 = vmatprep.subr.bf16.mxu0 0
        %1539 = vmatpush1.bf16.xpose.msra.mxu0 %v1527
        %1540 = vmatprep.subr.bf16.mxu0 0
        %1541 = vmatpush1.bf16.xpose.msra.mxu0 %v1530
        %1542 = vmatprep.subr.bf16.mxu0 0
        %1543 = vmatpush1.bf16.xpose.msra.mxu0 %v1533
        %1544 = vmatprep.subr.bf16.mxu0 0
        %1545 = vmatpush1.bf16.xpose.msra.mxu0 %v1536
        %1546 = vmatprep.subr.bf16.mxu0 0
        %1547 = vmatpush1.bf16.xpose.msra.mxu0 0
        %1548 = vmatprep.subr.bf16.mxu0 0
        %1549 = vmatpush1.bf16.xpose.msra.mxu0 0
        %1550 = vmatprep.subr.bf16.mxu0 0
        %1551 = vmatpush1.bf16.xpose.msra.mxu0 0
        %1552 = vmatprep.subr.bf16.mxu0 0
        %1553 = vmatpush1.bf16.xpose.msra.mxu0 0
        %1554 = vmatprep.subr.bf16.mxu0 0
        %1555 = vmatpush1.bf16.xpose.msra.mxu0 0
        %1556 = vmatprep.subr.bf16.mxu0 0
        %1557 = vmatpush1.bf16.xpose.msra.mxu0 0
        %1558 = vmatprep.subr.bf16.mxu0 0
        %1559 = vmatpush1.bf16.xpose.msra.mxu0 0
        %1560 = vmatprep.subr.bf16.mxu0 0
        %1561 = vmatpush1.bf16.xpose.msra.mxu0 0
        %1562 = vmatprep.subr.bf16.mxu0 0
        %1563 = vmatpush1.bf16.xpose.msra.mxu0 0
        %1564 = vmatprep.subr.bf16.mxu0 0
        %1565 = vmatpush1.bf16.xpose.msra.mxu0 0
        %1566 = vmatprep.subr.bf16.mxu0 0
        %1567 = vmatpush1.bf16.xpose.msra.mxu0 0
        %1568 = vmatprep.subr.bf16.mxu0 0
        %1569 = vmatpush1.bf16.xpose.msra.mxu0 0
        %1570 = vmatprep.mubr.bf16.mxu0 0
        %1571 = vmatmul.mubr.bf16.gmra.mrb[0].mxu0 %v1515
        %v1572 = vpop.f32.mrb[0].mxu0
        %v1573 = vadd.f32 0.0, %v1572
        %v1574 = vpop.f32.mrb[0].mxu0
        %v1575 = vpop.f32.mrb[0].mxu0
        %v1576 = vadd.f32 0.0, %v1575
        %v1577 = vpop.f32.mrb[0].mxu0
        %1578 = vmatprep.mubr.bf16.mxu0 0
        %1579 = vmatmul.mubr.bf16.gmra.mrb[0].mxu0 %v1518
        %v1580 = vpop.f32.mrb[0].mxu0
        %v1581 = vadd.f32 0.0, %v1580
        %v1582 = vpop.f32.mrb[0].mxu0
        %v1583 = vpop.f32.mrb[0].mxu0
        %v1584 = vadd.f32 0.0, %v1583
        %v1585 = vpop.f32.mrb[0].mxu0
        %1586 = vmatprep.mubr.bf16.mxu0 0
        %1587 = vmatmul.mubr.bf16.gmra.mrb[0].mxu0 %v1521
        %v1588 = vpop.f32.mrb[0].mxu0
        %v1589 = vadd.f32 0.0, %v1588
        %v1590 = vpop.f32.mrb[0].mxu0
        %v1591 = vpop.f32.mrb[0].mxu0
        %v1592 = vadd.f32 0.0, %v1591
        %v1593 = vpop.f32.mrb[0].mxu0
        %1594 = vmatprep.mubr.bf16.mxu0 0
        %1595 = vmatmul.mubr.bf16.gmra.mrb[0].mxu0 %v1524
        %v1596 = vpop.f32.mrb[0].mxu0
        %v1597 = vadd.f32 0.0, %v1596
        %v1598 = vpop.f32.mrb[0].mxu0
        %v1599 = vpop.f32.mrb[0].mxu0
        %v1600 = vadd.f32 0.0, %v1599
        %v1601 = vpop.f32.mrb[0].mxu0
        %1602 = vdwg.mxu0
        %1607 = vrot.lane.b32.xlu0 %v944, 96
        %v1608 = vpop.permute.xlu0 %1607
        %1609 = vrot.lane.b32.xlu0 %v947, 96
        %v1610 = vpop.permute.xlu0 %1609
        %1611 = vrot.lane.b32.xlu0 %v950, 96
        %v1612 = vpop.permute.xlu0 %1611
        %1613 = vrot.lane.b32.xlu0 %v953, 96
        %v1614 = vpop.permute.xlu0 %1613
        %1619 = vrot.lane.b32.xlu0 %v945, 96
        %v1620 = vpop.permute.xlu0 %1619
        %1621 = vrot.lane.b32.xlu0 %v948, 96
        %v1622 = vpop.permute.xlu0 %1621
        %1623 = vrot.lane.b32.xlu0 %v951, 96
        %v1624 = vpop.permute.xlu0 %1623
        %1625 = vrot.lane.b32.xlu0 %v954, 96
        %v1626 = vpop.permute.xlu0 %1625
        %v1628 = vsel %vm956, %v1608, 0
        %v1631 = vsel %vm956, %v1610, 0
        %v1634 = vsel %vm956, %v1612, 0
        %v1637 = vsel %vm956, %v1614, 0
        %v1640 = vsel %vm956, %v1620, 0
        %v1643 = vsel %vm956, %v1622, 0
        %v1646 = vsel %vm956, %v1624, 0
        %v1649 = vsel %vm956, %v1626, 0
        %1651 = vmatprep.subr.bf16.mxu0 0
        %1652 = vmatpush1.bf16.xpose.msra.mxu0 %v1640
        %1653 = vmatprep.subr.bf16.mxu0 0
        %1654 = vmatpush1.bf16.xpose.msra.mxu0 %v1643
        %1655 = vmatprep.subr.bf16.mxu0 0
        %1656 = vmatpush1.bf16.xpose.msra.mxu0 %v1646
        %1657 = vmatprep.subr.bf16.mxu0 0
        %1658 = vmatpush1.bf16.xpose.msra.mxu0 %v1649
        %1659 = vmatprep.subr.bf16.mxu0 0
        %1660 = vmatpush1.bf16.xpose.msra.mxu0 0
        %1661 = vmatprep.subr.bf16.mxu0 0
        %1662 = vmatpush1.bf16.xpose.msra.mxu0 0
        %1663 = vmatprep.subr.bf16.mxu0 0
        %1664 = vmatpush1.bf16.xpose.msra.mxu0 0
        %1665 = vmatprep.subr.bf16.mxu0 0
        %1666 = vmatpush1.bf16.xpose.msra.mxu0 0
        %1667 = vmatprep.subr.bf16.mxu0 0
        %1668 = vmatpush1.bf16.xpose.msra.mxu0 0
        %1669 = vmatprep.subr.bf16.mxu0 0
        %1670 = vmatpush1.bf16.xpose.msra.mxu0 0
        %1671 = vmatprep.subr.bf16.mxu0 0
        %1672 = vmatpush1.bf16.xpose.msra.mxu0 0
        %1673 = vmatprep.subr.bf16.mxu0 0
        %1674 = vmatpush1.bf16.xpose.msra.mxu0 0
        %1675 = vmatprep.subr.bf16.mxu0 0
        %1676 = vmatpush1.bf16.xpose.msra.mxu0 0
        %1677 = vmatprep.subr.bf16.mxu0 0
        %1678 = vmatpush1.bf16.xpose.msra.mxu0 0
        %1679 = vmatprep.subr.bf16.mxu0 0
        %1680 = vmatpush1.bf16.xpose.msra.mxu0 0
        %1681 = vmatprep.subr.bf16.mxu0 0
        %1682 = vmatpush1.bf16.xpose.msra.mxu0 0
        %1683 = vmatprep.mubr.bf16.mxu0 0
        %1684 = vmatmul.mubr.bf16.gmra.mrb[0].mxu0 %v1628
        %v1685 = vpop.f32.mrb[0].mxu0
        %v1686 = vadd.f32 0.0, %v1685
        %v1687 = vpop.f32.mrb[0].mxu0
        %v1688 = vpop.f32.mrb[0].mxu0
        %v1689 = vadd.f32 0.0, %v1688
        %v1690 = vpop.f32.mrb[0].mxu0
        %1691 = vmatprep.mubr.bf16.mxu0 0
        %1692 = vmatmul.mubr.bf16.gmra.mrb[0].mxu0 %v1631
        %v1693 = vpop.f32.mrb[0].mxu0
        %v1694 = vadd.f32 0.0, %v1693
        %v1695 = vpop.f32.mrb[0].mxu0
        %v1696 = vpop.f32.mrb[0].mxu0
        %v1697 = vadd.f32 0.0, %v1696
        %v1698 = vpop.f32.mrb[0].mxu0
        %1699 = vmatprep.mubr.bf16.mxu0 0
        %1700 = vmatmul.mubr.bf16.gmra.mrb[0].mxu0 %v1634
        %v1701 = vpop.f32.mrb[0].mxu0
        %v1702 = vadd.f32 0.0, %v1701
        %v1703 = vpop.f32.mrb[0].mxu0
        %v1704 = vpop.f32.mrb[0].mxu0
        %v1705 = vadd.f32 0.0, %v1704
        %v1706 = vpop.f32.mrb[0].mxu0
        %1707 = vmatprep.mubr.bf16.mxu0 0
        %1708 = vmatmul.mubr.bf16.gmra.mrb[0].mxu0 %v1637
        %v1709 = vpop.f32.mrb[0].mxu0
        %v1710 = vadd.f32 0.0, %v1709
        %v1711 = vpop.f32.mrb[0].mxu0
        %v1712 = vpop.f32.mrb[0].mxu0
        %v1713 = vadd.f32 0.0, %v1712
        %v1714 = vpop.f32.mrb[0].mxu0
        %1715 = vdwg.mxu0
        %v1716 = vsel %vm1135, %v1573, -inf
        %1717 = vmax.xlane.f32.xlu0 %v1716
        %v1718 = vpop.xlane.xlu0 %1717
        %v1719 = vsel %vm1135, %v1576, -inf
        %1720 = vmax.xlane.f32.xlu0 %v1719
        %v1721 = vpop.xlane.xlu0 %1720
        %v1722 = vsel %vm1135, %v1581, -inf
        %1723 = vmax.xlane.f32.xlu0 %v1722
        %v1724 = vpop.xlane.xlu0 %1723
        %v1725 = vsel %vm1135, %v1584, -inf
        %1726 = vmax.xlane.f32.xlu0 %v1725
        %v1727 = vpop.xlane.xlu0 %1726
        %v1728 = vsel %vm1135, %v1589, -inf
        %1729 = vmax.xlane.f32.xlu0 %v1728
        %v1730 = vpop.xlane.xlu0 %1729
        %v1731 = vsel %vm1135, %v1592, -inf
        %1732 = vmax.xlane.f32.xlu0 %v1731
        %v1733 = vpop.xlane.xlu0 %1732
        %v1734 = vsel %vm1135, %v1597, -inf
        %1735 = vmax.xlane.f32.xlu0 %v1734
        %v1736 = vpop.xlane.xlu0 %1735
        %v1737 = vsel %vm1135, %v1600, -inf
        %1738 = vmax.xlane.f32.xlu0 %v1737
        %v1739 = vpop.xlane.xlu0 %1738
        %v1740 = vsel %vm1135, %v1686, -inf
        %1741 = vmax.xlane.f32.xlu0 %v1740
        %v1742 = vpop.xlane.xlu0 %1741
        %v1743 = vsel %vm1135, %v1689, -inf
        %1744 = vmax.xlane.f32.xlu0 %v1743
        %v1745 = vpop.xlane.xlu0 %1744
        %v1746 = vsel %vm1135, %v1694, -inf
        %1747 = vmax.xlane.f32.xlu0 %v1746
        %v1748 = vpop.xlane.xlu0 %1747
        %v1749 = vsel %vm1135, %v1697, -inf
        %1750 = vmax.xlane.f32.xlu0 %v1749
        %v1751 = vpop.xlane.xlu0 %1750
        %v1752 = vsel %vm1135, %v1702, -inf
        %1753 = vmax.xlane.f32.xlu0 %v1752
        %v1754 = vpop.xlane.xlu0 %1753
        %v1755 = vsel %vm1135, %v1705, -inf
        %1756 = vmax.xlane.f32.xlu0 %v1755
        %v1757 = vpop.xlane.xlu0 %1756
        %v1758 = vsel %vm1135, %v1710, -inf
        %1759 = vmax.xlane.f32.xlu0 %v1758
        %v1760 = vpop.xlane.xlu0 %1759
        %v1761 = vsel %vm1135, %v1713, -inf
        %1762 = vmax.xlane.f32.xlu0 %v1761
        %v1763 = vpop.xlane.xlu0 %1762
        %v1764 = vsub.f32 %v1573, %v1718
        %v1765 = vsub.f32 %v1576, %v1721
        %v1766 = vsub.f32 %v1581, %v1724
        %v1767 = vsub.f32 %v1584, %v1727
        %v1768 = vsub.f32 %v1589, %v1730
        %v1769 = vsub.f32 %v1592, %v1733
        %v1770 = vsub.f32 %v1597, %v1736
        %v1771 = vsub.f32 %v1600, %v1739
        %v1772 = vsub.f32 %v1686, %v1742
        %v1773 = vsub.f32 %v1689, %v1745
        %v1774 = vsub.f32 %v1694, %v1748
        %v1775 = vsub.f32 %v1697, %v1751
        %v1776 = vsub.f32 %v1702, %v1754
        %v1777 = vsub.f32 %v1705, %v1757
        %v1778 = vsub.f32 %v1710, %v1760
        %v1779 = vsub.f32 %v1713, %v1763
        %v1780 = vmul.f32 %v1764, 1.442695
        %v1781 = vpow.pop %v1780
        %v1782 = vmul.f32 %v1765, 1.442695
        %v1783 = vpow.pop %v1782
        %v1784 = vmul.f32 %v1766, 1.442695
        %v1785 = vpow.pop %v1784
        %v1786 = vmul.f32 %v1767, 1.442695
        %v1787 = vpow.pop %v1786
        %v1788 = vmul.f32 %v1768, 1.442695
        %v1789 = vpow.pop %v1788
        %v1790 = vmul.f32 %v1769, 1.442695
        %v1791 = vpow.pop %v1790
        %v1792 = vmul.f32 %v1770, 1.442695
        %v1793 = vpow.pop %v1792
        %v1794 = vmul.f32 %v1771, 1.442695
        %v1795 = vpow.pop %v1794
        %v1796 = vmul.f32 %v1772, 1.442695
        %v1797 = vpow.pop %v1796
        %v1798 = vmul.f32 %v1773, 1.442695
        %v1799 = vpow.pop %v1798
        %v1800 = vmul.f32 %v1774, 1.442695
        %v1801 = vpow.pop %v1800
        %v1802 = vmul.f32 %v1775, 1.442695
        %v1803 = vpow.pop %v1802
        %v1804 = vmul.f32 %v1776, 1.442695
        %v1805 = vpow.pop %v1804
        %v1806 = vmul.f32 %v1777, 1.442695
        %v1807 = vpow.pop %v1806
        %v1808 = vmul.f32 %v1778, 1.442695
        %v1809 = vpow.pop %v1808
        %v1810 = vmul.f32 %v1779, 1.442695
        %v1811 = vpow.pop %v1810
        %v1812 = vsel %vm1135, %v1781, 0.0
        %1813 = vadd.xlane.f32.xlu0 %v1812
        %v1814 = vpop.xlane.xlu0 %1813
        %v1815 = vsel %vm1135, %v1783, 0.0
        %1816 = vadd.xlane.f32.xlu0 %v1815
        %v1817 = vpop.xlane.xlu0 %1816
        %v1818 = vsel %vm1135, %v1785, 0.0
        %1819 = vadd.xlane.f32.xlu0 %v1818
        %v1820 = vpop.xlane.xlu0 %1819
        %v1821 = vsel %vm1135, %v1787, 0.0
        %1822 = vadd.xlane.f32.xlu0 %v1821
        %v1823 = vpop.xlane.xlu0 %1822
        %v1824 = vsel %vm1135, %v1789, 0.0
        %1825 = vadd.xlane.f32.xlu0 %v1824
        %v1826 = vpop.xlane.xlu0 %1825
        %v1827 = vsel %vm1135, %v1791, 0.0
        %1828 = vadd.xlane.f32.xlu0 %v1827
        %v1829 = vpop.xlane.xlu0 %1828
        %v1830 = vsel %vm1135, %v1793, 0.0
        %1831 = vadd.xlane.f32.xlu0 %v1830
        %v1832 = vpop.xlane.xlu0 %1831
        %v1833 = vsel %vm1135, %v1795, 0.0
        %1834 = vadd.xlane.f32.xlu0 %v1833
        %v1835 = vpop.xlane.xlu0 %1834
        %v1836 = vsel %vm1135, %v1797, 0.0
        %1837 = vadd.xlane.f32.xlu0 %v1836
        %v1838 = vpop.xlane.xlu0 %1837
        %v1839 = vsel %vm1135, %v1799, 0.0
        %1840 = vadd.xlane.f32.xlu0 %v1839
        %v1841 = vpop.xlane.xlu0 %1840
        %v1842 = vsel %vm1135, %v1801, 0.0
        %1843 = vadd.xlane.f32.xlu0 %v1842
        %v1844 = vpop.xlane.xlu0 %1843
        %v1845 = vsel %vm1135, %v1803, 0.0
        %1846 = vadd.xlane.f32.xlu0 %v1845
        %v1847 = vpop.xlane.xlu0 %1846
        %v1848 = vsel %vm1135, %v1805, 0.0
        %1849 = vadd.xlane.f32.xlu0 %v1848
        %v1850 = vpop.xlane.xlu0 %1849
        %v1851 = vsel %vm1135, %v1807, 0.0
        %1852 = vadd.xlane.f32.xlu0 %v1851
        %v1853 = vpop.xlane.xlu0 %1852
        %v1854 = vsel %vm1135, %v1809, 0.0
        %1855 = vadd.xlane.f32.xlu0 %v1854
        %v1856 = vpop.xlane.xlu0 %1855
        %v1857 = vsel %vm1135, %v1811, 0.0
        %1858 = vadd.xlane.f32.xlu0 %v1857
        %v1859 = vpop.xlane.xlu0 %1858
        %v1860 = vrcp.pop %v1814
        %v1861 = vrcp.pop %v1817
        %v1862 = vrcp.pop %v1820
        %v1863 = vrcp.pop %v1823
        %v1864 = vrcp.pop %v1826
        %v1865 = vrcp.pop %v1829
        %v1866 = vrcp.pop %v1832
        %v1867 = vrcp.pop %v1835
        %v1868 = vrcp.pop %v1838
        %v1869 = vrcp.pop %v1841
        %v1870 = vrcp.pop %v1844
        %v1871 = vrcp.pop %v1847
        %v1872 = vrcp.pop %v1850
        %v1873 = vrcp.pop %v1853
        %v1874 = vrcp.pop %v1856
        %v1875 = vrcp.pop %v1859
        %v1876 = vmul.f32 %v1781, %v1860
        %v1877 = vmul.f32 %v1783, %v1861
        %v1878 = vmul.f32 %v1785, %v1862
        %v1879 = vmul.f32 %v1787, %v1863
        %v1880 = vmul.f32 %v1789, %v1864
        %v1881 = vmul.f32 %v1791, %v1865
        %v1882 = vmul.f32 %v1793, %v1866
        %v1883 = vmul.f32 %v1795, %v1867
        %v1884 = vmul.f32 %v1797, %v1868
        %v1885 = vmul.f32 %v1799, %v1869
        %v1886 = vmul.f32 %v1801, %v1870
        %v1887 = vmul.f32 %v1803, %v1871
        %v1888 = vmul.f32 %v1805, %v1872
        %v1889 = vmul.f32 %v1807, %v1873
        %v1890 = vmul.f32 %v1809, %v1874
        %v1891 = vmul.f32 %v1811, %v1875
        %v1892 = vpack.c.bf16 %v1877, %v1876
        %v1893 = vpack.c.bf16 %v1879, %v1878
        %v1894 = vpack.c.bf16 %v1881, %v1880
        %v1895 = vpack.c.bf16 %v1883, %v1882
        %v1896 = vpack.c.bf16 %v1885, %v1884
        %v1897 = vpack.c.bf16 %v1887, %v1886
        %v1898 = vpack.c.bf16 %v1889, %v1888
        %v1899 = vpack.c.bf16 %v1891, %v1890
        %1904 = vrot.lane.b32.xlu0 %v934, 96
        %v1905 = vpop.permute.xlu0 %1904
        %1906 = vrot.lane.b32.xlu0 %v937, 96
        %v1907 = vpop.permute.xlu0 %1906
        %1908 = vrot.lane.b32.xlu0 %v940, 96
        %v1909 = vpop.permute.xlu0 %1908
        %1910 = vrot.lane.b32.xlu0 %v943, 96
        %v1911 = vpop.permute.xlu0 %1910
        %v1917 = vsel %vm1135, %v1892, 0
        %v1920 = vsel %vm1135, %v1893, 0
        %v1923 = vsel %vm1135, %v1894, 0
        %v1926 = vsel %vm1135, %v1895, 0
        %1928 = vmatprep.subr.bf16.mxu0 0
        %1929 = vmatpush1.bf16.msra.mxu0 %v1905
        %1930 = vmatprep.subr.bf16.mxu0 0
        %1931 = vmatpush1.bf16.msra.mxu0 %v1907
        %1932 = vmatprep.subr.bf16.mxu0 0
        %1933 = vmatpush1.bf16.msra.mxu0 %v1909
        %1934 = vmatprep.subr.bf16.mxu0 0
        %1935 = vmatpush1.bf16.msra.mxu0 %v1911
        %1936 = vmatprep.subr.bf16.mxu0 0
        %1937 = vmatpush1.bf16.msra.mxu0 0
        %1938 = vmatprep.subr.bf16.mxu0 0
        %1939 = vmatpush1.bf16.msra.mxu0 0
        %1940 = vmatprep.subr.bf16.mxu0 0
        %1941 = vmatpush1.bf16.msra.mxu0 0
        %1942 = vmatprep.subr.bf16.mxu0 0
        %1943 = vmatpush1.bf16.msra.mxu0 0
        %1944 = vmatprep.subr.bf16.mxu0 0
        %1945 = vmatpush1.bf16.msra.mxu0 0
        %1946 = vmatprep.subr.bf16.mxu0 0
        %1947 = vmatpush1.bf16.msra.mxu0 0
        %1948 = vmatprep.subr.bf16.mxu0 0
        %1949 = vmatpush1.bf16.msra.mxu0 0
        %1950 = vmatprep.subr.bf16.mxu0 0
        %1951 = vmatpush1.bf16.msra.mxu0 0
        %1952 = vmatprep.subr.bf16.mxu0 0
        %1953 = vmatpush1.bf16.msra.mxu0 0
        %1954 = vmatprep.subr.bf16.mxu0 0
        %1955 = vmatpush1.bf16.msra.mxu0 0
        %1956 = vmatprep.subr.bf16.mxu0 0
        %1957 = vmatpush1.bf16.msra.mxu0 0
        %1958 = vmatprep.subr.bf16.mxu0 0
        %1959 = vmatpush1.bf16.msra.mxu0 0
        %1960 = vmatprep.mubr.bf16.mxu0 0
        %1961 = vmatmul.mubr.bf16.gmra.mrb[0].mxu0 %v1917
        %v1962 = vpop.f32.mrb[0].mxu0
        %v1963 = vadd.f32 0.0, %v1962
        %v1964 = vpop.f32.mrb[0].mxu0
        %v1965 = vpop.f32.mrb[0].mxu0
        %v1966 = vadd.f32 0.0, %v1965
        %v1967 = vpop.f32.mrb[0].mxu0
        %1968 = vmatprep.mubr.bf16.mxu0 0
        %1969 = vmatmul.mubr.bf16.gmra.mrb[0].mxu0 %v1920
        %v1970 = vpop.f32.mrb[0].mxu0
        %v1971 = vadd.f32 0.0, %v1970
        %v1972 = vpop.f32.mrb[0].mxu0
        %v1973 = vpop.f32.mrb[0].mxu0
        %v1974 = vadd.f32 0.0, %v1973
        %v1975 = vpop.f32.mrb[0].mxu0
        %1976 = vmatprep.mubr.bf16.mxu0 0
        %1977 = vmatmul.mubr.bf16.gmra.mrb[0].mxu0 %v1923
        %v1978 = vpop.f32.mrb[0].mxu0
        %v1979 = vadd.f32 0.0, %v1978
        %v1980 = vpop.f32.mrb[0].mxu0
        %v1981 = vpop.f32.mrb[0].mxu0
        %v1982 = vadd.f32 0.0, %v1981
        %v1983 = vpop.f32.mrb[0].mxu0
        %1984 = vmatprep.mubr.bf16.mxu0 0
        %1985 = vmatmul.mubr.bf16.gmra.mrb[0].mxu0 %v1926
        %v1986 = vpop.f32.mrb[0].mxu0
        %v1987 = vadd.f32 0.0, %v1986
        %v1988 = vpop.f32.mrb[0].mxu0
        %v1989 = vpop.f32.mrb[0].mxu0
        %v1990 = vadd.f32 0.0, %v1989
        %v1991 = vpop.f32.mrb[0].mxu0
        %1992 = vdwg.mxu0
        %1997 = vrot.lane.b32.xlu0 %v946, 96
        %v1998 = vpop.permute.xlu0 %1997
        %1999 = vrot.lane.b32.xlu0 %v949, 96
        %v2000 = vpop.permute.xlu0 %1999
        %2001 = vrot.lane.b32.xlu0 %v952, 96
        %v2002 = vpop.permute.xlu0 %2001
        %2003 = vrot.lane.b32.xlu0 %v955, 96
        %v2004 = vpop.permute.xlu0 %2003
        %v2010 = vsel %vm1135, %v1896, 0
        %v2013 = vsel %vm1135, %v1897, 0
        %v2016 = vsel %vm1135, %v1898, 0
        %v2019 = vsel %vm1135, %v1899, 0
        %2021 = vmatprep.subr.bf16.mxu0 0
        %2022 = vmatpush1.bf16.msra.mxu0 %v1998
        %2023 = vmatprep.subr.bf16.mxu0 0
        %2024 = vmatpush1.bf16.msra.mxu0 %v2000
        %2025 = vmatprep.subr.bf16.mxu0 0
        %2026 = vmatpush1.bf16.msra.mxu0 %v2002
        %2027 = vmatprep.subr.bf16.mxu0 0
        %2028 = vmatpush1.bf16.msra.mxu0 %v2004
        %2029 = vmatprep.subr.bf16.mxu0 0
        %2030 = vmatpush1.bf16.msra.mxu0 0
        %2031 = vmatprep.subr.bf16.mxu0 0
        %2032 = vmatpush1.bf16.msra.mxu0 0
        %2033 = vmatprep.subr.bf16.mxu0 0
        %2034 = vmatpush1.bf16.msra.mxu0 0
        %2035 = vmatprep.subr.bf16.mxu0 0
        %2036 = vmatpush1.bf16.msra.mxu0 0
        %2037 = vmatprep.subr.bf16.mxu0 0
        %2038 = vmatpush1.bf16.msra.mxu0 0
        %2039 = vmatprep.subr.bf16.mxu0 0
        %2040 = vmatpush1.bf16.msra.mxu0 0
        %2041 = vmatprep.subr.bf16.mxu0 0
        %2042 = vmatpush1.bf16.msra.mxu0 0
        %2043 = vmatprep.subr.bf16.mxu0 0
        %2044 = vmatpush1.bf16.msra.mxu0 0
        %2045 = vmatprep.subr.bf16.mxu0 0
        %2046 = vmatpush1.bf16.msra.mxu0 0
        %2047 = vmatprep.subr.bf16.mxu0 0
        %2048 = vmatpush1.bf16.msra.mxu0 0
        %2049 = vmatprep.subr.bf16.mxu0 0
        %2050 = vmatpush1.bf16.msra.mxu0 0
        %2051 = vmatprep.subr.bf16.mxu0 0
        %2052 = vmatpush1.bf16.msra.mxu0 0
        %2053 = vmatprep.mubr.bf16.mxu0 0
        %2054 = vmatmul.mubr.bf16.gmra.mrb[0].mxu0 %v2010
        %v2055 = vpop.f32.mrb[0].mxu0
        %v2056 = vadd.f32 0.0, %v2055
        %v2057 = vpop.f32.mrb[0].mxu0
        %v2058 = vpop.f32.mrb[0].mxu0
        %v2059 = vadd.f32 0.0, %v2058
        %v2060 = vpop.f32.mrb[0].mxu0
        %2061 = vmatprep.mubr.bf16.mxu0 0
        %2062 = vmatmul.mubr.bf16.gmra.mrb[0].mxu0 %v2013
        %v2063 = vpop.f32.mrb[0].mxu0
        %v2064 = vadd.f32 0.0, %v2063
        %v2065 = vpop.f32.mrb[0].mxu0
        %v2066 = vpop.f32.mrb[0].mxu0
        %v2067 = vadd.f32 0.0, %v2066
        %v2068 = vpop.f32.mrb[0].mxu0
        %2069 = vmatprep.mubr.bf16.mxu0 0
        %2070 = vmatmul.mubr.bf16.gmra.mrb[0].mxu0 %v2016
        %v2071 = vpop.f32.mrb[0].mxu0
        %v2072 = vadd.f32 0.0, %v2071
        %v2073 = vpop.f32.mrb[0].mxu0
        %v2074 = vpop.f32.mrb[0].mxu0
        %v2075 = vadd.f32 0.0, %v2074
        %v2076 = vpop.f32.mrb[0].mxu0
        %2077 = vmatprep.mubr.bf16.mxu0 0
        %2078 = vmatmul.mubr.bf16.gmra.mrb[0].mxu0 %v2019
        %v2079 = vpop.f32.mrb[0].mxu0
        %v2080 = vadd.f32 0.0, %v2079
        %v2081 = vpop.f32.mrb[0].mxu0
        %v2082 = vpop.f32.mrb[0].mxu0
        %v2083 = vadd.f32 0.0, %v2082
        %v2084 = vpop.f32.mrb[0].mxu0
        %2085 = vdwg.mxu0
        %v2086 = vpack.c.bf16 %v1966, %v1963
        %v2087 = vpack.c.bf16 %v1974, %v1971
        %v2088 = vpack.c.bf16 %v1982, %v1979
        %v2089 = vpack.c.bf16 %v1990, %v1987
        %v2090 = vpack.c.bf16 %v2059, %v2056
        %v2091 = vpack.c.bf16 %v2067, %v2064
        %v2092 = vpack.c.bf16 %v2075, %v2072
        %v2093 = vpack.c.bf16 %v2083, %v2080
        %2102 = vrot.lane.b32.xlu0 %v2086, 32
        %v2103 = vpop.permute.xlu0 %2102
        %2104 = vrot.lane.b32.xlu0 %v2087, 32
        %v2105 = vpop.permute.xlu0 %2104
        %2106 = vrot.lane.b32.xlu0 %v2088, 32
        %v2107 = vpop.permute.xlu0 %2106
        %2108 = vrot.lane.b32.xlu0 %v2089, 32
        %v2109 = vpop.permute.xlu0 %2108
        %2110 = vrot.lane.b32.xlu0 %v2090, 32
        %v2111 = vpop.permute.xlu0 %2110
        %2112 = vrot.lane.b32.xlu0 %v2091, 32
        %v2113 = vpop.permute.xlu0 %2112
        %2114 = vrot.lane.b32.xlu0 %v2092, 32
        %v2115 = vpop.permute.xlu0 %2114
        %2116 = vrot.lane.b32.xlu0 %v2093, 32
        %v2117 = vpop.permute.xlu0 %2116
        %vm2126 = vcmask 523520
        %2127 = vst.msk [vmem:[#allocation2] sm:$0xff] %vm2126, %v2103
        %2128 = vst.msk [vmem:[#allocation2 + $0x8] sm:$0xff] %vm2126, %v2105
        %2129 = vst.msk [vmem:[#allocation2 + $0x10] sm:$0xff] %vm2126, %v2107
        %2130 = vst.msk [vmem:[#allocation2 + $0x18] sm:$0xff] %vm2126, %v2109
        %2131 = vst.msk [vmem:[#allocation2 + $0x20] sm:$0xff] %vm2126, %v2111
        %2132 = vst.msk [vmem:[#allocation2 + $0x28] sm:$0xff] %vm2126, %v2113
        %2133 = vst.msk [vmem:[#allocation2 + $0x30] sm:$0xff] %vm2126, %v2115
        %2134 = vst.msk [vmem:[#allocation2 + $0x38] sm:$0xff] %vm2126, %v2117
        %2135 = vrot.lane.b32.xlu0 %v932, 64
        %v2136 = vpop.permute.xlu0 %2135
        %2137 = vrot.lane.b32.xlu0 %v935, 64
        %v2138 = vpop.permute.xlu0 %2137
        %2139 = vrot.lane.b32.xlu0 %v938, 64
        %v2140 = vpop.permute.xlu0 %2139
        %2141 = vrot.lane.b32.xlu0 %v941, 64
        %v2142 = vpop.permute.xlu0 %2141
        %2143 = vrot.lane.b32.xlu0 %v933, 64
        %v2144 = vpop.permute.xlu0 %2143
        %2145 = vrot.lane.b32.xlu0 %v936, 64
        %v2146 = vpop.permute.xlu0 %2145
        %2147 = vrot.lane.b32.xlu0 %v939, 64
        %v2148 = vpop.permute.xlu0 %2147
        %2149 = vrot.lane.b32.xlu0 %v942, 64
        %v2150 = vpop.permute.xlu0 %2149
        %v2152 = vsel %vm956, %v2136, 0
        %v2155 = vsel %vm956, %v2138, 0
        %v2158 = vsel %vm956, %v2140, 0
        %v2161 = vsel %vm956, %v2142, 0
        %v2164 = vsel %vm956, %v2144, 0
        %v2167 = vsel %vm956, %v2146, 0
        %v2170 = vsel %vm956, %v2148, 0
        %v2173 = vsel %vm956, %v2150, 0
        %2175 = vmatprep.subr.bf16.mxu0 0
        %2176 = vmatpush1.bf16.xpose.msra.mxu0 %v2164
        %2177 = vmatprep.subr.bf16.mxu0 0
        %2178 = vmatpush1.bf16.xpose.msra.mxu0 %v2167
        %2179 = vmatprep.subr.bf16.mxu0 0
        %2180 = vmatpush1.bf16.xpose.msra.mxu0 %v2170
        %2181 = vmatprep.subr.bf16.mxu0 0
        %2182 = vmatpush1.bf16.xpose.msra.mxu0 %v2173
        %2183 = vmatprep.subr.bf16.mxu0 0
        %2184 = vmatpush1.bf16.xpose.msra.mxu0 0
        %2185 = vmatprep.subr.bf16.mxu0 0
        %2186 = vmatpush1.bf16.xpose.msra.mxu0 0
        %2187 = vmatprep.subr.bf16.mxu0 0
        %2188 = vmatpush1.bf16.xpose.msra.mxu0 0
        %2189 = vmatprep.subr.bf16.mxu0 0
        %2190 = vmatpush1.bf16.xpose.msra.mxu0 0
        %2191 = vmatprep.subr.bf16.mxu0 0
        %2192 = vmatpush1.bf16.xpose.msra.mxu0 0
        %2193 = vmatprep.subr.bf16.mxu0 0
        %2194 = vmatpush1.bf16.xpose.msra.mxu0 0
        %2195 = vmatprep.subr.bf16.mxu0 0
        %2196 = vmatpush1.bf16.xpose.msra.mxu0 0
        %2197 = vmatprep.subr.bf16.mxu0 0
        %2198 = vmatpush1.bf16.xpose.msra.mxu0 0
        %2199 = vmatprep.subr.bf16.mxu0 0
        %2200 = vmatpush1.bf16.xpose.msra.mxu0 0
        %2201 = vmatprep.subr.bf16.mxu0 0
        %2202 = vmatpush1.bf16.xpose.msra.mxu0 0
        %2203 = vmatprep.subr.bf16.mxu0 0
        %2204 = vmatpush1.bf16.xpose.msra.mxu0 0
        %2205 = vmatprep.subr.bf16.mxu0 0
        %2206 = vmatpush1.bf16.xpose.msra.mxu0 0
        %2207 = vmatprep.mubr.bf16.mxu0 0
        %2208 = vmatmul.mubr.bf16.gmra.mrb[0].mxu0 %v2152
        %v2209 = vpop.f32.mrb[0].mxu0
        %v2210 = vadd.f32 0.0, %v2209
        %v2211 = vpop.f32.mrb[0].mxu0
        %v2212 = vpop.f32.mrb[0].mxu0
        %v2213 = vadd.f32 0.0, %v2212
        %v2214 = vpop.f32.mrb[0].mxu0
        %2215 = vmatprep.mubr.bf16.mxu0 0
        %2216 = vmatmul.mubr.bf16.gmra.mrb[0].mxu0 %v2155
        %v2217 = vpop.f32.mrb[0].mxu0
        %v2218 = vadd.f32 0.0, %v2217
        %v2219 = vpop.f32.mrb[0].mxu0
        %v2220 = vpop.f32.mrb[0].mxu0
        %v2221 = vadd.f32 0.0, %v2220
        %v2222 = vpop.f32.mrb[0].mxu0
        %2223 = vmatprep.mubr.bf16.mxu0 0
        %2224 = vmatmul.mubr.bf16.gmra.mrb[0].mxu0 %v2158
        %v2225 = vpop.f32.mrb[0].mxu0
        %v2226 = vadd.f32 0.0, %v2225
        %v2227 = vpop.f32.mrb[0].mxu0
        %v2228 = vpop.f32.mrb[0].mxu0
        %v2229 = vadd.f32 0.0, %v2228
        %v2230 = vpop.f32.mrb[0].mxu0
        %2231 = vmatprep.mubr.bf16.mxu0 0
        %2232 = vmatmul.mubr.bf16.gmra.mrb[0].mxu0 %v2161
        %v2233 = vpop.f32.mrb[0].mxu0
        %v2234 = vadd.f32 0.0, %v2233
        %v2235 = vpop.f32.mrb[0].mxu0
        %v2236 = vpop.f32.mrb[0].mxu0
        %v2237 = vadd.f32 0.0, %v2236
        %v2238 = vpop.f32.mrb[0].mxu0
        %2239 = vdwg.mxu0
        %2240 = vrot.lane.b32.xlu0 %v944, 64
        %v2241 = vpop.permute.xlu0 %2240
        %2242 = vrot.lane.b32.xlu0 %v947, 64
        %v2243 = vpop.permute.xlu0 %2242
        %2244 = vrot.lane.b32.xlu0 %v950, 64
        %v2245 = vpop.permute.xlu0 %2244
        %2246 = vrot.lane.b32.xlu0 %v953, 64
        %v2247 = vpop.permute.xlu0 %2246
        %2248 = vrot.lane.b32.xlu0 %v945, 64
        %v2249 = vpop.permute.xlu0 %2248
        %2250 = vrot.lane.b32.xlu0 %v948, 64
        %v2251 = vpop.permute.xlu0 %2250
        %2252 = vrot.lane.b32.xlu0 %v951, 64
        %v2253 = vpop.permute.xlu0 %2252
        %2254 = vrot.lane.b32.xlu0 %v954, 64
        %v2255 = vpop.permute.xlu0 %2254
        %v2257 = vsel %vm956, %v2241, 0
        %v2260 = vsel %vm956, %v2243, 0
        %v2263 = vsel %vm956, %v2245, 0
        %v2266 = vsel %vm956, %v2247, 0
        %v2269 = vsel %vm956, %v2249, 0
        %v2272 = vsel %vm956, %v2251, 0
        %v2275 = vsel %vm956, %v2253, 0
        %v2278 = vsel %vm956, %v2255, 0
        %2280 = vmatprep.subr.bf16.mxu0 0
        %2281 = vmatpush1.bf16.xpose.msra.mxu0 %v2269
        %2282 = vmatprep.subr.bf16.mxu0 0
        %2283 = vmatpush1.bf16.xpose.msra.mxu0 %v2272
        %2284 = vmatprep.subr.bf16.mxu0 0
        %2285 = vmatpush1.bf16.xpose.msra.mxu0 %v2275
        %2286 = vmatprep.subr.bf16.mxu0 0
        %2287 = vmatpush1.bf16.xpose.msra.mxu0 %v2278
        %2288 = vmatprep.subr.bf16.mxu0 0
        %2289 = vmatpush1.bf16.xpose.msra.mxu0 0
        %2290 = vmatprep.subr.bf16.mxu0 0
        %2291 = vmatpush1.bf16.xpose.msra.mxu0 0
        %2292 = vmatprep.subr.bf16.mxu0 0
        %2293 = vmatpush1.bf16.xpose.msra.mxu0 0
        %2294 = vmatprep.subr.bf16.mxu0 0
        %2295 = vmatpush1.bf16.xpose.msra.mxu0 0
        %2296 = vmatprep.subr.bf16.mxu0 0
        %2297 = vmatpush1.bf16.xpose.msra.mxu0 0
        %2298 = vmatprep.subr.bf16.mxu0 0
        %2299 = vmatpush1.bf16.xpose.msra.mxu0 0
        %2300 = vmatprep.subr.bf16.mxu0 0
        %2301 = vmatpush1.bf16.xpose.msra.mxu0 0
        %2302 = vmatprep.subr.bf16.mxu0 0
        %2303 = vmatpush1.bf16.xpose.msra.mxu0 0
        %2304 = vmatprep.subr.bf16.mxu0 0
        %2305 = vmatpush1.bf16.xpose.msra.mxu0 0
        %2306 = vmatprep.subr.bf16.mxu0 0
        %2307 = vmatpush1.bf16.xpose.msra.mxu0 0
        %2308 = vmatprep.subr.bf16.mxu0 0
        %2309 = vmatpush1.bf16.xpose.msra.mxu0 0
        %2310 = vmatprep.subr.bf16.mxu0 0
        %2311 = vmatpush1.bf16.xpose.msra.mxu0 0
        %2312 = vmatprep.mubr.bf16.mxu0 0
        %2313 = vmatmul.mubr.bf16.gmra.mrb[0].mxu0 %v2257
        %v2314 = vpop.f32.mrb[0].mxu0
        %v2315 = vadd.f32 0.0, %v2314
        %v2316 = vpop.f32.mrb[0].mxu0
        %v2317 = vpop.f32.mrb[0].mxu0
        %v2318 = vadd.f32 0.0, %v2317
        %v2319 = vpop.f32.mrb[0].mxu0
        %2320 = vmatprep.mubr.bf16.mxu0 0
        %2321 = vmatmul.mubr.bf16.gmra.mrb[0].mxu0 %v2260
        %v2322 = vpop.f32.mrb[0].mxu0
        %v2323 = vadd.f32 0.0, %v2322
        %v2324 = vpop.f32.mrb[0].mxu0
        %v2325 = vpop.f32.mrb[0].mxu0
        %v2326 = vadd.f32 0.0, %v2325
        %v2327 = vpop.f32.mrb[0].mxu0
        %2328 = vmatprep.mubr.bf16.mxu0 0
        %2329 = vmatmul.mubr.bf16.gmra.mrb[0].mxu0 %v2263
        %v2330 = vpop.f32.mrb[0].mxu0
        %v2331 = vadd.f32 0.0, %v2330
        %v2332 = vpop.f32.mrb[0].mxu0
        %v2333 = vpop.f32.mrb[0].mxu0
        %v2334 = vadd.f32 0.0, %v2333
        %v2335 = vpop.f32.mrb[0].mxu0
        %2336 = vmatprep.mubr.bf16.mxu0 0
        %2337 = vmatmul.mubr.bf16.gmra.mrb[0].mxu0 %v2266
        %v2338 = vpop.f32.mrb[0].mxu0
        %v2339 = vadd.f32 0.0, %v2338
        %v2340 = vpop.f32.mrb[0].mxu0
        %v2341 = vpop.f32.mrb[0].mxu0
        %v2342 = vadd.f32 0.0, %v2341
        %v2343 = vpop.f32.mrb[0].mxu0
        %2344 = vdwg.mxu0
        %v2345 = vsel %vm1135, %v2210, -inf
        %2346 = vmax.xlane.f32.xlu0 %v2345
        %v2347 = vpop.xlane.xlu0 %2346
        %v2348 = vsel %vm1135, %v2213, -inf
        %2349 = vmax.xlane.f32.xlu0 %v2348
        %v2350 = vpop.xlane.xlu0 %2349
        %v2351 = vsel %vm1135, %v2218, -inf
        %2352 = vmax.xlane.f32.xlu0 %v2351
        %v2353 = vpop.xlane.xlu0 %2352
        %v2354 = vsel %vm1135, %v2221, -inf
        %2355 = vmax.xlane.f32.xlu0 %v2354
        %v2356 = vpop.xlane.xlu0 %2355
        %v2357 = vsel %vm1135, %v2226, -inf
        %2358 = vmax.xlane.f32.xlu0 %v2357
        %v2359 = vpop.xlane.xlu0 %2358
        %v2360 = vsel %vm1135, %v2229, -inf
        %2361 = vmax.xlane.f32.xlu0 %v2360
        %v2362 = vpop.xlane.xlu0 %2361
        %v2363 = vsel %vm1135, %v2234, -inf
        %2364 = vmax.xlane.f32.xlu0 %v2363
        %v2365 = vpop.xlane.xlu0 %2364
        %v2366 = vsel %vm1135, %v2237, -inf
        %2367 = vmax.xlane.f32.xlu0 %v2366
        %v2368 = vpop.xlane.xlu0 %2367
        %v2369 = vsel %vm1135, %v2315, -inf
        %2370 = vmax.xlane.f32.xlu0 %v2369
        %v2371 = vpop.xlane.xlu0 %2370
        %v2372 = vsel %vm1135, %v2318, -inf
        %2373 = vmax.xlane.f32.xlu0 %v2372
        %v2374 = vpop.xlane.xlu0 %2373
        %v2375 = vsel %vm1135, %v2323, -inf
        %2376 = vmax.xlane.f32.xlu0 %v2375
        %v2377 = vpop.xlane.xlu0 %2376
        %v2378 = vsel %vm1135, %v2326, -inf
        %2379 = vmax.xlane.f32.xlu0 %v2378
        %v2380 = vpop.xlane.xlu0 %2379
        %v2381 = vsel %vm1135, %v2331, -inf
        %2382 = vmax.xlane.f32.xlu0 %v2381
        %v2383 = vpop.xlane.xlu0 %2382
        %v2384 = vsel %vm1135, %v2334, -inf
        %2385 = vmax.xlane.f32.xlu0 %v2384
        %v2386 = vpop.xlane.xlu0 %2385
        %v2387 = vsel %vm1135, %v2339, -inf
        %2388 = vmax.xlane.f32.xlu0 %v2387
        %v2389 = vpop.xlane.xlu0 %2388
        %v2390 = vsel %vm1135, %v2342, -inf
        %2391 = vmax.xlane.f32.xlu0 %v2390
        %v2392 = vpop.xlane.xlu0 %2391
        %v2393 = vsub.f32 %v2210, %v2347
        %v2394 = vsub.f32 %v2213, %v2350
        %v2395 = vsub.f32 %v2218, %v2353
        %v2396 = vsub.f32 %v2221, %v2356
        %v2397 = vsub.f32 %v2226, %v2359
        %v2398 = vsub.f32 %v2229, %v2362
        %v2399 = vsub.f32 %v2234, %v2365
        %v2400 = vsub.f32 %v2237, %v2368
        %v2401 = vsub.f32 %v2315, %v2371
        %v2402 = vsub.f32 %v2318, %v2374
        %v2403 = vsub.f32 %v2323, %v2377
        %v2404 = vsub.f32 %v2326, %v2380
        %v2405 = vsub.f32 %v2331, %v2383
        %v2406 = vsub.f32 %v2334, %v2386
        %v2407 = vsub.f32 %v2339, %v2389
        %v2408 = vsub.f32 %v2342, %v2392
        %v2409 = vmul.f32 %v2393, 1.442695
        %v2410 = vpow.pop %v2409
        %v2411 = vmul.f32 %v2394, 1.442695
        %v2412 = vpow.pop %v2411
        %v2413 = vmul.f32 %v2395, 1.442695
        %v2414 = vpow.pop %v2413
        %v2415 = vmul.f32 %v2396, 1.442695
        %v2416 = vpow.pop %v2415
        %v2417 = vmul.f32 %v2397, 1.442695
        %v2418 = vpow.pop %v2417
        %v2419 = vmul.f32 %v2398, 1.442695
        %v2420 = vpow.pop %v2419
        %v2421 = vmul.f32 %v2399, 1.442695
        %v2422 = vpow.pop %v2421
        %v2423 = vmul.f32 %v2400, 1.442695
        %v2424 = vpow.pop %v2423
        %v2425 = vmul.f32 %v2401, 1.442695
        %v2426 = vpow.pop %v2425
        %v2427 = vmul.f32 %v2402, 1.442695
        %v2428 = vpow.pop %v2427
        %v2429 = vmul.f32 %v2403, 1.442695
        %v2430 = vpow.pop %v2429
        %v2431 = vmul.f32 %v2404, 1.442695
        %v2432 = vpow.pop %v2431
        %v2433 = vmul.f32 %v2405, 1.442695
        %v2434 = vpow.pop %v2433
        %v2435 = vmul.f32 %v2406, 1.442695
        %v2436 = vpow.pop %v2435
        %v2437 = vmul.f32 %v2407, 1.442695
        %v2438 = vpow.pop %v2437
        %v2439 = vmul.f32 %v2408, 1.442695
        %v2440 = vpow.pop %v2439
        %v2441 = vsel %vm1135, %v2410, 0.0
        %2442 = vadd.xlane.f32.xlu0 %v2441
        %v2443 = vpop.xlane.xlu0 %2442
        %v2444 = vsel %vm1135, %v2412, 0.0
        %2445 = vadd.xlane.f32.xlu0 %v2444
        %v2446 = vpop.xlane.xlu0 %2445
        %v2447 = vsel %vm1135, %v2414, 0.0
        %2448 = vadd.xlane.f32.xlu0 %v2447
        %v2449 = vpop.xlane.xlu0 %2448
        %v2450 = vsel %vm1135, %v2416, 0.0
        %2451 = vadd.xlane.f32.xlu0 %v2450
        %v2452 = vpop.xlane.xlu0 %2451
        %v2453 = vsel %vm1135, %v2418, 0.0
        %2454 = vadd.xlane.f32.xlu0 %v2453
        %v2455 = vpop.xlane.xlu0 %2454
        %v2456 = vsel %vm1135, %v2420, 0.0
        %2457 = vadd.xlane.f32.xlu0 %v2456
        %v2458 = vpop.xlane.xlu0 %2457
        %v2459 = vsel %vm1135, %v2422, 0.0
        %2460 = vadd.xlane.f32.xlu0 %v2459
        %v2461 = vpop.xlane.xlu0 %2460
        %v2462 = vsel %vm1135, %v2424, 0.0
        %2463 = vadd.xlane.f32.xlu0 %v2462
        %v2464 = vpop.xlane.xlu0 %2463
        %v2465 = vsel %vm1135, %v2426, 0.0
        %2466 = vadd.xlane.f32.xlu0 %v2465
        %v2467 = vpop.xlane.xlu0 %2466
        %v2468 = vsel %vm1135, %v2428, 0.0
        %2469 = vadd.xlane.f32.xlu0 %v2468
        %v2470 = vpop.xlane.xlu0 %2469
        %v2471 = vsel %vm1135, %v2430, 0.0
        %2472 = vadd.xlane.f32.xlu0 %v2471
        %v2473 = vpop.xlane.xlu0 %2472
        %v2474 = vsel %vm1135, %v2432, 0.0
        %2475 = vadd.xlane.f32.xlu0 %v2474
        %v2476 = vpop.xlane.xlu0 %2475
        %v2477 = vsel %vm1135, %v2434, 0.0
        %2478 = vadd.xlane.f32.xlu0 %v2477
        %v2479 = vpop.xlane.xlu0 %2478
        %v2480 = vsel %vm1135, %v2436, 0.0
        %2481 = vadd.xlane.f32.xlu0 %v2480
        %v2482 = vpop.xlane.xlu0 %2481
        %v2483 = vsel %vm1135, %v2438, 0.0
        %2484 = vadd.xlane.f32.xlu0 %v2483
        %v2485 = vpop.xlane.xlu0 %2484
        %v2486 = vsel %vm1135, %v2440, 0.0
        %2487 = vadd.xlane.f32.xlu0 %v2486
        %v2488 = vpop.xlane.xlu0 %2487
        %v2489 = vrcp.pop %v2443
        %v2490 = vrcp.pop %v2446
        %v2491 = vrcp.pop %v2449
        %v2492 = vrcp.pop %v2452
        %v2493 = vrcp.pop %v2455
        %v2494 = vrcp.pop %v2458
        %v2495 = vrcp.pop %v2461
        %v2496 = vrcp.pop %v2464
        %v2497 = vrcp.pop %v2467
        %v2498 = vrcp.pop %v2470
        %v2499 = vrcp.pop %v2473
        %v2500 = vrcp.pop %v2476
        %v2501 = vrcp.pop %v2479
        %v2502 = vrcp.pop %v2482
        %v2503 = vrcp.pop %v2485
        %v2504 = vrcp.pop %v2488
        %v2505 = vmul.f32 %v2410, %v2489
        %v2506 = vmul.f32 %v2412, %v2490
        %v2507 = vmul.f32 %v2414, %v2491
        %v2508 = vmul.f32 %v2416, %v2492
        %v2509 = vmul.f32 %v2418, %v2493
        %v2510 = vmul.f32 %v2420, %v2494
        %v2511 = vmul.f32 %v2422, %v2495
        %v2512 = vmul.f32 %v2424, %v2496
        %v2513 = vmul.f32 %v2426, %v2497
        %v2514 = vmul.f32 %v2428, %v2498
        %v2515 = vmul.f32 %v2430, %v2499
        %v2516 = vmul.f32 %v2432, %v2500
        %v2517 = vmul.f32 %v2434, %v2501
        %v2518 = vmul.f32 %v2436, %v2502
        %v2519 = vmul.f32 %v2438, %v2503
        %v2520 = vmul.f32 %v2440, %v2504
        %v2521 = vpack.c.bf16 %v2506, %v2505
        %v2522 = vpack.c.bf16 %v2508, %v2507
        %v2523 = vpack.c.bf16 %v2510, %v2509
        %v2524 = vpack.c.bf16 %v2512, %v2511
        %v2525 = vpack.c.bf16 %v2514, %v2513
        %v2526 = vpack.c.bf16 %v2516, %v2515
        %v2527 = vpack.c.bf16 %v2518, %v2517
        %v2528 = vpack.c.bf16 %v2520, %v2519
        %2529 = vrot.lane.b32.xlu0 %v934, 64
        %v2530 = vpop.permute.xlu0 %2529
        %2531 = vrot.lane.b32.xlu0 %v937, 64
        %v2532 = vpop.permute.xlu0 %2531
        %2533 = vrot.lane.b32.xlu0 %v940, 64
        %v2534 = vpop.permute.xlu0 %2533
        %2535 = vrot.lane.b32.xlu0 %v943, 64
        %v2536 = vpop.permute.xlu0 %2535
        %v2542 = vsel %vm1135, %v2521, 0
        %v2545 = vsel %vm1135, %v2522, 0
        %v2548 = vsel %vm1135, %v2523, 0
        %v2551 = vsel %vm1135, %v2524, 0
        %2553 = vmatprep.subr.bf16.mxu0 0
        %2554 = vmatpush1.bf16.msra.mxu0 %v2530
        %2555 = vmatprep.subr.bf16.mxu0 0
        %2556 = vmatpush1.bf16.msra.mxu0 %v2532
        %2557 = vmatprep.subr.bf16.mxu0 0
        %2558 = vmatpush1.bf16.msra.mxu0 %v2534
        %2559 = vmatprep.subr.bf16.mxu0 0
        %2560 = vmatpush1.bf16.msra.mxu0 %v2536
        %2561 = vmatprep.subr.bf16.mxu0 0
        %2562 = vmatpush1.bf16.msra.mxu0 0
        %2563 = vmatprep.subr.bf16.mxu0 0
        %2564 = vmatpush1.bf16.msra.mxu0 0
        %2565 = vmatprep.subr.bf16.mxu0 0
        %2566 = vmatpush1.bf16.msra.mxu0 0
        %2567 = vmatprep.subr.bf16.mxu0 0
        %2568 = vmatpush1.bf16.msra.mxu0 0
        %2569 = vmatprep.subr.bf16.mxu0 0
        %2570 = vmatpush1.bf16.msra.mxu0 0
        %2571 = vmatprep.subr.bf16.mxu0 0
        %2572 = vmatpush1.bf16.msra.mxu0 0
        %2573 = vmatprep.subr.bf16.mxu0 0
        %2574 = vmatpush1.bf16.msra.mxu0 0
        %2575 = vmatprep.subr.bf16.mxu0 0
        %2576 = vmatpush1.bf16.msra.mxu0 0
        %2577 = vmatprep.subr.bf16.mxu0 0
        %2578 = vmatpush1.bf16.msra.mxu0 0
        %2579 = vmatprep.subr.bf16.mxu0 0
        %2580 = vmatpush1.bf16.msra.mxu0 0
        %2581 = vmatprep.subr.bf16.mxu0 0
        %2582 = vmatpush1.bf16.msra.mxu0 0
        %2583 = vmatprep.subr.bf16.mxu0 0
        %2584 = vmatpush1.bf16.msra.mxu0 0
        %2585 = vmatprep.mubr.bf16.mxu0 0
        %2586 = vmatmul.mubr.bf16.gmra.mrb[0].mxu0 %v2542
        %v2587 = vpop.f32.mrb[0].mxu0
        %v2588 = vadd.f32 0.0, %v2587
        %v2589 = vpop.f32.mrb[0].mxu0
        %v2590 = vpop.f32.mrb[0].mxu0
        %v2591 = vadd.f32 0.0, %v2590
        %v2592 = vpop.f32.mrb[0].mxu0
        %2593 = vmatprep.mubr.bf16.mxu0 0
        %2594 = vmatmul.mubr.bf16.gmra.mrb[0].mxu0 %v2545
        %v2595 = vpop.f32.mrb[0].mxu0
        %v2596 = vadd.f32 0.0, %v2595
        %v2597 = vpop.f32.mrb[0].mxu0
        %v2598 = vpop.f32.mrb[0].mxu0
        %v2599 = vadd.f32 0.0, %v2598
        %v2600 = vpop.f32.mrb[0].mxu0
        %2601 = vmatprep.mubr.bf16.mxu0 0
        %2602 = vmatmul.mubr.bf16.gmra.mrb[0].mxu0 %v2548
        %v2603 = vpop.f32.mrb[0].mxu0
        %v2604 = vadd.f32 0.0, %v2603
        %v2605 = vpop.f32.mrb[0].mxu0
        %v2606 = vpop.f32.mrb[0].mxu0
        %v2607 = vadd.f32 0.0, %v2606
        %v2608 = vpop.f32.mrb[0].mxu0
        %2609 = vmatprep.mubr.bf16.mxu0 0
        %2610 = vmatmul.mubr.bf16.gmra.mrb[0].mxu0 %v2551
        %v2611 = vpop.f32.mrb[0].mxu0
        %v2612 = vadd.f32 0.0, %v2611
        %v2613 = vpop.f32.mrb[0].mxu0
        %v2614 = vpop.f32.mrb[0].mxu0
        %v2615 = vadd.f32 0.0, %v2614
        %v2616 = vpop.f32.mrb[0].mxu0
        %2617 = vdwg.mxu0
        %2618 = vrot.lane.b32.xlu0 %v946, 64
        %v2619 = vpop.permute.xlu0 %2618
        %2620 = vrot.lane.b32.xlu0 %v949, 64
        %v2621 = vpop.permute.xlu0 %2620
        %2622 = vrot.lane.b32.xlu0 %v952, 64
        %v2623 = vpop.permute.xlu0 %2622
        %2624 = vrot.lane.b32.xlu0 %v955, 64
        %v2625 = vpop.permute.xlu0 %2624
        %v2631 = vsel %vm1135, %v2525, 0
        %v2634 = vsel %vm1135, %v2526, 0
        %v2637 = vsel %vm1135, %v2527, 0
        %v2640 = vsel %vm1135, %v2528, 0
        %2642 = vmatprep.subr.bf16.mxu0 0
        %2643 = vmatpush1.bf16.msra.mxu0 %v2619
        %2644 = vmatprep.subr.bf16.mxu0 0
        %2645 = vmatpush1.bf16.msra.mxu0 %v2621
        %2646 = vmatprep.subr.bf16.mxu0 0
        %2647 = vmatpush1.bf16.msra.mxu0 %v2623
        %2648 = vmatprep.subr.bf16.mxu0 0
        %2649 = vmatpush1.bf16.msra.mxu0 %v2625
        %2650 = vmatprep.subr.bf16.mxu0 0
        %2651 = vmatpush1.bf16.msra.mxu0 0
        %2652 = vmatprep.subr.bf16.mxu0 0
        %2653 = vmatpush1.bf16.msra.mxu0 0
        %2654 = vmatprep.subr.bf16.mxu0 0
        %2655 = vmatpush1.bf16.msra.mxu0 0
        %2656 = vmatprep.subr.bf16.mxu0 0
        %2657 = vmatpush1.bf16.msra.mxu0 0
        %2658 = vmatprep.subr.bf16.mxu0 0
        %2659 = vmatpush1.bf16.msra.mxu0 0
        %2660 = vmatprep.subr.bf16.mxu0 0
        %2661 = vmatpush1.bf16.msra.mxu0 0
        %2662 = vmatprep.subr.bf16.mxu0 0
        %2663 = vmatpush1.bf16.msra.mxu0 0
        %2664 = vmatprep.subr.bf16.mxu0 0
        %2665 = vmatpush1.bf16.msra.mxu0 0
        %2666 = vmatprep.subr.bf16.mxu0 0
        %2667 = vmatpush1.bf16.msra.mxu0 0
        %2668 = vmatprep.subr.bf16.mxu0 0
        %2669 = vmatpush1.bf16.msra.mxu0 0
        %2670 = vmatprep.subr.bf16.mxu0 0
        %2671 = vmatpush1.bf16.msra.mxu0 0
        %2672 = vmatprep.subr.bf16.mxu0 0
        %2673 = vmatpush1.bf16.msra.mxu0 0
        %2674 = vmatprep.mubr.bf16.mxu0 0
        %2675 = vmatmul.mubr.bf16.gmra.mrb[0].mxu0 %v2631
        %v2676 = vpop.f32.mrb[0].mxu0
        %v2677 = vadd.f32 0.0, %v2676
        %v2678 = vpop.f32.mrb[0].mxu0
        %v2679 = vpop.f32.mrb[0].mxu0
        %v2680 = vadd.f32 0.0, %v2679
        %v2681 = vpop.f32.mrb[0].mxu0
        %2682 = vmatprep.mubr.bf16.mxu0 0
        %2683 = vmatmul.mubr.bf16.gmra.mrb[0].mxu0 %v2634
        %v2684 = vpop.f32.mrb[0].mxu0
        %v2685 = vadd.f32 0.0, %v2684
        %v2686 = vpop.f32.mrb[0].mxu0
        %v2687 = vpop.f32.mrb[0].mxu0
        %v2688 = vadd.f32 0.0, %v2687
        %v2689 = vpop.f32.mrb[0].mxu0
        %2690 = vmatprep.mubr.bf16.mxu0 0
        %2691 = vmatmul.mubr.bf16.gmra.mrb[0].mxu0 %v2637
        %v2692 = vpop.f32.mrb[0].mxu0
        %v2693 = vadd.f32 0.0, %v2692
        %v2694 = vpop.f32.mrb[0].mxu0
        %v2695 = vpop.f32.mrb[0].mxu0
        %v2696 = vadd.f32 0.0, %v2695
        %v2697 = vpop.f32.mrb[0].mxu0
        %2698 = vmatprep.mubr.bf16.mxu0 0
        %2699 = vmatmul.mubr.bf16.gmra.mrb[0].mxu0 %v2640
        %v2700 = vpop.f32.mrb[0].mxu0
        %v2701 = vadd.f32 0.0, %v2700
        %v2702 = vpop.f32.mrb[0].mxu0
        %v2703 = vpop.f32.mrb[0].mxu0
        %v2704 = vadd.f32 0.0, %v2703
        %v2705 = vpop.f32.mrb[0].mxu0
        %2706 = vdwg.mxu0
        %v2707 = vpack.c.bf16 %v2591, %v2588
        %v2708 = vpack.c.bf16 %v2599, %v2596
        %v2709 = vpack.c.bf16 %v2607, %v2604
        %v2710 = vpack.c.bf16 %v2615, %v2612
        %v2711 = vpack.c.bf16 %v2680, %v2677
        %v2712 = vpack.c.bf16 %v2688, %v2685
        %v2713 = vpack.c.bf16 %v2696, %v2693
        %v2714 = vpack.c.bf16 %v2704, %v2701
        %2723 = vrot.lane.b32.xlu0 %v2707, 64
        %v2724 = vpop.permute.xlu0 %2723
        %2725 = vrot.lane.b32.xlu0 %v2708, 64
        %v2726 = vpop.permute.xlu0 %2725
        %2727 = vrot.lane.b32.xlu0 %v2709, 64
        %v2728 = vpop.permute.xlu0 %2727
        %2729 = vrot.lane.b32.xlu0 %v2710, 64
        %v2730 = vpop.permute.xlu0 %2729
        %2731 = vrot.lane.b32.xlu0 %v2711, 64
        %v2732 = vpop.permute.xlu0 %2731
        %2733 = vrot.lane.b32.xlu0 %v2712, 64
        %v2734 = vpop.permute.xlu0 %2733
        %2735 = vrot.lane.b32.xlu0 %v2713, 64
        %v2736 = vpop.permute.xlu0 %2735
        %2737 = vrot.lane.b32.xlu0 %v2714, 64
        %v2738 = vpop.permute.xlu0 %2737
        %vm2747 = vcmask 785920
        %2748 = vst.msk [vmem:[#allocation2] sm:$0xff] %vm2747, %v2724
        %2749 = vst.msk [vmem:[#allocation2 + $0x8] sm:$0xff] %vm2747, %v2726
        %2750 = vst.msk [vmem:[#allocation2 + $0x10] sm:$0xff] %vm2747, %v2728
        %2751 = vst.msk [vmem:[#allocation2 + $0x18] sm:$0xff] %vm2747, %v2730
        %2752 = vst.msk [vmem:[#allocation2 + $0x20] sm:$0xff] %vm2747, %v2732
        %2753 = vst.msk [vmem:[#allocation2 + $0x28] sm:$0xff] %vm2747, %v2734
        %2754 = vst.msk [vmem:[#allocation2 + $0x30] sm:$0xff] %vm2747, %v2736
        %2755 = vst.msk [vmem:[#allocation2 + $0x38] sm:$0xff] %vm2747, %v2738
        %2756 = vrot.lane.b32.xlu0 %v932, 32
        %v2757 = vpop.permute.xlu0 %2756
        %2758 = vrot.lane.b32.xlu0 %v935, 32
        %v2759 = vpop.permute.xlu0 %2758
        %2760 = vrot.lane.b32.xlu0 %v938, 32
        %v2761 = vpop.permute.xlu0 %2760
        %2762 = vrot.lane.b32.xlu0 %v941, 32
        %v2763 = vpop.permute.xlu0 %2762
        %2764 = vrot.lane.b32.xlu0 %v933, 32
        %v2765 = vpop.permute.xlu0 %2764
        %2766 = vrot.lane.b32.xlu0 %v936, 32
        %v2767 = vpop.permute.xlu0 %2766
        %2768 = vrot.lane.b32.xlu0 %v939, 32
        %v2769 = vpop.permute.xlu0 %2768
        %2770 = vrot.lane.b32.xlu0 %v942, 32
        %v2771 = vpop.permute.xlu0 %2770
        %v2773 = vsel %vm956, %v2757, 0
        %v2776 = vsel %vm956, %v2759, 0
        %v2779 = vsel %vm956, %v2761, 0
        %v2782 = vsel %vm956, %v2763, 0
        %v2785 = vsel %vm956, %v2765, 0
        %v2788 = vsel %vm956, %v2767, 0
        %v2791 = vsel %vm956, %v2769, 0
        %v2794 = vsel %vm956, %v2771, 0
        %2796 = vmatprep.subr.bf16.mxu0 0
        %2797 = vmatpush1.bf16.xpose.msra.mxu0 %v2785
        %2798 = vmatprep.subr.bf16.mxu0 0
        %2799 = vmatpush1.bf16.xpose.msra.mxu0 %v2788
        %2800 = vmatprep.subr.bf16.mxu0 0
        %2801 = vmatpush1.bf16.xpose.msra.mxu0 %v2791
        %2802 = vmatprep.subr.bf16.mxu0 0
        %2803 = vmatpush1.bf16.xpose.msra.mxu0 %v2794
        %2804 = vmatprep.subr.bf16.mxu0 0
        %2805 = vmatpush1.bf16.xpose.msra.mxu0 0
        %2806 = vmatprep.subr.bf16.mxu0 0
        %2807 = vmatpush1.bf16.xpose.msra.mxu0 0
        %2808 = vmatprep.subr.bf16.mxu0 0
        %2809 = vmatpush1.bf16.xpose.msra.mxu0 0
        %2810 = vmatprep.subr.bf16.mxu0 0
        %2811 = vmatpush1.bf16.xpose.msra.mxu0 0
        %2812 = vmatprep.subr.bf16.mxu0 0
        %2813 = vmatpush1.bf16.xpose.msra.mxu0 0
        %2814 = vmatprep.subr.bf16.mxu0 0
        %2815 = vmatpush1.bf16.xpose.msra.mxu0 0
        %2816 = vmatprep.subr.bf16.mxu0 0
        %2817 = vmatpush1.bf16.xpose.msra.mxu0 0
        %2818 = vmatprep.subr.bf16.mxu0 0
        %2819 = vmatpush1.bf16.xpose.msra.mxu0 0
        %2820 = vmatprep.subr.bf16.mxu0 0
        %2821 = vmatpush1.bf16.xpose.msra.mxu0 0
        %2822 = vmatprep.subr.bf16.mxu0 0
        %2823 = vmatpush1.bf16.xpose.msra.mxu0 0
        %2824 = vmatprep.subr.bf16.mxu0 0
        %2825 = vmatpush1.bf16.xpose.msra.mxu0 0
        %2826 = vmatprep.subr.bf16.mxu0 0
        %2827 = vmatpush1.bf16.xpose.msra.mxu0 0
        %2828 = vmatprep.mubr.bf16.mxu0 0
        %2829 = vmatmul.mubr.bf16.gmra.mrb[0].mxu0 %v2773
        %v2830 = vpop.f32.mrb[0].mxu0
        %v2831 = vadd.f32 0.0, %v2830
        %v2832 = vpop.f32.mrb[0].mxu0
        %v2833 = vpop.f32.mrb[0].mxu0
        %v2834 = vadd.f32 0.0, %v2833
        %v2835 = vpop.f32.mrb[0].mxu0
        %2836 = vmatprep.mubr.bf16.mxu0 0
        %2837 = vmatmul.mubr.bf16.gmra.mrb[0].mxu0 %v2776
        %v2838 = vpop.f32.mrb[0].mxu0
        %v2839 = vadd.f32 0.0, %v2838
        %v2840 = vpop.f32.mrb[0].mxu0
        %v2841 = vpop.f32.mrb[0].mxu0
        %v2842 = vadd.f32 0.0, %v2841
        %v2843 = vpop.f32.mrb[0].mxu0
        %2844 = vmatprep.mubr.bf16.mxu0 0
        %2845 = vmatmul.mubr.bf16.gmra.mrb[0].mxu0 %v2779
        %v2846 = vpop.f32.mrb[0].mxu0
        %v2847 = vadd.f32 0.0, %v2846
        %v2848 = vpop.f32.mrb[0].mxu0
        %v2849 = vpop.f32.mrb[0].mxu0
        %v2850 = vadd.f32 0.0, %v2849
        %v2851 = vpop.f32.mrb[0].mxu0
        %2852 = vmatprep.mubr.bf16.mxu0 0
        %2853 = vmatmul.mubr.bf16.gmra.mrb[0].mxu0 %v2782
        %v2854 = vpop.f32.mrb[0].mxu0
        %v2855 = vadd.f32 0.0, %v2854
        %v2856 = vpop.f32.mrb[0].mxu0
        %v2857 = vpop.f32.mrb[0].mxu0
        %v2858 = vadd.f32 0.0, %v2857
        %v2859 = vpop.f32.mrb[0].mxu0
        %2860 = vdwg.mxu0
        %2861 = vrot.lane.b32.xlu0 %v944, 32
        %v2862 = vpop.permute.xlu0 %2861
        %2863 = vrot.lane.b32.xlu0 %v947, 32
        %v2864 = vpop.permute.xlu0 %2863
        %2865 = vrot.lane.b32.xlu0 %v950, 32
        %v2866 = vpop.permute.xlu0 %2865
        %2867 = vrot.lane.b32.xlu0 %v953, 32
        %v2868 = vpop.permute.xlu0 %2867
        %2869 = vrot.lane.b32.xlu0 %v945, 32
        %v2870 = vpop.permute.xlu0 %2869
        %2871 = vrot.lane.b32.xlu0 %v948, 32
        %v2872 = vpop.permute.xlu0 %2871
        %2873 = vrot.lane.b32.xlu0 %v951, 32
        %v2874 = vpop.permute.xlu0 %2873
        %2875 = vrot.lane.b32.xlu0 %v954, 32
        %v2876 = vpop.permute.xlu0 %2875
        %v2878 = vsel %vm956, %v2862, 0
        %v2881 = vsel %vm956, %v2864, 0
        %v2884 = vsel %vm956, %v2866, 0
        %v2887 = vsel %vm956, %v2868, 0
        %v2890 = vsel %vm956, %v2870, 0
        %v2893 = vsel %vm956, %v2872, 0
        %v2896 = vsel %vm956, %v2874, 0
        %v2899 = vsel %vm956, %v2876, 0
        %2901 = vmatprep.subr.bf16.mxu0 0
        %2902 = vmatpush1.bf16.xpose.msra.mxu0 %v2890
        %2903 = vmatprep.subr.bf16.mxu0 0
        %2904 = vmatpush1.bf16.xpose.msra.mxu0 %v2893
        %2905 = vmatprep.subr.bf16.mxu0 0
        %2906 = vmatpush1.bf16.xpose.msra.mxu0 %v2896
        %2907 = vmatprep.subr.bf16.mxu0 0
        %2908 = vmatpush1.bf16.xpose.msra.mxu0 %v2899
        %2909 = vmatprep.subr.bf16.mxu0 0
        %2910 = vmatpush1.bf16.xpose.msra.mxu0 0
        %2911 = vmatprep.subr.bf16.mxu0 0
        %2912 = vmatpush1.bf16.xpose.msra.mxu0 0
        %2913 = vmatprep.subr.bf16.mxu0 0
        %2914 = vmatpush1.bf16.xpose.msra.mxu0 0
        %2915 = vmatprep.subr.bf16.mxu0 0
        %2916 = vmatpush1.bf16.xpose.msra.mxu0 0
        %2917 = vmatprep.subr.bf16.mxu0 0
        %2918 = vmatpush1.bf16.xpose.msra.mxu0 0
        %2919 = vmatprep.subr.bf16.mxu0 0
        %2920 = vmatpush1.bf16.xpose.msra.mxu0 0
        %2921 = vmatprep.subr.bf16.mxu0 0
        %2922 = vmatpush1.bf16.xpose.msra.mxu0 0
        %2923 = vmatprep.subr.bf16.mxu0 0
        %2924 = vmatpush1.bf16.xpose.msra.mxu0 0
        %2925 = vmatprep.subr.bf16.mxu0 0
        %2926 = vmatpush1.bf16.xpose.msra.mxu0 0
        %2927 = vmatprep.subr.bf16.mxu0 0
        %2928 = vmatpush1.bf16.xpose.msra.mxu0 0
        %2929 = vmatprep.subr.bf16.mxu0 0
        %2930 = vmatpush1.bf16.xpose.msra.mxu0 0
        %2931 = vmatprep.subr.bf16.mxu0 0
        %2932 = vmatpush1.bf16.xpose.msra.mxu0 0
        %2933 = vmatprep.mubr.bf16.mxu0 0
        %2934 = vmatmul.mubr.bf16.gmra.mrb[0].mxu0 %v2878
        %v2935 = vpop.f32.mrb[0].mxu0
        %v2936 = vadd.f32 0.0, %v2935
        %v2937 = vpop.f32.mrb[0].mxu0
        %v2938 = vpop.f32.mrb[0].mxu0
        %v2939 = vadd.f32 0.0, %v2938
        %v2940 = vpop.f32.mrb[0].mxu0
        %2941 = vmatprep.mubr.bf16.mxu0 0
        %2942 = vmatmul.mubr.bf16.gmra.mrb[0].mxu0 %v2881
        %v2943 = vpop.f32.mrb[0].mxu0
        %v2944 = vadd.f32 0.0, %v2943
        %v2945 = vpop.f32.mrb[0].mxu0
        %v2946 = vpop.f32.mrb[0].mxu0
        %v2947 = vadd.f32 0.0, %v2946
        %v2948 = vpop.f32.mrb[0].mxu0
        %2949 = vmatprep.mubr.bf16.mxu0 0
        %2950 = vmatmul.mubr.bf16.gmra.mrb[0].mxu0 %v2884
        %v2951 = vpop.f32.mrb[0].mxu0
        %v2952 = vadd.f32 0.0, %v2951
        %v2953 = vpop.f32.mrb[0].mxu0
        %v2954 = vpop.f32.mrb[0].mxu0
        %v2955 = vadd.f32 0.0, %v2954
        %v2956 = vpop.f32.mrb[0].mxu0
        %2957 = vmatprep.mubr.bf16.mxu0 0
        %2958 = vmatmul.mubr.bf16.gmra.mrb[0].mxu0 %v2887
        %v2959 = vpop.f32.mrb[0].mxu0
        %v2960 = vadd.f32 0.0, %v2959
        %v2961 = vpop.f32.mrb[0].mxu0
        %v2962 = vpop.f32.mrb[0].mxu0
        %v2963 = vadd.f32 0.0, %v2962
        %v2964 = vpop.f32.mrb[0].mxu0
        %2965 = vdwg.mxu0
        %v2966 = vsel %vm1135, %v2831, -inf
        %2967 = vmax.xlane.f32.xlu0 %v2966
        %v2968 = vpop.xlane.xlu0 %2967
        %v2969 = vsel %vm1135, %v2834, -inf
        %2970 = vmax.xlane.f32.xlu0 %v2969
        %v2971 = vpop.xlane.xlu0 %2970
        %v2972 = vsel %vm1135, %v2839, -inf
        %2973 = vmax.xlane.f32.xlu0 %v2972
        %v2974 = vpop.xlane.xlu0 %2973
        %v2975 = vsel %vm1135, %v2842, -inf
        %2976 = vmax.xlane.f32.xlu0 %v2975
        %v2977 = vpop.xlane.xlu0 %2976
        %v2978 = vsel %vm1135, %v2847, -inf
        %2979 = vmax.xlane.f32.xlu0 %v2978
        %v2980 = vpop.xlane.xlu0 %2979
        %v2981 = vsel %vm1135, %v2850, -inf
        %2982 = vmax.xlane.f32.xlu0 %v2981
        %v2983 = vpop.xlane.xlu0 %2982
        %v2984 = vsel %vm1135, %v2855, -inf
        %2985 = vmax.xlane.f32.xlu0 %v2984
        %v2986 = vpop.xlane.xlu0 %2985
        %v2987 = vsel %vm1135, %v2858, -inf
        %2988 = vmax.xlane.f32.xlu0 %v2987
        %v2989 = vpop.xlane.xlu0 %2988
        %v2990 = vsel %vm1135, %v2936, -inf
        %2991 = vmax.xlane.f32.xlu0 %v2990
        %v2992 = vpop.xlane.xlu0 %2991
        %v2993 = vsel %vm1135, %v2939, -inf
        %2994 = vmax.xlane.f32.xlu0 %v2993
        %v2995 = vpop.xlane.xlu0 %2994
        %v2996 = vsel %vm1135, %v2944, -inf
        %2997 = vmax.xlane.f32.xlu0 %v2996
        %v2998 = vpop.xlane.xlu0 %2997
        %v2999 = vsel %vm1135, %v2947, -inf
        %3000 = vmax.xlane.f32.xlu0 %v2999
        %v3001 = vpop.xlane.xlu0 %3000
        %v3002 = vsel %vm1135, %v2952, -inf
        %3003 = vmax.xlane.f32.xlu0 %v3002
        %v3004 = vpop.xlane.xlu0 %3003
        %v3005 = vsel %vm1135, %v2955, -inf
        %3006 = vmax.xlane.f32.xlu0 %v3005
        %v3007 = vpop.xlane.xlu0 %3006
        %v3008 = vsel %vm1135, %v2960, -inf
        %3009 = vmax.xlane.f32.xlu0 %v3008
        %v3010 = vpop.xlane.xlu0 %3009
        %v3011 = vsel %vm1135, %v2963, -inf
        %3012 = vmax.xlane.f32.xlu0 %v3011
        %v3013 = vpop.xlane.xlu0 %3012
        %v3014 = vsub.f32 %v2831, %v2968
        %v3015 = vsub.f32 %v2834, %v2971
        %v3016 = vsub.f32 %v2839, %v2974
        %v3017 = vsub.f32 %v2842, %v2977
        %v3018 = vsub.f32 %v2847, %v2980
        %v3019 = vsub.f32 %v2850, %v2983
        %v3020 = vsub.f32 %v2855, %v2986
        %v3021 = vsub.f32 %v2858, %v2989
        %v3022 = vsub.f32 %v2936, %v2992
        %v3023 = vsub.f32 %v2939, %v2995
        %v3024 = vsub.f32 %v2944, %v2998
        %v3025 = vsub.f32 %v2947, %v3001
        %v3026 = vsub.f32 %v2952, %v3004
        %v3027 = vsub.f32 %v2955, %v3007
        %v3028 = vsub.f32 %v2960, %v3010
        %v3029 = vsub.f32 %v2963, %v3013
        %v3030 = vmul.f32 %v3014, 1.442695
        %v3031 = vpow.pop %v3030
        %v3032 = vmul.f32 %v3015, 1.442695
        %v3033 = vpow.pop %v3032
        %v3034 = vmul.f32 %v3016, 1.442695
        %v3035 = vpow.pop %v3034
        %v3036 = vmul.f32 %v3017, 1.442695
        %v3037 = vpow.pop %v3036
        %v3038 = vmul.f32 %v3018, 1.442695
        %v3039 = vpow.pop %v3038
        %v3040 = vmul.f32 %v3019, 1.442695
        %v3041 = vpow.pop %v3040
        %v3042 = vmul.f32 %v3020, 1.442695
        %v3043 = vpow.pop %v3042
        %v3044 = vmul.f32 %v3021, 1.442695
        %v3045 = vpow.pop %v3044
        %v3046 = vmul.f32 %v3022, 1.442695
        %v3047 = vpow.pop %v3046
        %v3048 = vmul.f32 %v3023, 1.442695
        %v3049 = vpow.pop %v3048
        %v3050 = vmul.f32 %v3024, 1.442695
        %v3051 = vpow.pop %v3050
        %v3052 = vmul.f32 %v3025, 1.442695
        %v3053 = vpow.pop %v3052
        %v3054 = vmul.f32 %v3026, 1.442695
        %v3055 = vpow.pop %v3054
        %v3056 = vmul.f32 %v3027, 1.442695
        %v3057 = vpow.pop %v3056
        %v3058 = vmul.f32 %v3028, 1.442695
        %v3059 = vpow.pop %v3058
        %v3060 = vmul.f32 %v3029, 1.442695
        %v3061 = vpow.pop %v3060
        %v3062 = vsel %vm1135, %v3031, 0.0
        %3063 = vadd.xlane.f32.xlu0 %v3062
        %v3064 = vpop.xlane.xlu0 %3063
        %v3065 = vsel %vm1135, %v3033, 0.0
        %3066 = vadd.xlane.f32.xlu0 %v3065
        %v3067 = vpop.xlane.xlu0 %3066
        %v3068 = vsel %vm1135, %v3035, 0.0
        %3069 = vadd.xlane.f32.xlu0 %v3068
        %v3070 = vpop.xlane.xlu0 %3069
        %v3071 = vsel %vm1135, %v3037, 0.0
        %3072 = vadd.xlane.f32.xlu0 %v3071
        %v3073 = vpop.xlane.xlu0 %3072
        %v3074 = vsel %vm1135, %v3039, 0.0
        %3075 = vadd.xlane.f32.xlu0 %v3074
        %v3076 = vpop.xlane.xlu0 %3075
        %v3077 = vsel %vm1135, %v3041, 0.0
        %3078 = vadd.xlane.f32.xlu0 %v3077
        %v3079 = vpop.xlane.xlu0 %3078
        %v3080 = vsel %vm1135, %v3043, 0.0
        %3081 = vadd.xlane.f32.xlu0 %v3080
        %v3082 = vpop.xlane.xlu0 %3081
        %v3083 = vsel %vm1135, %v3045, 0.0
        %3084 = vadd.xlane.f32.xlu0 %v3083
        %v3085 = vpop.xlane.xlu0 %3084
        %v3086 = vsel %vm1135, %v3047, 0.0
        %3087 = vadd.xlane.f32.xlu0 %v3086
        %v3088 = vpop.xlane.xlu0 %3087
        %v3089 = vsel %vm1135, %v3049, 0.0
        %3090 = vadd.xlane.f32.xlu0 %v3089
        %v3091 = vpop.xlane.xlu0 %3090
        %v3092 = vsel %vm1135, %v3051, 0.0
        %3093 = vadd.xlane.f32.xlu0 %v3092
        %v3094 = vpop.xlane.xlu0 %3093
        %v3095 = vsel %vm1135, %v3053, 0.0
        %3096 = vadd.xlane.f32.xlu0 %v3095
        %v3097 = vpop.xlane.xlu0 %3096
        %v3098 = vsel %vm1135, %v3055, 0.0
        %3099 = vadd.xlane.f32.xlu0 %v3098
        %v3100 = vpop.xlane.xlu0 %3099
        %v3101 = vsel %vm1135, %v3057, 0.0
        %3102 = vadd.xlane.f32.xlu0 %v3101
        %v3103 = vpop.xlane.xlu0 %3102
        %v3104 = vsel %vm1135, %v3059, 0.0
        %3105 = vadd.xlane.f32.xlu0 %v3104
        %v3106 = vpop.xlane.xlu0 %3105
        %v3107 = vsel %vm1135, %v3061, 0.0
        %3108 = vadd.xlane.f32.xlu0 %v3107
        %v3109 = vpop.xlane.xlu0 %3108
        %v3110 = vrcp.pop %v3064
        %v3111 = vrcp.pop %v3067
        %v3112 = vrcp.pop %v3070
        %v3113 = vrcp.pop %v3073
        %v3114 = vrcp.pop %v3076
        %v3115 = vrcp.pop %v3079
        %v3116 = vrcp.pop %v3082
        %v3117 = vrcp.pop %v3085
        %v3118 = vrcp.pop %v3088
        %v3119 = vrcp.pop %v3091
        %v3120 = vrcp.pop %v3094
        %v3121 = vrcp.pop %v3097
        %v3122 = vrcp.pop %v3100
        %v3123 = vrcp.pop %v3103
        %v3124 = vrcp.pop %v3106
        %v3125 = vrcp.pop %v3109
        %v3126 = vmul.f32 %v3031, %v3110
        %v3127 = vmul.f32 %v3033, %v3111
        %v3128 = vmul.f32 %v3035, %v3112
        %v3129 = vmul.f32 %v3037, %v3113
        %v3130 = vmul.f32 %v3039, %v3114
        %v3131 = vmul.f32 %v3041, %v3115
        %v3132 = vmul.f32 %v3043, %v3116
        %v3133 = vmul.f32 %v3045, %v3117
        %v3134 = vmul.f32 %v3047, %v3118
        %v3135 = vmul.f32 %v3049, %v3119
        %v3136 = vmul.f32 %v3051, %v3120
        %v3137 = vmul.f32 %v3053, %v3121
        %v3138 = vmul.f32 %v3055, %v3122
        %v3139 = vmul.f32 %v3057, %v3123
        %v3140 = vmul.f32 %v3059, %v3124
        %v3141 = vmul.f32 %v3061, %v3125
        %v3142 = vpack.c.bf16 %v3127, %v3126
        %v3143 = vpack.c.bf16 %v3129, %v3128
        %v3144 = vpack.c.bf16 %v3131, %v3130
        %v3145 = vpack.c.bf16 %v3133, %v3132
        %v3146 = vpack.c.bf16 %v3135, %v3134
        %v3147 = vpack.c.bf16 %v3137, %v3136
        %v3148 = vpack.c.bf16 %v3139, %v3138
        %v3149 = vpack.c.bf16 %v3141, %v3140
        %3150 = vrot.lane.b32.xlu0 %v934, 32
        %v3151 = vpop.permute.xlu0 %3150
        %3152 = vrot.lane.b32.xlu0 %v937, 32
        %v3153 = vpop.permute.xlu0 %3152
        %3154 = vrot.lane.b32.xlu0 %v940, 32
        %v3155 = vpop.permute.xlu0 %3154
        %3156 = vrot.lane.b32.xlu0 %v943, 32
        %v3157 = vpop.permute.xlu0 %3156
        %v3163 = vsel %vm1135, %v3142, 0
        %v3166 = vsel %vm1135, %v3143, 0
        %v3169 = vsel %vm1135, %v3144, 0
        %v3172 = vsel %vm1135, %v3145, 0
        %3174 = vmatprep.subr.bf16.mxu0 0
        %3175 = vmatpush1.bf16.msra.mxu0 %v3151
        %3176 = vmatprep.subr.bf16.mxu0 0
        %3177 = vmatpush1.bf16.msra.mxu0 %v3153
        %3178 = vmatprep.subr.bf16.mxu0 0
        %3179 = vmatpush1.bf16.msra.mxu0 %v3155
        %3180 = vmatprep.subr.bf16.mxu0 0
        %3181 = vmatpush1.bf16.msra.mxu0 %v3157
        %3182 = vmatprep.subr.bf16.mxu0 0
        %3183 = vmatpush1.bf16.msra.mxu0 0
        %3184 = vmatprep.subr.bf16.mxu0 0
        %3185 = vmatpush1.bf16.msra.mxu0 0
        %3186 = vmatprep.subr.bf16.mxu0 0
        %3187 = vmatpush1.bf16.msra.mxu0 0
        %3188 = vmatprep.subr.bf16.mxu0 0
        %3189 = vmatpush1.bf16.msra.mxu0 0
        %3190 = vmatprep.subr.bf16.mxu0 0
        %3191 = vmatpush1.bf16.msra.mxu0 0
        %3192 = vmatprep.subr.bf16.mxu0 0
        %3193 = vmatpush1.bf16.msra.mxu0 0
        %3194 = vmatprep.subr.bf16.mxu0 0
        %3195 = vmatpush1.bf16.msra.mxu0 0
        %3196 = vmatprep.subr.bf16.mxu0 0
        %3197 = vmatpush1.bf16.msra.mxu0 0
        %3198 = vmatprep.subr.bf16.mxu0 0
        %3199 = vmatpush1.bf16.msra.mxu0 0
        %3200 = vmatprep.subr.bf16.mxu0 0
        %3201 = vmatpush1.bf16.msra.mxu0 0
        %3202 = vmatprep.subr.bf16.mxu0 0
        %3203 = vmatpush1.bf16.msra.mxu0 0
        %3204 = vmatprep.subr.bf16.mxu0 0
        %3205 = vmatpush1.bf16.msra.mxu0 0
        %3206 = vmatprep.mubr.bf16.mxu0 0
        %3207 = vmatmul.mubr.bf16.gmra.mrb[0].mxu0 %v3163
        %v3208 = vpop.f32.mrb[0].mxu0
        %v3209 = vadd.f32 0.0, %v3208
        %v3210 = vpop.f32.mrb[0].mxu0
        %v3211 = vpop.f32.mrb[0].mxu0
        %v3212 = vadd.f32 0.0, %v3211
        %v3213 = vpop.f32.mrb[0].mxu0
        %3214 = vmatprep.mubr.bf16.mxu0 0
        %3215 = vmatmul.mubr.bf16.gmra.mrb[0].mxu0 %v3166
        %v3216 = vpop.f32.mrb[0].mxu0
        %v3217 = vadd.f32 0.0, %v3216
        %v3218 = vpop.f32.mrb[0].mxu0
        %v3219 = vpop.f32.mrb[0].mxu0
        %v3220 = vadd.f32 0.0, %v3219
        %v3221 = vpop.f32.mrb[0].mxu0
        %3222 = vmatprep.mubr.bf16.mxu0 0
        %3223 = vmatmul.mubr.bf16.gmra.mrb[0].mxu0 %v3169
        %v3224 = vpop.f32.mrb[0].mxu0
        %v3225 = vadd.f32 0.0, %v3224
        %v3226 = vpop.f32.mrb[0].mxu0
        %v3227 = vpop.f32.mrb[0].mxu0
        %v3228 = vadd.f32 0.0, %v3227
        %v3229 = vpop.f32.mrb[0].mxu0
        %3230 = vmatprep.mubr.bf16.mxu0 0
        %3231 = vmatmul.mubr.bf16.gmra.mrb[0].mxu0 %v3172
        %v3232 = vpop.f32.mrb[0].mxu0
        %v3233 = vadd.f32 0.0, %v3232
        %v3234 = vpop.f32.mrb[0].mxu0
        %v3235 = vpop.f32.mrb[0].mxu0
        %v3236 = vadd.f32 0.0, %v3235
        %v3237 = vpop.f32.mrb[0].mxu0
        %3238 = vdwg.mxu0
        %3239 = vrot.lane.b32.xlu0 %v946, 32
        %v3240 = vpop.permute.xlu0 %3239
        %3241 = vrot.lane.b32.xlu0 %v949, 32
        %v3242 = vpop.permute.xlu0 %3241
        %3243 = vrot.lane.b32.xlu0 %v952, 32
        %v3244 = vpop.permute.xlu0 %3243
        %3245 = vrot.lane.b32.xlu0 %v955, 32
        %v3246 = vpop.permute.xlu0 %3245
        %v3252 = vsel %vm1135, %v3146, 0
        %v3255 = vsel %vm1135, %v3147, 0
        %v3258 = vsel %vm1135, %v3148, 0
        %v3261 = vsel %vm1135, %v3149, 0
        %3263 = vmatprep.subr.bf16.mxu0 0
        %3264 = vmatpush1.bf16.msra.mxu0 %v3240
        %3265 = vmatprep.subr.bf16.mxu0 0
        %3266 = vmatpush1.bf16.msra.mxu0 %v3242
        %3267 = vmatprep.subr.bf16.mxu0 0
        %3268 = vmatpush1.bf16.msra.mxu0 %v3244
        %3269 = vmatprep.subr.bf16.mxu0 0
        %3270 = vmatpush1.bf16.msra.mxu0 %v3246
        %3271 = vmatprep.subr.bf16.mxu0 0
        %3272 = vmatpush1.bf16.msra.mxu0 0
        %3273 = vmatprep.subr.bf16.mxu0 0
        %3274 = vmatpush1.bf16.msra.mxu0 0
        %3275 = vmatprep.subr.bf16.mxu0 0
        %3276 = vmatpush1.bf16.msra.mxu0 0
        %3277 = vmatprep.subr.bf16.mxu0 0
        %3278 = vmatpush1.bf16.msra.mxu0 0
        %3279 = vmatprep.subr.bf16.mxu0 0
        %3280 = vmatpush1.bf16.msra.mxu0 0
        %3281 = vmatprep.subr.bf16.mxu0 0
        %3282 = vmatpush1.bf16.msra.mxu0 0
        %3283 = vmatprep.subr.bf16.mxu0 0
        %3284 = vmatpush1.bf16.msra.mxu0 0
        %3285 = vmatprep.subr.bf16.mxu0 0
        %3286 = vmatpush1.bf16.msra.mxu0 0
        %3287 = vmatprep.subr.bf16.mxu0 0
        %3288 = vmatpush1.bf16.msra.mxu0 0
        %3289 = vmatprep.subr.bf16.mxu0 0
        %3290 = vmatpush1.bf16.msra.mxu0 0
        %3291 = vmatprep.subr.bf16.mxu0 0
        %3292 = vmatpush1.bf16.msra.mxu0 0
        %3293 = vmatprep.subr.bf16.mxu0 0
        %3294 = vmatpush1.bf16.msra.mxu0 0
        %3295 = vmatprep.mubr.bf16.mxu0 0
        %3296 = vmatmul.mubr.bf16.gmra.mrb[0].mxu0 %v3252
        %v3297 = vpop.f32.mrb[0].mxu0
        %v3298 = vadd.f32 0.0, %v3297
        %v3299 = vpop.f32.mrb[0].mxu0
        %v3300 = vpop.f32.mrb[0].mxu0
        %v3301 = vadd.f32 0.0, %v3300
        %v3302 = vpop.f32.mrb[0].mxu0
        %3303 = vmatprep.mubr.bf16.mxu0 0
        %3304 = vmatmul.mubr.bf16.gmra.mrb[0].mxu0 %v3255
        %v3305 = vpop.f32.mrb[0].mxu0
        %v3306 = vadd.f32 0.0, %v3305
        %v3307 = vpop.f32.mrb[0].mxu0
        %v3308 = vpop.f32.mrb[0].mxu0
        %v3309 = vadd.f32 0.0, %v3308
        %v3310 = vpop.f32.mrb[0].mxu0
        %3311 = vmatprep.mubr.bf16.mxu0 0
        %3312 = vmatmul.mubr.bf16.gmra.mrb[0].mxu0 %v3258
        %v3313 = vpop.f32.mrb[0].mxu0
        %v3314 = vadd.f32 0.0, %v3313
        %v3315 = vpop.f32.mrb[0].mxu0
        %v3316 = vpop.f32.mrb[0].mxu0
        %v3317 = vadd.f32 0.0, %v3316
        %v3318 = vpop.f32.mrb[0].mxu0
        %3319 = vmatprep.mubr.bf16.mxu0 0
        %3320 = vmatmul.mubr.bf16.gmra.mrb[0].mxu0 %v3261
        %v3321 = vpop.f32.mrb[0].mxu0
        %v3322 = vadd.f32 0.0, %v3321
        %v3323 = vpop.f32.mrb[0].mxu0
        %v3324 = vpop.f32.mrb[0].mxu0
        %v3325 = vadd.f32 0.0, %v3324
        %v3326 = vpop.f32.mrb[0].mxu0
        %3327 = vdwg.mxu0
        %v3328 = vpack.c.bf16 %v3212, %v3209
        %v3329 = vpack.c.bf16 %v3220, %v3217
        %v3330 = vpack.c.bf16 %v3228, %v3225
        %v3331 = vpack.c.bf16 %v3236, %v3233
        %v3332 = vpack.c.bf16 %v3301, %v3298
        %v3333 = vpack.c.bf16 %v3309, %v3306
        %v3334 = vpack.c.bf16 %v3317, %v3314
        %v3335 = vpack.c.bf16 %v3325, %v3322
        %3344 = vrot.lane.b32.xlu0 %v3328, 96
        %v3345 = vpop.permute.xlu0 %3344
        %3346 = vrot.lane.b32.xlu0 %v3329, 96
        %v3347 = vpop.permute.xlu0 %3346
        %3348 = vrot.lane.b32.xlu0 %v3330, 96
        %v3349 = vpop.permute.xlu0 %3348
        %3350 = vrot.lane.b32.xlu0 %v3331, 96
        %v3351 = vpop.permute.xlu0 %3350
        %3352 = vrot.lane.b32.xlu0 %v3332, 96
        %v3353 = vpop.permute.xlu0 %3352
        %3354 = vrot.lane.b32.xlu0 %v3333, 96
        %v3355 = vpop.permute.xlu0 %3354
        %3356 = vrot.lane.b32.xlu0 %v3334, 96
        %v3357 = vpop.permute.xlu0 %3356
        %3358 = vrot.lane.b32.xlu0 %v3335, 96
        %v3359 = vpop.permute.xlu0 %3358
        %vm3368 = vcmask 1048320
        %3369 = vst.msk [vmem:[#allocation2] sm:$0xff] %vm3368, %v3345
        %3370 = vst.msk [vmem:[#allocation2 + $0x8] sm:$0xff] %vm3368, %v3347
        %3371 = vst.msk [vmem:[#allocation2 + $0x10] sm:$0xff] %vm3368, %v3349
        %3372 = vst.msk [vmem:[#allocation2 + $0x18] sm:$0xff] %vm3368, %v3351
        %3373 = vst.msk [vmem:[#allocation2 + $0x20] sm:$0xff] %vm3368, %v3353
        %3374 = vst.msk [vmem:[#allocation2 + $0x28] sm:$0xff] %vm3368, %v3355
        %3375 = vst.msk [vmem:[#allocation2 + $0x30] sm:$0xff] %vm3368, %v3357
        %3376 = vst.msk [vmem:[#allocation2 + $0x38] sm:$0xff] %vm3368, %v3359
        %v3377 = vld [vmem:[#allocation2] sm:$0xff]
        %v3378 = vld [vmem:[#allocation2 + $0x8] sm:$0xff]
        %v3379 = vld [vmem:[#allocation2 + $0x10] sm:$0xff]
        %v3380 = vld [vmem:[#allocation2 + $0x18] sm:$0xff]
        %v3381 = vld [vmem:[#allocation2 + $0x20] sm:$0xff]
        %v3382 = vld [vmem:[#allocation2 + $0x28] sm:$0xff]
        %v3383 = vld [vmem:[#allocation2 + $0x30] sm:$0xff]
        %v3384 = vld [vmem:[#allocation2 + $0x38] sm:$0xff]
        %v3385 = vld [vmem:[#allocation8] sm:$0xf]
        %v3386 = vld [vmem:[#allocation8 + $0x4] sm:$0xf]
        %v3387 = vld [vmem:[#allocation8 + $0x8] sm:$0xf]
        %v3388 = vld [vmem:[#allocation8 + $0xc] sm:$0xf]
        %v3389 = vld [vmem:[#allocation8 + $0x10] sm:$0xf]
        %v3390 = vld [vmem:[#allocation8 + $0x14] sm:$0xf]
        %v3391 = vld [vmem:[#allocation8 + $0x18] sm:$0xf]
        %v3392 = vld [vmem:[#allocation8 + $0x1c] sm:$0xf]
        %v3393 = vld [vmem:[#allocation8 + $0x20] sm:$0xf]
        %v3394 = vld [vmem:[#allocation8 + $0x24] sm:$0xf]
        %v3395 = vld [vmem:[#allocation8 + $0x28] sm:$0xf]
        %v3396 = vld [vmem:[#allocation8 + $0x2c] sm:$0xf]
        %v3397 = vld [vmem:[#allocation8 + $0x30] sm:$0xf]
        %v3398 = vld [vmem:[#allocation8 + $0x34] sm:$0xf]
        %v3399 = vld [vmem:[#allocation8 + $0x38] sm:$0xf]
        %v3400 = vld [vmem:[#allocation8 + $0x3c] sm:$0xf]
        %v3401 = vld [vmem:[%s4] sm:$0x1]
        %v3403 = vlaneseq
        %v3404 = vshrl.u32 %v3403, 7
        %v3405 = vsub.s32 0, %v3404
        %v3406 = vrot.slane %v3401, %v3405
        %v3424 = vunpack.c.l.b16 %v3385
        %v3425 = vunpack.c.l.b16 %v3386
        %v3426 = vunpack.c.l.b16 %v3387
        %v3427 = vunpack.c.l.b16 %v3388
        %v3428 = vunpack.c.l.b16 %v3389
        %v3429 = vunpack.c.l.b16 %v3390
        %v3430 = vunpack.c.l.b16 %v3391
        %v3431 = vunpack.c.l.b16 %v3392
        %v3432 = vunpack.c.l.b16 %v3393
        %v3433 = vunpack.c.l.b16 %v3394
        %v3434 = vunpack.c.l.b16 %v3395
        %v3435 = vunpack.c.l.b16 %v3396
        %v3436 = vunpack.c.l.b16 %v3397
        %v3437 = vunpack.c.l.b16 %v3398
        %v3438 = vunpack.c.l.b16 %v3399
        %v3439 = vunpack.c.l.b16 %v3400
        %v3440 = vpack.c.b16 %v3425, %v3424
        %v3441 = vpack.c.b16 %v3427, %v3426
        %v3442 = vpack.c.b16 %v3429, %v3428
        %v3443 = vpack.c.b16 %v3431, %v3430
        %v3444 = vpack.c.b16 %v3433, %v3432
        %v3445 = vpack.c.b16 %v3435, %v3434
        %v3446 = vpack.c.b16 %v3437, %v3436
        %v3447 = vpack.c.b16 %v3439, %v3438
        %3456 = vmatprep.subr.bf16.mxu0 0
        %3457 = vmatpush1.bf16.msra.mxu0 %v3440
        %3458 = vmatprep.subr.bf16.mxu0 0
        %3459 = vmatpush1.bf16.msra.mxu0 %v3441
        %3460 = vmatprep.subr.bf16.mxu0 0
        %3461 = vmatpush1.bf16.msra.mxu0 %v3442
        %3462 = vmatprep.subr.bf16.mxu0 0
        %3463 = vmatpush1.bf16.msra.mxu0 %v3443
        %3464 = vmatprep.subr.bf16.mxu0 0
        %3465 = vmatpush1.bf16.msra.mxu0 %v3444
        %3466 = vmatprep.subr.bf16.mxu0 0
        %3467 = vmatpush1.bf16.msra.mxu0 %v3445
        %3468 = vmatprep.subr.bf16.mxu0 0
        %3469 = vmatpush1.bf16.msra.mxu0 %v3446
        %3470 = vmatprep.subr.bf16.mxu0 0
        %3471 = vmatpush1.bf16.msra.mxu0 %v3447
        %3472 = vmatprep.subr.bf16.mxu0 0
        %3473 = vmatpush1.bf16.msra.mxu0 0
        %3474 = vmatprep.subr.bf16.mxu0 0
        %3475 = vmatpush1.bf16.msra.mxu0 0
        %3476 = vmatprep.subr.bf16.mxu0 0
        %3477 = vmatpush1.bf16.msra.mxu0 0
        %3478 = vmatprep.subr.bf16.mxu0 0
        %3479 = vmatpush1.bf16.msra.mxu0 0
        %3480 = vmatprep.subr.bf16.mxu0 0
        %3481 = vmatpush1.bf16.msra.mxu0 0
        %3482 = vmatprep.subr.bf16.mxu0 0
        %3483 = vmatpush1.bf16.msra.mxu0 0
        %3484 = vmatprep.subr.bf16.mxu0 0
        %3485 = vmatpush1.bf16.msra.mxu0 0
        %3486 = vmatprep.subr.bf16.mxu0 0
        %3487 = vmatpush1.bf16.msra.mxu0 0
        %3488 = vmatprep.mubr.bf16.mxu0 0
        %3489 = vmatmul.mubr.bf16.gmra.mrb[0].mxu0 %v3377
        %v3490 = vpop.f32.mrb[0].mxu0
        %v3491 = vadd.f32 %v3406, %v3490
        %v3492 = vpop.f32.mrb[0].mxu0
        %v3493 = vpop.f32.mrb[0].mxu0
        %v3494 = vadd.f32 %v3406, %v3493
        %v3495 = vpop.f32.mrb[0].mxu0
        %3496 = vmatprep.mubr.bf16.mxu0 0
        %3497 = vmatmul.mubr.bf16.gmra.mrb[0].mxu0 %v3378
        %v3498 = vpop.f32.mrb[0].mxu0
        %v3499 = vadd.f32 %v3406, %v3498
        %v3500 = vpop.f32.mrb[0].mxu0
        %v3501 = vpop.f32.mrb[0].mxu0
        %v3502 = vadd.f32 %v3406, %v3501
        %v3503 = vpop.f32.mrb[0].mxu0
        %3504 = vmatprep.mubr.bf16.mxu0 0
        %3505 = vmatmul.mubr.bf16.gmra.mrb[0].mxu0 %v3379
        %v3506 = vpop.f32.mrb[0].mxu0
        %v3507 = vadd.f32 %v3406, %v3506
        %v3508 = vpop.f32.mrb[0].mxu0
        %v3509 = vpop.f32.mrb[0].mxu0
        %v3510 = vadd.f32 %v3406, %v3509
        %v3511 = vpop.f32.mrb[0].mxu0
        %3512 = vmatprep.mubr.bf16.mxu0 0
        %3513 = vmatmul.mubr.bf16.gmra.mrb[0].mxu0 %v3380
        %v3514 = vpop.f32.mrb[0].mxu0
        %v3515 = vadd.f32 %v3406, %v3514
        %v3516 = vpop.f32.mrb[0].mxu0
        %v3517 = vpop.f32.mrb[0].mxu0
        %v3518 = vadd.f32 %v3406, %v3517
        %v3519 = vpop.f32.mrb[0].mxu0
        %3520 = vmatprep.mubr.bf16.mxu0 0
        %3521 = vmatmul.mubr.bf16.gmra.mrb[0].mxu0 %v3381
        %v3522 = vpop.f32.mrb[0].mxu0
        %v3523 = vadd.f32 %v3406, %v3522
        %v3524 = vpop.f32.mrb[0].mxu0
        %v3525 = vpop.f32.mrb[0].mxu0
        %v3526 = vadd.f32 %v3406, %v3525
        %v3527 = vpop.f32.mrb[0].mxu0
        %3528 = vmatprep.mubr.bf16.mxu0 0
        %3529 = vmatmul.mubr.bf16.gmra.mrb[0].mxu0 %v3382
        %v3530 = vpop.f32.mrb[0].mxu0
        %v3531 = vadd.f32 %v3406, %v3530
        %v3532 = vpop.f32.mrb[0].mxu0
        %v3533 = vpop.f32.mrb[0].mxu0
        %v3534 = vadd.f32 %v3406, %v3533
        %v3535 = vpop.f32.mrb[0].mxu0
        %3536 = vmatprep.mubr.bf16.mxu0 0
        %3537 = vmatmul.mubr.bf16.gmra.mrb[0].mxu0 %v3383
        %v3538 = vpop.f32.mrb[0].mxu0
        %v3539 = vadd.f32 %v3406, %v3538
        %v3540 = vpop.f32.mrb[0].mxu0
        %v3541 = vpop.f32.mrb[0].mxu0
        %v3542 = vadd.f32 %v3406, %v3541
        %v3543 = vpop.f32.mrb[0].mxu0
        %3544 = vmatprep.mubr.bf16.mxu0 0
        %3545 = vmatmul.mubr.bf16.gmra.mrb[0].mxu0 %v3384
        %v3546 = vpop.f32.mrb[0].mxu0
        %v3547 = vadd.f32 %v3406, %v3546
        %v3548 = vpop.f32.mrb[0].mxu0
        %v3549 = vpop.f32.mrb[0].mxu0
        %v3550 = vadd.f32 %v3406, %v3549
        %v3551 = vpop.f32.mrb[0].mxu0
        %3552 = vdwg.mxu0
        %v3553 = vadd.f32 %v521, %v3491
        %v3554 = vadd.f32 %v522, %v3494
        %v3555 = vadd.f32 %v523, %v3499
        %v3556 = vadd.f32 %v524, %v3502
        %v3557 = vadd.f32 %v525, %v3507
        %v3558 = vadd.f32 %v526, %v3510
        %v3559 = vadd.f32 %v527, %v3515
        %v3560 = vadd.f32 %v528, %v3518
        %v3561 = vadd.f32 %v529, %v3523
        %v3562 = vadd.f32 %v530, %v3526
        %v3563 = vadd.f32 %v531, %v3531
        %v3564 = vadd.f32 %v532, %v3534
        %v3565 = vadd.f32 %v533, %v3539
        %v3566 = vadd.f32 %v534, %v3542
        %v3567 = vadd.f32 %v535, %v3547
        %v3568 = vadd.f32 %v536, %v3550
        %v3569 = vld [vmem:[%s5] sm:$0x1]
        %v3570 = vld [vmem:[%s6] sm:$0x1]
        %3571 = vadd.xlane.f32.xlu0 %v3553
        %v3572 = vpop.xlane.xlu0 %3571
        %3573 = vadd.xlane.f32.xlu0 %v3554
        %v3574 = vpop.xlane.xlu0 %3573
        %3575 = vadd.xlane.f32.xlu0 %v3555
        %v3576 = vpop.xlane.xlu0 %3575
        %3577 = vadd.xlane.f32.xlu0 %v3556
        %v3578 = vpop.xlane.xlu0 %3577
        %3579 = vadd.xlane.f32.xlu0 %v3557
        %v3580 = vpop.xlane.xlu0 %3579
        %3581 = vadd.xlane.f32.xlu0 %v3558
        %v3582 = vpop.xlane.xlu0 %3581
        %3583 = vadd.xlane.f32.xlu0 %v3559
        %v3584 = vpop.xlane.xlu0 %3583
        %3585 = vadd.xlane.f32.xlu0 %v3560
        %v3586 = vpop.xlane.xlu0 %3585
        %3587 = vadd.xlane.f32.xlu0 %v3561
        %v3588 = vpop.xlane.xlu0 %3587
        %3589 = vadd.xlane.f32.xlu0 %v3562
        %v3590 = vpop.xlane.xlu0 %3589
        %3591 = vadd.xlane.f32.xlu0 %v3563
        %v3592 = vpop.xlane.xlu0 %3591
        %3593 = vadd.xlane.f32.xlu0 %v3564
        %v3594 = vpop.xlane.xlu0 %3593
        %3595 = vadd.xlane.f32.xlu0 %v3565
        %v3596 = vpop.xlane.xlu0 %3595
        %3597 = vadd.xlane.f32.xlu0 %v3566
        %v3598 = vpop.xlane.xlu0 %3597
        %3599 = vadd.xlane.f32.xlu0 %v3567
        %v3600 = vpop.xlane.xlu0 %3599
        %3601 = vadd.xlane.f32.xlu0 %v3568
        %v3602 = vpop.xlane.xlu0 %3601
        %v3603 = vrcp.pop 128.0
        %v3604 = vmul.f32 %v3572, %v3603
        %v3605 = vmul.f32 %v3574, %v3603
        %v3606 = vmul.f32 %v3576, %v3603
        %v3607 = vmul.f32 %v3578, %v3603
        %v3608 = vmul.f32 %v3580, %v3603
        %v3609 = vmul.f32 %v3582, %v3603
        %v3610 = vmul.f32 %v3584, %v3603
        %v3611 = vmul.f32 %v3586, %v3603
        %v3612 = vmul.f32 %v3588, %v3603
        %v3613 = vmul.f32 %v3590, %v3603
        %v3614 = vmul.f32 %v3592, %v3603
        %v3615 = vmul.f32 %v3594, %v3603
        %v3616 = vmul.f32 %v3596, %v3603
        %v3617 = vmul.f32 %v3598, %v3603
        %v3618 = vmul.f32 %v3600, %v3603
        %v3619 = vmul.f32 %v3602, %v3603
        %v3620 = vsub.f32 %v3553, %v3604
        %v3621 = vsub.f32 %v3554, %v3605
        %v3622 = vsub.f32 %v3555, %v3606
        %v3623 = vsub.f32 %v3556, %v3607
        %v3624 = vsub.f32 %v3557, %v3608
        %v3625 = vsub.f32 %v3558, %v3609
        %v3626 = vsub.f32 %v3559, %v3610
        %v3627 = vsub.f32 %v3560, %v3611
        %v3628 = vsub.f32 %v3561, %v3612
        %v3629 = vsub.f32 %v3562, %v3613
        %v3630 = vsub.f32 %v3563, %v3614
        %v3631 = vsub.f32 %v3564, %v3615
        %v3632 = vsub.f32 %v3565, %v3616
        %v3633 = vsub.f32 %v3566, %v3617
        %v3634 = vsub.f32 %v3567, %v3618
        %v3635 = vsub.f32 %v3568, %v3619
        %v3636 = vmul.f32 %v3620, %v3620
        %v3637 = vmul.f32 %v3621, %v3621
        %v3638 = vmul.f32 %v3622, %v3622
        %v3639 = vmul.f32 %v3623, %v3623
        %v3640 = vmul.f32 %v3624, %v3624
        %v3641 = vmul.f32 %v3625, %v3625
        %v3642 = vmul.f32 %v3626, %v3626
        %v3643 = vmul.f32 %v3627, %v3627
        %v3644 = vmul.f32 %v3628, %v3628
        %v3645 = vmul.f32 %v3629, %v3629
        %v3646 = vmul.f32 %v3630, %v3630
        %v3647 = vmul.f32 %v3631, %v3631
        %v3648 = vmul.f32 %v3632, %v3632
        %v3649 = vmul.f32 %v3633, %v3633
        %v3650 = vmul.f32 %v3634, %v3634
        %v3651 = vmul.f32 %v3635, %v3635
        %3652 = vadd.xlane.f32.xlu0 %v3636
        %v3653 = vpop.xlane.xlu0 %3652
        %3654 = vadd.xlane.f32.xlu0 %v3637
        %v3655 = vpop.xlane.xlu0 %3654
        %3656 = vadd.xlane.f32.xlu0 %v3638
        %v3657 = vpop.xlane.xlu0 %3656
        %3658 = vadd.xlane.f32.xlu0 %v3639
        %v3659 = vpop.xlane.xlu0 %3658
        %3660 = vadd.xlane.f32.xlu0 %v3640
        %v3661 = vpop.xlane.xlu0 %3660
        %3662 = vadd.xlane.f32.xlu0 %v3641
        %v3663 = vpop.xlane.xlu0 %3662
        %3664 = vadd.xlane.f32.xlu0 %v3642
        %v3665 = vpop.xlane.xlu0 %3664
        %3666 = vadd.xlane.f32.xlu0 %v3643
        %v3667 = vpop.xlane.xlu0 %3666
        %3668 = vadd.xlane.f32.xlu0 %v3644
        %v3669 = vpop.xlane.xlu0 %3668
        %3670 = vadd.xlane.f32.xlu0 %v3645
        %v3671 = vpop.xlane.xlu0 %3670
        %3672 = vadd.xlane.f32.xlu0 %v3646
        %v3673 = vpop.xlane.xlu0 %3672
        %3674 = vadd.xlane.f32.xlu0 %v3647
        %v3675 = vpop.xlane.xlu0 %3674
        %3676 = vadd.xlane.f32.xlu0 %v3648
        %v3677 = vpop.xlane.xlu0 %3676
        %3678 = vadd.xlane.f32.xlu0 %v3649
        %v3679 = vpop.xlane.xlu0 %3678
        %3680 = vadd.xlane.f32.xlu0 %v3650
        %v3681 = vpop.xlane.xlu0 %3680
        %3682 = vadd.xlane.f32.xlu0 %v3651
        %v3683 = vpop.xlane.xlu0 %3682
        %v3684 = vmul.f32 %v3653, %v3603
        %v3685 = vmul.f32 %v3655, %v3603
        %v3686 = vmul.f32 %v3657, %v3603
        %v3687 = vmul.f32 %v3659, %v3603
        %v3688 = vmul.f32 %v3661, %v3603
        %v3689 = vmul.f32 %v3663, %v3603
        %v3690 = vmul.f32 %v3665, %v3603
        %v3691 = vmul.f32 %v3667, %v3603
        %v3692 = vmul.f32 %v3669, %v3603
        %v3693 = vmul.f32 %v3671, %v3603
        %v3694 = vmul.f32 %v3673, %v3603
        %v3695 = vmul.f32 %v3675, %v3603
        %v3696 = vmul.f32 %v3677, %v3603
        %v3697 = vmul.f32 %v3679, %v3603
        %v3698 = vmul.f32 %v3681, %v3603
        %v3699 = vmul.f32 %v3683, %v3603
        %v3700 = vadd.f32 %v3684, 1e-12
        %v3701 = vadd.f32 %v3685, 1e-12
        %v3702 = vadd.f32 %v3686, 1e-12
        %v3703 = vadd.f32 %v3687, 1e-12
        %v3704 = vadd.f32 %v3688, 1e-12
        %v3705 = vadd.f32 %v3689, 1e-12
        %v3706 = vadd.f32 %v3690, 1e-12
        %v3707 = vadd.f32 %v3691, 1e-12
        %v3708 = vadd.f32 %v3692, 1e-12
        %v3709 = vadd.f32 %v3693, 1e-12
        %v3710 = vadd.f32 %v3694, 1e-12
        %v3711 = vadd.f32 %v3695, 1e-12
        %v3712 = vadd.f32 %v3696, 1e-12
        %v3713 = vadd.f32 %v3697, 1e-12
        %v3714 = vadd.f32 %v3698, 1e-12
        %v3715 = vadd.f32 %v3699, 1e-12
        %v3716 = vrsqrt.pop %v3700
        %v3717 = vrsqrt.pop %v3701
        %v3718 = vrsqrt.pop %v3702
        %v3719 = vrsqrt.pop %v3703
        %v3720 = vrsqrt.pop %v3704
        %v3721 = vrsqrt.pop %v3705
        %v3722 = vrsqrt.pop %v3706
        %v3723 = vrsqrt.pop %v3707
        %v3724 = vrsqrt.pop %v3708
        %v3725 = vrsqrt.pop %v3709
        %v3726 = vrsqrt.pop %v3710
        %v3727 = vrsqrt.pop %v3711
        %v3728 = vrsqrt.pop %v3712
        %v3729 = vrsqrt.pop %v3713
        %v3730 = vrsqrt.pop %v3714
        %v3731 = vrsqrt.pop %v3715
        %v3732 = vmul.f32 %v3620, %v3716
        %v3733 = vmul.f32 %v3621, %v3717
        %v3734 = vmul.f32 %v3622, %v3718
        %v3735 = vmul.f32 %v3623, %v3719
        %v3736 = vmul.f32 %v3624, %v3720
        %v3737 = vmul.f32 %v3625, %v3721
        %v3738 = vmul.f32 %v3626, %v3722
        %v3739 = vmul.f32 %v3627, %v3723
        %v3740 = vmul.f32 %v3628, %v3724
        %v3741 = vmul.f32 %v3629, %v3725
        %v3742 = vmul.f32 %v3630, %v3726
        %v3743 = vmul.f32 %v3631, %v3727
        %v3744 = vmul.f32 %v3632, %v3728
        %v3745 = vmul.f32 %v3633, %v3729
        %v3746 = vmul.f32 %v3634, %v3730
        %v3747 = vmul.f32 %v3635, %v3731
        %v3749 = vlaneseq
        %v3750 = vshrl.u32 %v3749, 7
        %v3751 = vsub.s32 0, %v3750
        %v3752 = vrot.slane %v3569, %v3751
        %v3754 = vmul.f32 %v3732, %v3752
        %v3755 = vmul.f32 %v3733, %v3752
        %v3756 = vmul.f32 %v3734, %v3752
        %v3757 = vmul.f32 %v3735, %v3752
        %v3758 = vmul.f32 %v3736, %v3752
        %v3759 = vmul.f32 %v3737, %v3752
        %v3760 = vmul.f32 %v3738, %v3752
        %v3761 = vmul.f32 %v3739, %v3752
        %v3762 = vmul.f32 %v3740, %v3752
        %v3763 = vmul.f32 %v3741, %v3752
        %v3764 = vmul.f32 %v3742, %v3752
        %v3765 = vmul.f32 %v3743, %v3752
        %v3766 = vmul.f32 %v3744, %v3752
        %v3767 = vmul.f32 %v3745, %v3752
        %v3768 = vmul.f32 %v3746, %v3752
        %v3769 = vmul.f32 %v3747, %v3752
        %v3771 = vlaneseq
        %v3772 = vshrl.u32 %v3771, 7
        %v3773 = vsub.s32 0, %v3772
        %v3774 = vrot.slane %v3570, %v3773
        %v3776 = vadd.f32 %v3754, %v3774
        %v3777 = vadd.f32 %v3755, %v3774
        %v3778 = vadd.f32 %v3756, %v3774
        %v3779 = vadd.f32 %v3757, %v3774
        %v3780 = vadd.f32 %v3758, %v3774
        %v3781 = vadd.f32 %v3759, %v3774
        %v3782 = vadd.f32 %v3760, %v3774
        %v3783 = vadd.f32 %v3761, %v3774
        %v3784 = vadd.f32 %v3762, %v3774
        %v3785 = vadd.f32 %v3763, %v3774
        %v3786 = vadd.f32 %v3764, %v3774
        %v3787 = vadd.f32 %v3765, %v3774
        %v3788 = vadd.f32 %v3766, %v3774
        %v3789 = vadd.f32 %v3767, %v3774
        %v3790 = vadd.f32 %v3768, %v3774
        %v3791 = vadd.f32 %v3769, %v3774
        %v3792 = vpack.c.bf16 %v3777, %v3776
        %v3793 = vpack.c.bf16 %v3779, %v3778
        %v3794 = vpack.c.bf16 %v3781, %v3780
        %v3795 = vpack.c.bf16 %v3783, %v3782
        %v3796 = vpack.c.bf16 %v3785, %v3784
        %v3797 = vpack.c.bf16 %v3787, %v3786
        %v3798 = vpack.c.bf16 %v3789, %v3788
        %v3799 = vpack.c.bf16 %v3791, %v3790
        %v3800 = vld [vmem:[#allocation9] sm:$0xff]
        %v3801 = vld [vmem:[#allocation9 + $0x8] sm:$0xff]
        %v3802 = vld [vmem:[#allocation9 + $0x10] sm:$0xff]
        %v3803 = vld [vmem:[#allocation9 + $0x18] sm:$0xff]
        %v3804 = vld [vmem:[#allocation9 + $0x20] sm:$0xff]
        %v3805 = vld [vmem:[#allocation9 + $0x28] sm:$0xff]
        %v3806 = vld [vmem:[#allocation9 + $0x30] sm:$0xff]
        %v3807 = vld [vmem:[#allocation9 + $0x38] sm:$0xff]
        %v3808 = vld [vmem:[#allocation9 + $0x40] sm:$0xff]
        %v3809 = vld [vmem:[#allocation9 + $0x48] sm:$0xff]
        %v3810 = vld [vmem:[#allocation9 + $0x50] sm:$0xff]
        %v3811 = vld [vmem:[#allocation9 + $0x58] sm:$0xff]
        %v3812 = vld [vmem:[#allocation9 + $0x60] sm:$0xff]
        %v3813 = vld [vmem:[#allocation9 + $0x68] sm:$0xff]
        %v3814 = vld [vmem:[#allocation9 + $0x70] sm:$0xff]
        %v3815 = vld [vmem:[#allocation9 + $0x78] sm:$0xff]
        %v3816 = vld [vmem:[%s8] sm:$0x3]
        %v3818 = vlaneseq
        %v3819 = vshrl.u32 %v3818, 7
        %v3820 = vsub.s32 0, %v3819
        %v3821 = vrot.slane %v3816, %v3820
        %v3822 = vlaneseq
        %v3823 = vshrl.u32 %v3822, 7
        %v3824 = vsub.s32 1, %v3823
        %v3825 = vrot.slane %v3816, %v3824
        %v3844 = vunpack.c.l.b16 %v3800
        %v3845 = vunpack.c.h.b16 %v3800
        %v3846 = vunpack.c.l.b16 %v3801
        %v3847 = vunpack.c.h.b16 %v3801
        %v3848 = vunpack.c.l.b16 %v3802
        %v3849 = vunpack.c.h.b16 %v3802
        %v3850 = vunpack.c.l.b16 %v3803
        %v3851 = vunpack.c.h.b16 %v3803
        %v3852 = vunpack.c.l.b16 %v3804
        %v3853 = vunpack.c.h.b16 %v3804
        %v3854 = vunpack.c.l.b16 %v3805
        %v3855 = vunpack.c.h.b16 %v3805
        %v3856 = vunpack.c.l.b16 %v3806
        %v3857 = vunpack.c.h.b16 %v3806
        %v3858 = vunpack.c.l.b16 %v3807
        %v3859 = vunpack.c.h.b16 %v3807
        %v3860 = vunpack.c.l.b16 %v3808
        %v3861 = vunpack.c.h.b16 %v3808
        %v3862 = vunpack.c.l.b16 %v3809
        %v3863 = vunpack.c.h.b16 %v3809
        %v3864 = vunpack.c.l.b16 %v3810
        %v3865 = vunpack.c.h.b16 %v3810
        %v3866 = vunpack.c.l.b16 %v3811
        %v3867 = vunpack.c.h.b16 %v3811
        %v3868 = vunpack.c.l.b16 %v3812
        %v3869 = vunpack.c.h.b16 %v3812
        %v3870 = vunpack.c.l.b16 %v3813
        %v3871 = vunpack.c.h.b16 %v3813
        %v3872 = vunpack.c.l.b16 %v3814
        %v3873 = vunpack.c.h.b16 %v3814
        %v3874 = vunpack.c.l.b16 %v3815
        %v3875 = vunpack.c.h.b16 %v3815
        %v3876 = vpack.c.b16 %v3846, %v3844
        %v3877 = vpack.c.b16 %v3847, %v3845
        %v3878 = vpack.c.b16 %v3850, %v3848
        %v3879 = vpack.c.b16 %v3851, %v3849
        %v3880 = vpack.c.b16 %v3854, %v3852
        %v3881 = vpack.c.b16 %v3855, %v3853
        %v3882 = vpack.c.b16 %v3858, %v3856
        %v3883 = vpack.c.b16 %v3859, %v3857
        %v3884 = vpack.c.b16 %v3862, %v3860
        %v3885 = vpack.c.b16 %v3863, %v3861
        %v3886 = vpack.c.b16 %v3866, %v3864
        %v3887 = vpack.c.b16 %v3867, %v3865
        %v3888 = vpack.c.b16 %v3870, %v3868
        %v3889 = vpack.c.b16 %v3871, %v3869
        %v3890 = vpack.c.b16 %v3874, %v3872
        %v3891 = vpack.c.b16 %v3875, %v3873
        %3908 = vmatprep.subr.bf16.mxu0 %v3877
        %3909 = vmatpush1.bf16.msra.mxu0 %v3876
        %3910 = vmatprep.subr.bf16.mxu0 %v3879
        %3911 = vmatpush1.bf16.msra.mxu0 %v3878
        %3912 = vmatprep.subr.bf16.mxu0 %v3881
        %3913 = vmatpush1.bf16.msra.mxu0 %v3880
        %3914 = vmatprep.subr.bf16.mxu0 %v3883
        %3915 = vmatpush1.bf16.msra.mxu0 %v3882
        %3916 = vmatprep.subr.bf16.mxu0 %v3885
        %3917 = vmatpush1.bf16.msra.mxu0 %v3884
        %3918 = vmatprep.subr.bf16.mxu0 %v3887
        %3919 = vmatpush1.bf16.msra.mxu0 %v3886
        %3920 = vmatprep.subr.bf16.mxu0 %v3889
        %3921 = vmatpush1.bf16.msra.mxu0 %v3888
        %3922 = vmatprep.subr.bf16.mxu0 %v3891
        %3923 = vmatpush1.bf16.msra.mxu0 %v3890
        %3924 = vmatprep.subr.bf16.mxu0 0
        %3925 = vmatpush1.bf16.msra.mxu0 0
        %3926 = vmatprep.subr.bf16.mxu0 0
        %3927 = vmatpush1.bf16.msra.mxu0 0
        %3928 = vmatprep.subr.bf16.mxu0 0
        %3929 = vmatpush1.bf16.msra.mxu0 0
        %3930 = vmatprep.subr.bf16.mxu0 0
        %3931 = vmatpush1.bf16.msra.mxu0 0
        %3932 = vmatprep.subr.bf16.mxu0 0
        %3933 = vmatpush1.bf16.msra.mxu0 0
        %3934 = vmatprep.subr.bf16.mxu0 0
        %3935 = vmatpush1.bf16.msra.mxu0 0
        %3936 = vmatprep.subr.bf16.mxu0 0
        %3937 = vmatpush1.bf16.msra.mxu0 0
        %3938 = vmatprep.subr.bf16.mxu0 0
        %3939 = vmatpush1.bf16.msra.mxu0 0
        %3940 = vmatprep.mubr.bf16.mxu0 0
        %3941 = vmatmul.mubr.bf16.gmra.mrb[0].mxu0 %v3792
        %v3942 = vpop.f32.mrb[0].mxu0
        %v3943 = vadd.f32 %v3821, %v3942
        %v3944 = vpop.f32.mrb[0].mxu0
        %v3945 = vadd.f32 %v3825, %v3944
        %v3946 = vpop.f32.mrb[0].mxu0
        %v3947 = vadd.f32 %v3821, %v3946
        %v3948 = vpop.f32.mrb[0].mxu0
        %v3949 = vadd.f32 %v3825, %v3948
        %3950 = vmatprep.mubr.bf16.mxu0 0
        %3951 = vmatmul.mubr.bf16.gmra.mrb[0].mxu0 %v3793
        %v3952 = vpop.f32.mrb[0].mxu0
        %v3953 = vadd.f32 %v3821, %v3952
        %v3954 = vpop.f32.mrb[0].mxu0
        %v3955 = vadd.f32 %v3825, %v3954
        %v3956 = vpop.f32.mrb[0].mxu0
        %v3957 = vadd.f32 %v3821, %v3956
        %v3958 = vpop.f32.mrb[0].mxu0
        %v3959 = vadd.f32 %v3825, %v3958
        %3960 = vmatprep.mubr.bf16.mxu0 0
        %3961 = vmatmul.mubr.bf16.gmra.mrb[0].mxu0 %v3794
        %v3962 = vpop.f32.mrb[0].mxu0
        %v3963 = vadd.f32 %v3821, %v3962
        %v3964 = vpop.f32.mrb[0].mxu0
        %v3965 = vadd.f32 %v3825, %v3964
        %v3966 = vpop.f32.mrb[0].mxu0
        %v3967 = vadd.f32 %v3821, %v3966
        %v3968 = vpop.f32.mrb[0].mxu0
        %v3969 = vadd.f32 %v3825, %v3968
        %3970 = vmatprep.mubr.bf16.mxu0 0
        %3971 = vmatmul.mubr.bf16.gmra.mrb[0].mxu0 %v3795
        %v3972 = vpop.f32.mrb[0].mxu0
        %v3973 = vadd.f32 %v3821, %v3972
        %v3974 = vpop.f32.mrb[0].mxu0
        %v3975 = vadd.f32 %v3825, %v3974
        %v3976 = vpop.f32.mrb[0].mxu0
        %v3977 = vadd.f32 %v3821, %v3976
        %v3978 = vpop.f32.mrb[0].mxu0
        %v3979 = vadd.f32 %v3825, %v3978
        %3980 = vmatprep.mubr.bf16.mxu0 0
        %3981 = vmatmul.mubr.bf16.gmra.mrb[0].mxu0 %v3796
        %v3982 = vpop.f32.mrb[0].mxu0
        %v3983 = vadd.f32 %v3821, %v3982
        %v3984 = vpop.f32.mrb[0].mxu0
        %v3985 = vadd.f32 %v3825, %v3984
        %v3986 = vpop.f32.mrb[0].mxu0
        %v3987 = vadd.f32 %v3821, %v3986
        %v3988 = vpop.f32.mrb[0].mxu0
        %v3989 = vadd.f32 %v3825, %v3988
        %3990 = vmatprep.mubr.bf16.mxu0 0
        %3991 = vmatmul.mubr.bf16.gmra.mrb[0].mxu0 %v3797
        %v3992 = vpop.f32.mrb[0].mxu0
        %v3993 = vadd.f32 %v3821, %v3992
        %v3994 = vpop.f32.mrb[0].mxu0
        %v3995 = vadd.f32 %v3825, %v3994
        %v3996 = vpop.f32.mrb[0].mxu0
        %v3997 = vadd.f32 %v3821, %v3996
        %v3998 = vpop.f32.mrb[0].mxu0
        %v3999 = vadd.f32 %v3825, %v3998
        %4000 = vmatprep.mubr.bf16.mxu0 0
        %4001 = vmatmul.mubr.bf16.gmra.mrb[0].mxu0 %v3798
        %v4002 = vpop.f32.mrb[0].mxu0
        %v4003 = vadd.f32 %v3821, %v4002
        %v4004 = vpop.f32.mrb[0].mxu0
        %v4005 = vadd.f32 %v3825, %v4004
        %v4006 = vpop.f32.mrb[0].mxu0
        %v4007 = vadd.f32 %v3821, %v4006
        %v4008 = vpop.f32.mrb[0].mxu0
        %v4009 = vadd.f32 %v3825, %v4008
        %4010 = vmatprep.mubr.bf16.mxu0 0
        %4011 = vmatmul.mubr.bf16.gmra.mrb[0].mxu0 %v3799
        %v4012 = vpop.f32.mrb[0].mxu0
        %v4013 = vadd.f32 %v3821, %v4012
        %v4014 = vpop.f32.mrb[0].mxu0
        %v4015 = vadd.f32 %v3825, %v4014
        %v4016 = vpop.f32.mrb[0].mxu0
        %v4017 = vadd.f32 %v3821, %v4016
        %v4018 = vpop.f32.mrb[0].mxu0
        %v4019 = vadd.f32 %v3825, %v4018
        %4020 = vdwg.mxu0
        %v4021 = vmul.f32 %v3943, 0.5
        %v4022 = vmul.f32 %v3945, 0.5
        %v4023 = vmul.f32 %v3947, 0.5
        %v4024 = vmul.f32 %v3949, 0.5
        %v4025 = vmul.f32 %v3953, 0.5
        %v4026 = vmul.f32 %v3955, 0.5
        %v4027 = vmul.f32 %v3957, 0.5
        %v4028 = vmul.f32 %v3959, 0.5
        %v4029 = vmul.f32 %v3963, 0.5
        %v4030 = vmul.f32 %v3965, 0.5
        %v4031 = vmul.f32 %v3967, 0.5
        %v4032 = vmul.f32 %v3969, 0.5
        %v4033 = vmul.f32 %v3973, 0.5
        %v4034 = vmul.f32 %v3975, 0.5
        %v4035 = vmul.f32 %v3977, 0.5
        %v4036 = vmul.f32 %v3979, 0.5
        %v4037 = vmul.f32 %v3983, 0.5
        %v4038 = vmul.f32 %v3985, 0.5
        %v4039 = vmul.f32 %v3987, 0.5
        %v4040 = vmul.f32 %v3989, 0.5
        %v4041 = vmul.f32 %v3993, 0.5
        %v4042 = vmul.f32 %v3995, 0.5
        %v4043 = vmul.f32 %v3997, 0.5
        %v4044 = vmul.f32 %v3999, 0.5
        %v4045 = vmul.f32 %v4003, 0.5
        %v4046 = vmul.f32 %v4005, 0.5
        %v4047 = vmul.f32 %v4007, 0.5
        %v4048 = vmul.f32 %v4009, 0.5
        %v4049 = vmul.f32 %v4013, 0.5
        %v4050 = vmul.f32 %v4015, 0.5
        %v4051 = vmul.f32 %v4017, 0.5
        %v4052 = vmul.f32 %v4019, 0.5
        %v4053 = vmul.f32 %v3943, 0.70710677
        %v4054 = vmul.f32 %v3945, 0.70710677
        %v4055 = vmul.f32 %v3947, 0.70710677
        %v4056 = vmul.f32 %v3949, 0.70710677
        %v4057 = vmul.f32 %v3953, 0.70710677
        %v4058 = vmul.f32 %v3955, 0.70710677
        %v4059 = vmul.f32 %v3957, 0.70710677
        %v4060 = vmul.f32 %v3959, 0.70710677
        %v4061 = vmul.f32 %v3963, 0.70710677
        %v4062 = vmul.f32 %v3965, 0.70710677
        %v4063 = vmul.f32 %v3967, 0.70710677
        %v4064 = vmul.f32 %v3969, 0.70710677
        %v4065 = vmul.f32 %v3973, 0.70710677
        %v4066 = vmul.f32 %v3975, 0.70710677
        %v4067 = vmul.f32 %v3977, 0.70710677
        %v4068 = vmul.f32 %v3979, 0.70710677
        %v4069 = vmul.f32 %v3983, 0.70710677
        %v4070 = vmul.f32 %v3985, 0.70710677
        %v4071 = vmul.f32 %v3987, 0.70710677
        %v4072 = vmul.f32 %v3989, 0.70710677
        %v4073 = vmul.f32 %v3993, 0.70710677
        %v4074 = vmul.f32 %v3995, 0.70710677
        %v4075 = vmul.f32 %v3997, 0.70710677
        %v4076 = vmul.f32 %v3999, 0.70710677
        %v4077 = vmul.f32 %v4003, 0.70710677
        %v4078 = vmul.f32 %v4005, 0.70710677
        %v4079 = vmul.f32 %v4007, 0.70710677
        %v4080 = vmul.f32 %v4009, 0.70710677
        %v4081 = vmul.f32 %v4013, 0.70710677
        %v4082 = vmul.f32 %v4015, 0.70710677
        %v4083 = vmul.f32 %v4017, 0.70710677
        %v4084 = vmul.f32 %v4019, 0.70710677
        %v4085 = verf.f32.pop %v4053
        %v4086 = verf.f32.pop %v4054
        %v4087 = verf.f32.pop %v4055
        %v4088 = verf.f32.pop %v4056
        %v4089 = verf.f32.pop %v4057
        %v4090 = verf.f32.pop %v4058
        %v4091 = verf.f32.pop %v4059
        %v4092 = verf.f32.pop %v4060
        %v4093 = verf.f32.pop %v4061
        %v4094 = verf.f32.pop %v4062
        %v4095 = verf.f32.pop %v4063
        %v4096 = verf.f32.pop %v4064
        %v4097 = verf.f32.pop %v4065
        %v4098 = verf.f32.pop %v4066
        %v4099 = verf.f32.pop %v4067
        %v4100 = verf.f32.pop %v4068
        %v4101 = verf.f32.pop %v4069
        %v4102 = verf.f32.pop %v4070
        %v4103 = verf.f32.pop %v4071
        %v4104 = verf.f32.pop %v4072
        %v4105 = verf.f32.pop %v4073
        %v4106 = verf.f32.pop %v4074
        %v4107 = verf.f32.pop %v4075
        %v4108 = verf.f32.pop %v4076
        %v4109 = verf.f32.pop %v4077
        %v4110 = verf.f32.pop %v4078
        %v4111 = verf.f32.pop %v4079
        %v4112 = verf.f32.pop %v4080
        %v4113 = verf.f32.pop %v4081
        %v4114 = verf.f32.pop %v4082
        %v4115 = verf.f32.pop %v4083
        %v4116 = verf.f32.pop %v4084
        %v4117 = vadd.f32 %v4085, 1.0
        %v4118 = vadd.f32 %v4086, 1.0
        %v4119 = vadd.f32 %v4087, 1.0
        %v4120 = vadd.f32 %v4088, 1.0
        %v4121 = vadd.f32 %v4089, 1.0
        %v4122 = vadd.f32 %v4090, 1.0
        %v4123 = vadd.f32 %v4091, 1.0
        %v4124 = vadd.f32 %v4092, 1.0
        %v4125 = vadd.f32 %v4093, 1.0
        %v4126 = vadd.f32 %v4094, 1.0
        %v4127 = vadd.f32 %v4095, 1.0
        %v4128 = vadd.f32 %v4096, 1.0
        %v4129 = vadd.f32 %v4097, 1.0
        %v4130 = vadd.f32 %v4098, 1.0
        %v4131 = vadd.f32 %v4099, 1.0
        %v4132 = vadd.f32 %v4100, 1.0
        %v4133 = vadd.f32 %v4101, 1.0
        %v4134 = vadd.f32 %v4102, 1.0
        %v4135 = vadd.f32 %v4103, 1.0
        %v4136 = vadd.f32 %v4104, 1.0
        %v4137 = vadd.f32 %v4105, 1.0
        %v4138 = vadd.f32 %v4106, 1.0
        %v4139 = vadd.f32 %v4107, 1.0
        %v4140 = vadd.f32 %v4108, 1.0
        %v4141 = vadd.f32 %v4109, 1.0
        %v4142 = vadd.f32 %v4110, 1.0
        %v4143 = vadd.f32 %v4111, 1.0
        %v4144 = vadd.f32 %v4112, 1.0
        %v4145 = vadd.f32 %v4113, 1.0
        %v4146 = vadd.f32 %v4114, 1.0
        %v4147 = vadd.f32 %v4115, 1.0
        %v4148 = vadd.f32 %v4116, 1.0
        %v4149 = vmul.f32 %v4021, %v4117
        %v4150 = vmul.f32 %v4022, %v4118
        %v4151 = vmul.f32 %v4023, %v4119
        %v4152 = vmul.f32 %v4024, %v4120
        %v4153 = vmul.f32 %v4025, %v4121
        %v4154 = vmul.f32 %v4026, %v4122
        %v4155 = vmul.f32 %v4027, %v4123
        %v4156 = vmul.f32 %v4028, %v4124
        %v4157 = vmul.f32 %v4029, %v4125
        %v4158 = vmul.f32 %v4030, %v4126
        %v4159 = vmul.f32 %v4031, %v4127
        %v4160 = vmul.f32 %v4032, %v4128
        %v4161 = vmul.f32 %v4033, %v4129
        %v4162 = vmul.f32 %v4034, %v4130
        %v4163 = vmul.f32 %v4035, %v4131
        %v4164 = vmul.f32 %v4036, %v4132
        %v4165 = vmul.f32 %v4037, %v4133
        %v4166 = vmul.f32 %v4038, %v4134
        %v4167 = vmul.f32 %v4039, %v4135
        %v4168 = vmul.f32 %v4040, %v4136
        %v4169 = vmul.f32 %v4041, %v4137
        %v4170 = vmul.f32 %v4042, %v4138
        %v4171 = vmul.f32 %v4043, %v4139
        %v4172 = vmul.f32 %v4044, %v4140
        %v4173 = vmul.f32 %v4045, %v4141
        %v4174 = vmul.f32 %v4046, %v4142
        %v4175 = vmul.f32 %v4047, %v4143
        %v4176 = vmul.f32 %v4048, %v4144
        %v4177 = vmul.f32 %v4049, %v4145
        %v4178 = vmul.f32 %v4050, %v4146
        %v4179 = vmul.f32 %v4051, %v4147
        %v4180 = vmul.f32 %v4052, %v4148
        %v4181 = vpack.c.bf16 %v4151, %v4149
        %v4182 = vpack.c.bf16 %v4152, %v4150
        %v4183 = vpack.c.bf16 %v4155, %v4153
        %v4184 = vpack.c.bf16 %v4156, %v4154
        %v4185 = vpack.c.bf16 %v4159, %v4157
        %v4186 = vpack.c.bf16 %v4160, %v4158
        %v4187 = vpack.c.bf16 %v4163, %v4161
        %v4188 = vpack.c.bf16 %v4164, %v4162
        %v4189 = vpack.c.bf16 %v4167, %v4165
        %v4190 = vpack.c.bf16 %v4168, %v4166
        %v4191 = vpack.c.bf16 %v4171, %v4169
        %v4192 = vpack.c.bf16 %v4172, %v4170
        %v4193 = vpack.c.bf16 %v4175, %v4173
        %v4194 = vpack.c.bf16 %v4176, %v4174
        %v4195 = vpack.c.bf16 %v4179, %v4177
        %v4196 = vpack.c.bf16 %v4180, %v4178
        %v4197 = vld [vmem:[#allocation11] sm:$0xf]
        %v4198 = vld [vmem:[#allocation11 + $0x4] sm:$0xf]
        %v4199 = vld [vmem:[#allocation11 + $0x8] sm:$0xf]
        %v4200 = vld [vmem:[#allocation11 + $0xc] sm:$0xf]
        %v4201 = vld [vmem:[#allocation11 + $0x10] sm:$0xf]
        %v4202 = vld [vmem:[#allocation11 + $0x14] sm:$0xf]
        %v4203 = vld [vmem:[#allocation11 + $0x18] sm:$0xf]
        %v4204 = vld [vmem:[#allocation11 + $0x1c] sm:$0xf]
        %v4205 = vld [vmem:[#allocation11 + $0x20] sm:$0xf]
        %v4206 = vld [vmem:[#allocation11 + $0x24] sm:$0xf]
        %v4207 = vld [vmem:[#allocation11 + $0x28] sm:$0xf]
        %v4208 = vld [vmem:[#allocation11 + $0x2c] sm:$0xf]
        %v4209 = vld [vmem:[#allocation11 + $0x30] sm:$0xf]
        %v4210 = vld [vmem:[#allocation11 + $0x34] sm:$0xf]
        %v4211 = vld [vmem:[#allocation11 + $0x38] sm:$0xf]
        %v4212 = vld [vmem:[#allocation11 + $0x3c] sm:$0xf]
        %v4213 = vld [vmem:[#allocation11 + $0x40] sm:$0xf]
        %v4214 = vld [vmem:[#allocation11 + $0x44] sm:$0xf]
        %v4215 = vld [vmem:[#allocation11 + $0x48] sm:$0xf]
        %v4216 = vld [vmem:[#allocation11 + $0x4c] sm:$0xf]
        %v4217 = vld [vmem:[#allocation11 + $0x50] sm:$0xf]
        %v4218 = vld [vmem:[#allocation11 + $0x54] sm:$0xf]
        %v4219 = vld [vmem:[#allocation11 + $0x58] sm:$0xf]
        %v4220 = vld [vmem:[#allocation11 + $0x5c] sm:$0xf]
        %v4221 = vld [vmem:[#allocation11 + $0x60] sm:$0xf]
        %v4222 = vld [vmem:[#allocation11 + $0x64] sm:$0xf]
        %v4223 = vld [vmem:[#allocation11 + $0x68] sm:$0xf]
        %v4224 = vld [vmem:[#allocation11 + $0x6c] sm:$0xf]
        %v4225 = vld [vmem:[#allocation11 + $0x70] sm:$0xf]
        %v4226 = vld [vmem:[#allocation11 + $0x74] sm:$0xf]
        %v4227 = vld [vmem:[#allocation11 + $0x78] sm:$0xf]
        %v4228 = vld [vmem:[#allocation11 + $0x7c] sm:$0xf]
        %v4229 = vld [vmem:[%s10] sm:$0x1]
        %v4231 = vlaneseq
        %v4232 = vshrl.u32 %v4231, 7
        %v4233 = vsub.s32 0, %v4232
        %v4234 = vrot.slane %v4229, %v4233
        %v4268 = vunpack.c.l.b16 %v4197
        %v4269 = vunpack.c.l.b16 %v4198
        %v4270 = vunpack.c.l.b16 %v4199
        %v4271 = vunpack.c.l.b16 %v4200
        %v4272 = vunpack.c.l.b16 %v4201
        %v4273 = vunpack.c.l.b16 %v4202
        %v4274 = vunpack.c.l.b16 %v4203
        %v4275 = vunpack.c.l.b16 %v4204
        %v4276 = vunpack.c.l.b16 %v4205
        %v4277 = vunpack.c.l.b16 %v4206
        %v4278 = vunpack.c.l.b16 %v4207
        %v4279 = vunpack.c.l.b16 %v4208
        %v4280 = vunpack.c.l.b16 %v4209
        %v4281 = vunpack.c.l.b16 %v4210
        %v4282 = vunpack.c.l.b16 %v4211
        %v4283 = vunpack.c.l.b16 %v4212
        %v4284 = vunpack.c.l.b16 %v4213
        %v4285 = vunpack.c.l.b16 %v4214
        %v4286 = vunpack.c.l.b16 %v4215
        %v4287 = vunpack.c.l.b16 %v4216
        %v4288 = vunpack.c.l.b16 %v4217
        %v4289 = vunpack.c.l.b16 %v4218
        %v4290 = vunpack.c.l.b16 %v4219
        %v4291 = vunpack.c.l.b16 %v4220
        %v4292 = vunpack.c.l.b16 %v4221
        %v4293 = vunpack.c.l.b16 %v4222
        %v4294 = vunpack.c.l.b16 %v4223
        %v4295 = vunpack.c.l.b16 %v4224
        %v4296 = vunpack.c.l.b16 %v4225
        %v4297 = vunpack.c.l.b16 %v4226
        %v4298 = vunpack.c.l.b16 %v4227
        %v4299 = vunpack.c.l.b16 %v4228
        %v4300 = vpack.c.b16 %v4269, %v4268
        %v4301 = vpack.c.b16 %v4271, %v4270
        %v4302 = vpack.c.b16 %v4273, %v4272
        %v4303 = vpack.c.b16 %v4275, %v4274
        %v4304 = vpack.c.b16 %v4277, %v4276
        %v4305 = vpack.c.b16 %v4279, %v4278
        %v4306 = vpack.c.b16 %v4281, %v4280
        %v4307 = vpack.c.b16 %v4283, %v4282
        %v4308 = vpack.c.b16 %v4285, %v4284
        %v4309 = vpack.c.b16 %v4287, %v4286
        %v4310 = vpack.c.b16 %v4289, %v4288
        %v4311 = vpack.c.b16 %v4291, %v4290
        %v4312 = vpack.c.b16 %v4293, %v4292
        %v4313 = vpack.c.b16 %v4295, %v4294
        %v4314 = vpack.c.b16 %v4297, %v4296
        %v4315 = vpack.c.b16 %v4299, %v4298
        %4332 = vmatprep.subr.bf16.mxu0 0
        %4333 = vmatpush1.bf16.msra.mxu0 %v4300
        %4334 = vmatprep.subr.bf16.mxu0 0
        %4335 = vmatpush1.bf16.msra.mxu0 %v4301
        %4336 = vmatprep.subr.bf16.mxu0 0
        %4337 = vmatpush1.bf16.msra.mxu0 %v4302
        %4338 = vmatprep.subr.bf16.mxu0 0
        %4339 = vmatpush1.bf16.msra.mxu0 %v4303
        %4340 = vmatprep.subr.bf16.mxu0 0
        %4341 = vmatpush1.bf16.msra.mxu0 %v4304
        %4342 = vmatprep.subr.bf16.mxu0 0
        %4343 = vmatpush1.bf16.msra.mxu0 %v4305
        %4344 = vmatprep.subr.bf16.mxu0 0
        %4345 = vmatpush1.bf16.msra.mxu0 %v4306
        %4346 = vmatprep.subr.bf16.mxu0 0
        %4347 = vmatpush1.bf16.msra.mxu0 %v4307
        %4348 = vmatprep.subr.bf16.mxu0 0
        %4349 = vmatpush1.bf16.msra.mxu0 %v4308
        %4350 = vmatprep.subr.bf16.mxu0 0
        %4351 = vmatpush1.bf16.msra.mxu0 %v4309
        %4352 = vmatprep.subr.bf16.mxu0 0
        %4353 = vmatpush1.bf16.msra.mxu0 %v4310
        %4354 = vmatprep.subr.bf16.mxu0 0
        %4355 = vmatpush1.bf16.msra.mxu0 %v4311
        %4356 = vmatprep.subr.bf16.mxu0 0
        %4357 = vmatpush1.bf16.msra.mxu0 %v4312
        %4358 = vmatprep.subr.bf16.mxu0 0
        %4359 = vmatpush1.bf16.msra.mxu0 %v4313
        %4360 = vmatprep.subr.bf16.mxu0 0
        %4361 = vmatpush1.bf16.msra.mxu0 %v4314
        %4362 = vmatprep.subr.bf16.mxu0 0
        %4363 = vmatpush1.bf16.msra.mxu0 %v4315
        %4364 = vmatprep.mubr.bf16.mxu0 %v4182
        %4365 = vmatmul.mubr.bf16.gmra.mrb[0].mxu0 %v4181
        %v4366 = vpop.f32.mrb[0].mxu0
        %v4367 = vadd.f32 %v4234, %v4366
        %v4368 = vpop.f32.mrb[0].mxu0
        %v4369 = vpop.f32.mrb[0].mxu0
        %v4370 = vadd.f32 %v4234, %v4369
        %v4371 = vpop.f32.mrb[0].mxu0
        %4372 = vmatprep.mubr.bf16.mxu0 %v4184
        %4373 = vmatmul.mubr.bf16.gmra.mrb[0].mxu0 %v4183
        %v4374 = vpop.f32.mrb[0].mxu0
        %v4375 = vadd.f32 %v4234, %v4374
        %v4376 = vpop.f32.mrb[0].mxu0
        %v4377 = vpop.f32.mrb[0].mxu0
        %v4378 = vadd.f32 %v4234, %v4377
        %v4379 = vpop.f32.mrb[0].mxu0
        %4380 = vmatprep.mubr.bf16.mxu0 %v4186
        %4381 = vmatmul.mubr.bf16.gmra.mrb[0].mxu0 %v4185
        %v4382 = vpop.f32.mrb[0].mxu0
        %v4383 = vadd.f32 %v4234, %v4382
        %v4384 = vpop.f32.mrb[0].mxu0
        %v4385 = vpop.f32.mrb[0].mxu0
        %v4386 = vadd.f32 %v4234, %v4385
        %v4387 = vpop.f32.mrb[0].mxu0
        %4388 = vmatprep.mubr.bf16.mxu0 %v4188
        %4389 = vmatmul.mubr.bf16.gmra.mrb[0].mxu0 %v4187
        %v4390 = vpop.f32.mrb[0].mxu0
        %v4391 = vadd.f32 %v4234, %v4390
        %v4392 = vpop.f32.mrb[0].mxu0
        %v4393 = vpop.f32.mrb[0].mxu0
        %v4394 = vadd.f32 %v4234, %v4393
        %v4395 = vpop.f32.mrb[0].mxu0
        %4396 = vmatprep.mubr.bf16.mxu0 %v4190
        %4397 = vmatmul.mubr.bf16.gmra.mrb[0].mxu0 %v4189
        %v4398 = vpop.f32.mrb[0].mxu0
        %v4399 = vadd.f32 %v4234, %v4398
        %v4400 = vpop.f32.mrb[0].mxu0
        %v4401 = vpop.f32.mrb[0].mxu0
        %v4402 = vadd.f32 %v4234, %v4401
        %v4403 = vpop.f32.mrb[0].mxu0
        %4404 = vmatprep.mubr.bf16.mxu0 %v4192
        %4405 = vmatmul.mubr.bf16.gmra.mrb[0].mxu0 %v4191
        %v4406 = vpop.f32.mrb[0].mxu0
        %v4407 = vadd.f32 %v4234, %v4406
        %v4408 = vpop.f32.mrb[0].mxu0
        %v4409 = vpop.f32.mrb[0].mxu0
        %v4410 = vadd.f32 %v4234, %v4409
        %v4411 = vpop.f32.mrb[0].mxu0
        %4412 = vmatprep.mubr.bf16.mxu0 %v4194
        %4413 = vmatmul.mubr.bf16.gmra.mrb[0].mxu0 %v4193
        %v4414 = vpop.f32.mrb[0].mxu0
        %v4415 = vadd.f32 %v4234, %v4414
        %v4416 = vpop.f32.mrb[0].mxu0
        %v4417 = vpop.f32.mrb[0].mxu0
        %v4418 = vadd.f32 %v4234, %v4417
        %v4419 = vpop.f32.mrb[0].mxu0
        %4420 = vmatprep.mubr.bf16.mxu0 %v4196
        %4421 = vmatmul.mubr.bf16.gmra.mrb[0].mxu0 %v4195
        %v4422 = vpop.f32.mrb[0].mxu0
        %v4423 = vadd.f32 %v4234, %v4422
        %v4424 = vpop.f32.mrb[0].mxu0
        %v4425 = vpop.f32.mrb[0].mxu0
        %v4426 = vadd.f32 %v4234, %v4425
        %v4427 = vpop.f32.mrb[0].mxu0
        %4428 = vdwg.mxu0
        %v4429 = vadd.f32 %v3776, %v4367
        %v4430 = vadd.f32 %v3777, %v4370
        %v4431 = vadd.f32 %v3778, %v4375
        %v4432 = vadd.f32 %v3779, %v4378
        %v4433 = vadd.f32 %v3780, %v4383
        %v4434 = vadd.f32 %v3781, %v4386
        %v4435 = vadd.f32 %v3782, %v4391
        %v4436 = vadd.f32 %v3783, %v4394
        %v4437 = vadd.f32 %v3784, %v4399
        %v4438 = vadd.f32 %v3785, %v4402
        %v4439 = vadd.f32 %v3786, %v4407
        %v4440 = vadd.f32 %v3787, %v4410
        %v4441 = vadd.f32 %v3788, %v4415
        %v4442 = vadd.f32 %v3789, %v4418
        %v4443 = vadd.f32 %v3790, %v4423
        %v4444 = vadd.f32 %v3791, %v4426
        %v4445 = vld [vmem:[%s11] sm:$0x1]
        %v4446 = vld [vmem:[%s12] sm:$0x1]
        %4447 = vadd.xlane.f32.xlu0 %v4429
        %v4448 = vpop.xlane.xlu0 %4447
        %4449 = vadd.xlane.f32.xlu0 %v4430
        %v4450 = vpop.xlane.xlu0 %4449
        %4451 = vadd.xlane.f32.xlu0 %v4431
        %v4452 = vpop.xlane.xlu0 %4451
        %4453 = vadd.xlane.f32.xlu0 %v4432
        %v4454 = vpop.xlane.xlu0 %4453
        %4455 = vadd.xlane.f32.xlu0 %v4433
        %v4456 = vpop.xlane.xlu0 %4455
        %4457 = vadd.xlane.f32.xlu0 %v4434
        %v4458 = vpop.xlane.xlu0 %4457
        %4459 = vadd.xlane.f32.xlu0 %v4435
        %v4460 = vpop.xlane.xlu0 %4459
        %4461 = vadd.xlane.f32.xlu0 %v4436
        %v4462 = vpop.xlane.xlu0 %4461
        %4463 = vadd.xlane.f32.xlu0 %v4437
        %v4464 = vpop.xlane.xlu0 %4463
        %4465 = vadd.xlane.f32.xlu0 %v4438
        %v4466 = vpop.xlane.xlu0 %4465
        %4467 = vadd.xlane.f32.xlu0 %v4439
        %v4468 = vpop.xlane.xlu0 %4467
        %4469 = vadd.xlane.f32.xlu0 %v4440
        %v4470 = vpop.xlane.xlu0 %4469
        %4471 = vadd.xlane.f32.xlu0 %v4441
        %v4472 = vpop.xlane.xlu0 %4471
        %4473 = vadd.xlane.f32.xlu0 %v4442
        %v4474 = vpop.xlane.xlu0 %4473
        %4475 = vadd.xlane.f32.xlu0 %v4443
        %v4476 = vpop.xlane.xlu0 %4475
        %4477 = vadd.xlane.f32.xlu0 %v4444
        %v4478 = vpop.xlane.xlu0 %4477
        %v4479 = vmul.f32 %v4448, %v3603
        %v4480 = vmul.f32 %v4450, %v3603
        %v4481 = vmul.f32 %v4452, %v3603
        %v4482 = vmul.f32 %v4454, %v3603
        %v4483 = vmul.f32 %v4456, %v3603
        %v4484 = vmul.f32 %v4458, %v3603
        %v4485 = vmul.f32 %v4460, %v3603
        %v4486 = vmul.f32 %v4462, %v3603
        %v4487 = vmul.f32 %v4464, %v3603
        %v4488 = vmul.f32 %v4466, %v3603
        %v4489 = vmul.f32 %v4468, %v3603
        %v4490 = vmul.f32 %v4470, %v3603
        %v4491 = vmul.f32 %v4472, %v3603
        %v4492 = vmul.f32 %v4474, %v3603
        %v4493 = vmul.f32 %v4476, %v3603
        %v4494 = vmul.f32 %v4478, %v3603
        %v4495 = vsub.f32 %v4429, %v4479
        %v4496 = vsub.f32 %v4430, %v4480
        %v4497 = vsub.f32 %v4431, %v4481
        %v4498 = vsub.f32 %v4432, %v4482
        %v4499 = vsub.f32 %v4433, %v4483
        %v4500 = vsub.f32 %v4434, %v4484
        %v4501 = vsub.f32 %v4435, %v4485
        %v4502 = vsub.f32 %v4436, %v4486
        %v4503 = vsub.f32 %v4437, %v4487
        %v4504 = vsub.f32 %v4438, %v4488
        %v4505 = vsub.f32 %v4439, %v4489
        %v4506 = vsub.f32 %v4440, %v4490
        %v4507 = vsub.f32 %v4441, %v4491
        %v4508 = vsub.f32 %v4442, %v4492
        %v4509 = vsub.f32 %v4443, %v4493
        %v4510 = vsub.f32 %v4444, %v4494
        %v4511 = vmul.f32 %v4495, %v4495
        %v4512 = vmul.f32 %v4496, %v4496
        %v4513 = vmul.f32 %v4497, %v4497
        %v4514 = vmul.f32 %v4498, %v4498
        %v4515 = vmul.f32 %v4499, %v4499
        %v4516 = vmul.f32 %v4500, %v4500
        %v4517 = vmul.f32 %v4501, %v4501
        %v4518 = vmul.f32 %v4502, %v4502
        %v4519 = vmul.f32 %v4503, %v4503
        %v4520 = vmul.f32 %v4504, %v4504
        %v4521 = vmul.f32 %v4505, %v4505
        %v4522 = vmul.f32 %v4506, %v4506
        %v4523 = vmul.f32 %v4507, %v4507
        %v4524 = vmul.f32 %v4508, %v4508
        %v4525 = vmul.f32 %v4509, %v4509
        %v4526 = vmul.f32 %v4510, %v4510
        %4527 = vadd.xlane.f32.xlu0 %v4511
        %v4528 = vpop.xlane.xlu0 %4527
        %4529 = vadd.xlane.f32.xlu0 %v4512
        %v4530 = vpop.xlane.xlu0 %4529
        %4531 = vadd.xlane.f32.xlu0 %v4513
        %v4532 = vpop.xlane.xlu0 %4531
        %4533 = vadd.xlane.f32.xlu0 %v4514
        %v4534 = vpop.xlane.xlu0 %4533
        %4535 = vadd.xlane.f32.xlu0 %v4515
        %v4536 = vpop.xlane.xlu0 %4535
        %4537 = vadd.xlane.f32.xlu0 %v4516
        %v4538 = vpop.xlane.xlu0 %4537
        %4539 = vadd.xlane.f32.xlu0 %v4517
        %v4540 = vpop.xlane.xlu0 %4539
        %4541 = vadd.xlane.f32.xlu0 %v4518
        %v4542 = vpop.xlane.xlu0 %4541
        %4543 = vadd.xlane.f32.xlu0 %v4519
        %v4544 = vpop.xlane.xlu0 %4543
        %4545 = vadd.xlane.f32.xlu0 %v4520
        %v4546 = vpop.xlane.xlu0 %4545
        %4547 = vadd.xlane.f32.xlu0 %v4521
        %v4548 = vpop.xlane.xlu0 %4547
        %4549 = vadd.xlane.f32.xlu0 %v4522
        %v4550 = vpop.xlane.xlu0 %4549
        %4551 = vadd.xlane.f32.xlu0 %v4523
        %v4552 = vpop.xlane.xlu0 %4551
        %4553 = vadd.xlane.f32.xlu0 %v4524
        %v4554 = vpop.xlane.xlu0 %4553
        %4555 = vadd.xlane.f32.xlu0 %v4525
        %v4556 = vpop.xlane.xlu0 %4555
        %4557 = vadd.xlane.f32.xlu0 %v4526
        %v4558 = vpop.xlane.xlu0 %4557
        %v4559 = vmul.f32 %v4528, %v3603
        %v4560 = vmul.f32 %v4530, %v3603
        %v4561 = vmul.f32 %v4532, %v3603
        %v4562 = vmul.f32 %v4534, %v3603
        %v4563 = vmul.f32 %v4536, %v3603
        %v4564 = vmul.f32 %v4538, %v3603
        %v4565 = vmul.f32 %v4540, %v3603
        %v4566 = vmul.f32 %v4542, %v3603
        %v4567 = vmul.f32 %v4544, %v3603
        %v4568 = vmul.f32 %v4546, %v3603
        %v4569 = vmul.f32 %v4548, %v3603
        %v4570 = vmul.f32 %v4550, %v3603
        %v4571 = vmul.f32 %v4552, %v3603
        %v4572 = vmul.f32 %v4554, %v3603
        %v4573 = vmul.f32 %v4556, %v3603
        %v4574 = vmul.f32 %v4558, %v3603
        %v4575 = vadd.f32 %v4559, 1e-12
        %v4576 = vadd.f32 %v4560, 1e-12
        %v4577 = vadd.f32 %v4561, 1e-12
        %v4578 = vadd.f32 %v4562, 1e-12
        %v4579 = vadd.f32 %v4563, 1e-12
        %v4580 = vadd.f32 %v4564, 1e-12
        %v4581 = vadd.f32 %v4565, 1e-12
        %v4582 = vadd.f32 %v4566, 1e-12
        %v4583 = vadd.f32 %v4567, 1e-12
        %v4584 = vadd.f32 %v4568, 1e-12
        %v4585 = vadd.f32 %v4569, 1e-12
        %v4586 = vadd.f32 %v4570, 1e-12
        %v4587 = vadd.f32 %v4571, 1e-12
        %v4588 = vadd.f32 %v4572, 1e-12
        %v4589 = vadd.f32 %v4573, 1e-12
        %v4590 = vadd.f32 %v4574, 1e-12
        %v4591 = vrsqrt.pop %v4575
        %v4592 = vrsqrt.pop %v4576
        %v4593 = vrsqrt.pop %v4577
        %v4594 = vrsqrt.pop %v4578
        %v4595 = vrsqrt.pop %v4579
        %v4596 = vrsqrt.pop %v4580
        %v4597 = vrsqrt.pop %v4581
        %v4598 = vrsqrt.pop %v4582
        %v4599 = vrsqrt.pop %v4583
        %v4600 = vrsqrt.pop %v4584
        %v4601 = vrsqrt.pop %v4585
        %v4602 = vrsqrt.pop %v4586
        %v4603 = vrsqrt.pop %v4587
        %v4604 = vrsqrt.pop %v4588
        %v4605 = vrsqrt.pop %v4589
        %v4606 = vrsqrt.pop %v4590
        %v4607 = vmul.f32 %v4495, %v4591
        %v4608 = vmul.f32 %v4496, %v4592
        %v4609 = vmul.f32 %v4497, %v4593
        %v4610 = vmul.f32 %v4498, %v4594
        %v4611 = vmul.f32 %v4499, %v4595
        %v4612 = vmul.f32 %v4500, %v4596
        %v4613 = vmul.f32 %v4501, %v4597
        %v4614 = vmul.f32 %v4502, %v4598
        %v4615 = vmul.f32 %v4503, %v4599
        %v4616 = vmul.f32 %v4504, %v4600
        %v4617 = vmul.f32 %v4505, %v4601
        %v4618 = vmul.f32 %v4506, %v4602
        %v4619 = vmul.f32 %v4507, %v4603
        %v4620 = vmul.f32 %v4508, %v4604
        %v4621 = vmul.f32 %v4509, %v4605
        %v4622 = vmul.f32 %v4510, %v4606
        %v4624 = vlaneseq
        %v4625 = vshrl.u32 %v4624, 7
        %v4626 = vsub.s32 0, %v4625
        %v4627 = vrot.slane %v4445, %v4626
        %v4629 = vmul.f32 %v4607, %v4627
        %v4630 = vmul.f32 %v4608, %v4627
        %v4631 = vmul.f32 %v4609, %v4627
        %v4632 = vmul.f32 %v4610, %v4627
        %v4633 = vmul.f32 %v4611, %v4627
        %v4634 = vmul.f32 %v4612, %v4627
        %v4635 = vmul.f32 %v4613, %v4627
        %v4636 = vmul.f32 %v4614, %v4627
        %v4637 = vmul.f32 %v4615, %v4627
        %v4638 = vmul.f32 %v4616, %v4627
        %v4639 = vmul.f32 %v4617, %v4627
        %v4640 = vmul.f32 %v4618, %v4627
        %v4641 = vmul.f32 %v4619, %v4627
        %v4642 = vmul.f32 %v4620, %v4627
        %v4643 = vmul.f32 %v4621, %v4627
        %v4644 = vmul.f32 %v4622, %v4627
        %v4646 = vlaneseq
        %v4647 = vshrl.u32 %v4646, 7
        %v4648 = vsub.s32 0, %v4647
        %v4649 = vrot.slane %v4446, %v4648
        %v4651 = vadd.f32 %v4629, %v4649
        %v4652 = vadd.f32 %v4630, %v4649
        %v4653 = vadd.f32 %v4631, %v4649
        %v4654 = vadd.f32 %v4632, %v4649
        %v4655 = vadd.f32 %v4633, %v4649
        %v4656 = vadd.f32 %v4634, %v4649
        %v4657 = vadd.f32 %v4635, %v4649
        %v4658 = vadd.f32 %v4636, %v4649
        %v4659 = vadd.f32 %v4637, %v4649
        %v4660 = vadd.f32 %v4638, %v4649
        %v4661 = vadd.f32 %v4639, %v4649
        %v4662 = vadd.f32 %v4640, %v4649
        %v4663 = vadd.f32 %v4641, %v4649
        %v4664 = vadd.f32 %v4642, %v4649
        %v4665 = vadd.f32 %v4643, %v4649
        %v4666 = vadd.f32 %v4644, %v4649
        %4667 = vst [vmem:[%s517] sm:$0xff] %v4651
        %4668 = vst [vmem:[%s517 + $0x8] sm:$0xff] %v4652
        %4669 = vst [vmem:[%s517 + $0x10] sm:$0xff] %v4653
        %4670 = vst [vmem:[%s517 + $0x18] sm:$0xff] %v4654
        %4671 = vst [vmem:[%s517 + $0x20] sm:$0xff] %v4655
        %4672 = vst [vmem:[%s517 + $0x28] sm:$0xff] %v4656
        %4673 = vst [vmem:[%s517 + $0x30] sm:$0xff] %v4657
        %4674 = vst [vmem:[%s517 + $0x38] sm:$0xff] %v4658
        %4675 = vst [vmem:[%s517 + $0x40] sm:$0xff] %v4659
        %4676 = vst [vmem:[%s517 + $0x48] sm:$0xff] %v4660
        %4677 = vst [vmem:[%s517 + $0x50] sm:$0xff] %v4661
        %4678 = vst [vmem:[%s517 + $0x58] sm:$0xff] %v4662
        %4679 = vst [vmem:[%s517 + $0x60] sm:$0xff] %v4663
        %4680 = vst [vmem:[%s517 + $0x68] sm:$0xff] %v4664
        %4681 = vst [vmem:[%s517 + $0x70] sm:$0xff] %v4665
        %4682 = vst [vmem:[%s517 + $0x78] sm:$0xff] %v4666
        %s4683 = sand.u32 %s318, 1
        %s4684 = scalar_lea.sflag [#allocation5], %s4683
        %s4685 = sand.u32 %s318, 1
        %s4686 = smul.addr %s4685, 128
        %s4687 = scalar_lea.vmem [#allocation12], %s4686
        // Predicated region
        $region93: #{tpu_custom_call.1} parent=71 // pred_check
          %p4688 = pneg %p328
        $region94: #{tpu_custom_call.1} parent=71 // pred_check_branch
          %4690 = sbr.rel (%p4688) target = $region96
        $region95: #{tpu_custom_call.1} parent=71 // pred_region
          %s4691 = smul.u32 2, %s32
          %s4693 = ssub.s32 2048, 2048
          %4694 = vsyncadd %s4684, %s4693
          %s4695 = smul.addr %s4691, 8
          %s4696 = smul.addr %s4695, 128
          %s4697 = scalar_lea.hbm %s13, %s4696
          %s4698 = sshll.u32 %s4687, 4
          %s4699 = int_to_ptr.vmem [resolvable:$true] %s4698
          %4704 = dma.vmem_to_hbm [thread:$0]  %s4699, 2048, %s4697, %s4684, 128, 128, 8
        $region96: #{tpu_custom_call.1} parent=71 // pred_fallthru
          _
      $region72: #{tpu_custom_call.1} parent=5 // pred_fallthru
        _
      %p4705 = scmp.le.s32.totalorder 2, %s27
      // Predicated region
      $region97: #{tpu_custom_call.1} parent=5 // pred_check
        %p4706 = pneg %p4705
      $region98: #{tpu_custom_call.1} parent=5 // pred_check_branch
        %4708 = sbr.rel (%p4706) target = $region100
      $region99: #{tpu_custom_call.1} parent=5 // pred_region
        %s4709 = ssub.s32 %s27, 2
        // Predicated region
        $region101: #{tpu_custom_call.1} parent=99 // pred_check
          %p4710 = pneg %p334
        $region102: #{tpu_custom_call.1} parent=99 // pred_check_branch
          %4712 = sbr.rel (%p4710) target = $region104
        $region103: #{tpu_custom_call.1} parent=99 // pred_region
          %s4713 = sand.u32 %s319, 1
          %s4714 = scalar_lea.sflag [#allocation5], %s4713
          %s4715 = sand.u32 %s319, 1
          %s4716 = smul.addr %s4715, 128
          %s4717 = scalar_lea.vmem [#allocation12], %s4716
          %4718 = dma.done %s4714, 2048
        $region104: #{tpu_custom_call.1} parent=99 // pred_fallthru
          _
      $region100: #{tpu_custom_call.1} parent=5 // pred_fallthru
        _
    $region6: #{tpu_custom_call.1} parent=1 // loop_footer
      %s31 = sadd.s32 1, %s27
    $region7: #{tpu_custom_call.1} parent=1 // loop_footer_branch
      %26 = sbr.rel target = $region3
    $region8: #{tpu_custom_call.1} parent=1 // loop_exit
      _
    %4719 = vsyncpa [#allocation4], 1
    %s4720 = scalar_lea.sflag [#allocation4], 1
    %4721 = vsyncpa %s4720, 1
    %4722 = vsyncpa [#allocation7], 1
    %4723 = vsyncpa [#allocation10], 1
    %4724 = vsyncpa [#allocation5], 1
    %s4725 = scalar_lea.sflag [#allocation5], 1
    %4726 = vsyncpa %s4725, 1

</llo_original>
